<compile_context>
chip_gen: v7x
topology: tpu7x:2x2x1
jax: 0.10.0
libtpu: 0.0.40
codegen_flags: <defaults>
</compile_context>

<pallas_src>
import functools

import jax
import jax.numpy as jnp
from jax import lax
from jax.experimental import pallas as pl
from jax.experimental.pallas import tpu as pltpu

# Set to jnp.bfloat16 on v6e/v7x for MXU peak (loosen test tolerances then).
_MM_DTYPE = jnp.float32


# ----------------------------------------------------------------------------
# Chip-aware VMEM budgeting helpers.
# ----------------------------------------------------------------------------
def _vmem_capacity():
    try:
        return int(pltpu.get_tpu_info().vmem_capacity_bytes)
    except Exception:
        return 64 << 20                      # v7x-safe fallback


def _tile_vmem_bytes(tile_h, W, C, Cm, itemsize):
    th2 = tile_h + 2
    slab = th2 * W
    mo = tile_h * W
    return (2 * slab * C * itemsize          # double-buffered halo slabs
            + 2 * mo * C * itemsize          # double-buffered output blocks
            + slab * Cm * 4 * 6              # y1 / left / right / concat (f32)
            + mo * C * 4 * 2                 # accumulator + y2 (f32)
            + 2 * (C * Cm + 9 * Cm * C + 2 * Cm + 2 * C) * 4)   # weights


def _fused_vmem_bytes(N, H, W, C, Cm, R, itemsize):
    M = N * H * W
    return (2 * M * C * itemsize             # input + output blocks
            + M * Cm * 4 * 6                 # y1 / taps / concat (f32)
            + M * C * 4 * 3                  # x (f32), acc, y2
            + 2 * R * (C * Cm + 9 * Cm * C + 2 * Cm + 2 * C) * 4)


def _pick_tile_h(H, W, C, Cm, itemsize, budget):
    best = 1
    for t in range(1, H + 1):
        if H % t == 0 and _tile_vmem_bytes(t, W, C, Cm, itemsize) <= budget:
            best = t
    return best


# ----------------------------------------------------------------------------
# Fused path: all repetitions in one pallas_call, feature map resident in VMEM.
# ----------------------------------------------------------------------------
def _resblock_fused_kernel(x_ref, w1_ref, s1_ref, b1_ref, w2_ref, s2_ref,
                           b2_ref, o_ref, *, use_residual, N, H, W):
    C = x_ref.shape[-1]
    R = w1_ref.shape[0]
    M = N * H * W

    x = x_ref[...].reshape(M, C).astype(jnp.float32)

    # (M, 1) column masks, built once, reused across repetitions.
    h_idx = lax.broadcasted_iota(jnp.int32, (N, H, W, 1), 1).reshape(M, 1)
    w_idx = lax.broadcasted_iota(jnp.int32, (N, H, W, 1), 2).reshape(M, 1)
    left_ok = w_idx >= 1
    right_ok = w_idx <= W - 2
    top_ok = h_idx >= 1
    bot_ok = h_idx <= H - 2

    for r in range(R):
        # 1x1 conv (C -> Cm) + folded BN + LeakyReLU
        y1 = jnp.dot(x.astype(_MM_DTYPE), w1_ref[r].astype(_MM_DTYPE),
                     preferred_element_type=jnp.float32)
        y1 = y1 * s1_ref[r] + b1_ref[r]
        y1 = jnp.maximum(y1, 0.1 * y1)

        # dx taps via sublane roll + W-boundary mask, fused along lanes.
        y1_l = jnp.where(left_ok, pltpu.roll(y1, 1, axis=0), 0.0)
        y1_r = jnp.where(right_ok, pltpu.roll(y1, M - 1, axis=0), 0.0)
        y1c = jnp.concatenate([y1_l, y1, y1_r], axis=1)       # (M, 3*Cm)

        # dy taps: roll whole rows + H-boundary mask; 3 matmuls with K=3*Cm,
        # accumulated in registers.
        t0 = jnp.where(top_ok, pltpu.roll(y1c, W, axis=0), 0.0)
        t2 = jnp.where(bot_ok, pltpu.roll(y1c, M - W, axis=0), 0.0)
        acc = jnp.dot(t0.astype(_MM_DTYPE), w2_ref[r, 0].astype(_MM_DTYPE),
                      preferred_element_type=jnp.float32)
        acc = acc + jnp.dot(y1c.astype(_MM_DTYPE), w2_ref[r, 1].astype(_MM_DTYPE),
                            preferred_element_type=jnp.float32)
        acc = acc + jnp.dot(t2.astype(_MM_DTYPE), w2_ref[r, 2].astype(_MM_DTYPE),
                            preferred_element_type=jnp.float32)

        y2 = acc * s2_ref[r] + b2_ref[r]
        y2 = jnp.maximum(y2, 0.1 * y2)
        x = (y2 + x) if use_residual else y2

    o_ref[...] = x.reshape(N, H, W, C).astype(o_ref.dtype)


def _resblock_fused_call(x_nhwc, sp, use_residual):
    N, H, W, C = x_nhwc.shape
    R, _, Cm = sp["w1"].shape
    assert W % 8 == 0, "W must be a multiple of 8 (sublane alignment)"
    cap = _vmem_capacity()
    est = _fused_vmem_bytes(N, H, W, C, Cm, R, x_nhwc.dtype.itemsize)
    vmem_limit = int(min(max(2 * est, 32 << 20), int(0.85 * cap)))

    return pl.pallas_call(
        functools.partial(_resblock_fused_kernel, use_residual=use_residual,
                          N=N, H=H, W=W),
        out_shape=jax.ShapeDtypeStruct((N, H, W, C), x_nhwc.dtype),
        grid_spec=pltpu.PrefetchScalarGridSpec(
            num_scalar_prefetch=0,
            grid=(1,),
            in_specs=[
                pl.BlockSpec((N, H, W, C), lambda g: (0, 0, 0, 0)),
                pl.BlockSpec((R, C, Cm), lambda g: (0, 0, 0)),
                pl.BlockSpec((R, 1, Cm), lambda g: (0, 0, 0)),
                pl.BlockSpec((R, 1, Cm), lambda g: (0, 0, 0)),
                pl.BlockSpec((R, 3, 3 * Cm, C), lambda g: (0, 0, 0, 0)),
                pl.BlockSpec((R, 1, C), lambda g: (0, 0, 0)),
                pl.BlockSpec((R, 1, C), lambda g: (0, 0, 0)),
            ],
            out_specs=pl.BlockSpec((N, H, W, C), lambda g: (0, 0, 0, 0)),
        ),
        compiler_params=pltpu.CompilerParams(
            dimension_semantics=("arbitrary",),
            vmem_limit_bytes=vmem_limit),
    )(x_nhwc, sp["w1"], sp["s1"], sp["b1"], sp["w2"], sp["s2"], sp["b2"])


# ----------------------------------------------------------------------------
# Tiled path: one (image, row-tile) step per grid point, manual halo DMA.
# ----------------------------------------------------------------------------
def _resblock_kernel(x_hbm, w1_ref, s1_ref, b1_ref, w2_ref, s2_ref, b2_ref,
                     o_ref, x_buf, sem_m, sem_h, *, use_residual, single_tile):
    n = pl.program_id(0)
    i = pl.program_id(1)
    num_n = pl.num_programs(0)
    num_h = pl.num_programs(1)

    _, th2, W, C = x_buf.shape            # x_buf: (2, tile_h + 2, W, C)
    tile_h = th2 - 2
    M2 = th2 * W
    Mo = tile_h * W

    t = n * num_h + i                     # global step (sequential grid)
    slot = t % 2

    # ---- manual halo DMA (no host padding) ---------------------------------
    # Main copy: tile_h+1 rows covering [top halo, center] (interior / last
    # tile) or [center, bottom halo] (first tile).  The uncovered halo row at
    # the global image boundary is never fetched; it is masked to zero below
    # (that zero is exactly the 3x3 conv's zero padding).
    def main_copy(nn, ii, slot_):
        if single_tile:
            src = x_hbm.at[nn, pl.ds(0, tile_h)]
            dst = x_buf.at[slot_, pl.ds(1, tile_h)]
        else:
            src_start = jnp.where(ii == 0, 0, ii * tile_h - 1)
            dst_start = jnp.where(ii == 0, 1, 0)
            src = x_hbm.at[nn, pl.ds(src_start, tile_h + 1)]
            dst = x_buf.at[slot_, pl.ds(dst_start, tile_h + 1)]
        return pltpu.make_async_copy(src, dst, sem_m.at[slot_])

    def halo_copy(nn, ii, slot_):         # 1-row bottom halo (interior tiles)
        return pltpu.make_async_copy(
            x_hbm.at[nn, pl.ds((ii + 1) * tile_h, 1)],
            x_buf.at[slot_, pl.ds(tile_h + 1, 1)],
            sem_h.at[slot_])

    def issue(nn, ii, slot_):
        main_copy(nn, ii, slot_).start()
        if not single_tile:
            @pl.when((ii > 0) & (ii < num_h - 1))
            def _():
                halo_copy(nn, ii, slot_).start()

    @pl.when(t == 0)                      # first tile overall: fetch now
    def _():
        issue(n, i, slot)

    @pl.when(t + 1 < num_n * num_h)       # cross-image prefetch of next tile
    def _():
        nxt = i == num_h - 1
        issue(jnp.where(nxt, n + 1, n), jnp.where(nxt, 0, i + 1), 1 - slot)

    main_copy(n, i, slot).wait()          # wait for the current slab
    if not single_tile:
        @pl.when((i > 0) & (i < num_h - 1))
        def _():
            halo_copy(n, i, slot).wait()

    # ---- compute ------------------------------------------------------------
    slab = x_buf[slot]                    # (th2, W, C), raw dtype
    x2d = slab.reshape(M2, C)

    # 1x1 conv (C -> Cm) + folded BN + LeakyReLU over the whole slab.
    y1 = jnp.dot(x2d.astype(_MM_DTYPE), w1_ref[...].astype(_MM_DTYPE),
                 preferred_element_type=jnp.float32)
    y1 = y1 * s1_ref[...] + b1_ref[...]
    y1 = jnp.maximum(y1, 0.1 * y1)

    # (M2, 1) column masks.  row_ok zeroes the un-fetched halo rows at the
    # global image top/bottom (torch's zero padding of conv2's input) and also
    # contains any stale-VMEM garbage in those rows.
    r_col = lax.broadcasted_iota(jnp.int32, (th2, W, 1), 0).reshape(M2, 1)
    w_col = lax.broadcasted_iota(jnp.int32, (th2, W, 1), 1).reshape(M2, 1)
    row_ok = ((r_col > 0) | (i > 0)) & ((r_col <= tile_h) | (i < num_h - 1))
    y1 = jnp.where(row_ok, y1, 0.0)

    # dx = -1/+1 taps via sublane roll + W-boundary masks, fused along lanes.
    y1_l = jnp.where(w_col >= 1, pltpu.roll(y1, 1, axis=0), 0.0)
    y1_r = jnp.where(w_col <= W - 2, pltpu.roll(y1, M2 - 1, axis=0), 0.0)
    y1c = jnp.concatenate([y1_l, y1, y1_r], axis=1)          # (M2, 3*Cm)

    # 3x3 conv (Cm -> C): 3 matmuls with K=3*Cm, register accumulation.
    acc = None
    for dy in range(3):
        lo = dy * W                       # sublane-aligned (W % 8 == 0)
        term = jnp.dot(y1c[lo:lo + Mo].astype(_MM_DTYPE),
                       w2_ref[dy].astype(_MM_DTYPE),
                       preferred_element_type=jnp.float32)
        acc = term if acc is None else acc + term

    # folded BN + LeakyReLU + residual
    y2 = acc * s2_ref[...] + b2_ref[...]
    y2 = jnp.maximum(y2, 0.1 * y2)
    if use_residual:
        y2 = y2 + x2d[W:W + Mo].astype(jnp.float32)   # center rows of slab
    o_ref[0] = y2.reshape(tile_h, W, C).astype(o_ref.dtype)


def _resblock_call(x_nhwc, p, use_residual, tile_h=None):
    N, H, W, C = x_nhwc.shape
    Cm = p["w1"].shape[1]
    assert W % 8 == 0, "W must be a multiple of 8 (sublane alignment)"

    cap = _vmem_capacity()
    if tile_h is None:
        tile_h = _pick_tile_h(H, W, C, Cm, x_nhwc.dtype.itemsize,
                              budget=int(0.5 * cap))
    assert H % tile_h == 0
    num_h = H // tile_h

    est = _tile_vmem_bytes(tile_h, W, C, Cm, x_nhwc.dtype.itemsize)
    vmem_limit = int(min(max(2 * est, 32 << 20), int(0.85 * cap)))

    return pl.pallas_call(
        functools.partial(_resblock_kernel, use_residual=use_residual,
                          single_tile=(num_h == 1)),
        out_shape=jax.ShapeDtypeStruct((N, H, W, C), x_nhwc.dtype),
        grid_spec=pltpu.PrefetchScalarGridSpec(
            num_scalar_prefetch=0,
            grid=(N, num_h),
            in_specs=[
                pl.BlockSpec(memory_space=pl.ANY),                   # x (HBM)
                pl.BlockSpec((C, Cm), lambda n, i: (0, 0)),          # w1
                pl.BlockSpec((1, Cm), lambda n, i: (0, 0)),          # scale1
                pl.BlockSpec((1, Cm), lambda n, i: (0, 0)),          # bias1
                pl.BlockSpec((3, 3 * Cm, C), lambda n, i: (0, 0, 0)),  # w2
                pl.BlockSpec((1, C), lambda n, i: (0, 0)),           # scale2
                pl.BlockSpec((1, C), lambda n, i: (0, 0)),           # bias2
            ],
            out_specs=pl.BlockSpec((1, tile_h, W, C),
                                   lambda n, i: (n, i, 0, 0)),
            scratch_shapes=[
                pltpu.VMEM((2, tile_h + 2, W, C), x_nhwc.dtype),  # halo slabs
                pltpu.SemaphoreType.DMA((2,)),                    # main DMA
                pltpu.SemaphoreType.DMA((2,)),                    # halo DMA
            ],
        ),
        compiler_params=pltpu.CompilerParams(
            # TODO(synk): on v7x (2 TCs) split the row-tile axis per core and
            # keep one prefetch chain per core (core_parallel leading axis).
            dimension_semantics=("arbitrary", "arbitrary"),
            vmem_limit_bytes=vmem_limit),
    )(x_nhwc, p["w1"], p["s1"], p["b1"], p["w2"], p["s2"], p["b2"])


# ----------------------------------------------------------------------------
# Parameter init (deterministic) + BN/bias folding.
# ----------------------------------------------------------------------------
def init_params(key, channels, num_repetitions):
    """Returns (raw_params, folded_params) lists, one entry per repetition."""
    assert channels % 2 == 0
    cm = channels // 2
    eps = 1e-5
    raw, folded = [], []
    for r in range(num_repetitions):
        ks = jax.random.split(jax.random.fold_in(key, r), 12)
        w1_oihw = 0.1 * jax.random.normal(ks[0], (cm, channels, 1, 1), jnp.float32)
        b1 = 0.1 * jax.random.normal(ks[1], (cm,), jnp.float32)
        g1 = 1.0 + 0.1 * jax.random.normal(ks[2], (cm,), jnp.float32)
        be1 = 0.1 * jax.random.normal(ks[3], (cm,), jnp.float32)
        m1 = 0.1 * jax.random.normal(ks[4], (cm,), jnp.float32)
        v1 = 0.5 + jax.random.uniform(ks[5], (cm,), jnp.float32)

        w2_oihw = 0.05 * jax.random.normal(ks[6], (channels, cm, 3, 3), jnp.float32)
        b2 = 0.1 * jax.random.normal(ks[7], (channels,), jnp.float32)
        g2 = 1.0 + 0.1 * jax.random.normal(ks[8], (channels,), jnp.float32)
        be2 = 0.1 * jax.random.normal(ks[9], (channels,), jnp.float32)
        m2 = 0.1 * jax.random.normal(ks[10], (channels,), jnp.float32)
        v2 = 0.5 + jax.random.uniform(ks[11], (channels,), jnp.float32)

        raw.append(dict(w1=w1_oihw, b1=b1, g1=g1, be1=be1, m1=m1, v1=v1,
                        w2=w2_oihw, b2=b2, g2=g2, be2=be2, m2=m2, v2=v2))

        # Fold conv bias + eval-mode BN into per-channel (scale, bias).
        s1 = g1 / jnp.sqrt(v1 + eps)
        bi1 = be1 + s1 * (b1 - m1)
        s2 = g2 / jnp.sqrt(v2 + eps)
        bi2 = be2 + s2 * (b2 - m2)

        folded.append(dict(
            w1=jnp.transpose(w1_oihw.reshape(cm, channels), (1, 0)),   # (C, Cm)
            s1=s1.reshape(1, cm), b1=bi1.reshape(1, cm),
            # (ky, kx, Cm, C) -> (3, 3*Cm, C), kx outer (matches lane concat)
            w2=jnp.transpose(w2_oihw, (2, 3, 1, 0)).reshape(3, 3 * cm, channels),
            s2=s2.reshape(1, channels), b2=bi2.reshape(1, channels),
        ))
    return raw, folded


def residual_block_forward(x_nchw, folded_params, use_residual=True,
                           path=None, tile_h=None):
    """Pallas implementation of ResidualBlock.forward (eval-mode BN).

    path: None (auto), "fused" (all reps in one VMEM-resident pallas_call) or
    "tiled" (one pallas_call per repetition with manual halo DMA).
    """
    x = jnp.transpose(x_nchw, (0, 2, 3, 1))   # NCHW -> NHWC
    N, H, W, C = x.shape
    Cm = folded_params[0]["w1"].shape[1]
    R = len(folded_params)
    cap = _vmem_capacity()
    fused_ok = _fused_vmem_bytes(N, H, W, C, Cm, R,
                                 x.dtype.itemsize) <= int(0.45 * cap)
    if path == "fused" or (path is None and fused_ok):
        stacked = {k: jnp.stack([p[k] for p in folded_params])
                   for k in folded_params[0]}
        x = _resblock_fused_call(x, stacked, use_residual)
    else:
        for p in folded_params:
            x = _resblock_call(x, p, use_residual, tile_h=tile_h)
    return jnp.transpose(x, (0, 3, 1, 2))      # NHWC -> NCHW


# ----------------------------------------------------------------------------
# Pure-JAX reference (mirrors the PyTorch module in eval mode).
# ----------------------------------------------------------------------------
def reference_forward(x, raw_params, use_residual=True):
    eps = 1e-5
    dn = ("NCHW", "OIHW", "NCHW")
    leaky = lambda t: jnp.where(t > 0, t, 0.1 * t)

    def bn(t, g, b, m, v):
        return g[None, :, None, None] * (t - m[None, :, None, None]) / \
               jnp.sqrt(v[None, :, None, None] + eps) + b[None, :, None, None]

    for p in raw_params:
        res = x
        y = lax.conv_general_dilated(x, p["w1"], (1, 1), "VALID",
                                     dimension_numbers=dn)
        y = y + p["b1"][None, :, None, None]
        y = leaky(bn(y, p["g1"], p["be1"], p["m1"], p["v1"]))
        y = lax.conv_general_dilated(y, p["w2"], (1, 1), "SAME",
                                     dimension_numbers=dn)
        y = y + p["b2"][None, :, None, None]
        y = leaky(bn(y, p["g2"], p["be2"], p["m2"], p["v2"]))
        if use_residual:
            y = y + res
        x = y
    return x


if __name__ == "__main__":
    key = jax.random.PRNGKey(0)
    N, C, H, W = 2, 8, 16, 16
    num_repetitions = 2
    use_residual = True

    k_x, k_p = jax.random.split(key)
    x = jax.random.normal(k_x, (N, C, H, W), jnp.float32)

    raw_params, folded_params = init_params(k_p, C, num_repetitions)
    ref = reference_forward(x, raw_params, use_residual)

    # Exercise all kernel paths: fused, tiled single-tile, tiled multi-tile
    # (halo DMAs + cross-image prefetch).
    outs = {
        "fused": residual_block_forward(x, folded_params, use_residual,
                                        path="fused"),
        "tiled_auto": residual_block_forward(x, folded_params, use_residual,
                                             path="tiled"),
        "tiled_4": residual_block_forward(x, folded_params, use_residual,
                                          path="tiled", tile_h=4),
    }
    for name, out in outs.items():
        out = jax.block_until_ready(out)
        assert out.shape == (N, C, H, W) and out.dtype == jnp.float32
        err = jnp.max(jnp.abs(out - ref))
        assert jnp.allclose(out, ref, rtol=1e-4, atol=1e-4), \
            f"{name}: max abs err {err}"

    print("KERNEL_OK")
</pallas_src>

<mosaic_0001>
module attributes {stable_mosaic.version = 11 : i64} {
  func.func @_resblock_fused_kernel(%arg0: i32, %arg1: memref<2x16x16x8xf32, #tpu.memory_space<vmem>>, %arg2: memref<2x8x4xf32, #tpu.memory_space<vmem>>, %arg3: memref<2x1x4xf32, #tpu.memory_space<vmem>>, %arg4: memref<2x1x4xf32, #tpu.memory_space<vmem>>, %arg5: memref<2x3x12x8xf32, #tpu.memory_space<vmem>>, %arg6: memref<2x1x8xf32, #tpu.memory_space<vmem>>, %arg7: memref<2x1x8xf32, #tpu.memory_space<vmem>>, %arg8: memref<2x16x16x8xf32, #tpu.memory_space<vmem>>) attributes {dimension_semantics = [#tpu.dimension_semantics<arbitrary>], iteration_bounds = array<i64: 1>, scalar_prefetch = 0 : i64, scratch_operands = 0 : i64, tpu.core_type = #tpu.core_type<tc>, window_params = [{pipeline_mode = #tpu.pipeline_mode<synchronous>, transform_indices = @transform_0, window_bounds = array<i64: 2, 16, 16, 8>}, {pipeline_mode = #tpu.pipeline_mode<synchronous>, transform_indices = @transform_1, window_bounds = array<i64: 2, 8, 4>}, {pipeline_mode = #tpu.pipeline_mode<synchronous>, transform_indices = @transform_2, window_bounds = array<i64: 2, 1, 4>}, {pipeline_mode = #tpu.pipeline_mode<synchronous>, transform_indices = @transform_3, window_bounds = array<i64: 2, 1, 4>}, {pipeline_mode = #tpu.pipeline_mode<synchronous>, transform_indices = @transform_4, window_bounds = array<i64: 2, 3, 12, 8>}, {pipeline_mode = #tpu.pipeline_mode<synchronous>, transform_indices = @transform_5, window_bounds = array<i64: 2, 1, 8>}, {pipeline_mode = #tpu.pipeline_mode<synchronous>, transform_indices = @transform_6, window_bounds = array<i64: 2, 1, 8>}, {pipeline_mode = #tpu.pipeline_mode<synchronous>, transform_indices = @transform_7, window_bounds = array<i64: 2, 16, 16, 8>}]} {
    %c0 = arith.constant 0 : index
    %c0_0 = arith.constant 0 : index
    %c0_1 = arith.constant 0 : index
    %c0_2 = arith.constant 0 : index
    %0 = vector.load %arg1[%c0, %c0_0, %c0_1, %c0_2] : memref<2x16x16x8xf32, #tpu.memory_space<vmem>>, vector<2x16x16x8xf32>
    %1 = vector.shape_cast %0 : vector<2x16x16x8xf32> to vector<512x8xf32>
    %2 = tpu.iota {dimensions = array<i32: 1>} : vector<2x16x16x1xi32>
    %3 = vector.shape_cast %2 : vector<2x16x16x1xi32> to vector<512x1xi32>
    %4 = tpu.iota {dimensions = array<i32: 2>} : vector<2x16x16x1xi32>
    %5 = vector.shape_cast %4 : vector<2x16x16x1xi32> to vector<512x1xi32>
    %c1_i32 = arith.constant 1 : i32
    %6 = vector.broadcast %c1_i32 : i32 to vector<512x1xi32>
    %7 = arith.cmpi sge, %5, %6 : vector<512x1xi32>
    %c14_i32 = arith.constant 14 : i32
    %8 = vector.broadcast %c14_i32 : i32 to vector<512x1xi32>
    %9 = arith.cmpi sle, %5, %8 : vector<512x1xi32>
    %c1_i32_3 = arith.constant 1 : i32
    %10 = vector.broadcast %c1_i32_3 : i32 to vector<512x1xi32>
    %11 = arith.cmpi sge, %3, %10 : vector<512x1xi32>
    %c14_i32_4 = arith.constant 14 : i32
    %12 = vector.broadcast %c14_i32_4 : i32 to vector<512x1xi32>
    %13 = arith.cmpi sle, %3, %12 : vector<512x1xi32>
    %c0_5 = arith.constant 0 : index
    %c0_6 = arith.constant 0 : index
    %c0_7 = arith.constant 0 : index
    %14 = vector.load %arg2[%c0_5, %c0_6, %c0_7] : memref<2x8x4xf32, #tpu.memory_space<vmem>>, vector<1x8x4xf32>
    %15 = vector.shape_cast %14 : vector<1x8x4xf32> to vector<8x4xf32>
    %cst = arith.constant dense<0.000000e+00> : vector<512x4xf32>
    %16 = tpu.matmul %1, %15, %cst {dimension_numbers = #tpu.dot_dimension_numbers<[1], [0], [0], [1], [0, 0, 1, 1], [], []>} : vector<512x8xf32>, vector<8x4xf32>, vector<512x4xf32> -> vector<512x4xf32>
    %c0_8 = arith.constant 0 : index
    %c0_9 = arith.constant 0 : index
    %c0_10 = arith.constant 0 : index
    %17 = vector.load %arg3[%c0_8, %c0_9, %c0_10] : memref<2x1x4xf32, #tpu.memory_space<vmem>>, vector<1x1x4xf32>
    %18 = vector.shape_cast %17 : vector<1x1x4xf32> to vector<1x4xf32>
    %19 = vector.broadcast %18 : vector<1x4xf32> to vector<512x4xf32>
    %20 = arith.mulf %16, %19 : vector<512x4xf32>
    %c0_11 = arith.constant 0 : index
    %c0_12 = arith.constant 0 : index
    %c0_13 = arith.constant 0 : index
    %21 = vector.load %arg4[%c0_11, %c0_12, %c0_13] : memref<2x1x4xf32, #tpu.memory_space<vmem>>, vector<1x1x4xf32>
    %22 = vector.shape_cast %21 : vector<1x1x4xf32> to vector<1x4xf32>
    %23 = vector.broadcast %22 : vector<1x4xf32> to vector<512x4xf32>
    %24 = arith.addf %20, %23 : vector<512x4xf32>
    %cst_14 = arith.constant 1.000000e-01 : f32
    %25 = vector.broadcast %cst_14 : f32 to vector<512x4xf32>
    %26 = arith.mulf %25, %24 : vector<512x4xf32>
    %27 = arith.maximumf %24, %26 : vector<512x4xf32>
    %c1_i32_15 = arith.constant 1 : i32
    %28 = tpu.dynamic_rotate %27 by %c1_i32_15 dim 0 : vector<512x4xf32>, i32 -> vector<512x4xf32>
    %cst_16 = arith.constant 0.000000e+00 : f32
    %29 = vector.shape_cast %7 : vector<512x1xi1> to vector<512x1xi1>
    %30 = vector.broadcast %29 : vector<512x1xi1> to vector<512x4xi1>
    %31 = vector.broadcast %cst_16 : f32 to vector<512x4xf32>
    %32 = arith.select %30, %28, %31 : vector<512x4xi1>, vector<512x4xf32>
    %c511_i32 = arith.constant 511 : i32
    %33 = tpu.dynamic_rotate %27 by %c511_i32 dim 0 : vector<512x4xf32>, i32 -> vector<512x4xf32>
    %cst_17 = arith.constant 0.000000e+00 : f32
    %34 = vector.shape_cast %9 : vector<512x1xi1> to vector<512x1xi1>
    %35 = vector.broadcast %34 : vector<512x1xi1> to vector<512x4xi1>
    %36 = vector.broadcast %cst_17 : f32 to vector<512x4xf32>
    %37 = arith.select %35, %33, %36 : vector<512x4xi1>, vector<512x4xf32>
    %38 = tpu.concatenate %32, %27, %37 in 1 : vector<512x4xf32>, vector<512x4xf32>, vector<512x4xf32> -> vector<512x12xf32>
    %c16_i32 = arith.constant 16 : i32
    %39 = tpu.dynamic_rotate %38 by %c16_i32 dim 0 : vector<512x12xf32>, i32 -> vector<512x12xf32>
    %cst_18 = arith.constant 0.000000e+00 : f32
    %40 = vector.shape_cast %11 : vector<512x1xi1> to vector<512x1xi1>
    %41 = vector.broadcast %40 : vector<512x1xi1> to vector<512x12xi1>
    %42 = vector.broadcast %cst_18 : f32 to vector<512x12xf32>
    %43 = arith.select %41, %39, %42 : vector<512x12xi1>, vector<512x12xf32>
    %c496_i32 = arith.constant 496 : i32
    %44 = tpu.dynamic_rotate %38 by %c496_i32 dim 0 : vector<512x12xf32>, i32 -> vector<512x12xf32>
    %cst_19 = arith.constant 0.000000e+00 : f32
    %45 = vector.shape_cast %13 : vector<512x1xi1> to vector<512x1xi1>
    %46 = vector.broadcast %45 : vector<512x1xi1> to vector<512x12xi1>
    %47 = vector.broadcast %cst_19 : f32 to vector<512x12xf32>
    %48 = arith.select %46, %44, %47 : vector<512x12xi1>, vector<512x12xf32>
    %c0_20 = arith.constant 0 : index
    %c0_21 = arith.constant 0 : index
    %c0_22 = arith.constant 0 : index
    %c0_23 = arith.constant 0 : index
    %49 = vector.load %arg5[%c0_20, %c0_21, %c0_22, %c0_23] : memref<2x3x12x8xf32, #tpu.memory_space<vmem>>, vector<1x1x12x8xf32>
    %50 = vector.shape_cast %49 : vector<1x1x12x8xf32> to vector<12x8xf32>
    %cst_24 = arith.constant dense<0.000000e+00> : vector<512x8xf32>
    %51 = tpu.matmul %43, %50, %cst_24 {dimension_numbers = #tpu.dot_dimension_numbers<[1], [0], [0], [1], [0, 0, 1, 1], [], []>} : vector<512x12xf32>, vector<12x8xf32>, vector<512x8xf32> -> vector<512x8xf32>
    %c0_25 = arith.constant 0 : index
    %c1 = arith.constant 1 : index
    %c0_26 = arith.constant 0 : index
    %c0_27 = arith.constant 0 : index
    %52 = vector.load %arg5[%c0_25, %c1, %c0_26, %c0_27] : memref<2x3x12x8xf32, #tpu.memory_space<vmem>>, vector<1x1x12x8xf32>
    %53 = vector.shape_cast %52 : vector<1x1x12x8xf32> to vector<12x8xf32>
    %cst_28 = arith.constant dense<0.000000e+00> : vector<512x8xf32>
    %54 = tpu.matmul %38, %53, %cst_28 {dimension_numbers = #tpu.dot_dimension_numbers<[1], [0], [0], [1], [0, 0, 1, 1], [], []>} : vector<512x12xf32>, vector<12x8xf32>, vector<512x8xf32> -> vector<512x8xf32>
    %55 = arith.addf %51, %54 : vector<512x8xf32>
    %c0_29 = arith.constant 0 : index
    %c2 = arith.constant 2 : index
    %c0_30 = arith.constant 0 : index
    %c0_31 = arith.constant 0 : index
    %56 = vector.load %arg5[%c0_29, %c2, %c0_30, %c0_31] : memref<2x3x12x8xf32, #tpu.memory_space<vmem>>, vector<1x1x12x8xf32>
    %57 = vector.shape_cast %56 : vector<1x1x12x8xf32> to vector<12x8xf32>
    %cst_32 = arith.constant dense<0.000000e+00> : vector<512x8xf32>
    %58 = tpu.matmul %48, %57, %cst_32 {dimension_numbers = #tpu.dot_dimension_numbers<[1], [0], [0], [1], [0, 0, 1, 1], [], []>} : vector<512x12xf32>, vector<12x8xf32>, vector<512x8xf32> -> vector<512x8xf32>
    %59 = arith.addf %55, %58 : vector<512x8xf32>
    %c0_33 = arith.constant 0 : index
    %c0_34 = arith.constant 0 : index
    %c0_35 = arith.constant 0 : index
    %60 = vector.load %arg6[%c0_33, %c0_34, %c0_35] : memref<2x1x8xf32, #tpu.memory_space<vmem>>, vector<1x1x8xf32>
    %61 = vector.shape_cast %60 : vector<1x1x8xf32> to vector<1x8xf32>
    %62 = vector.broadcast %61 : vector<1x8xf32> to vector<512x8xf32>
    %63 = arith.mulf %59, %62 : vector<512x8xf32>
    %c0_36 = arith.constant 0 : index
    %c0_37 = arith.constant 0 : index
    %c0_38 = arith.constant 0 : index
    %64 = vector.load %arg7[%c0_36, %c0_37, %c0_38] : memref<2x1x8xf32, #tpu.memory_space<vmem>>, vector<1x1x8xf32>
    %65 = vector.shape_cast %64 : vector<1x1x8xf32> to vector<1x8xf32>
    %66 = vector.broadcast %65 : vector<1x8xf32> to vector<512x8xf32>
    %67 = arith.addf %63, %66 : vector<512x8xf32>
    %cst_39 = arith.constant 1.000000e-01 : f32
    %68 = vector.broadcast %cst_39 : f32 to vector<512x8xf32>
    %69 = arith.mulf %68, %67 : vector<512x8xf32>
    %70 = arith.maximumf %67, %69 : vector<512x8xf32>
    %71 = arith.addf %70, %1 : vector<512x8xf32>
    %c1_40 = arith.constant 1 : index
    %c0_41 = arith.constant 0 : index
    %c0_42 = arith.constant 0 : index
    %72 = vector.load %arg2[%c1_40, %c0_41, %c0_42] : memref<2x8x4xf32, #tpu.memory_space<vmem>>, vector<1x8x4xf32>
    %73 = vector.shape_cast %72 : vector<1x8x4xf32> to vector<8x4xf32>
    %cst_43 = arith.constant dense<0.000000e+00> : vector<512x4xf32>
    %74 = tpu.matmul %71, %73, %cst_43 {dimension_numbers = #tpu.dot_dimension_numbers<[1], [0], [0], [1], [0, 0, 1, 1], [], []>} : vector<512x8xf32>, vector<8x4xf32>, vector<512x4xf32> -> vector<512x4xf32>
    %c1_44 = arith.constant 1 : index
    %c0_45 = arith.constant 0 : index
    %c0_46 = arith.constant 0 : index
    %75 = vector.load %arg3[%c1_44, %c0_45, %c0_46] : memref<2x1x4xf32, #tpu.memory_space<vmem>>, vector<1x1x4xf32>
    %76 = vector.shape_cast %75 : vector<1x1x4xf32> to vector<1x4xf32>
    %77 = vector.broadcast %76 : vector<1x4xf32> to vector<512x4xf32>
    %78 = arith.mulf %74, %77 : vector<512x4xf32>
    %c1_47 = arith.constant 1 : index
    %c0_48 = arith.constant 0 : index
    %c0_49 = arith.constant 0 : index
    %79 = vector.load %arg4[%c1_47, %c0_48, %c0_49] : memref<2x1x4xf32, #tpu.memory_space<vmem>>, vector<1x1x4xf32>
    %80 = vector.shape_cast %79 : vector<1x1x4xf32> to vector<1x4xf32>
    %81 = vector.broadcast %80 : vector<1x4xf32> to vector<512x4xf32>
    %82 = arith.addf %78, %81 : vector<512x4xf32>
    %cst_50 = arith.constant 1.000000e-01 : f32
    %83 = vector.broadcast %cst_50 : f32 to vector<512x4xf32>
    %84 = arith.mulf %83, %82 : vector<512x4xf32>
    %85 = arith.maximumf %82, %84 : vector<512x4xf32>
    %c1_i32_51 = arith.constant 1 : i32
    %86 = tpu.dynamic_rotate %85 by %c1_i32_51 dim 0 : vector<512x4xf32>, i32 -> vector<512x4xf32>
    %cst_52 = arith.constant 0.000000e+00 : f32
    %87 = vector.shape_cast %7 : vector<512x1xi1> to vector<512x1xi1>
    %88 = vector.broadcast %87 : vector<512x1xi1> to vector<512x4xi1>
    %89 = vector.broadcast %cst_52 : f32 to vector<512x4xf32>
    %90 = arith.select %88, %86, %89 : vector<512x4xi1>, vector<512x4xf32>
    %c511_i32_53 = arith.constant 511 : i32
    %91 = tpu.dynamic_rotate %85 by %c511_i32_53 dim 0 : vector<512x4xf32>, i32 -> vector<512x4xf32>
    %cst_54 = arith.constant 0.000000e+00 : f32
    %92 = vector.shape_cast %9 : vector<512x1xi1> to vector<512x1xi1>
    %93 = vector.broadcast %92 : vector<512x1xi1> to vector<512x4xi1>
    %94 = vector.broadcast %cst_54 : f32 to vector<512x4xf32>
    %95 = arith.select %93, %91, %94 : vector<512x4xi1>, vector<512x4xf32>
    %96 = tpu.concatenate %90, %85, %95 in 1 : vector<512x4xf32>, vector<512x4xf32>, vector<512x4xf32> -> vector<512x12xf32>
    %c16_i32_55 = arith.constant 16 : i32
    %97 = tpu.dynamic_rotate %96 by %c16_i32_55 dim 0 : vector<512x12xf32>, i32 -> vector<512x12xf32>
    %cst_56 = arith.constant 0.000000e+00 : f32
    %98 = vector.shape_cast %11 : vector<512x1xi1> to vector<512x1xi1>
    %99 = vector.broadcast %98 : vector<512x1xi1> to vector<512x12xi1>
    %100 = vector.broadcast %cst_56 : f32 to vector<512x12xf32>
    %101 = arith.select %99, %97, %100 : vector<512x12xi1>, vector<512x12xf32>
    %c496_i32_57 = arith.constant 496 : i32
    %102 = tpu.dynamic_rotate %96 by %c496_i32_57 dim 0 : vector<512x12xf32>, i32 -> vector<512x12xf32>
    %cst_58 = arith.constant 0.000000e+00 : f32
    %103 = vector.shape_cast %13 : vector<512x1xi1> to vector<512x1xi1>
    %104 = vector.broadcast %103 : vector<512x1xi1> to vector<512x12xi1>
    %105 = vector.broadcast %cst_58 : f32 to vector<512x12xf32>
    %106 = arith.select %104, %102, %105 : vector<512x12xi1>, vector<512x12xf32>
    %c1_59 = arith.constant 1 : index
    %c0_60 = arith.constant 0 : index
    %c0_61 = arith.constant 0 : index
    %c0_62 = arith.constant 0 : index
    %107 = vector.load %arg5[%c1_59, %c0_60, %c0_61, %c0_62] : memref<2x3x12x8xf32, #tpu.memory_space<vmem>>, vector<1x1x12x8xf32>
    %108 = vector.shape_cast %107 : vector<1x1x12x8xf32> to vector<12x8xf32>
    %cst_63 = arith.constant dense<0.000000e+00> : vector<512x8xf32>
    %109 = tpu.matmul %101, %108, %cst_63 {dimension_numbers = #tpu.dot_dimension_numbers<[1], [0], [0], [1], [0, 0, 1, 1], [], []>} : vector<512x12xf32>, vector<12x8xf32>, vector<512x8xf32> -> vector<512x8xf32>
    %c1_64 = arith.constant 1 : index
    %c1_65 = arith.constant 1 : index
    %c0_66 = arith.constant 0 : index
    %c0_67 = arith.constant 0 : index
    %110 = vector.load %arg5[%c1_64, %c1_65, %c0_66, %c0_67] : memref<2x3x12x8xf32, #tpu.memory_space<vmem>>, vector<1x1x12x8xf32>
    %111 = vector.shape_cast %110 : vector<1x1x12x8xf32> to vector<12x8xf32>
    %cst_68 = arith.constant dense<0.000000e+00> : vector<512x8xf32>
    %112 = tpu.matmul %96, %111, %cst_68 {dimension_numbers = #tpu.dot_dimension_numbers<[1], [0], [0], [1], [0, 0, 1, 1], [], []>} : vector<512x12xf32>, vector<12x8xf32>, vector<512x8xf32> -> vector<512x8xf32>
    %113 = arith.addf %109, %112 : vector<512x8xf32>
    %c1_69 = arith.constant 1 : index
    %c2_70 = arith.constant 2 : index
    %c0_71 = arith.constant 0 : index
    %c0_72 = arith.constant 0 : index
    %114 = vector.load %arg5[%c1_69, %c2_70, %c0_71, %c0_72] : memref<2x3x12x8xf32, #tpu.memory_space<vmem>>, vector<1x1x12x8xf32>
    %115 = vector.shape_cast %114 : vector<1x1x12x8xf32> to vector<12x8xf32>
    %cst_73 = arith.constant dense<0.000000e+00> : vector<512x8xf32>
    %116 = tpu.matmul %106, %115, %cst_73 {dimension_numbers = #tpu.dot_dimension_numbers<[1], [0], [0], [1], [0, 0, 1, 1], [], []>} : vector<512x12xf32>, vector<12x8xf32>, vector<512x8xf32> -> vector<512x8xf32>
    %117 = arith.addf %113, %116 : vector<512x8xf32>
    %c1_74 = arith.constant 1 : index
    %c0_75 = arith.constant 0 : index
    %c0_76 = arith.constant 0 : index
    %118 = vector.load %arg6[%c1_74, %c0_75, %c0_76] : memref<2x1x8xf32, #tpu.memory_space<vmem>>, vector<1x1x8xf32>
    %119 = vector.shape_cast %118 : vector<1x1x8xf32> to vector<1x8xf32>
    %120 = vector.broadcast %119 : vector<1x8xf32> to vector<512x8xf32>
    %121 = arith.mulf %117, %120 : vector<512x8xf32>
    %c1_77 = arith.constant 1 : index
    %c0_78 = arith.constant 0 : index
    %c0_79 = arith.constant 0 : index
    %122 = vector.load %arg7[%c1_77, %c0_78, %c0_79] : memref<2x1x8xf32, #tpu.memory_space<vmem>>, vector<1x1x8xf32>
    %123 = vector.shape_cast %122 : vector<1x1x8xf32> to vector<1x8xf32>
    %124 = vector.broadcast %123 : vector<1x8xf32> to vector<512x8xf32>
    %125 = arith.addf %121, %124 : vector<512x8xf32>
    %cst_80 = arith.constant 1.000000e-01 : f32
    %126 = vector.broadcast %cst_80 : f32 to vector<512x8xf32>
    %127 = arith.mulf %126, %125 : vector<512x8xf32>
    %128 = arith.maximumf %125, %127 : vector<512x8xf32>
    %129 = arith.addf %128, %71 : vector<512x8xf32>
    %130 = vector.shape_cast %129 : vector<512x8xf32> to vector<2x16x16x8xf32>
    %c0_81 = arith.constant 0 : index
    %c0_82 = arith.constant 0 : index
    %c0_83 = arith.constant 0 : index
    %c0_84 = arith.constant 0 : index
    %131 = vector.load %arg8[%c0_81, %c0_82, %c0_83, %c0_84] : memref<2x16x16x8xf32, #tpu.memory_space<vmem>>, vector<2x16x16x8xf32>
    tpu.vector_store %arg8[%c0_81, %c0_82, %c0_83, %c0_84], %130 {strides = array<i32>} : memref<2x16x16x8xf32, #tpu.memory_space<vmem>>, vector<2x16x16x8xf32>,
    return
  }
  func.func @transform_0(%arg0: i32) -> (i32, i32, i32, i32) {
    %c0_i32 = arith.constant 0 : i32
    %c0_i32_0 = arith.constant 0 : i32
    %c0_i32_1 = arith.constant 0 : i32
    %c0_i32_2 = arith.constant 0 : i32
    %c0_i32_3 = arith.constant 0 : i32
    return %c0_i32, %c0_i32_0, %c0_i32_1, %c0_i32_2 : i32, i32, i32, i32
  }
  func.func @transform_1(%arg0: i32) -> (i32, i32, i32) {
    %c0_i32 = arith.constant 0 : i32
    %c0_i32_0 = arith.constant 0 : i32
    %c0_i32_1 = arith.constant 0 : i32
    %c0_i32_2 = arith.constant 0 : i32
    return %c0_i32, %c0_i32_0, %c0_i32_1 : i32, i32, i32
  }
  func.func @transform_2(%arg0: i32) -> (i32, i32, i32) {
    %c0_i32 = arith.constant 0 : i32
    %c0_i32_0 = arith.constant 0 : i32
    %c0_i32_1 = arith.constant 0 : i32
    %c0_i32_2 = arith.constant 0 : i32
    return %c0_i32, %c0_i32_0, %c0_i32_1 : i32, i32, i32
  }
  func.func @transform_3(%arg0: i32) -> (i32, i32, i32) {
    %c0_i32 = arith.constant 0 : i32
    %c0_i32_0 = arith.constant 0 : i32
    %c0_i32_1 = arith.constant 0 : i32
    %c0_i32_2 = arith.constant 0 : i32
    return %c0_i32, %c0_i32_0, %c0_i32_1 : i32, i32, i32
  }
  func.func @transform_4(%arg0: i32) -> (i32, i32, i32, i32) {
    %c0_i32 = arith.constant 0 : i32
    %c0_i32_0 = arith.constant 0 : i32
    %c0_i32_1 = arith.constant 0 : i32
    %c0_i32_2 = arith.constant 0 : i32
    %c0_i32_3 = arith.constant 0 : i32
    return %c0_i32, %c0_i32_0, %c0_i32_1, %c0_i32_2 : i32, i32, i32, i32
  }
  func.func @transform_5(%arg0: i32) -> (i32, i32, i32) {
    %c0_i32 = arith.constant 0 : i32
    %c0_i32_0 = arith.constant 0 : i32
    %c0_i32_1 = arith.constant 0 : i32
    %c0_i32_2 = arith.constant 0 : i32
    return %c0_i32, %c0_i32_0, %c0_i32_1 : i32, i32, i32
  }
  func.func @transform_6(%arg0: i32) -> (i32, i32, i32) {
    %c0_i32 = arith.constant 0 : i32
    %c0_i32_0 = arith.constant 0 : i32
    %c0_i32_1 = arith.constant 0 : i32
    %c0_i32_2 = arith.constant 0 : i32
    return %c0_i32, %c0_i32_0, %c0_i32_1 : i32, i32, i32
  }
  func.func @transform_7(%arg0: i32) -> (i32, i32, i32, i32) {
    %c0_i32 = arith.constant 0 : i32
    %c0_i32_0 = arith.constant 0 : i32
    %c0_i32_1 = arith.constant 0 : i32
    %c0_i32_2 = arith.constant 0 : i32
    %c0_i32_3 = arith.constant 0 : i32
    return %c0_i32, %c0_i32_0, %c0_i32_1, %c0_i32_2 : i32, i32, i32, i32
  }
}

</mosaic_0001>

<llo_original>
// kernel: tpu_custom_call.1
$region0: #{tpu_custom_call.1}
  #allocation0 [shape = 'u32[]', space=smem, size = 0x4, offset = 0x4, fixed_abs, tag = 'smem constant byte address 0x4 - core index']
  #allocation1 [shape = 'u32[144,128]{1,0:T(1,128)}', space=vmem, size = 0x12000, scoped, tag = 'internal scratch']
  %s0 = inlined_call_operand.vmem [shape: f32[2,16,16,8], index: 0, kind: input, shape index: {}]
  %s1 = inlined_call_operand.vmem [shape: f32[2,8,4], index: 1, kind: input, shape index: {}]
  %s2 = inlined_call_operand.vmem [shape: f32[2,1,4], index: 2, kind: input, shape index: {}]
  %s3 = inlined_call_operand.vmem [shape: f32[2,1,4], index: 3, kind: input, shape index: {}]
  %s4 = inlined_call_operand.vmem [shape: f32[2,3,12,8], index: 4, kind: input, shape index: {}]
  %s5 = inlined_call_operand.vmem [shape: f32[2,1,8], index: 5, kind: input, shape index: {}]
  %s6 = inlined_call_operand.vmem [shape: f32[2,1,8], index: 6, kind: input, shape index: {}]
  %s7 = inlined_call_operand.vmem [shape: f32[2,16,16,8], index: 7, kind: output, shape index: {}]
  %s8 = sld [smem:[#allocation0]]
  $region38: #{tpu_custom_call.1} parent=0
    _
  %s10 = ssub.s32 1, %s8
  %s11 = scalar_select 0, %s10, %s8
  // Predicated region
  $region2: #{tpu_custom_call.1} parent=0 // pred_check
    _
  $region3: #{tpu_custom_call.1} parent=0 // pred_check_branch
    %13 = sbr.rel (0) target = $region5
  $region4: #{tpu_custom_call.1} parent=0 // pred_region
    _
  $region5: #{tpu_custom_call.1} parent=0 // pred_fallthru
    _
  // Predicated region
  $region6: #{tpu_custom_call.1} parent=0 // pred_check
    _
  $region7: #{tpu_custom_call.1} parent=0 // pred_check_branch
    %15 = sbr.rel (0) target = $region9
  $region8: #{tpu_custom_call.1} parent=0 // pred_region
    _
  $region9: #{tpu_custom_call.1} parent=0 // pred_fallthru
    _
  // Predicated region
  $region10: #{tpu_custom_call.1} parent=0 // pred_check
    _
  $region11: #{tpu_custom_call.1} parent=0 // pred_check_branch
    %17 = sbr.rel (0) target = $region13
  $region12: #{tpu_custom_call.1} parent=0 // pred_region
    _
  $region13: #{tpu_custom_call.1} parent=0 // pred_fallthru
    _
  // Predicated region
  $region14: #{tpu_custom_call.1} parent=0 // pred_check
    _
  $region15: #{tpu_custom_call.1} parent=0 // pred_check_branch
    %19 = sbr.rel (0) target = $region17
  $region16: #{tpu_custom_call.1} parent=0 // pred_region
    _
  $region17: #{tpu_custom_call.1} parent=0 // pred_fallthru
    _
  // Predicated region
  $region18: #{tpu_custom_call.1} parent=0 // pred_check
    _
  $region19: #{tpu_custom_call.1} parent=0 // pred_check_branch
    %21 = sbr.rel (0) target = $region21
  $region20: #{tpu_custom_call.1} parent=0 // pred_region
    _
  $region21: #{tpu_custom_call.1} parent=0 // pred_fallthru
    _
  // Predicated region
  $region22: #{tpu_custom_call.1} parent=0 // pred_check
    _
  $region23: #{tpu_custom_call.1} parent=0 // pred_check_branch
    %23 = sbr.rel (0) target = $region25
  $region24: #{tpu_custom_call.1} parent=0 // pred_region
    _
  $region25: #{tpu_custom_call.1} parent=0 // pred_fallthru
    _
  // Predicated region
  $region26: #{tpu_custom_call.1} parent=0 // pred_check
    _
  $region27: #{tpu_custom_call.1} parent=0 // pred_check_branch
    %25 = sbr.rel (0) target = $region29
  $region28: #{tpu_custom_call.1} parent=0 // pred_region
    _
  $region29: #{tpu_custom_call.1} parent=0 // pred_fallthru
    _
  %v26 = vld [vmem:[%s0] sm:$0xff]
  %v27 = vld [vmem:[%s0 + $0x8] sm:$0xff]
  %v28 = vld [vmem:[%s0 + $0x10] sm:$0xff]
  %v29 = vld [vmem:[%s0 + $0x18] sm:$0xff]
  %v30 = vld [vmem:[%s0 + $0x20] sm:$0xff]
  %v31 = vld [vmem:[%s0 + $0x28] sm:$0xff]
  %v32 = vld [vmem:[%s0 + $0x30] sm:$0xff]
  %v33 = vld [vmem:[%s0 + $0x38] sm:$0xff]
  %v34 = vld [vmem:[%s0 + $0x40] sm:$0xff]
  %v35 = vld [vmem:[%s0 + $0x48] sm:$0xff]
  %v36 = vld [vmem:[%s0 + $0x50] sm:$0xff]
  %v37 = vld [vmem:[%s0 + $0x58] sm:$0xff]
  %v38 = vld [vmem:[%s0 + $0x60] sm:$0xff]
  %v39 = vld [vmem:[%s0 + $0x68] sm:$0xff]
  %v40 = vld [vmem:[%s0 + $0x70] sm:$0xff]
  %v41 = vld [vmem:[%s0 + $0x78] sm:$0xff]
  %v42 = vld [vmem:[%s0 + $0x80] sm:$0xff]
  %v43 = vld [vmem:[%s0 + $0x88] sm:$0xff]
  %v44 = vld [vmem:[%s0 + $0x90] sm:$0xff]
  %v45 = vld [vmem:[%s0 + $0x98] sm:$0xff]
  %v46 = vld [vmem:[%s0 + $0xa0] sm:$0xff]
  %v47 = vld [vmem:[%s0 + $0xa8] sm:$0xff]
  %v48 = vld [vmem:[%s0 + $0xb0] sm:$0xff]
  %v49 = vld [vmem:[%s0 + $0xb8] sm:$0xff]
  %v50 = vld [vmem:[%s0 + $0xc0] sm:$0xff]
  %v51 = vld [vmem:[%s0 + $0xc8] sm:$0xff]
  %v52 = vld [vmem:[%s0 + $0xd0] sm:$0xff]
  %v53 = vld [vmem:[%s0 + $0xd8] sm:$0xff]
  %v54 = vld [vmem:[%s0 + $0xe0] sm:$0xff]
  %v55 = vld [vmem:[%s0 + $0xe8] sm:$0xff]
  %v56 = vld [vmem:[%s0 + $0xf0] sm:$0xff]
  %v57 = vld [vmem:[%s0 + $0xf8] sm:$0xff]
  %v58 = vld [vmem:[%s0 + $0x100] sm:$0xff]
  %v59 = vld [vmem:[%s0 + $0x108] sm:$0xff]
  %v60 = vld [vmem:[%s0 + $0x110] sm:$0xff]
  %v61 = vld [vmem:[%s0 + $0x118] sm:$0xff]
  %v62 = vld [vmem:[%s0 + $0x120] sm:$0xff]
  %v63 = vld [vmem:[%s0 + $0x128] sm:$0xff]
  %v64 = vld [vmem:[%s0 + $0x130] sm:$0xff]
  %v65 = vld [vmem:[%s0 + $0x138] sm:$0xff]
  %v66 = vld [vmem:[%s0 + $0x140] sm:$0xff]
  %v67 = vld [vmem:[%s0 + $0x148] sm:$0xff]
  %v68 = vld [vmem:[%s0 + $0x150] sm:$0xff]
  %v69 = vld [vmem:[%s0 + $0x158] sm:$0xff]
  %v70 = vld [vmem:[%s0 + $0x160] sm:$0xff]
  %v71 = vld [vmem:[%s0 + $0x168] sm:$0xff]
  %v72 = vld [vmem:[%s0 + $0x170] sm:$0xff]
  %v73 = vld [vmem:[%s0 + $0x178] sm:$0xff]
  %v74 = vld [vmem:[%s0 + $0x180] sm:$0xff]
  %v75 = vld [vmem:[%s0 + $0x188] sm:$0xff]
  %v76 = vld [vmem:[%s0 + $0x190] sm:$0xff]
  %v77 = vld [vmem:[%s0 + $0x198] sm:$0xff]
  %v78 = vld [vmem:[%s0 + $0x1a0] sm:$0xff]
  %v79 = vld [vmem:[%s0 + $0x1a8] sm:$0xff]
  %v80 = vld [vmem:[%s0 + $0x1b0] sm:$0xff]
  %v81 = vld [vmem:[%s0 + $0x1b8] sm:$0xff]
  %v82 = vld [vmem:[%s0 + $0x1c0] sm:$0xff]
  %v83 = vld [vmem:[%s0 + $0x1c8] sm:$0xff]
  %v84 = vld [vmem:[%s0 + $0x1d0] sm:$0xff]
  %v85 = vld [vmem:[%s0 + $0x1d8] sm:$0xff]
  %v86 = vld [vmem:[%s0 + $0x1e0] sm:$0xff]
  %v87 = vld [vmem:[%s0 + $0x1e8] sm:$0xff]
  %v88 = vld [vmem:[%s0 + $0x1f0] sm:$0xff]
  %v89 = vld [vmem:[%s0 + $0x1f8] sm:$0xff]
  %v90 = vlaneseq
  %v91 = vshrl.u32 %v90, 7
  %v92 = vadd.s32 %v91, 8
  %vm93 = vcmp.ge.s32.totalorder %v91, 1
  %vm94 = vcmp.ge.s32.totalorder %v92, 1
  %vm95 = vcmp.le.s32.totalorder %v91, 14
  %vm96 = vcmp.le.s32.totalorder %v92, 14
  %v97 = vld [vmem:[%s1] sm:$0xff]
  %vm98 = vcmask 64512
  %v100 = vsel %vm98, %v26, 0
  %v103 = vsel %vm98, %v27, 0
  %v106 = vsel %vm98, %v28, 0
  %v109 = vsel %vm98, %v29, 0
  %v112 = vsel %vm98, %v30, 0
  %v115 = vsel %vm98, %v31, 0
  %v118 = vsel %vm98, %v32, 0
  %v121 = vsel %vm98, %v33, 0
  %v124 = vsel %vm98, %v34, 0
  %v127 = vsel %vm98, %v35, 0
  %v130 = vsel %vm98, %v36, 0
  %v133 = vsel %vm98, %v37, 0
  %v136 = vsel %vm98, %v38, 0
  %v139 = vsel %vm98, %v39, 0
  %v142 = vsel %vm98, %v40, 0
  %v145 = vsel %vm98, %v41, 0
  %v148 = vsel %vm98, %v42, 0
  %v151 = vsel %vm98, %v43, 0
  %v154 = vsel %vm98, %v44, 0
  %v157 = vsel %vm98, %v45, 0
  %v160 = vsel %vm98, %v46, 0
  %v163 = vsel %vm98, %v47, 0
  %v166 = vsel %vm98, %v48, 0
  %v169 = vsel %vm98, %v49, 0
  %v172 = vsel %vm98, %v50, 0
  %v175 = vsel %vm98, %v51, 0
  %v178 = vsel %vm98, %v52, 0
  %v181 = vsel %vm98, %v53, 0
  %v184 = vsel %vm98, %v54, 0
  %v187 = vsel %vm98, %v55, 0
  %v190 = vsel %vm98, %v56, 0
  %v193 = vsel %vm98, %v57, 0
  %v196 = vsel %vm98, %v58, 0
  %v199 = vsel %vm98, %v59, 0
  %v202 = vsel %vm98, %v60, 0
  %v205 = vsel %vm98, %v61, 0
  %v208 = vsel %vm98, %v62, 0
  %v211 = vsel %vm98, %v63, 0
  %v214 = vsel %vm98, %v64, 0
  %v217 = vsel %vm98, %v65, 0
  %v220 = vsel %vm98, %v66, 0
  %v223 = vsel %vm98, %v67, 0
  %v226 = vsel %vm98, %v68, 0
  %v229 = vsel %vm98, %v69, 0
  %v232 = vsel %vm98, %v70, 0
  %v235 = vsel %vm98, %v71, 0
  %v238 = vsel %vm98, %v72, 0
  %v241 = vsel %vm98, %v73, 0
  %v244 = vsel %vm98, %v74, 0
  %v247 = vsel %vm98, %v75, 0
  %v250 = vsel %vm98, %v76, 0
  %v253 = vsel %vm98, %v77, 0
  %v256 = vsel %vm98, %v78, 0
  %v259 = vsel %vm98, %v79, 0
  %v262 = vsel %vm98, %v80, 0
  %v265 = vsel %vm98, %v81, 0
  %v268 = vsel %vm98, %v82, 0
  %v271 = vsel %vm98, %v83, 0
  %v274 = vsel %vm98, %v84, 0
  %v277 = vsel %vm98, %v85, 0
  %v280 = vsel %vm98, %v86, 0
  %v283 = vsel %vm98, %v87, 0
  %v286 = vsel %vm98, %v88, 0
  %v289 = vsel %vm98, %v89, 0
  %291 = vmatprep.subr.mxu0 0.0
  %292 = vmatpush1.msra.mxu0 %v97
  %293 = vmatprep.subr.mxu0 0.0
  %294 = vmatpush1.msra.mxu0 0.0
  %295 = vmatprep.subr.mxu0 0.0
  %296 = vmatpush1.msra.mxu0 0.0
  %297 = vmatprep.subr.mxu0 0.0
  %298 = vmatpush1.msra.mxu0 0.0
  %299 = vmatprep.subr.mxu0 0.0
  %300 = vmatpush1.msra.mxu0 0.0
  %301 = vmatprep.subr.mxu0 0.0
  %302 = vmatpush1.msra.mxu0 0.0
  %303 = vmatprep.subr.mxu0 0.0
  %304 = vmatpush1.msra.mxu0 0.0
  %305 = vmatprep.subr.mxu0 0.0
  %306 = vmatpush1.msra.mxu0 0.0
  %307 = vmatprep.subr.mxu0 0.0
  %308 = vmatpush1.msra.mxu0 0.0
  %309 = vmatprep.subr.mxu0 0.0
  %310 = vmatpush1.msra.mxu0 0.0
  %311 = vmatprep.subr.mxu0 0.0
  %312 = vmatpush1.msra.mxu0 0.0
  %313 = vmatprep.subr.mxu0 0.0
  %314 = vmatpush1.msra.mxu0 0.0
  %315 = vmatprep.subr.mxu0 0.0
  %316 = vmatpush1.msra.mxu0 0.0
  %317 = vmatprep.subr.mxu0 0.0
  %318 = vmatpush1.msra.mxu0 0.0
  %319 = vmatprep.subr.mxu0 0.0
  %320 = vmatpush1.msra.mxu0 0.0
  %321 = vmatprep.subr.mxu0 0.0
  %322 = vmatpush1.msra.mxu0 0.0
  %323 = vmatprep.subr.mxu0 0.0
  %324 = vmatpush1.msra.mxu0 0.0
  %325 = vmatprep.subr.mxu0 0.0
  %326 = vmatpush1.msra.mxu0 0.0
  %327 = vmatprep.subr.mxu0 0.0
  %328 = vmatpush1.msra.mxu0 0.0
  %329 = vmatprep.subr.mxu0 0.0
  %330 = vmatpush1.msra.mxu0 0.0
  %331 = vmatprep.subr.mxu0 0.0
  %332 = vmatpush1.msra.mxu0 0.0
  %333 = vmatprep.subr.mxu0 0.0
  %334 = vmatpush1.msra.mxu0 0.0
  %335 = vmatprep.subr.mxu0 0.0
  %336 = vmatpush1.msra.mxu0 0.0
  %337 = vmatprep.subr.mxu0 0.0
  %338 = vmatpush1.msra.mxu0 0.0
  %339 = vmatprep.subr.mxu0 0.0
  %340 = vmatpush1.msra.mxu0 0.0
  %341 = vmatprep.subr.mxu0 0.0
  %342 = vmatpush1.msra.mxu0 0.0
  %343 = vmatprep.subr.mxu0 0.0
  %344 = vmatpush1.msra.mxu0 0.0
  %345 = vmatprep.subr.mxu0 0.0
  %346 = vmatpush1.msra.mxu0 0.0
  %347 = vmatprep.subr.mxu0 0.0
  %348 = vmatpush1.msra.mxu0 0.0
  %349 = vmatprep.subr.mxu0 0.0
  %350 = vmatpush1.msra.mxu0 0.0
  %351 = vmatprep.subr.mxu0 0.0
  %352 = vmatpush1.msra.mxu0 0.0
  %353 = vmatprep.subr.mxu0 0.0
  %354 = vmatpush1.msra.mxu0 0.0
  %355 = vmatprep.mubr.f32.mxu0 0.0
  %356 = vmatmul.mubr.f32.gmra.mrb[0].mxu0 %v100
  %v357 = vpop.f32.mrb[0].mxu0
  %v358 = vadd.f32 0.0, %v357
  %v359 = vpop.f32.mrb[0].mxu0
  %360 = vmatprep.mubr.f32.mxu0 0.0
  %361 = vmatmul.mubr.f32.gmra.mrb[0].mxu0 %v103
  %v362 = vpop.f32.mrb[0].mxu0
  %v363 = vadd.f32 0.0, %v362
  %v364 = vpop.f32.mrb[0].mxu0
  %365 = vmatprep.mubr.f32.mxu0 0.0
  %366 = vmatmul.mubr.f32.gmra.mrb[0].mxu0 %v106
  %v367 = vpop.f32.mrb[0].mxu0
  %v368 = vadd.f32 0.0, %v367
  %v369 = vpop.f32.mrb[0].mxu0
  %370 = vmatprep.mubr.f32.mxu0 0.0
  %371 = vmatmul.mubr.f32.gmra.mrb[0].mxu0 %v109
  %v372 = vpop.f32.mrb[0].mxu0
  %v373 = vadd.f32 0.0, %v372
  %v374 = vpop.f32.mrb[0].mxu0
  %375 = vmatprep.mubr.f32.mxu0 0.0
  %376 = vmatmul.mubr.f32.gmra.mrb[0].mxu0 %v112
  %v377 = vpop.f32.mrb[0].mxu0
  %v378 = vadd.f32 0.0, %v377
  %v379 = vpop.f32.mrb[0].mxu0
  %380 = vmatprep.mubr.f32.mxu0 0.0
  %381 = vmatmul.mubr.f32.gmra.mrb[0].mxu0 %v115
  %v382 = vpop.f32.mrb[0].mxu0
  %v383 = vadd.f32 0.0, %v382
  %v384 = vpop.f32.mrb[0].mxu0
  %385 = vmatprep.mubr.f32.mxu0 0.0
  %386 = vmatmul.mubr.f32.gmra.mrb[0].mxu0 %v118
  %v387 = vpop.f32.mrb[0].mxu0
  %v388 = vadd.f32 0.0, %v387
  %v389 = vpop.f32.mrb[0].mxu0
  %390 = vmatprep.mubr.f32.mxu0 0.0
  %391 = vmatmul.mubr.f32.gmra.mrb[0].mxu0 %v121
  %v392 = vpop.f32.mrb[0].mxu0
  %v393 = vadd.f32 0.0, %v392
  %v394 = vpop.f32.mrb[0].mxu0
  %395 = vmatprep.mubr.f32.mxu0 0.0
  %396 = vmatmul.mubr.f32.gmra.mrb[0].mxu0 %v124
  %v397 = vpop.f32.mrb[0].mxu0
  %v398 = vadd.f32 0.0, %v397
  %v399 = vpop.f32.mrb[0].mxu0
  %400 = vmatprep.mubr.f32.mxu0 0.0
  %401 = vmatmul.mubr.f32.gmra.mrb[0].mxu0 %v127
  %v402 = vpop.f32.mrb[0].mxu0
  %v403 = vadd.f32 0.0, %v402
  %v404 = vpop.f32.mrb[0].mxu0
  %405 = vmatprep.mubr.f32.mxu0 0.0
  %406 = vmatmul.mubr.f32.gmra.mrb[0].mxu0 %v130
  %v407 = vpop.f32.mrb[0].mxu0
  %v408 = vadd.f32 0.0, %v407
  %v409 = vpop.f32.mrb[0].mxu0
  %410 = vmatprep.mubr.f32.mxu0 0.0
  %411 = vmatmul.mubr.f32.gmra.mrb[0].mxu0 %v133
  %v412 = vpop.f32.mrb[0].mxu0
  %v413 = vadd.f32 0.0, %v412
  %v414 = vpop.f32.mrb[0].mxu0
  %415 = vmatprep.mubr.f32.mxu0 0.0
  %416 = vmatmul.mubr.f32.gmra.mrb[0].mxu0 %v136
  %v417 = vpop.f32.mrb[0].mxu0
  %v418 = vadd.f32 0.0, %v417
  %v419 = vpop.f32.mrb[0].mxu0
  %420 = vmatprep.mubr.f32.mxu0 0.0
  %421 = vmatmul.mubr.f32.gmra.mrb[0].mxu0 %v139
  %v422 = vpop.f32.mrb[0].mxu0
  %v423 = vadd.f32 0.0, %v422
  %v424 = vpop.f32.mrb[0].mxu0
  %425 = vmatprep.mubr.f32.mxu0 0.0
  %426 = vmatmul.mubr.f32.gmra.mrb[0].mxu0 %v142
  %v427 = vpop.f32.mrb[0].mxu0
  %v428 = vadd.f32 0.0, %v427
  %v429 = vpop.f32.mrb[0].mxu0
  %430 = vmatprep.mubr.f32.mxu0 0.0
  %431 = vmatmul.mubr.f32.gmra.mrb[0].mxu0 %v145
  %v432 = vpop.f32.mrb[0].mxu0
  %v433 = vadd.f32 0.0, %v432
  %v434 = vpop.f32.mrb[0].mxu0
  %435 = vmatprep.mubr.f32.mxu0 0.0
  %436 = vmatmul.mubr.f32.gmra.mrb[0].mxu0 %v148
  %v437 = vpop.f32.mrb[0].mxu0
  %v438 = vadd.f32 0.0, %v437
  %v439 = vpop.f32.mrb[0].mxu0
  %440 = vmatprep.mubr.f32.mxu0 0.0
  %441 = vmatmul.mubr.f32.gmra.mrb[0].mxu0 %v151
  %v442 = vpop.f32.mrb[0].mxu0
  %v443 = vadd.f32 0.0, %v442
  %v444 = vpop.f32.mrb[0].mxu0
  %445 = vmatprep.mubr.f32.mxu0 0.0
  %446 = vmatmul.mubr.f32.gmra.mrb[0].mxu0 %v154
  %v447 = vpop.f32.mrb[0].mxu0
  %v448 = vadd.f32 0.0, %v447
  %v449 = vpop.f32.mrb[0].mxu0
  %450 = vmatprep.mubr.f32.mxu0 0.0
  %451 = vmatmul.mubr.f32.gmra.mrb[0].mxu0 %v157
  %v452 = vpop.f32.mrb[0].mxu0
  %v453 = vadd.f32 0.0, %v452
  %v454 = vpop.f32.mrb[0].mxu0
  %455 = vmatprep.mubr.f32.mxu0 0.0
  %456 = vmatmul.mubr.f32.gmra.mrb[0].mxu0 %v160
  %v457 = vpop.f32.mrb[0].mxu0
  %v458 = vadd.f32 0.0, %v457
  %v459 = vpop.f32.mrb[0].mxu0
  %460 = vmatprep.mubr.f32.mxu0 0.0
  %461 = vmatmul.mubr.f32.gmra.mrb[0].mxu0 %v163
  %v462 = vpop.f32.mrb[0].mxu0
  %v463 = vadd.f32 0.0, %v462
  %v464 = vpop.f32.mrb[0].mxu0
  %465 = vmatprep.mubr.f32.mxu0 0.0
  %466 = vmatmul.mubr.f32.gmra.mrb[0].mxu0 %v166
  %v467 = vpop.f32.mrb[0].mxu0
  %v468 = vadd.f32 0.0, %v467
  %v469 = vpop.f32.mrb[0].mxu0
  %470 = vmatprep.mubr.f32.mxu0 0.0
  %471 = vmatmul.mubr.f32.gmra.mrb[0].mxu0 %v169
  %v472 = vpop.f32.mrb[0].mxu0
  %v473 = vadd.f32 0.0, %v472
  %v474 = vpop.f32.mrb[0].mxu0
  %475 = vmatprep.mubr.f32.mxu0 0.0
  %476 = vmatmul.mubr.f32.gmra.mrb[0].mxu0 %v172
  %v477 = vpop.f32.mrb[0].mxu0
  %v478 = vadd.f32 0.0, %v477
  %v479 = vpop.f32.mrb[0].mxu0
  %480 = vmatprep.mubr.f32.mxu0 0.0
  %481 = vmatmul.mubr.f32.gmra.mrb[0].mxu0 %v175
  %v482 = vpop.f32.mrb[0].mxu0
  %v483 = vadd.f32 0.0, %v482
  %v484 = vpop.f32.mrb[0].mxu0
  %485 = vmatprep.mubr.f32.mxu0 0.0
  %486 = vmatmul.mubr.f32.gmra.mrb[0].mxu0 %v178
  %v487 = vpop.f32.mrb[0].mxu0
  %v488 = vadd.f32 0.0, %v487
  %v489 = vpop.f32.mrb[0].mxu0
  %490 = vmatprep.mubr.f32.mxu0 0.0
  %491 = vmatmul.mubr.f32.gmra.mrb[0].mxu0 %v181
  %v492 = vpop.f32.mrb[0].mxu0
  %v493 = vadd.f32 0.0, %v492
  %v494 = vpop.f32.mrb[0].mxu0
  %495 = vmatprep.mubr.f32.mxu0 0.0
  %496 = vmatmul.mubr.f32.gmra.mrb[0].mxu0 %v184
  %v497 = vpop.f32.mrb[0].mxu0
  %v498 = vadd.f32 0.0, %v497
  %v499 = vpop.f32.mrb[0].mxu0
  %500 = vmatprep.mubr.f32.mxu0 0.0
  %501 = vmatmul.mubr.f32.gmra.mrb[0].mxu0 %v187
  %v502 = vpop.f32.mrb[0].mxu0
  %v503 = vadd.f32 0.0, %v502
  %v504 = vpop.f32.mrb[0].mxu0
  %505 = vmatprep.mubr.f32.mxu0 0.0
  %506 = vmatmul.mubr.f32.gmra.mrb[0].mxu0 %v190
  %v507 = vpop.f32.mrb[0].mxu0
  %v508 = vadd.f32 0.0, %v507
  %v509 = vpop.f32.mrb[0].mxu0
  %510 = vmatprep.mubr.f32.mxu0 0.0
  %511 = vmatmul.mubr.f32.gmra.mrb[0].mxu0 %v193
  %v512 = vpop.f32.mrb[0].mxu0
  %v513 = vadd.f32 0.0, %v512
  %v514 = vpop.f32.mrb[0].mxu0
  %515 = vmatprep.mubr.f32.mxu0 0.0
  %516 = vmatmul.mubr.f32.gmra.mrb[0].mxu0 %v196
  %v517 = vpop.f32.mrb[0].mxu0
  %v518 = vadd.f32 0.0, %v517
  %v519 = vpop.f32.mrb[0].mxu0
  %520 = vmatprep.mubr.f32.mxu0 0.0
  %521 = vmatmul.mubr.f32.gmra.mrb[0].mxu0 %v199
  %v522 = vpop.f32.mrb[0].mxu0
  %v523 = vadd.f32 0.0, %v522
  %v524 = vpop.f32.mrb[0].mxu0
  %525 = vmatprep.mubr.f32.mxu0 0.0
  %526 = vmatmul.mubr.f32.gmra.mrb[0].mxu0 %v202
  %v527 = vpop.f32.mrb[0].mxu0
  %v528 = vadd.f32 0.0, %v527
  %v529 = vpop.f32.mrb[0].mxu0
  %530 = vmatprep.mubr.f32.mxu0 0.0
  %531 = vmatmul.mubr.f32.gmra.mrb[0].mxu0 %v205
  %v532 = vpop.f32.mrb[0].mxu0
  %v533 = vadd.f32 0.0, %v532
  %v534 = vpop.f32.mrb[0].mxu0
  %535 = vmatprep.mubr.f32.mxu0 0.0
  %536 = vmatmul.mubr.f32.gmra.mrb[0].mxu0 %v208
  %v537 = vpop.f32.mrb[0].mxu0
  %v538 = vadd.f32 0.0, %v537
  %v539 = vpop.f32.mrb[0].mxu0
  %540 = vmatprep.mubr.f32.mxu0 0.0
  %541 = vmatmul.mubr.f32.gmra.mrb[0].mxu0 %v211
  %v542 = vpop.f32.mrb[0].mxu0
  %v543 = vadd.f32 0.0, %v542
  %v544 = vpop.f32.mrb[0].mxu0
  %545 = vmatprep.mubr.f32.mxu0 0.0
  %546 = vmatmul.mubr.f32.gmra.mrb[0].mxu0 %v214
  %v547 = vpop.f32.mrb[0].mxu0
  %v548 = vadd.f32 0.0, %v547
  %v549 = vpop.f32.mrb[0].mxu0
  %550 = vmatprep.mubr.f32.mxu0 0.0
  %551 = vmatmul.mubr.f32.gmra.mrb[0].mxu0 %v217
  %v552 = vpop.f32.mrb[0].mxu0
  %v553 = vadd.f32 0.0, %v552
  %v554 = vpop.f32.mrb[0].mxu0
  %555 = vmatprep.mubr.f32.mxu0 0.0
  %556 = vmatmul.mubr.f32.gmra.mrb[0].mxu0 %v220
  %v557 = vpop.f32.mrb[0].mxu0
  %v558 = vadd.f32 0.0, %v557
  %v559 = vpop.f32.mrb[0].mxu0
  %560 = vmatprep.mubr.f32.mxu0 0.0
  %561 = vmatmul.mubr.f32.gmra.mrb[0].mxu0 %v223
  %v562 = vpop.f32.mrb[0].mxu0
  %v563 = vadd.f32 0.0, %v562
  %v564 = vpop.f32.mrb[0].mxu0
  %565 = vmatprep.mubr.f32.mxu0 0.0
  %566 = vmatmul.mubr.f32.gmra.mrb[0].mxu0 %v226
  %v567 = vpop.f32.mrb[0].mxu0
  %v568 = vadd.f32 0.0, %v567
  %v569 = vpop.f32.mrb[0].mxu0
  %570 = vmatprep.mubr.f32.mxu0 0.0
  %571 = vmatmul.mubr.f32.gmra.mrb[0].mxu0 %v229
  %v572 = vpop.f32.mrb[0].mxu0
  %v573 = vadd.f32 0.0, %v572
  %v574 = vpop.f32.mrb[0].mxu0
  %575 = vmatprep.mubr.f32.mxu0 0.0
  %576 = vmatmul.mubr.f32.gmra.mrb[0].mxu0 %v232
  %v577 = vpop.f32.mrb[0].mxu0
  %v578 = vadd.f32 0.0, %v577
  %v579 = vpop.f32.mrb[0].mxu0
  %580 = vmatprep.mubr.f32.mxu0 0.0
  %581 = vmatmul.mubr.f32.gmra.mrb[0].mxu0 %v235
  %v582 = vpop.f32.mrb[0].mxu0
  %v583 = vadd.f32 0.0, %v582
  %v584 = vpop.f32.mrb[0].mxu0
  %585 = vmatprep.mubr.f32.mxu0 0.0
  %586 = vmatmul.mubr.f32.gmra.mrb[0].mxu0 %v238
  %v587 = vpop.f32.mrb[0].mxu0
  %v588 = vadd.f32 0.0, %v587
  %v589 = vpop.f32.mrb[0].mxu0
  %590 = vmatprep.mubr.f32.mxu0 0.0
  %591 = vmatmul.mubr.f32.gmra.mrb[0].mxu0 %v241
  %v592 = vpop.f32.mrb[0].mxu0
  %v593 = vadd.f32 0.0, %v592
  %v594 = vpop.f32.mrb[0].mxu0
  %595 = vmatprep.mubr.f32.mxu0 0.0
  %596 = vmatmul.mubr.f32.gmra.mrb[0].mxu0 %v244
  %v597 = vpop.f32.mrb[0].mxu0
  %v598 = vadd.f32 0.0, %v597
  %v599 = vpop.f32.mrb[0].mxu0
  %600 = vmatprep.mubr.f32.mxu0 0.0
  %601 = vmatmul.mubr.f32.gmra.mrb[0].mxu0 %v247
  %v602 = vpop.f32.mrb[0].mxu0
  %v603 = vadd.f32 0.0, %v602
  %v604 = vpop.f32.mrb[0].mxu0
  %605 = vmatprep.mubr.f32.mxu0 0.0
  %606 = vmatmul.mubr.f32.gmra.mrb[0].mxu0 %v250
  %v607 = vpop.f32.mrb[0].mxu0
  %v608 = vadd.f32 0.0, %v607
  %v609 = vpop.f32.mrb[0].mxu0
  %610 = vmatprep.mubr.f32.mxu0 0.0
  %611 = vmatmul.mubr.f32.gmra.mrb[0].mxu0 %v253
  %v612 = vpop.f32.mrb[0].mxu0
  %v613 = vadd.f32 0.0, %v612
  %v614 = vpop.f32.mrb[0].mxu0
  %615 = vmatprep.mubr.f32.mxu0 0.0
  %616 = vmatmul.mubr.f32.gmra.mrb[0].mxu0 %v256
  %v617 = vpop.f32.mrb[0].mxu0
  %v618 = vadd.f32 0.0, %v617
  %v619 = vpop.f32.mrb[0].mxu0
  %620 = vmatprep.mubr.f32.mxu0 0.0
  %621 = vmatmul.mubr.f32.gmra.mrb[0].mxu0 %v259
  %v622 = vpop.f32.mrb[0].mxu0
  %v623 = vadd.f32 0.0, %v622
  %v624 = vpop.f32.mrb[0].mxu0
  %625 = vmatprep.mubr.f32.mxu0 0.0
  %626 = vmatmul.mubr.f32.gmra.mrb[0].mxu0 %v262
  %v627 = vpop.f32.mrb[0].mxu0
  %v628 = vadd.f32 0.0, %v627
  %v629 = vpop.f32.mrb[0].mxu0
  %630 = vmatprep.mubr.f32.mxu0 0.0
  %631 = vmatmul.mubr.f32.gmra.mrb[0].mxu0 %v265
  %v632 = vpop.f32.mrb[0].mxu0
  %v633 = vadd.f32 0.0, %v632
  %v634 = vpop.f32.mrb[0].mxu0
  %635 = vmatprep.mubr.f32.mxu0 0.0
  %636 = vmatmul.mubr.f32.gmra.mrb[0].mxu0 %v268
  %v637 = vpop.f32.mrb[0].mxu0
  %v638 = vadd.f32 0.0, %v637
  %v639 = vpop.f32.mrb[0].mxu0
  %640 = vmatprep.mubr.f32.mxu0 0.0
  %641 = vmatmul.mubr.f32.gmra.mrb[0].mxu0 %v271
  %v642 = vpop.f32.mrb[0].mxu0
  %v643 = vadd.f32 0.0, %v642
  %v644 = vpop.f32.mrb[0].mxu0
  %645 = vmatprep.mubr.f32.mxu0 0.0
  %646 = vmatmul.mubr.f32.gmra.mrb[0].mxu0 %v274
  %v647 = vpop.f32.mrb[0].mxu0
  %v648 = vadd.f32 0.0, %v647
  %v649 = vpop.f32.mrb[0].mxu0
  %650 = vmatprep.mubr.f32.mxu0 0.0
  %651 = vmatmul.mubr.f32.gmra.mrb[0].mxu0 %v277
  %v652 = vpop.f32.mrb[0].mxu0
  %v653 = vadd.f32 0.0, %v652
  %v654 = vpop.f32.mrb[0].mxu0
  %655 = vmatprep.mubr.f32.mxu0 0.0
  %656 = vmatmul.mubr.f32.gmra.mrb[0].mxu0 %v280
  %v657 = vpop.f32.mrb[0].mxu0
  %v658 = vadd.f32 0.0, %v657
  %v659 = vpop.f32.mrb[0].mxu0
  %660 = vmatprep.mubr.f32.mxu0 0.0
  %661 = vmatmul.mubr.f32.gmra.mrb[0].mxu0 %v283
  %v662 = vpop.f32.mrb[0].mxu0
  %v663 = vadd.f32 0.0, %v662
  %v664 = vpop.f32.mrb[0].mxu0
  %665 = vmatprep.mubr.f32.mxu0 0.0
  %666 = vmatmul.mubr.f32.gmra.mrb[0].mxu0 %v286
  %v667 = vpop.f32.mrb[0].mxu0
  %v668 = vadd.f32 0.0, %v667
  %v669 = vpop.f32.mrb[0].mxu0
  %670 = vmatprep.mubr.f32.mxu0 0.0
  %671 = vmatmul.mubr.f32.gmra.mrb[0].mxu0 %v289
  %v672 = vpop.f32.mrb[0].mxu0
  %v673 = vadd.f32 0.0, %v672
  %v674 = vpop.f32.mrb[0].mxu0
  %675 = vdwg.mxu0
  %v676 = vld [vmem:[%s2] sm:$0x1]
  %v678 = vlaneseq
  %v679 = vshrl.u32 %v678, 7
  %v680 = vsub.s32 0, %v679
  %v681 = vrot.slane %v676, %v680
  %v683 = vmul.f32 %v358, %v681
  %v684 = vmul.f32 %v363, %v681
  %v685 = vmul.f32 %v368, %v681
  %v686 = vmul.f32 %v373, %v681
  %v687 = vmul.f32 %v378, %v681
  %v688 = vmul.f32 %v383, %v681
  %v689 = vmul.f32 %v388, %v681
  %v690 = vmul.f32 %v393, %v681
  %v691 = vmul.f32 %v398, %v681
  %v692 = vmul.f32 %v403, %v681
  %v693 = vmul.f32 %v408, %v681
  %v694 = vmul.f32 %v413, %v681
  %v695 = vmul.f32 %v418, %v681
  %v696 = vmul.f32 %v423, %v681
  %v697 = vmul.f32 %v428, %v681
  %v698 = vmul.f32 %v433, %v681
  %v699 = vmul.f32 %v438, %v681
  %v700 = vmul.f32 %v443, %v681
  %v701 = vmul.f32 %v448, %v681
  %v702 = vmul.f32 %v453, %v681
  %v703 = vmul.f32 %v458, %v681
  %v704 = vmul.f32 %v463, %v681
  %v705 = vmul.f32 %v468, %v681
  %v706 = vmul.f32 %v473, %v681
  %v707 = vmul.f32 %v478, %v681
  %v708 = vmul.f32 %v483, %v681
  %v709 = vmul.f32 %v488, %v681
  %v710 = vmul.f32 %v493, %v681
  %v711 = vmul.f32 %v498, %v681
  %v712 = vmul.f32 %v503, %v681
  %v713 = vmul.f32 %v508, %v681
  %v714 = vmul.f32 %v513, %v681
  %v715 = vmul.f32 %v518, %v681
  %v716 = vmul.f32 %v523, %v681
  %v717 = vmul.f32 %v528, %v681
  %v718 = vmul.f32 %v533, %v681
  %v719 = vmul.f32 %v538, %v681
  %v720 = vmul.f32 %v543, %v681
  %v721 = vmul.f32 %v548, %v681
  %v722 = vmul.f32 %v553, %v681
  %v723 = vmul.f32 %v558, %v681
  %v724 = vmul.f32 %v563, %v681
  %v725 = vmul.f32 %v568, %v681
  %v726 = vmul.f32 %v573, %v681
  %v727 = vmul.f32 %v578, %v681
  %v728 = vmul.f32 %v583, %v681
  %v729 = vmul.f32 %v588, %v681
  %v730 = vmul.f32 %v593, %v681
  %v731 = vmul.f32 %v598, %v681
  %v732 = vmul.f32 %v603, %v681
  %v733 = vmul.f32 %v608, %v681
  %v734 = vmul.f32 %v613, %v681
  %v735 = vmul.f32 %v618, %v681
  %v736 = vmul.f32 %v623, %v681
  %v737 = vmul.f32 %v628, %v681
  %v738 = vmul.f32 %v633, %v681
  %v739 = vmul.f32 %v638, %v681
  %v740 = vmul.f32 %v643, %v681
  %v741 = vmul.f32 %v648, %v681
  %v742 = vmul.f32 %v653, %v681
  %v743 = vmul.f32 %v658, %v681
  %v744 = vmul.f32 %v663, %v681
  %v745 = vmul.f32 %v668, %v681
  %v746 = vmul.f32 %v673, %v681
  %v747 = vld [vmem:[%s3] sm:$0x1]
  %v749 = vlaneseq
  %v750 = vshrl.u32 %v749, 7
  %v751 = vsub.s32 0, %v750
  %v752 = vrot.slane %v747, %v751
  %v754 = vadd.f32 %v683, %v752
  %v755 = vadd.f32 %v684, %v752
  %v756 = vadd.f32 %v685, %v752
  %v757 = vadd.f32 %v686, %v752
  %v758 = vadd.f32 %v687, %v752
  %v759 = vadd.f32 %v688, %v752
  %v760 = vadd.f32 %v689, %v752
  %v761 = vadd.f32 %v690, %v752
  %v762 = vadd.f32 %v691, %v752
  %v763 = vadd.f32 %v692, %v752
  %v764 = vadd.f32 %v693, %v752
  %v765 = vadd.f32 %v694, %v752
  %v766 = vadd.f32 %v695, %v752
  %v767 = vadd.f32 %v696, %v752
  %v768 = vadd.f32 %v697, %v752
  %v769 = vadd.f32 %v698, %v752
  %v770 = vadd.f32 %v699, %v752
  %v771 = vadd.f32 %v700, %v752
  %v772 = vadd.f32 %v701, %v752
  %v773 = vadd.f32 %v702, %v752
  %v774 = vadd.f32 %v703, %v752
  %v775 = vadd.f32 %v704, %v752
  %v776 = vadd.f32 %v705, %v752
  %v777 = vadd.f32 %v706, %v752
  %v778 = vadd.f32 %v707, %v752
  %v779 = vadd.f32 %v708, %v752
  %v780 = vadd.f32 %v709, %v752
  %v781 = vadd.f32 %v710, %v752
  %v782 = vadd.f32 %v711, %v752
  %v783 = vadd.f32 %v712, %v752
  %v784 = vadd.f32 %v713, %v752
  %v785 = vadd.f32 %v714, %v752
  %v786 = vadd.f32 %v715, %v752
  %v787 = vadd.f32 %v716, %v752
  %v788 = vadd.f32 %v717, %v752
  %v789 = vadd.f32 %v718, %v752
  %v790 = vadd.f32 %v719, %v752
  %v791 = vadd.f32 %v720, %v752
  %v792 = vadd.f32 %v721, %v752
  %v793 = vadd.f32 %v722, %v752
  %v794 = vadd.f32 %v723, %v752
  %v795 = vadd.f32 %v724, %v752
  %v796 = vadd.f32 %v725, %v752
  %v797 = vadd.f32 %v726, %v752
  %v798 = vadd.f32 %v727, %v752
  %v799 = vadd.f32 %v728, %v752
  %v800 = vadd.f32 %v729, %v752
  %v801 = vadd.f32 %v730, %v752
  %v802 = vadd.f32 %v731, %v752
  %v803 = vadd.f32 %v732, %v752
  %v804 = vadd.f32 %v733, %v752
  %v805 = vadd.f32 %v734, %v752
  %v806 = vadd.f32 %v735, %v752
  %v807 = vadd.f32 %v736, %v752
  %v808 = vadd.f32 %v737, %v752
  %v809 = vadd.f32 %v738, %v752
  %v810 = vadd.f32 %v739, %v752
  %v811 = vadd.f32 %v740, %v752
  %v812 = vadd.f32 %v741, %v752
  %v813 = vadd.f32 %v742, %v752
  %v814 = vadd.f32 %v743, %v752
  %v815 = vadd.f32 %v744, %v752
  %v816 = vadd.f32 %v745, %v752
  %v817 = vadd.f32 %v746, %v752
  %v818 = vmul.f32 %v754, 0.1
  %v819 = vmul.f32 %v755, 0.1
  %v820 = vmul.f32 %v756, 0.1
  %v821 = vmul.f32 %v757, 0.1
  %v822 = vmul.f32 %v758, 0.1
  %v823 = vmul.f32 %v759, 0.1
  %v824 = vmul.f32 %v760, 0.1
  %v825 = vmul.f32 %v761, 0.1
  %v826 = vmul.f32 %v762, 0.1
  %v827 = vmul.f32 %v763, 0.1
  %v828 = vmul.f32 %v764, 0.1
  %v829 = vmul.f32 %v765, 0.1
  %v830 = vmul.f32 %v766, 0.1
  %v831 = vmul.f32 %v767, 0.1
  %v832 = vmul.f32 %v768, 0.1
  %v833 = vmul.f32 %v769, 0.1
  %v834 = vmul.f32 %v770, 0.1
  %v835 = vmul.f32 %v771, 0.1
  %v836 = vmul.f32 %v772, 0.1
  %v837 = vmul.f32 %v773, 0.1
  %v838 = vmul.f32 %v774, 0.1
  %v839 = vmul.f32 %v775, 0.1
  %v840 = vmul.f32 %v776, 0.1
  %v841 = vmul.f32 %v777, 0.1
  %v842 = vmul.f32 %v778, 0.1
  %v843 = vmul.f32 %v779, 0.1
  %v844 = vmul.f32 %v780, 0.1
  %v845 = vmul.f32 %v781, 0.1
  %v846 = vmul.f32 %v782, 0.1
  %v847 = vmul.f32 %v783, 0.1
  %v848 = vmul.f32 %v784, 0.1
  %v849 = vmul.f32 %v785, 0.1
  %v850 = vmul.f32 %v786, 0.1
  %v851 = vmul.f32 %v787, 0.1
  %v852 = vmul.f32 %v788, 0.1
  %v853 = vmul.f32 %v789, 0.1
  %v854 = vmul.f32 %v790, 0.1
  %v855 = vmul.f32 %v791, 0.1
  %v856 = vmul.f32 %v792, 0.1
  %v857 = vmul.f32 %v793, 0.1
  %v858 = vmul.f32 %v794, 0.1
  %v859 = vmul.f32 %v795, 0.1
  %v860 = vmul.f32 %v796, 0.1
  %v861 = vmul.f32 %v797, 0.1
  %v862 = vmul.f32 %v798, 0.1
  %v863 = vmul.f32 %v799, 0.1
  %v864 = vmul.f32 %v800, 0.1
  %v865 = vmul.f32 %v801, 0.1
  %v866 = vmul.f32 %v802, 0.1
  %v867 = vmul.f32 %v803, 0.1
  %v868 = vmul.f32 %v804, 0.1
  %v869 = vmul.f32 %v805, 0.1
  %v870 = vmul.f32 %v806, 0.1
  %v871 = vmul.f32 %v807, 0.1
  %v872 = vmul.f32 %v808, 0.1
  %v873 = vmul.f32 %v809, 0.1
  %v874 = vmul.f32 %v810, 0.1
  %v875 = vmul.f32 %v811, 0.1
  %v876 = vmul.f32 %v812, 0.1
  %v877 = vmul.f32 %v813, 0.1
  %v878 = vmul.f32 %v814, 0.1
  %v879 = vmul.f32 %v815, 0.1
  %v880 = vmul.f32 %v816, 0.1
  %v881 = vmul.f32 %v817, 0.1
  %v882 = vmax.f32 %v754, %v818
  %v883 = vmax.f32 %v755, %v819
  %v884 = vmax.f32 %v756, %v820
  %v885 = vmax.f32 %v757, %v821
  %v886 = vmax.f32 %v758, %v822
  %v887 = vmax.f32 %v759, %v823
  %v888 = vmax.f32 %v760, %v824
  %v889 = vmax.f32 %v761, %v825
  %v890 = vmax.f32 %v762, %v826
  %v891 = vmax.f32 %v763, %v827
  %v892 = vmax.f32 %v764, %v828
  %v893 = vmax.f32 %v765, %v829
  %v894 = vmax.f32 %v766, %v830
  %v895 = vmax.f32 %v767, %v831
  %v896 = vmax.f32 %v768, %v832
  %v897 = vmax.f32 %v769, %v833
  %v898 = vmax.f32 %v770, %v834
  %v899 = vmax.f32 %v771, %v835
  %v900 = vmax.f32 %v772, %v836
  %v901 = vmax.f32 %v773, %v837
  %v902 = vmax.f32 %v774, %v838
  %v903 = vmax.f32 %v775, %v839
  %v904 = vmax.f32 %v776, %v840
  %v905 = vmax.f32 %v777, %v841
  %v906 = vmax.f32 %v778, %v842
  %v907 = vmax.f32 %v779, %v843
  %v908 = vmax.f32 %v780, %v844
  %v909 = vmax.f32 %v781, %v845
  %v910 = vmax.f32 %v782, %v846
  %v911 = vmax.f32 %v783, %v847
  %v912 = vmax.f32 %v784, %v848
  %v913 = vmax.f32 %v785, %v849
  %v914 = vmax.f32 %v786, %v850
  %v915 = vmax.f32 %v787, %v851
  %v916 = vmax.f32 %v788, %v852
  %v917 = vmax.f32 %v789, %v853
  %v918 = vmax.f32 %v790, %v854
  %v919 = vmax.f32 %v791, %v855
  %v920 = vmax.f32 %v792, %v856
  %v921 = vmax.f32 %v793, %v857
  %v922 = vmax.f32 %v794, %v858
  %v923 = vmax.f32 %v795, %v859
  %v924 = vmax.f32 %v796, %v860
  %v925 = vmax.f32 %v797, %v861
  %v926 = vmax.f32 %v798, %v862
  %v927 = vmax.f32 %v799, %v863
  %v928 = vmax.f32 %v800, %v864
  %v929 = vmax.f32 %v801, %v865
  %v930 = vmax.f32 %v802, %v866
  %v931 = vmax.f32 %v803, %v867
  %v932 = vmax.f32 %v804, %v868
  %v933 = vmax.f32 %v805, %v869
  %v934 = vmax.f32 %v806, %v870
  %v935 = vmax.f32 %v807, %v871
  %v936 = vmax.f32 %v808, %v872
  %v937 = vmax.f32 %v809, %v873
  %v938 = vmax.f32 %v810, %v874
  %v939 = vmax.f32 %v811, %v875
  %v940 = vmax.f32 %v812, %v876
  %v941 = vmax.f32 %v813, %v877
  %v942 = vmax.f32 %v814, %v878
  %v943 = vmax.f32 %v815, %v879
  %v944 = vmax.f32 %v816, %v880
  %v945 = vmax.f32 %v817, %v881
  %v946 = vrot.slane %v882, 7
  %v947 = vrot.slane %v883, 7
  %v948 = vrot.slane %v884, 7
  %v949 = vrot.slane %v885, 7
  %v950 = vrot.slane %v886, 7
  %v951 = vrot.slane %v887, 7
  %v952 = vrot.slane %v888, 7
  %v953 = vrot.slane %v889, 7
  %v954 = vrot.slane %v890, 7
  %v955 = vrot.slane %v891, 7
  %v956 = vrot.slane %v892, 7
  %v957 = vrot.slane %v893, 7
  %v958 = vrot.slane %v894, 7
  %v959 = vrot.slane %v895, 7
  %v960 = vrot.slane %v896, 7
  %v961 = vrot.slane %v897, 7
  %v962 = vrot.slane %v898, 7
  %v963 = vrot.slane %v899, 7
  %v964 = vrot.slane %v900, 7
  %v965 = vrot.slane %v901, 7
  %v966 = vrot.slane %v902, 7
  %v967 = vrot.slane %v903, 7
  %v968 = vrot.slane %v904, 7
  %v969 = vrot.slane %v905, 7
  %v970 = vrot.slane %v906, 7
  %v971 = vrot.slane %v907, 7
  %v972 = vrot.slane %v908, 7
  %v973 = vrot.slane %v909, 7
  %v974 = vrot.slane %v910, 7
  %v975 = vrot.slane %v911, 7
  %v976 = vrot.slane %v912, 7
  %v977 = vrot.slane %v913, 7
  %v978 = vrot.slane %v914, 7
  %v979 = vrot.slane %v915, 7
  %v980 = vrot.slane %v916, 7
  %v981 = vrot.slane %v917, 7
  %v982 = vrot.slane %v918, 7
  %v983 = vrot.slane %v919, 7
  %v984 = vrot.slane %v920, 7
  %v985 = vrot.slane %v921, 7
  %v986 = vrot.slane %v922, 7
  %v987 = vrot.slane %v923, 7
  %v988 = vrot.slane %v924, 7
  %v989 = vrot.slane %v925, 7
  %v990 = vrot.slane %v926, 7
  %v991 = vrot.slane %v927, 7
  %v992 = vrot.slane %v928, 7
  %v993 = vrot.slane %v929, 7
  %v994 = vrot.slane %v930, 7
  %v995 = vrot.slane %v931, 7
  %v996 = vrot.slane %v932, 7
  %v997 = vrot.slane %v933, 7
  %v998 = vrot.slane %v934, 7
  %v999 = vrot.slane %v935, 7
  %v1000 = vrot.slane %v936, 7
  %v1001 = vrot.slane %v937, 7
  %v1002 = vrot.slane %v938, 7
  %v1003 = vrot.slane %v939, 7
  %v1004 = vrot.slane %v940, 7
  %v1005 = vrot.slane %v941, 7
  %v1006 = vrot.slane %v942, 7
  %v1007 = vrot.slane %v943, 7
  %v1008 = vrot.slane %v944, 7
  %v1009 = vrot.slane %v945, 7
  %vm1010 = vcmp.lt.s32.totalorder %v91, 1
  %v1011 = vsel %vm1010, %v1008, %v1009
  %v1012 = vsel %vm1010, %v1007, %v1008
  %v1013 = vsel %vm1010, %v1006, %v1007
  %v1014 = vsel %vm1010, %v1005, %v1006
  %v1015 = vsel %vm1010, %v1004, %v1005
  %v1016 = vsel %vm1010, %v1003, %v1004
  %v1017 = vsel %vm1010, %v1002, %v1003
  %v1018 = vsel %vm1010, %v1001, %v1002
  %v1019 = vsel %vm1010, %v1000, %v1001
  %v1020 = vsel %vm1010, %v999, %v1000
  %v1021 = vsel %vm1010, %v998, %v999
  %v1022 = vsel %vm1010, %v997, %v998
  %v1023 = vsel %vm1010, %v996, %v997
  %v1024 = vsel %vm1010, %v995, %v996
  %v1025 = vsel %vm1010, %v994, %v995
  %v1026 = vsel %vm1010, %v993, %v994
  %v1027 = vsel %vm1010, %v992, %v993
  %v1028 = vsel %vm1010, %v991, %v992
  %v1029 = vsel %vm1010, %v990, %v991
  %v1030 = vsel %vm1010, %v989, %v990
  %v1031 = vsel %vm1010, %v988, %v989
  %v1032 = vsel %vm1010, %v987, %v988
  %v1033 = vsel %vm1010, %v986, %v987
  %v1034 = vsel %vm1010, %v985, %v986
  %v1035 = vsel %vm1010, %v984, %v985
  %v1036 = vsel %vm1010, %v983, %v984
  %v1037 = vsel %vm1010, %v982, %v983
  %v1038 = vsel %vm1010, %v981, %v982
  %v1039 = vsel %vm1010, %v980, %v981
  %v1040 = vsel %vm1010, %v979, %v980
  %v1041 = vsel %vm1010, %v978, %v979
  %v1042 = vsel %vm1010, %v977, %v978
  %v1043 = vsel %vm1010, %v976, %v977
  %v1044 = vsel %vm1010, %v975, %v976
  %v1045 = vsel %vm1010, %v974, %v975
  %v1046 = vsel %vm1010, %v973, %v974
  %v1047 = vsel %vm1010, %v972, %v973
  %v1048 = vsel %vm1010, %v971, %v972
  %v1049 = vsel %vm1010, %v970, %v971
  %v1050 = vsel %vm1010, %v969, %v970
  %v1051 = vsel %vm1010, %v968, %v969
  %v1052 = vsel %vm1010, %v967, %v968
  %v1053 = vsel %vm1010, %v966, %v967
  %v1054 = vsel %vm1010, %v965, %v966
  %v1055 = vsel %vm1010, %v964, %v965
  %v1056 = vsel %vm1010, %v963, %v964
  %v1057 = vsel %vm1010, %v962, %v963
  %v1058 = vsel %vm1010, %v961, %v962
  %v1059 = vsel %vm1010, %v960, %v961
  %v1060 = vsel %vm1010, %v959, %v960
  %v1061 = vsel %vm1010, %v958, %v959
  %v1062 = vsel %vm1010, %v957, %v958
  %v1063 = vsel %vm1010, %v956, %v957
  %v1064 = vsel %vm1010, %v955, %v956
  %v1065 = vsel %vm1010, %v954, %v955
  %v1066 = vsel %vm1010, %v953, %v954
  %v1067 = vsel %vm1010, %v952, %v953
  %v1068 = vsel %vm1010, %v951, %v952
  %v1069 = vsel %vm1010, %v950, %v951
  %v1070 = vsel %vm1010, %v949, %v950
  %v1071 = vsel %vm1010, %v948, %v949
  %v1072 = vsel %vm1010, %v947, %v948
  %v1073 = vsel %vm1010, %v946, %v947
  %v1074 = vsel %vm1010, %v1009, %v946
  %v1075 = vsel %vm93, 1, 0
  %v1076 = vsel %vm94, 1, 0
  %vm1077 = vcmp.eq.s32.totalorder %v1075, 1
  %vm1078 = vcmp.eq.s32.totalorder %v1076, 1
  %v1079 = vsel %vm1077, %v1074, 0.0
  %v1080 = vsel %vm1078, %v1073, 0.0
  %v1081 = vsel %vm1077, %v1072, 0.0
  %v1082 = vsel %vm1078, %v1071, 0.0
  %v1083 = vsel %vm1077, %v1070, 0.0
  %v1084 = vsel %vm1078, %v1069, 0.0
  %v1085 = vsel %vm1077, %v1068, 0.0
  %v1086 = vsel %vm1078, %v1067, 0.0
  %v1087 = vsel %vm1077, %v1066, 0.0
  %v1088 = vsel %vm1078, %v1065, 0.0
  %v1089 = vsel %vm1077, %v1064, 0.0
  %v1090 = vsel %vm1078, %v1063, 0.0
  %v1091 = vsel %vm1077, %v1062, 0.0
  %v1092 = vsel %vm1078, %v1061, 0.0
  %v1093 = vsel %vm1077, %v1060, 0.0
  %v1094 = vsel %vm1078, %v1059, 0.0
  %v1095 = vsel %vm1077, %v1058, 0.0
  %v1096 = vsel %vm1078, %v1057, 0.0
  %v1097 = vsel %vm1077, %v1056, 0.0
  %v1098 = vsel %vm1078, %v1055, 0.0
  %v1099 = vsel %vm1077, %v1054, 0.0
  %v1100 = vsel %vm1078, %v1053, 0.0
  %v1101 = vsel %vm1077, %v1052, 0.0
  %v1102 = vsel %vm1078, %v1051, 0.0
  %v1103 = vsel %vm1077, %v1050, 0.0
  %v1104 = vsel %vm1078, %v1049, 0.0
  %v1105 = vsel %vm1077, %v1048, 0.0
  %v1106 = vsel %vm1078, %v1047, 0.0
  %v1107 = vsel %vm1077, %v1046, 0.0
  %v1108 = vsel %vm1078, %v1045, 0.0
  %v1109 = vsel %vm1077, %v1044, 0.0
  %v1110 = vsel %vm1078, %v1043, 0.0
  %v1111 = vsel %vm1077, %v1042, 0.0
  %v1112 = vsel %vm1078, %v1041, 0.0
  %v1113 = vsel %vm1077, %v1040, 0.0
  %v1114 = vsel %vm1078, %v1039, 0.0
  %v1115 = vsel %vm1077, %v1038, 0.0
  %v1116 = vsel %vm1078, %v1037, 0.0
  %v1117 = vsel %vm1077, %v1036, 0.0
  %v1118 = vsel %vm1078, %v1035, 0.0
  %v1119 = vsel %vm1077, %v1034, 0.0
  %v1120 = vsel %vm1078, %v1033, 0.0
  %v1121 = vsel %vm1077, %v1032, 0.0
  %v1122 = vsel %vm1078, %v1031, 0.0
  %v1123 = vsel %vm1077, %v1030, 0.0
  %v1124 = vsel %vm1078, %v1029, 0.0
  %v1125 = vsel %vm1077, %v1028, 0.0
  %v1126 = vsel %vm1078, %v1027, 0.0
  %v1127 = vsel %vm1077, %v1026, 0.0
  %v1128 = vsel %vm1078, %v1025, 0.0
  %v1129 = vsel %vm1077, %v1024, 0.0
  %v1130 = vsel %vm1078, %v1023, 0.0
  %v1131 = vsel %vm1077, %v1022, 0.0
  %v1132 = vsel %vm1078, %v1021, 0.0
  %v1133 = vsel %vm1077, %v1020, 0.0
  %v1134 = vsel %vm1078, %v1019, 0.0
  %v1135 = vsel %vm1077, %v1018, 0.0
  %v1136 = vsel %vm1078, %v1017, 0.0
  %v1137 = vsel %vm1077, %v1016, 0.0
  %v1138 = vsel %vm1078, %v1015, 0.0
  %v1139 = vsel %vm1077, %v1014, 0.0
  %v1140 = vsel %vm1078, %v1013, 0.0
  %v1141 = vsel %vm1077, %v1012, 0.0
  %v1142 = vsel %vm1078, %v1011, 0.0
  %v1143 = vrot.slane %v882, 1
  %v1144 = vrot.slane %v883, 1
  %v1145 = vrot.slane %v884, 1
  %v1146 = vrot.slane %v885, 1
  %v1147 = vrot.slane %v886, 1
  %v1148 = vrot.slane %v887, 1
  %v1149 = vrot.slane %v888, 1
  %v1150 = vrot.slane %v889, 1
  %v1151 = vrot.slane %v890, 1
  %v1152 = vrot.slane %v891, 1
  %v1153 = vrot.slane %v892, 1
  %v1154 = vrot.slane %v893, 1
  %v1155 = vrot.slane %v894, 1
  %v1156 = vrot.slane %v895, 1
  %v1157 = vrot.slane %v896, 1
  %v1158 = vrot.slane %v897, 1
  %v1159 = vrot.slane %v898, 1
  %v1160 = vrot.slane %v899, 1
  %v1161 = vrot.slane %v900, 1
  %v1162 = vrot.slane %v901, 1
  %v1163 = vrot.slane %v902, 1
  %v1164 = vrot.slane %v903, 1
  %v1165 = vrot.slane %v904, 1
  %v1166 = vrot.slane %v905, 1
  %v1167 = vrot.slane %v906, 1
  %v1168 = vrot.slane %v907, 1
  %v1169 = vrot.slane %v908, 1
  %v1170 = vrot.slane %v909, 1
  %v1171 = vrot.slane %v910, 1
  %v1172 = vrot.slane %v911, 1
  %v1173 = vrot.slane %v912, 1
  %v1174 = vrot.slane %v913, 1
  %v1175 = vrot.slane %v914, 1
  %v1176 = vrot.slane %v915, 1
  %v1177 = vrot.slane %v916, 1
  %v1178 = vrot.slane %v917, 1
  %v1179 = vrot.slane %v918, 1
  %v1180 = vrot.slane %v919, 1
  %v1181 = vrot.slane %v920, 1
  %v1182 = vrot.slane %v921, 1
  %v1183 = vrot.slane %v922, 1
  %v1184 = vrot.slane %v923, 1
  %v1185 = vrot.slane %v924, 1
  %v1186 = vrot.slane %v925, 1
  %v1187 = vrot.slane %v926, 1
  %v1188 = vrot.slane %v927, 1
  %v1189 = vrot.slane %v928, 1
  %v1190 = vrot.slane %v929, 1
  %v1191 = vrot.slane %v930, 1
  %v1192 = vrot.slane %v931, 1
  %v1193 = vrot.slane %v932, 1
  %v1194 = vrot.slane %v933, 1
  %v1195 = vrot.slane %v934, 1
  %v1196 = vrot.slane %v935, 1
  %v1197 = vrot.slane %v936, 1
  %v1198 = vrot.slane %v937, 1
  %v1199 = vrot.slane %v938, 1
  %v1200 = vrot.slane %v939, 1
  %v1201 = vrot.slane %v940, 1
  %v1202 = vrot.slane %v941, 1
  %v1203 = vrot.slane %v942, 1
  %v1204 = vrot.slane %v943, 1
  %v1205 = vrot.slane %v944, 1
  %v1206 = vrot.slane %v945, 1
  %vm1207 = vcmp.lt.s32.totalorder %v91, 7
  %v1208 = vsel %vm1207, %v1205, %v1206
  %v1209 = vsel %vm1207, %v1204, %v1205
  %v1210 = vsel %vm1207, %v1203, %v1204
  %v1211 = vsel %vm1207, %v1202, %v1203
  %v1212 = vsel %vm1207, %v1201, %v1202
  %v1213 = vsel %vm1207, %v1200, %v1201
  %v1214 = vsel %vm1207, %v1199, %v1200
  %v1215 = vsel %vm1207, %v1198, %v1199
  %v1216 = vsel %vm1207, %v1197, %v1198
  %v1217 = vsel %vm1207, %v1196, %v1197
  %v1218 = vsel %vm1207, %v1195, %v1196
  %v1219 = vsel %vm1207, %v1194, %v1195
  %v1220 = vsel %vm1207, %v1193, %v1194
  %v1221 = vsel %vm1207, %v1192, %v1193
  %v1222 = vsel %vm1207, %v1191, %v1192
  %v1223 = vsel %vm1207, %v1190, %v1191
  %v1224 = vsel %vm1207, %v1189, %v1190
  %v1225 = vsel %vm1207, %v1188, %v1189
  %v1226 = vsel %vm1207, %v1187, %v1188
  %v1227 = vsel %vm1207, %v1186, %v1187
  %v1228 = vsel %vm1207, %v1185, %v1186
  %v1229 = vsel %vm1207, %v1184, %v1185
  %v1230 = vsel %vm1207, %v1183, %v1184
  %v1231 = vsel %vm1207, %v1182, %v1183
  %v1232 = vsel %vm1207, %v1181, %v1182
  %v1233 = vsel %vm1207, %v1180, %v1181
  %v1234 = vsel %vm1207, %v1179, %v1180
  %v1235 = vsel %vm1207, %v1178, %v1179
  %v1236 = vsel %vm1207, %v1177, %v1178
  %v1237 = vsel %vm1207, %v1176, %v1177
  %v1238 = vsel %vm1207, %v1175, %v1176
  %v1239 = vsel %vm1207, %v1174, %v1175
  %v1240 = vsel %vm1207, %v1173, %v1174
  %v1241 = vsel %vm1207, %v1172, %v1173
  %v1242 = vsel %vm1207, %v1171, %v1172
  %v1243 = vsel %vm1207, %v1170, %v1171
  %v1244 = vsel %vm1207, %v1169, %v1170
  %v1245 = vsel %vm1207, %v1168, %v1169
  %v1246 = vsel %vm1207, %v1167, %v1168
  %v1247 = vsel %vm1207, %v1166, %v1167
  %v1248 = vsel %vm1207, %v1165, %v1166
  %v1249 = vsel %vm1207, %v1164, %v1165
  %v1250 = vsel %vm1207, %v1163, %v1164
  %v1251 = vsel %vm1207, %v1162, %v1163
  %v1252 = vsel %vm1207, %v1161, %v1162
  %v1253 = vsel %vm1207, %v1160, %v1161
  %v1254 = vsel %vm1207, %v1159, %v1160
  %v1255 = vsel %vm1207, %v1158, %v1159
  %v1256 = vsel %vm1207, %v1157, %v1158
  %v1257 = vsel %vm1207, %v1156, %v1157
  %v1258 = vsel %vm1207, %v1155, %v1156
  %v1259 = vsel %vm1207, %v1154, %v1155
  %v1260 = vsel %vm1207, %v1153, %v1154
  %v1261 = vsel %vm1207, %v1152, %v1153
  %v1262 = vsel %vm1207, %v1151, %v1152
  %v1263 = vsel %vm1207, %v1150, %v1151
  %v1264 = vsel %vm1207, %v1149, %v1150
  %v1265 = vsel %vm1207, %v1148, %v1149
  %v1266 = vsel %vm1207, %v1147, %v1148
  %v1267 = vsel %vm1207, %v1146, %v1147
  %v1268 = vsel %vm1207, %v1145, %v1146
  %v1269 = vsel %vm1207, %v1144, %v1145
  %v1270 = vsel %vm1207, %v1143, %v1144
  %v1271 = vsel %vm1207, %v1206, %v1143
  %v1272 = vsel %vm95, 1, 0
  %v1273 = vsel %vm96, 1, 0
  %vm1274 = vcmp.eq.s32.totalorder %v1272, 1
  %vm1275 = vcmp.eq.s32.totalorder %v1273, 1
  %v1276 = vsel %vm1274, %v1270, 0.0
  %v1277 = vsel %vm1275, %v1269, 0.0
  %v1278 = vsel %vm1274, %v1268, 0.0
  %v1279 = vsel %vm1275, %v1267, 0.0
  %v1280 = vsel %vm1274, %v1266, 0.0
  %v1281 = vsel %vm1275, %v1265, 0.0
  %v1282 = vsel %vm1274, %v1264, 0.0
  %v1283 = vsel %vm1275, %v1263, 0.0
  %v1284 = vsel %vm1274, %v1262, 0.0
  %v1285 = vsel %vm1275, %v1261, 0.0
  %v1286 = vsel %vm1274, %v1260, 0.0
  %v1287 = vsel %vm1275, %v1259, 0.0
  %v1288 = vsel %vm1274, %v1258, 0.0
  %v1289 = vsel %vm1275, %v1257, 0.0
  %v1290 = vsel %vm1274, %v1256, 0.0
  %v1291 = vsel %vm1275, %v1255, 0.0
  %v1292 = vsel %vm1274, %v1254, 0.0
  %v1293 = vsel %vm1275, %v1253, 0.0
  %v1294 = vsel %vm1274, %v1252, 0.0
  %v1295 = vsel %vm1275, %v1251, 0.0
  %v1296 = vsel %vm1274, %v1250, 0.0
  %v1297 = vsel %vm1275, %v1249, 0.0
  %v1298 = vsel %vm1274, %v1248, 0.0
  %v1299 = vsel %vm1275, %v1247, 0.0
  %v1300 = vsel %vm1274, %v1246, 0.0
  %v1301 = vsel %vm1275, %v1245, 0.0
  %v1302 = vsel %vm1274, %v1244, 0.0
  %v1303 = vsel %vm1275, %v1243, 0.0
  %v1304 = vsel %vm1274, %v1242, 0.0
  %v1305 = vsel %vm1275, %v1241, 0.0
  %v1306 = vsel %vm1274, %v1240, 0.0
  %v1307 = vsel %vm1275, %v1239, 0.0
  %v1308 = vsel %vm1274, %v1238, 0.0
  %v1309 = vsel %vm1275, %v1237, 0.0
  %v1310 = vsel %vm1274, %v1236, 0.0
  %v1311 = vsel %vm1275, %v1235, 0.0
  %v1312 = vsel %vm1274, %v1234, 0.0
  %v1313 = vsel %vm1275, %v1233, 0.0
  %v1314 = vsel %vm1274, %v1232, 0.0
  %v1315 = vsel %vm1275, %v1231, 0.0
  %v1316 = vsel %vm1274, %v1230, 0.0
  %v1317 = vsel %vm1275, %v1229, 0.0
  %v1318 = vsel %vm1274, %v1228, 0.0
  %v1319 = vsel %vm1275, %v1227, 0.0
  %v1320 = vsel %vm1274, %v1226, 0.0
  %v1321 = vsel %vm1275, %v1225, 0.0
  %v1322 = vsel %vm1274, %v1224, 0.0
  %v1323 = vsel %vm1275, %v1223, 0.0
  %v1324 = vsel %vm1274, %v1222, 0.0
  %v1325 = vsel %vm1275, %v1221, 0.0
  %v1326 = vsel %vm1274, %v1220, 0.0
  %v1327 = vsel %vm1275, %v1219, 0.0
  %v1328 = vsel %vm1274, %v1218, 0.0
  %v1329 = vsel %vm1275, %v1217, 0.0
  %v1330 = vsel %vm1274, %v1216, 0.0
  %v1331 = vsel %vm1275, %v1215, 0.0
  %v1332 = vsel %vm1274, %v1214, 0.0
  %v1333 = vsel %vm1275, %v1213, 0.0
  %v1334 = vsel %vm1274, %v1212, 0.0
  %v1335 = vsel %vm1275, %v1211, 0.0
  %v1336 = vsel %vm1274, %v1210, 0.0
  %v1337 = vsel %vm1275, %v1209, 0.0
  %v1338 = vsel %vm1274, %v1208, 0.0
  %v1339 = vsel %vm1275, %v1271, 0.0
  %1404 = vrot.lane.b32.xlu0 %v882, 4
  %v1405 = vpop.permute.xlu0 %1404
  %1406 = vrot.lane.b32.xlu0 %v883, 4
  %v1407 = vpop.permute.xlu0 %1406
  %1408 = vrot.lane.b32.xlu0 %v884, 4
  %v1409 = vpop.permute.xlu0 %1408
  %1410 = vrot.lane.b32.xlu0 %v885, 4
  %v1411 = vpop.permute.xlu0 %1410
  %1412 = vrot.lane.b32.xlu0 %v886, 4
  %v1413 = vpop.permute.xlu0 %1412
  %1414 = vrot.lane.b32.xlu0 %v887, 4
  %v1415 = vpop.permute.xlu0 %1414
  %1416 = vrot.lane.b32.xlu0 %v888, 4
  %v1417 = vpop.permute.xlu0 %1416
  %1418 = vrot.lane.b32.xlu0 %v889, 4
  %v1419 = vpop.permute.xlu0 %1418
  %1420 = vrot.lane.b32.xlu0 %v890, 4
  %v1421 = vpop.permute.xlu0 %1420
  %1422 = vrot.lane.b32.xlu0 %v891, 4
  %v1423 = vpop.permute.xlu0 %1422
  %1424 = vrot.lane.b32.xlu0 %v892, 4
  %v1425 = vpop.permute.xlu0 %1424
  %1426 = vrot.lane.b32.xlu0 %v893, 4
  %v1427 = vpop.permute.xlu0 %1426
  %1428 = vrot.lane.b32.xlu0 %v894, 4
  %v1429 = vpop.permute.xlu0 %1428
  %1430 = vrot.lane.b32.xlu0 %v895, 4
  %v1431 = vpop.permute.xlu0 %1430
  %1432 = vrot.lane.b32.xlu0 %v896, 4
  %v1433 = vpop.permute.xlu0 %1432
  %1434 = vrot.lane.b32.xlu0 %v897, 4
  %v1435 = vpop.permute.xlu0 %1434
  %1436 = vrot.lane.b32.xlu0 %v898, 4
  %v1437 = vpop.permute.xlu0 %1436
  %1438 = vrot.lane.b32.xlu0 %v899, 4
  %v1439 = vpop.permute.xlu0 %1438
  %1440 = vrot.lane.b32.xlu0 %v900, 4
  %v1441 = vpop.permute.xlu0 %1440
  %1442 = vrot.lane.b32.xlu0 %v901, 4
  %v1443 = vpop.permute.xlu0 %1442
  %1444 = vrot.lane.b32.xlu0 %v902, 4
  %v1445 = vpop.permute.xlu0 %1444
  %1446 = vrot.lane.b32.xlu0 %v903, 4
  %v1447 = vpop.permute.xlu0 %1446
  %1448 = vrot.lane.b32.xlu0 %v904, 4
  %v1449 = vpop.permute.xlu0 %1448
  %1450 = vrot.lane.b32.xlu0 %v905, 4
  %v1451 = vpop.permute.xlu0 %1450
  %1452 = vrot.lane.b32.xlu0 %v906, 4
  %v1453 = vpop.permute.xlu0 %1452
  %1454 = vrot.lane.b32.xlu0 %v907, 4
  %v1455 = vpop.permute.xlu0 %1454
  %1456 = vrot.lane.b32.xlu0 %v908, 4
  %v1457 = vpop.permute.xlu0 %1456
  %1458 = vrot.lane.b32.xlu0 %v909, 4
  %v1459 = vpop.permute.xlu0 %1458
  %1460 = vrot.lane.b32.xlu0 %v910, 4
  %v1461 = vpop.permute.xlu0 %1460
  %1462 = vrot.lane.b32.xlu0 %v911, 4
  %v1463 = vpop.permute.xlu0 %1462
  %1464 = vrot.lane.b32.xlu0 %v912, 4
  %v1465 = vpop.permute.xlu0 %1464
  %1466 = vrot.lane.b32.xlu0 %v913, 4
  %v1467 = vpop.permute.xlu0 %1466
  %1468 = vrot.lane.b32.xlu0 %v914, 4
  %v1469 = vpop.permute.xlu0 %1468
  %1470 = vrot.lane.b32.xlu0 %v915, 4
  %v1471 = vpop.permute.xlu0 %1470
  %1472 = vrot.lane.b32.xlu0 %v916, 4
  %v1473 = vpop.permute.xlu0 %1472
  %1474 = vrot.lane.b32.xlu0 %v917, 4
  %v1475 = vpop.permute.xlu0 %1474
  %1476 = vrot.lane.b32.xlu0 %v918, 4
  %v1477 = vpop.permute.xlu0 %1476
  %1478 = vrot.lane.b32.xlu0 %v919, 4
  %v1479 = vpop.permute.xlu0 %1478
  %1480 = vrot.lane.b32.xlu0 %v920, 4
  %v1481 = vpop.permute.xlu0 %1480
  %1482 = vrot.lane.b32.xlu0 %v921, 4
  %v1483 = vpop.permute.xlu0 %1482
  %1484 = vrot.lane.b32.xlu0 %v922, 4
  %v1485 = vpop.permute.xlu0 %1484
  %1486 = vrot.lane.b32.xlu0 %v923, 4
  %v1487 = vpop.permute.xlu0 %1486
  %1488 = vrot.lane.b32.xlu0 %v924, 4
  %v1489 = vpop.permute.xlu0 %1488
  %1490 = vrot.lane.b32.xlu0 %v925, 4
  %v1491 = vpop.permute.xlu0 %1490
  %1492 = vrot.lane.b32.xlu0 %v926, 4
  %v1493 = vpop.permute.xlu0 %1492
  %1494 = vrot.lane.b32.xlu0 %v927, 4
  %v1495 = vpop.permute.xlu0 %1494
  %1496 = vrot.lane.b32.xlu0 %v928, 4
  %v1497 = vpop.permute.xlu0 %1496
  %1498 = vrot.lane.b32.xlu0 %v929, 4
  %v1499 = vpop.permute.xlu0 %1498
  %1500 = vrot.lane.b32.xlu0 %v930, 4
  %v1501 = vpop.permute.xlu0 %1500
  %1502 = vrot.lane.b32.xlu0 %v931, 4
  %v1503 = vpop.permute.xlu0 %1502
  %1504 = vrot.lane.b32.xlu0 %v932, 4
  %v1505 = vpop.permute.xlu0 %1504
  %1506 = vrot.lane.b32.xlu0 %v933, 4
  %v1507 = vpop.permute.xlu0 %1506
  %1508 = vrot.lane.b32.xlu0 %v934, 4
  %v1509 = vpop.permute.xlu0 %1508
  %1510 = vrot.lane.b32.xlu0 %v935, 4
  %v1511 = vpop.permute.xlu0 %1510
  %1512 = vrot.lane.b32.xlu0 %v936, 4
  %v1513 = vpop.permute.xlu0 %1512
  %1514 = vrot.lane.b32.xlu0 %v937, 4
  %v1515 = vpop.permute.xlu0 %1514
  %1516 = vrot.lane.b32.xlu0 %v938, 4
  %v1517 = vpop.permute.xlu0 %1516
  %1518 = vrot.lane.b32.xlu0 %v939, 4
  %v1519 = vpop.permute.xlu0 %1518
  %1520 = vrot.lane.b32.xlu0 %v940, 4
  %v1521 = vpop.permute.xlu0 %1520
  %1522 = vrot.lane.b32.xlu0 %v941, 4
  %v1523 = vpop.permute.xlu0 %1522
  %1524 = vrot.lane.b32.xlu0 %v942, 4
  %v1525 = vpop.permute.xlu0 %1524
  %1526 = vrot.lane.b32.xlu0 %v943, 4
  %v1527 = vpop.permute.xlu0 %1526
  %1528 = vrot.lane.b32.xlu0 %v944, 4
  %v1529 = vpop.permute.xlu0 %1528
  %1530 = vrot.lane.b32.xlu0 %v945, 4
  %v1531 = vpop.permute.xlu0 %1530
  %1660 = vrot.lane.b32.xlu0 %v1276, 8
  %v1661 = vpop.permute.xlu0 %1660
  %1662 = vrot.lane.b32.xlu0 %v1277, 8
  %v1663 = vpop.permute.xlu0 %1662
  %1664 = vrot.lane.b32.xlu0 %v1278, 8
  %v1665 = vpop.permute.xlu0 %1664
  %1666 = vrot.lane.b32.xlu0 %v1279, 8
  %v1667 = vpop.permute.xlu0 %1666
  %1668 = vrot.lane.b32.xlu0 %v1280, 8
  %v1669 = vpop.permute.xlu0 %1668
  %1670 = vrot.lane.b32.xlu0 %v1281, 8
  %v1671 = vpop.permute.xlu0 %1670
  %1672 = vrot.lane.b32.xlu0 %v1282, 8
  %v1673 = vpop.permute.xlu0 %1672
  %1674 = vrot.lane.b32.xlu0 %v1283, 8
  %v1675 = vpop.permute.xlu0 %1674
  %1676 = vrot.lane.b32.xlu0 %v1284, 8
  %v1677 = vpop.permute.xlu0 %1676
  %1678 = vrot.lane.b32.xlu0 %v1285, 8
  %v1679 = vpop.permute.xlu0 %1678
  %1680 = vrot.lane.b32.xlu0 %v1286, 8
  %v1681 = vpop.permute.xlu0 %1680
  %1682 = vrot.lane.b32.xlu0 %v1287, 8
  %v1683 = vpop.permute.xlu0 %1682
  %1684 = vrot.lane.b32.xlu0 %v1288, 8
  %v1685 = vpop.permute.xlu0 %1684
  %1686 = vrot.lane.b32.xlu0 %v1289, 8
  %v1687 = vpop.permute.xlu0 %1686
  %1688 = vrot.lane.b32.xlu0 %v1290, 8
  %v1689 = vpop.permute.xlu0 %1688
  %1690 = vrot.lane.b32.xlu0 %v1291, 8
  %v1691 = vpop.permute.xlu0 %1690
  %1692 = vrot.lane.b32.xlu0 %v1292, 8
  %v1693 = vpop.permute.xlu0 %1692
  %1694 = vrot.lane.b32.xlu0 %v1293, 8
  %v1695 = vpop.permute.xlu0 %1694
  %1696 = vrot.lane.b32.xlu0 %v1294, 8
  %v1697 = vpop.permute.xlu0 %1696
  %1698 = vrot.lane.b32.xlu0 %v1295, 8
  %v1699 = vpop.permute.xlu0 %1698
  %1700 = vrot.lane.b32.xlu0 %v1296, 8
  %v1701 = vpop.permute.xlu0 %1700
  %1702 = vrot.lane.b32.xlu0 %v1297, 8
  %v1703 = vpop.permute.xlu0 %1702
  %1704 = vrot.lane.b32.xlu0 %v1298, 8
  %v1705 = vpop.permute.xlu0 %1704
  %1706 = vrot.lane.b32.xlu0 %v1299, 8
  %v1707 = vpop.permute.xlu0 %1706
  %1708 = vrot.lane.b32.xlu0 %v1300, 8
  %v1709 = vpop.permute.xlu0 %1708
  %1710 = vrot.lane.b32.xlu0 %v1301, 8
  %v1711 = vpop.permute.xlu0 %1710
  %1712 = vrot.lane.b32.xlu0 %v1302, 8
  %v1713 = vpop.permute.xlu0 %1712
  %1714 = vrot.lane.b32.xlu0 %v1303, 8
  %v1715 = vpop.permute.xlu0 %1714
  %1716 = vrot.lane.b32.xlu0 %v1304, 8
  %v1717 = vpop.permute.xlu0 %1716
  %1718 = vrot.lane.b32.xlu0 %v1305, 8
  %v1719 = vpop.permute.xlu0 %1718
  %1720 = vrot.lane.b32.xlu0 %v1306, 8
  %v1721 = vpop.permute.xlu0 %1720
  %1722 = vrot.lane.b32.xlu0 %v1307, 8
  %v1723 = vpop.permute.xlu0 %1722
  %1724 = vrot.lane.b32.xlu0 %v1308, 8
  %v1725 = vpop.permute.xlu0 %1724
  %1726 = vrot.lane.b32.xlu0 %v1309, 8
  %v1727 = vpop.permute.xlu0 %1726
  %1728 = vrot.lane.b32.xlu0 %v1310, 8
  %v1729 = vpop.permute.xlu0 %1728
  %1730 = vrot.lane.b32.xlu0 %v1311, 8
  %v1731 = vpop.permute.xlu0 %1730
  %1732 = vrot.lane.b32.xlu0 %v1312, 8
  %v1733 = vpop.permute.xlu0 %1732
  %1734 = vrot.lane.b32.xlu0 %v1313, 8
  %v1735 = vpop.permute.xlu0 %1734
  %1736 = vrot.lane.b32.xlu0 %v1314, 8
  %v1737 = vpop.permute.xlu0 %1736
  %1738 = vrot.lane.b32.xlu0 %v1315, 8
  %v1739 = vpop.permute.xlu0 %1738
  %1740 = vrot.lane.b32.xlu0 %v1316, 8
  %v1741 = vpop.permute.xlu0 %1740
  %1742 = vrot.lane.b32.xlu0 %v1317, 8
  %v1743 = vpop.permute.xlu0 %1742
  %1744 = vrot.lane.b32.xlu0 %v1318, 8
  %v1745 = vpop.permute.xlu0 %1744
  %1746 = vrot.lane.b32.xlu0 %v1319, 8
  %v1747 = vpop.permute.xlu0 %1746
  %1748 = vrot.lane.b32.xlu0 %v1320, 8
  %v1749 = vpop.permute.xlu0 %1748
  %1750 = vrot.lane.b32.xlu0 %v1321, 8
  %v1751 = vpop.permute.xlu0 %1750
  %1752 = vrot.lane.b32.xlu0 %v1322, 8
  %v1753 = vpop.permute.xlu0 %1752
  %1754 = vrot.lane.b32.xlu0 %v1323, 8
  %v1755 = vpop.permute.xlu0 %1754
  %1756 = vrot.lane.b32.xlu0 %v1324, 8
  %v1757 = vpop.permute.xlu0 %1756
  %1758 = vrot.lane.b32.xlu0 %v1325, 8
  %v1759 = vpop.permute.xlu0 %1758
  %1760 = vrot.lane.b32.xlu0 %v1326, 8
  %v1761 = vpop.permute.xlu0 %1760
  %1762 = vrot.lane.b32.xlu0 %v1327, 8
  %v1763 = vpop.permute.xlu0 %1762
  %1764 = vrot.lane.b32.xlu0 %v1328, 8
  %v1765 = vpop.permute.xlu0 %1764
  %1766 = vrot.lane.b32.xlu0 %v1329, 8
  %v1767 = vpop.permute.xlu0 %1766
  %1768 = vrot.lane.b32.xlu0 %v1330, 8
  %v1769 = vpop.permute.xlu0 %1768
  %1770 = vrot.lane.b32.xlu0 %v1331, 8
  %v1771 = vpop.permute.xlu0 %1770
  %1772 = vrot.lane.b32.xlu0 %v1332, 8
  %v1773 = vpop.permute.xlu0 %1772
  %1774 = vrot.lane.b32.xlu0 %v1333, 8
  %v1775 = vpop.permute.xlu0 %1774
  %1776 = vrot.lane.b32.xlu0 %v1334, 8
  %v1777 = vpop.permute.xlu0 %1776
  %1778 = vrot.lane.b32.xlu0 %v1335, 8
  %v1779 = vpop.permute.xlu0 %1778
  %1780 = vrot.lane.b32.xlu0 %v1336, 8
  %v1781 = vpop.permute.xlu0 %1780
  %1782 = vrot.lane.b32.xlu0 %v1337, 8
  %v1783 = vpop.permute.xlu0 %1782
  %1784 = vrot.lane.b32.xlu0 %v1338, 8
  %v1785 = vpop.permute.xlu0 %1784
  %1786 = vrot.lane.b32.xlu0 %v1339, 8
  %v1787 = vpop.permute.xlu0 %1786
  %vm1852 = vcmask 31744
  %v1853 = vsel %vm1852, %v1079, %v1405
  %v1854 = vsel %vm1852, %v1080, %v1407
  %v1855 = vsel %vm1852, %v1081, %v1409
  %v1856 = vsel %vm1852, %v1082, %v1411
  %v1857 = vsel %vm1852, %v1083, %v1413
  %v1858 = vsel %vm1852, %v1084, %v1415
  %v1859 = vsel %vm1852, %v1085, %v1417
  %v1860 = vsel %vm1852, %v1086, %v1419
  %v1861 = vsel %vm1852, %v1087, %v1421
  %v1862 = vsel %vm1852, %v1088, %v1423
  %v1863 = vsel %vm1852, %v1089, %v1425
  %v1864 = vsel %vm1852, %v1090, %v1427
  %v1865 = vsel %vm1852, %v1091, %v1429
  %v1866 = vsel %vm1852, %v1092, %v1431
  %v1867 = vsel %vm1852, %v1093, %v1433
  %v1868 = vsel %vm1852, %v1094, %v1435
  %v1869 = vsel %vm1852, %v1095, %v1437
  %v1870 = vsel %vm1852, %v1096, %v1439
  %v1871 = vsel %vm1852, %v1097, %v1441
  %v1872 = vsel %vm1852, %v1098, %v1443
  %v1873 = vsel %vm1852, %v1099, %v1445
  %v1874 = vsel %vm1852, %v1100, %v1447
  %v1875 = vsel %vm1852, %v1101, %v1449
  %v1876 = vsel %vm1852, %v1102, %v1451
  %v1877 = vsel %vm1852, %v1103, %v1453
  %v1878 = vsel %vm1852, %v1104, %v1455
  %v1879 = vsel %vm1852, %v1105, %v1457
  %v1880 = vsel %vm1852, %v1106, %v1459
  %v1881 = vsel %vm1852, %v1107, %v1461
  %v1882 = vsel %vm1852, %v1108, %v1463
  %v1883 = vsel %vm1852, %v1109, %v1465
  %v1884 = vsel %vm1852, %v1110, %v1467
  %v1885 = vsel %vm1852, %v1111, %v1469
  %v1886 = vsel %vm1852, %v1112, %v1471
  %v1887 = vsel %vm1852, %v1113, %v1473
  %v1888 = vsel %vm1852, %v1114, %v1475
  %v1889 = vsel %vm1852, %v1115, %v1477
  %v1890 = vsel %vm1852, %v1116, %v1479
  %v1891 = vsel %vm1852, %v1117, %v1481
  %v1892 = vsel %vm1852, %v1118, %v1483
  %v1893 = vsel %vm1852, %v1119, %v1485
  %v1894 = vsel %vm1852, %v1120, %v1487
  %v1895 = vsel %vm1852, %v1121, %v1489
  %v1896 = vsel %vm1852, %v1122, %v1491
  %v1897 = vsel %vm1852, %v1123, %v1493
  %v1898 = vsel %vm1852, %v1124, %v1495
  %v1899 = vsel %vm1852, %v1125, %v1497
  %v1900 = vsel %vm1852, %v1126, %v1499
  %v1901 = vsel %vm1852, %v1127, %v1501
  %v1902 = vsel %vm1852, %v1128, %v1503
  %v1903 = vsel %vm1852, %v1129, %v1505
  %v1904 = vsel %vm1852, %v1130, %v1507
  %v1905 = vsel %vm1852, %v1131, %v1509
  %v1906 = vsel %vm1852, %v1132, %v1511
  %v1907 = vsel %vm1852, %v1133, %v1513
  %v1908 = vsel %vm1852, %v1134, %v1515
  %v1909 = vsel %vm1852, %v1135, %v1517
  %v1910 = vsel %vm1852, %v1136, %v1519
  %v1911 = vsel %vm1852, %v1137, %v1521
  %v1912 = vsel %vm1852, %v1138, %v1523
  %v1913 = vsel %vm1852, %v1139, %v1525
  %v1914 = vsel %vm1852, %v1140, %v1527
  %v1915 = vsel %vm1852, %v1141, %v1529
  %v1916 = vsel %vm1852, %v1142, %v1531
  %v1917 = vsel %vm98, %v1853, %v1661
  %v1918 = vsel %vm98, %v1854, %v1663
  %v1919 = vsel %vm98, %v1855, %v1665
  %v1920 = vsel %vm98, %v1856, %v1667
  %v1921 = vsel %vm98, %v1857, %v1669
  %v1922 = vsel %vm98, %v1858, %v1671
  %v1923 = vsel %vm98, %v1859, %v1673
  %v1924 = vsel %vm98, %v1860, %v1675
  %v1925 = vsel %vm98, %v1861, %v1677
  %v1926 = vsel %vm98, %v1862, %v1679
  %v1927 = vsel %vm98, %v1863, %v1681
  %v1928 = vsel %vm98, %v1864, %v1683
  %v1929 = vsel %vm98, %v1865, %v1685
  %v1930 = vsel %vm98, %v1866, %v1687
  %v1931 = vsel %vm98, %v1867, %v1689
  %v1932 = vsel %vm98, %v1868, %v1691
  %v1933 = vsel %vm98, %v1869, %v1693
  %v1934 = vsel %vm98, %v1870, %v1695
  %v1935 = vsel %vm98, %v1871, %v1697
  %v1936 = vsel %vm98, %v1872, %v1699
  %v1937 = vsel %vm98, %v1873, %v1701
  %v1938 = vsel %vm98, %v1874, %v1703
  %v1939 = vsel %vm98, %v1875, %v1705
  %v1940 = vsel %vm98, %v1876, %v1707
  %v1941 = vsel %vm98, %v1877, %v1709
  %v1942 = vsel %vm98, %v1878, %v1711
  %v1943 = vsel %vm98, %v1879, %v1713
  %v1944 = vsel %vm98, %v1880, %v1715
  %v1945 = vsel %vm98, %v1881, %v1717
  %v1946 = vsel %vm98, %v1882, %v1719
  %v1947 = vsel %vm98, %v1883, %v1721
  %v1948 = vsel %vm98, %v1884, %v1723
  %v1949 = vsel %vm98, %v1885, %v1725
  %v1950 = vsel %vm98, %v1886, %v1727
  %v1951 = vsel %vm98, %v1887, %v1729
  %v1952 = vsel %vm98, %v1888, %v1731
  %v1953 = vsel %vm98, %v1889, %v1733
  %v1954 = vsel %vm98, %v1890, %v1735
  %v1955 = vsel %vm98, %v1891, %v1737
  %v1956 = vsel %vm98, %v1892, %v1739
  %v1957 = vsel %vm98, %v1893, %v1741
  %v1958 = vsel %vm98, %v1894, %v1743
  %v1959 = vsel %vm98, %v1895, %v1745
  %v1960 = vsel %vm98, %v1896, %v1747
  %v1961 = vsel %vm98, %v1897, %v1749
  %v1962 = vsel %vm98, %v1898, %v1751
  %v1963 = vsel %vm98, %v1899, %v1753
  %v1964 = vsel %vm98, %v1900, %v1755
  %v1965 = vsel %vm98, %v1901, %v1757
  %v1966 = vsel %vm98, %v1902, %v1759
  %v1967 = vsel %vm98, %v1903, %v1761
  %v1968 = vsel %vm98, %v1904, %v1763
  %v1969 = vsel %vm98, %v1905, %v1765
  %v1970 = vsel %vm98, %v1906, %v1767
  %v1971 = vsel %vm98, %v1907, %v1769
  %v1972 = vsel %vm98, %v1908, %v1771
  %v1973 = vsel %vm98, %v1909, %v1773
  %v1974 = vsel %vm98, %v1910, %v1775
  %v1975 = vsel %vm98, %v1911, %v1777
  %v1976 = vsel %vm98, %v1912, %v1779
  %v1977 = vsel %vm98, %v1913, %v1781
  %v1978 = vsel %vm98, %v1914, %v1783
  %v1979 = vsel %vm98, %v1915, %v1785
  %v1980 = vsel %vm98, %v1916, %v1787
  %v1981 = vld [vmem:[%s4] sm:$0xff]
  %v1982 = vld [vmem:[%s4 + $0x8] sm:$0xf]
  %s1983 = scalar_lea.vmem %s4, 16
  %v1984 = vld [vmem:[%s1983] sm:$0xff]
  %v1985 = vld [vmem:[%s1983 + $0x8] sm:$0xf]
  %vm1986 = vcmask 97280
  %v1988 = vsel %vm1986, %v1917, 0
  %v1991 = vsel %vm1986, %v1918, 0
  %v1994 = vsel %vm1986, %v1919, 0
  %v1997 = vsel %vm1986, %v1920, 0
  %v2000 = vsel %vm1986, %v1921, 0
  %v2003 = vsel %vm1986, %v1922, 0
  %v2006 = vsel %vm1986, %v1923, 0
  %v2009 = vsel %vm1986, %v1924, 0
  %v2012 = vsel %vm1986, %v1925, 0
  %v2015 = vsel %vm1986, %v1926, 0
  %v2018 = vsel %vm1986, %v1927, 0
  %v2021 = vsel %vm1986, %v1928, 0
  %v2024 = vsel %vm1986, %v1929, 0
  %v2027 = vsel %vm1986, %v1930, 0
  %v2030 = vsel %vm1986, %v1931, 0
  %v2033 = vsel %vm1986, %v1932, 0
  %v2036 = vsel %vm1986, %v1933, 0
  %v2039 = vsel %vm1986, %v1934, 0
  %v2042 = vsel %vm1986, %v1935, 0
  %v2045 = vsel %vm1986, %v1936, 0
  %v2048 = vsel %vm1986, %v1937, 0
  %v2051 = vsel %vm1986, %v1938, 0
  %v2054 = vsel %vm1986, %v1939, 0
  %v2057 = vsel %vm1986, %v1940, 0
  %v2060 = vsel %vm1986, %v1941, 0
  %v2063 = vsel %vm1986, %v1942, 0
  %v2066 = vsel %vm1986, %v1943, 0
  %v2069 = vsel %vm1986, %v1944, 0
  %v2072 = vsel %vm1986, %v1945, 0
  %v2075 = vsel %vm1986, %v1946, 0
  %v2078 = vsel %vm1986, %v1947, 0
  %v2081 = vsel %vm1986, %v1948, 0
  %v2084 = vsel %vm1986, %v1949, 0
  %v2087 = vsel %vm1986, %v1950, 0
  %v2090 = vsel %vm1986, %v1951, 0
  %v2093 = vsel %vm1986, %v1952, 0
  %v2096 = vsel %vm1986, %v1953, 0
  %v2099 = vsel %vm1986, %v1954, 0
  %v2102 = vsel %vm1986, %v1955, 0
  %v2105 = vsel %vm1986, %v1956, 0
  %v2108 = vsel %vm1986, %v1957, 0
  %v2111 = vsel %vm1986, %v1958, 0
  %v2114 = vsel %vm1986, %v1959, 0
  %v2117 = vsel %vm1986, %v1960, 0
  %v2120 = vsel %vm1986, %v1961, 0
  %v2123 = vsel %vm1986, %v1962, 0
  %v2126 = vsel %vm1986, %v1963, 0
  %v2129 = vsel %vm1986, %v1964, 0
  %v2132 = vsel %vm1986, %v1965, 0
  %v2135 = vsel %vm1986, %v1966, 0
  %v2138 = vsel %vm1986, %v1967, 0
  %v2141 = vsel %vm1986, %v1968, 0
  %v2144 = vsel %vm1986, %v1969, 0
  %v2147 = vsel %vm1986, %v1970, 0
  %v2150 = vsel %vm1986, %v1971, 0
  %v2153 = vsel %vm1986, %v1972, 0
  %v2156 = vsel %vm1986, %v1973, 0
  %v2159 = vsel %vm1986, %v1974, 0
  %v2162 = vsel %vm1986, %v1975, 0
  %v2165 = vsel %vm1986, %v1976, 0
  %v2168 = vsel %vm1986, %v1977, 0
  %v2171 = vsel %vm1986, %v1978, 0
  %v2174 = vsel %vm1986, %v1979, 0
  %v2177 = vsel %vm1986, %v1980, 0
  %vm2179 = vcmask 1043456
  %v2181 = vsel %vm2179, %v1985, 0
  %2183 = vmatprep.subr.mxu0 0.0
  %2184 = vmatpush1.msra.mxu0 %v1984
  %2185 = vmatprep.subr.mxu0 0.0
  %2186 = vmatpush1.msra.mxu0 %v2181
  %2187 = vmatprep.subr.mxu0 0.0
  %2188 = vmatpush1.msra.mxu0 0.0
  %2189 = vmatprep.subr.mxu0 0.0
  %2190 = vmatpush1.msra.mxu0 0.0
  %2191 = vmatprep.subr.mxu0 0.0
  %2192 = vmatpush1.msra.mxu0 0.0
  %2193 = vmatprep.subr.mxu0 0.0
  %2194 = vmatpush1.msra.mxu0 0.0
  %2195 = vmatprep.subr.mxu0 0.0
  %2196 = vmatpush1.msra.mxu0 0.0
  %2197 = vmatprep.subr.mxu0 0.0
  %2198 = vmatpush1.msra.mxu0 0.0
  %2199 = vmatprep.subr.mxu0 0.0
  %2200 = vmatpush1.msra.mxu0 0.0
  %2201 = vmatprep.subr.mxu0 0.0
  %2202 = vmatpush1.msra.mxu0 0.0
  %2203 = vmatprep.subr.mxu0 0.0
  %2204 = vmatpush1.msra.mxu0 0.0
  %2205 = vmatprep.subr.mxu0 0.0
  %2206 = vmatpush1.msra.mxu0 0.0
  %2207 = vmatprep.subr.mxu0 0.0
  %2208 = vmatpush1.msra.mxu0 0.0
  %2209 = vmatprep.subr.mxu0 0.0
  %2210 = vmatpush1.msra.mxu0 0.0
  %2211 = vmatprep.subr.mxu0 0.0
  %2212 = vmatpush1.msra.mxu0 0.0
  %2213 = vmatprep.subr.mxu0 0.0
  %2214 = vmatpush1.msra.mxu0 0.0
  %2215 = vmatprep.subr.mxu0 0.0
  %2216 = vmatpush1.msra.mxu0 0.0
  %2217 = vmatprep.subr.mxu0 0.0
  %2218 = vmatpush1.msra.mxu0 0.0
  %2219 = vmatprep.subr.mxu0 0.0
  %2220 = vmatpush1.msra.mxu0 0.0
  %2221 = vmatprep.subr.mxu0 0.0
  %2222 = vmatpush1.msra.mxu0 0.0
  %2223 = vmatprep.subr.mxu0 0.0
  %2224 = vmatpush1.msra.mxu0 0.0
  %2225 = vmatprep.subr.mxu0 0.0
  %2226 = vmatpush1.msra.mxu0 0.0
  %2227 = vmatprep.subr.mxu0 0.0
  %2228 = vmatpush1.msra.mxu0 0.0
  %2229 = vmatprep.subr.mxu0 0.0
  %2230 = vmatpush1.msra.mxu0 0.0
  %2231 = vmatprep.subr.mxu0 0.0
  %2232 = vmatpush1.msra.mxu0 0.0
  %2233 = vmatprep.subr.mxu0 0.0
  %2234 = vmatpush1.msra.mxu0 0.0
  %2235 = vmatprep.subr.mxu0 0.0
  %2236 = vmatpush1.msra.mxu0 0.0
  %2237 = vmatprep.subr.mxu0 0.0
  %2238 = vmatpush1.msra.mxu0 0.0
  %2239 = vmatprep.subr.mxu0 0.0
  %2240 = vmatpush1.msra.mxu0 0.0
  %2241 = vmatprep.subr.mxu0 0.0
  %2242 = vmatpush1.msra.mxu0 0.0
  %2243 = vmatprep.subr.mxu0 0.0
  %2244 = vmatpush1.msra.mxu0 0.0
  %2245 = vmatprep.subr.mxu0 0.0
  %2246 = vmatpush1.msra.mxu0 0.0
  %2247 = vmatprep.mubr.f32.mxu0 0.0
  %2248 = vmatmul.mubr.f32.gmra.mrb[0].mxu0 %v1988
  %v2249 = vpop.f32.mrb[0].mxu0
  %v2250 = vadd.f32 0.0, %v2249
  %v2251 = vpop.f32.mrb[0].mxu0
  %2252 = vmatprep.mubr.f32.mxu0 0.0
  %2253 = vmatmul.mubr.f32.gmra.mrb[0].mxu0 %v1991
  %v2254 = vpop.f32.mrb[0].mxu0
  %v2255 = vadd.f32 0.0, %v2254
  %v2256 = vpop.f32.mrb[0].mxu0
  %2257 = vmatprep.mubr.f32.mxu0 0.0
  %2258 = vmatmul.mubr.f32.gmra.mrb[0].mxu0 %v1994
  %v2259 = vpop.f32.mrb[0].mxu0
  %v2260 = vadd.f32 0.0, %v2259
  %v2261 = vpop.f32.mrb[0].mxu0
  %2262 = vmatprep.mubr.f32.mxu0 0.0
  %2263 = vmatmul.mubr.f32.gmra.mrb[0].mxu0 %v1997
  %v2264 = vpop.f32.mrb[0].mxu0
  %v2265 = vadd.f32 0.0, %v2264
  %v2266 = vpop.f32.mrb[0].mxu0
  %2267 = vmatprep.mubr.f32.mxu0 0.0
  %2268 = vmatmul.mubr.f32.gmra.mrb[0].mxu0 %v2000
  %v2269 = vpop.f32.mrb[0].mxu0
  %v2270 = vadd.f32 0.0, %v2269
  %v2271 = vpop.f32.mrb[0].mxu0
  %2272 = vmatprep.mubr.f32.mxu0 0.0
  %2273 = vmatmul.mubr.f32.gmra.mrb[0].mxu0 %v2003
  %v2274 = vpop.f32.mrb[0].mxu0
  %v2275 = vadd.f32 0.0, %v2274
  %v2276 = vpop.f32.mrb[0].mxu0
  %2277 = vmatprep.mubr.f32.mxu0 0.0
  %2278 = vmatmul.mubr.f32.gmra.mrb[0].mxu0 %v2006
  %v2279 = vpop.f32.mrb[0].mxu0
  %v2280 = vadd.f32 0.0, %v2279
  %v2281 = vpop.f32.mrb[0].mxu0
  %2282 = vmatprep.mubr.f32.mxu0 0.0
  %2283 = vmatmul.mubr.f32.gmra.mrb[0].mxu0 %v2009
  %v2284 = vpop.f32.mrb[0].mxu0
  %v2285 = vadd.f32 0.0, %v2284
  %v2286 = vpop.f32.mrb[0].mxu0
  %2287 = vmatprep.mubr.f32.mxu0 0.0
  %2288 = vmatmul.mubr.f32.gmra.mrb[0].mxu0 %v2012
  %v2289 = vpop.f32.mrb[0].mxu0
  %v2290 = vadd.f32 0.0, %v2289
  %v2291 = vpop.f32.mrb[0].mxu0
  %2292 = vmatprep.mubr.f32.mxu0 0.0
  %2293 = vmatmul.mubr.f32.gmra.mrb[0].mxu0 %v2015
  %v2294 = vpop.f32.mrb[0].mxu0
  %v2295 = vadd.f32 0.0, %v2294
  %v2296 = vpop.f32.mrb[0].mxu0
  %2297 = vmatprep.mubr.f32.mxu0 0.0
  %2298 = vmatmul.mubr.f32.gmra.mrb[0].mxu0 %v2018
  %v2299 = vpop.f32.mrb[0].mxu0
  %v2300 = vadd.f32 0.0, %v2299
  %v2301 = vpop.f32.mrb[0].mxu0
  %2302 = vmatprep.mubr.f32.mxu0 0.0
  %2303 = vmatmul.mubr.f32.gmra.mrb[0].mxu0 %v2021
  %v2304 = vpop.f32.mrb[0].mxu0
  %v2305 = vadd.f32 0.0, %v2304
  %v2306 = vpop.f32.mrb[0].mxu0
  %2307 = vmatprep.mubr.f32.mxu0 0.0
  %2308 = vmatmul.mubr.f32.gmra.mrb[0].mxu0 %v2024
  %v2309 = vpop.f32.mrb[0].mxu0
  %v2310 = vadd.f32 0.0, %v2309
  %v2311 = vpop.f32.mrb[0].mxu0
  %2312 = vmatprep.mubr.f32.mxu0 0.0
  %2313 = vmatmul.mubr.f32.gmra.mrb[0].mxu0 %v2027
  %v2314 = vpop.f32.mrb[0].mxu0
  %v2315 = vadd.f32 0.0, %v2314
  %v2316 = vpop.f32.mrb[0].mxu0
  %2317 = vmatprep.mubr.f32.mxu0 0.0
  %2318 = vmatmul.mubr.f32.gmra.mrb[0].mxu0 %v2030
  %v2319 = vpop.f32.mrb[0].mxu0
  %v2320 = vadd.f32 0.0, %v2319
  %v2321 = vpop.f32.mrb[0].mxu0
  %2322 = vmatprep.mubr.f32.mxu0 0.0
  %2323 = vmatmul.mubr.f32.gmra.mrb[0].mxu0 %v2033
  %v2324 = vpop.f32.mrb[0].mxu0
  %v2325 = vadd.f32 0.0, %v2324
  %v2326 = vpop.f32.mrb[0].mxu0
  %2327 = vmatprep.mubr.f32.mxu0 0.0
  %2328 = vmatmul.mubr.f32.gmra.mrb[0].mxu0 %v2036
  %v2329 = vpop.f32.mrb[0].mxu0
  %v2330 = vadd.f32 0.0, %v2329
  %v2331 = vpop.f32.mrb[0].mxu0
  %2332 = vmatprep.mubr.f32.mxu0 0.0
  %2333 = vmatmul.mubr.f32.gmra.mrb[0].mxu0 %v2039
  %v2334 = vpop.f32.mrb[0].mxu0
  %v2335 = vadd.f32 0.0, %v2334
  %v2336 = vpop.f32.mrb[0].mxu0
  %2337 = vmatprep.mubr.f32.mxu0 0.0
  %2338 = vmatmul.mubr.f32.gmra.mrb[0].mxu0 %v2042
  %v2339 = vpop.f32.mrb[0].mxu0
  %v2340 = vadd.f32 0.0, %v2339
  %v2341 = vpop.f32.mrb[0].mxu0
  %2342 = vmatprep.mubr.f32.mxu0 0.0
  %2343 = vmatmul.mubr.f32.gmra.mrb[0].mxu0 %v2045
  %v2344 = vpop.f32.mrb[0].mxu0
  %v2345 = vadd.f32 0.0, %v2344
  %v2346 = vpop.f32.mrb[0].mxu0
  %2347 = vmatprep.mubr.f32.mxu0 0.0
  %2348 = vmatmul.mubr.f32.gmra.mrb[0].mxu0 %v2048
  %v2349 = vpop.f32.mrb[0].mxu0
  %v2350 = vadd.f32 0.0, %v2349
  %v2351 = vpop.f32.mrb[0].mxu0
  %2352 = vmatprep.mubr.f32.mxu0 0.0
  %2353 = vmatmul.mubr.f32.gmra.mrb[0].mxu0 %v2051
  %v2354 = vpop.f32.mrb[0].mxu0
  %v2355 = vadd.f32 0.0, %v2354
  %v2356 = vpop.f32.mrb[0].mxu0
  %2357 = vmatprep.mubr.f32.mxu0 0.0
  %2358 = vmatmul.mubr.f32.gmra.mrb[0].mxu0 %v2054
  %v2359 = vpop.f32.mrb[0].mxu0
  %v2360 = vadd.f32 0.0, %v2359
  %v2361 = vpop.f32.mrb[0].mxu0
  %2362 = vmatprep.mubr.f32.mxu0 0.0
  %2363 = vmatmul.mubr.f32.gmra.mrb[0].mxu0 %v2057
  %v2364 = vpop.f32.mrb[0].mxu0
  %v2365 = vadd.f32 0.0, %v2364
  %v2366 = vpop.f32.mrb[0].mxu0
  %2367 = vmatprep.mubr.f32.mxu0 0.0
  %2368 = vmatmul.mubr.f32.gmra.mrb[0].mxu0 %v2060
  %v2369 = vpop.f32.mrb[0].mxu0
  %v2370 = vadd.f32 0.0, %v2369
  %v2371 = vpop.f32.mrb[0].mxu0
  %2372 = vmatprep.mubr.f32.mxu0 0.0
  %2373 = vmatmul.mubr.f32.gmra.mrb[0].mxu0 %v2063
  %v2374 = vpop.f32.mrb[0].mxu0
  %v2375 = vadd.f32 0.0, %v2374
  %v2376 = vpop.f32.mrb[0].mxu0
  %2377 = vmatprep.mubr.f32.mxu0 0.0
  %2378 = vmatmul.mubr.f32.gmra.mrb[0].mxu0 %v2066
  %v2379 = vpop.f32.mrb[0].mxu0
  %v2380 = vadd.f32 0.0, %v2379
  %v2381 = vpop.f32.mrb[0].mxu0
  %2382 = vmatprep.mubr.f32.mxu0 0.0
  %2383 = vmatmul.mubr.f32.gmra.mrb[0].mxu0 %v2069
  %v2384 = vpop.f32.mrb[0].mxu0
  %v2385 = vadd.f32 0.0, %v2384
  %v2386 = vpop.f32.mrb[0].mxu0
  %2387 = vmatprep.mubr.f32.mxu0 0.0
  %2388 = vmatmul.mubr.f32.gmra.mrb[0].mxu0 %v2072
  %v2389 = vpop.f32.mrb[0].mxu0
  %v2390 = vadd.f32 0.0, %v2389
  %v2391 = vpop.f32.mrb[0].mxu0
  %2392 = vmatprep.mubr.f32.mxu0 0.0
  %2393 = vmatmul.mubr.f32.gmra.mrb[0].mxu0 %v2075
  %v2394 = vpop.f32.mrb[0].mxu0
  %v2395 = vadd.f32 0.0, %v2394
  %v2396 = vpop.f32.mrb[0].mxu0
  %2397 = vmatprep.mubr.f32.mxu0 0.0
  %2398 = vmatmul.mubr.f32.gmra.mrb[0].mxu0 %v2078
  %v2399 = vpop.f32.mrb[0].mxu0
  %v2400 = vadd.f32 0.0, %v2399
  %v2401 = vpop.f32.mrb[0].mxu0
  %2402 = vmatprep.mubr.f32.mxu0 0.0
  %2403 = vmatmul.mubr.f32.gmra.mrb[0].mxu0 %v2081
  %v2404 = vpop.f32.mrb[0].mxu0
  %v2405 = vadd.f32 0.0, %v2404
  %v2406 = vpop.f32.mrb[0].mxu0
  %2407 = vmatprep.mubr.f32.mxu0 0.0
  %2408 = vmatmul.mubr.f32.gmra.mrb[0].mxu0 %v2084
  %v2409 = vpop.f32.mrb[0].mxu0
  %v2410 = vadd.f32 0.0, %v2409
  %v2411 = vpop.f32.mrb[0].mxu0
  %2412 = vmatprep.mubr.f32.mxu0 0.0
  %2413 = vmatmul.mubr.f32.gmra.mrb[0].mxu0 %v2087
  %v2414 = vpop.f32.mrb[0].mxu0
  %v2415 = vadd.f32 0.0, %v2414
  %v2416 = vpop.f32.mrb[0].mxu0
  %2417 = vmatprep.mubr.f32.mxu0 0.0
  %2418 = vmatmul.mubr.f32.gmra.mrb[0].mxu0 %v2090
  %v2419 = vpop.f32.mrb[0].mxu0
  %v2420 = vadd.f32 0.0, %v2419
  %v2421 = vpop.f32.mrb[0].mxu0
  %2422 = vmatprep.mubr.f32.mxu0 0.0
  %2423 = vmatmul.mubr.f32.gmra.mrb[0].mxu0 %v2093
  %v2424 = vpop.f32.mrb[0].mxu0
  %v2425 = vadd.f32 0.0, %v2424
  %v2426 = vpop.f32.mrb[0].mxu0
  %2427 = vmatprep.mubr.f32.mxu0 0.0
  %2428 = vmatmul.mubr.f32.gmra.mrb[0].mxu0 %v2096
  %v2429 = vpop.f32.mrb[0].mxu0
  %v2430 = vadd.f32 0.0, %v2429
  %v2431 = vpop.f32.mrb[0].mxu0
  %2432 = vmatprep.mubr.f32.mxu0 0.0
  %2433 = vmatmul.mubr.f32.gmra.mrb[0].mxu0 %v2099
  %v2434 = vpop.f32.mrb[0].mxu0
  %v2435 = vadd.f32 0.0, %v2434
  %v2436 = vpop.f32.mrb[0].mxu0
  %2437 = vmatprep.mubr.f32.mxu0 0.0
  %2438 = vmatmul.mubr.f32.gmra.mrb[0].mxu0 %v2102
  %v2439 = vpop.f32.mrb[0].mxu0
  %v2440 = vadd.f32 0.0, %v2439
  %v2441 = vpop.f32.mrb[0].mxu0
  %2442 = vmatprep.mubr.f32.mxu0 0.0
  %2443 = vmatmul.mubr.f32.gmra.mrb[0].mxu0 %v2105
  %v2444 = vpop.f32.mrb[0].mxu0
  %v2445 = vadd.f32 0.0, %v2444
  %v2446 = vpop.f32.mrb[0].mxu0
  %2447 = vmatprep.mubr.f32.mxu0 0.0
  %2448 = vmatmul.mubr.f32.gmra.mrb[0].mxu0 %v2108
  %v2449 = vpop.f32.mrb[0].mxu0
  %v2450 = vadd.f32 0.0, %v2449
  %v2451 = vpop.f32.mrb[0].mxu0
  %2452 = vmatprep.mubr.f32.mxu0 0.0
  %2453 = vmatmul.mubr.f32.gmra.mrb[0].mxu0 %v2111
  %v2454 = vpop.f32.mrb[0].mxu0
  %v2455 = vadd.f32 0.0, %v2454
  %v2456 = vpop.f32.mrb[0].mxu0
  %2457 = vmatprep.mubr.f32.mxu0 0.0
  %2458 = vmatmul.mubr.f32.gmra.mrb[0].mxu0 %v2114
  %v2459 = vpop.f32.mrb[0].mxu0
  %v2460 = vadd.f32 0.0, %v2459
  %v2461 = vpop.f32.mrb[0].mxu0
  %2462 = vmatprep.mubr.f32.mxu0 0.0
  %2463 = vmatmul.mubr.f32.gmra.mrb[0].mxu0 %v2117
  %v2464 = vpop.f32.mrb[0].mxu0
  %v2465 = vadd.f32 0.0, %v2464
  %v2466 = vpop.f32.mrb[0].mxu0
  %2467 = vmatprep.mubr.f32.mxu0 0.0
  %2468 = vmatmul.mubr.f32.gmra.mrb[0].mxu0 %v2120
  %v2469 = vpop.f32.mrb[0].mxu0
  %v2470 = vadd.f32 0.0, %v2469
  %v2471 = vpop.f32.mrb[0].mxu0
  %2472 = vmatprep.mubr.f32.mxu0 0.0
  %2473 = vmatmul.mubr.f32.gmra.mrb[0].mxu0 %v2123
  %v2474 = vpop.f32.mrb[0].mxu0
  %v2475 = vadd.f32 0.0, %v2474
  %v2476 = vpop.f32.mrb[0].mxu0
  %2477 = vmatprep.mubr.f32.mxu0 0.0
  %2478 = vmatmul.mubr.f32.gmra.mrb[0].mxu0 %v2126
  %v2479 = vpop.f32.mrb[0].mxu0
  %v2480 = vadd.f32 0.0, %v2479
  %v2481 = vpop.f32.mrb[0].mxu0
  %2482 = vmatprep.mubr.f32.mxu0 0.0
  %2483 = vmatmul.mubr.f32.gmra.mrb[0].mxu0 %v2129
  %v2484 = vpop.f32.mrb[0].mxu0
  %v2485 = vadd.f32 0.0, %v2484
  %v2486 = vpop.f32.mrb[0].mxu0
  %2487 = vmatprep.mubr.f32.mxu0 0.0
  %2488 = vmatmul.mubr.f32.gmra.mrb[0].mxu0 %v2132
  %v2489 = vpop.f32.mrb[0].mxu0
  %v2490 = vadd.f32 0.0, %v2489
  %v2491 = vpop.f32.mrb[0].mxu0
  %2492 = vmatprep.mubr.f32.mxu0 0.0
  %2493 = vmatmul.mubr.f32.gmra.mrb[0].mxu0 %v2135
  %v2494 = vpop.f32.mrb[0].mxu0
  %v2495 = vadd.f32 0.0, %v2494
  %v2496 = vpop.f32.mrb[0].mxu0
  %2497 = vmatprep.mubr.f32.mxu0 0.0
  %2498 = vmatmul.mubr.f32.gmra.mrb[0].mxu0 %v2138
  %v2499 = vpop.f32.mrb[0].mxu0
  %v2500 = vadd.f32 0.0, %v2499
  %v2501 = vpop.f32.mrb[0].mxu0
  %2502 = vmatprep.mubr.f32.mxu0 0.0
  %2503 = vmatmul.mubr.f32.gmra.mrb[0].mxu0 %v2141
  %v2504 = vpop.f32.mrb[0].mxu0
  %v2505 = vadd.f32 0.0, %v2504
  %v2506 = vpop.f32.mrb[0].mxu0
  %2507 = vmatprep.mubr.f32.mxu0 0.0
  %2508 = vmatmul.mubr.f32.gmra.mrb[0].mxu0 %v2144
  %v2509 = vpop.f32.mrb[0].mxu0
  %v2510 = vadd.f32 0.0, %v2509
  %v2511 = vpop.f32.mrb[0].mxu0
  %2512 = vmatprep.mubr.f32.mxu0 0.0
  %2513 = vmatmul.mubr.f32.gmra.mrb[0].mxu0 %v2147
  %v2514 = vpop.f32.mrb[0].mxu0
  %v2515 = vadd.f32 0.0, %v2514
  %v2516 = vpop.f32.mrb[0].mxu0
  %2517 = vmatprep.mubr.f32.mxu0 0.0
  %2518 = vmatmul.mubr.f32.gmra.mrb[0].mxu0 %v2150
  %v2519 = vpop.f32.mrb[0].mxu0
  %v2520 = vadd.f32 0.0, %v2519
  %v2521 = vpop.f32.mrb[0].mxu0
  %2522 = vmatprep.mubr.f32.mxu0 0.0
  %2523 = vmatmul.mubr.f32.gmra.mrb[0].mxu0 %v2153
  %v2524 = vpop.f32.mrb[0].mxu0
  %v2525 = vadd.f32 0.0, %v2524
  %v2526 = vpop.f32.mrb[0].mxu0
  %2527 = vmatprep.mubr.f32.mxu0 0.0
  %2528 = vmatmul.mubr.f32.gmra.mrb[0].mxu0 %v2156
  %v2529 = vpop.f32.mrb[0].mxu0
  %v2530 = vadd.f32 0.0, %v2529
  %v2531 = vpop.f32.mrb[0].mxu0
  %2532 = vmatprep.mubr.f32.mxu0 0.0
  %2533 = vmatmul.mubr.f32.gmra.mrb[0].mxu0 %v2159
  %v2534 = vpop.f32.mrb[0].mxu0
  %v2535 = vadd.f32 0.0, %v2534
  %v2536 = vpop.f32.mrb[0].mxu0
  %2537 = vmatprep.mubr.f32.mxu0 0.0
  %2538 = vmatmul.mubr.f32.gmra.mrb[0].mxu0 %v2162
  %v2539 = vpop.f32.mrb[0].mxu0
  %v2540 = vadd.f32 0.0, %v2539
  %v2541 = vpop.f32.mrb[0].mxu0
  %2542 = vmatprep.mubr.f32.mxu0 0.0
  %2543 = vmatmul.mubr.f32.gmra.mrb[0].mxu0 %v2165
  %v2544 = vpop.f32.mrb[0].mxu0
  %v2545 = vadd.f32 0.0, %v2544
  %v2546 = vpop.f32.mrb[0].mxu0
  %2547 = vmatprep.mubr.f32.mxu0 0.0
  %2548 = vmatmul.mubr.f32.gmra.mrb[0].mxu0 %v2168
  %v2549 = vpop.f32.mrb[0].mxu0
  %v2550 = vadd.f32 0.0, %v2549
  %v2551 = vpop.f32.mrb[0].mxu0
  %2552 = vmatprep.mubr.f32.mxu0 0.0
  %2553 = vmatmul.mubr.f32.gmra.mrb[0].mxu0 %v2171
  %v2554 = vpop.f32.mrb[0].mxu0
  %v2555 = vadd.f32 0.0, %v2554
  %v2556 = vpop.f32.mrb[0].mxu0
  %2557 = vmatprep.mubr.f32.mxu0 0.0
  %2558 = vmatmul.mubr.f32.gmra.mrb[0].mxu0 %v2174
  %v2559 = vpop.f32.mrb[0].mxu0
  %v2560 = vadd.f32 0.0, %v2559
  %v2561 = vpop.f32.mrb[0].mxu0
  %2562 = vmatprep.mubr.f32.mxu0 0.0
  %2563 = vmatmul.mubr.f32.gmra.mrb[0].mxu0 %v2177
  %v2564 = vpop.f32.mrb[0].mxu0
  %v2565 = vadd.f32 0.0, %v2564
  %v2566 = vpop.f32.mrb[0].mxu0
  %2567 = vdwg.mxu0
  %v2569 = vsel %vm1986, 0.0, 0
  %v2572 = vsel %vm2179, %v1982, 0
  %2574 = vmatprep.subr.mxu0 0.0
  %2575 = vmatpush1.msra.mxu0 %v1981
  %2576 = vmatprep.subr.mxu0 0.0
  %2577 = vmatpush1.msra.mxu0 %v2572
  %2578 = vmatprep.subr.mxu0 0.0
  %2579 = vmatpush1.msra.mxu0 0.0
  %2580 = vmatprep.subr.mxu0 0.0
  %2581 = vmatpush1.msra.mxu0 0.0
  %2582 = vmatprep.subr.mxu0 0.0
  %2583 = vmatpush1.msra.mxu0 0.0
  %2584 = vmatprep.subr.mxu0 0.0
  %2585 = vmatpush1.msra.mxu0 0.0
  %2586 = vmatprep.subr.mxu0 0.0
  %2587 = vmatpush1.msra.mxu0 0.0
  %2588 = vmatprep.subr.mxu0 0.0
  %2589 = vmatpush1.msra.mxu0 0.0
  %2590 = vmatprep.subr.mxu0 0.0
  %2591 = vmatpush1.msra.mxu0 0.0
  %2592 = vmatprep.subr.mxu0 0.0
  %2593 = vmatpush1.msra.mxu0 0.0
  %2594 = vmatprep.subr.mxu0 0.0
  %2595 = vmatpush1.msra.mxu0 0.0
  %2596 = vmatprep.subr.mxu0 0.0
  %2597 = vmatpush1.msra.mxu0 0.0
  %2598 = vmatprep.subr.mxu0 0.0
  %2599 = vmatpush1.msra.mxu0 0.0
  %2600 = vmatprep.subr.mxu0 0.0
  %2601 = vmatpush1.msra.mxu0 0.0
  %2602 = vmatprep.subr.mxu0 0.0
  %2603 = vmatpush1.msra.mxu0 0.0
  %2604 = vmatprep.subr.mxu0 0.0
  %2605 = vmatpush1.msra.mxu0 0.0
  %2606 = vmatprep.subr.mxu0 0.0
  %2607 = vmatpush1.msra.mxu0 0.0
  %2608 = vmatprep.subr.mxu0 0.0
  %2609 = vmatpush1.msra.mxu0 0.0
  %2610 = vmatprep.subr.mxu0 0.0
  %2611 = vmatpush1.msra.mxu0 0.0
  %2612 = vmatprep.subr.mxu0 0.0
  %2613 = vmatpush1.msra.mxu0 0.0
  %2614 = vmatprep.subr.mxu0 0.0
  %2615 = vmatpush1.msra.mxu0 0.0
  %2616 = vmatprep.subr.mxu0 0.0
  %2617 = vmatpush1.msra.mxu0 0.0
  %2618 = vmatprep.subr.mxu0 0.0
  %2619 = vmatpush1.msra.mxu0 0.0
  %2620 = vmatprep.subr.mxu0 0.0
  %2621 = vmatpush1.msra.mxu0 0.0
  %2622 = vmatprep.subr.mxu0 0.0
  %2623 = vmatpush1.msra.mxu0 0.0
  %2624 = vmatprep.subr.mxu0 0.0
  %2625 = vmatpush1.msra.mxu0 0.0
  %2626 = vmatprep.subr.mxu0 0.0
  %2627 = vmatpush1.msra.mxu0 0.0
  %2628 = vmatprep.subr.mxu0 0.0
  %2629 = vmatpush1.msra.mxu0 0.0
  %2630 = vmatprep.subr.mxu0 0.0
  %2631 = vmatpush1.msra.mxu0 0.0
  %2632 = vmatprep.subr.mxu0 0.0
  %2633 = vmatpush1.msra.mxu0 0.0
  %2634 = vmatprep.subr.mxu0 0.0
  %2635 = vmatpush1.msra.mxu0 0.0
  %2636 = vmatprep.subr.mxu0 0.0
  %2637 = vmatpush1.msra.mxu0 0.0
  %2638 = vmatprep.mubr.f32.mxu0 0.0
  %2639 = vmatmul.mubr.f32.gmra.mrb[0].mxu0 %v2569
  %v2640 = vpop.f32.mrb[0].mxu0
  %v2641 = vadd.f32 %v2250, %v2640
  %v2642 = vpop.f32.mrb[0].mxu0
  %2643 = vmatprep.mubr.f32.mxu0 0.0
  %2644 = vmatmul.mubr.f32.gmra.mrb[0].mxu0 %v2569
  %v2645 = vpop.f32.mrb[0].mxu0
  %v2646 = vadd.f32 %v2255, %v2645
  %v2647 = vpop.f32.mrb[0].mxu0
  %2648 = vmatprep.mubr.f32.mxu0 0.0
  %2649 = vmatmul.mubr.f32.gmra.mrb[0].mxu0 %v1988
  %v2650 = vpop.f32.mrb[0].mxu0
  %v2651 = vadd.f32 %v2260, %v2650
  %v2652 = vpop.f32.mrb[0].mxu0
  %2653 = vmatprep.mubr.f32.mxu0 0.0
  %2654 = vmatmul.mubr.f32.gmra.mrb[0].mxu0 %v1991
  %v2655 = vpop.f32.mrb[0].mxu0
  %v2656 = vadd.f32 %v2265, %v2655
  %v2657 = vpop.f32.mrb[0].mxu0
  %2658 = vmatprep.mubr.f32.mxu0 0.0
  %2659 = vmatmul.mubr.f32.gmra.mrb[0].mxu0 %v1994
  %v2660 = vpop.f32.mrb[0].mxu0
  %v2661 = vadd.f32 %v2270, %v2660
  %v2662 = vpop.f32.mrb[0].mxu0
  %2663 = vmatprep.mubr.f32.mxu0 0.0
  %2664 = vmatmul.mubr.f32.gmra.mrb[0].mxu0 %v1997
  %v2665 = vpop.f32.mrb[0].mxu0
  %v2666 = vadd.f32 %v2275, %v2665
  %v2667 = vpop.f32.mrb[0].mxu0
  %2668 = vmatprep.mubr.f32.mxu0 0.0
  %2669 = vmatmul.mubr.f32.gmra.mrb[0].mxu0 %v2000
  %v2670 = vpop.f32.mrb[0].mxu0
  %v2671 = vadd.f32 %v2280, %v2670
  %v2672 = vpop.f32.mrb[0].mxu0
  %2673 = vmatprep.mubr.f32.mxu0 0.0
  %2674 = vmatmul.mubr.f32.gmra.mrb[0].mxu0 %v2003
  %v2675 = vpop.f32.mrb[0].mxu0
  %v2676 = vadd.f32 %v2285, %v2675
  %v2677 = vpop.f32.mrb[0].mxu0
  %2678 = vmatprep.mubr.f32.mxu0 0.0
  %2679 = vmatmul.mubr.f32.gmra.mrb[0].mxu0 %v2006
  %v2680 = vpop.f32.mrb[0].mxu0
  %v2681 = vadd.f32 %v2290, %v2680
  %v2682 = vpop.f32.mrb[0].mxu0
  %2683 = vmatprep.mubr.f32.mxu0 0.0
  %2684 = vmatmul.mubr.f32.gmra.mrb[0].mxu0 %v2009
  %v2685 = vpop.f32.mrb[0].mxu0
  %v2686 = vadd.f32 %v2295, %v2685
  %v2687 = vpop.f32.mrb[0].mxu0
  %2688 = vmatprep.mubr.f32.mxu0 0.0
  %2689 = vmatmul.mubr.f32.gmra.mrb[0].mxu0 %v2012
  %v2690 = vpop.f32.mrb[0].mxu0
  %v2691 = vadd.f32 %v2300, %v2690
  %v2692 = vpop.f32.mrb[0].mxu0
  %2693 = vmatprep.mubr.f32.mxu0 0.0
  %2694 = vmatmul.mubr.f32.gmra.mrb[0].mxu0 %v2015
  %v2695 = vpop.f32.mrb[0].mxu0
  %v2696 = vadd.f32 %v2305, %v2695
  %v2697 = vpop.f32.mrb[0].mxu0
  %2698 = vmatprep.mubr.f32.mxu0 0.0
  %2699 = vmatmul.mubr.f32.gmra.mrb[0].mxu0 %v2018
  %v2700 = vpop.f32.mrb[0].mxu0
  %v2701 = vadd.f32 %v2310, %v2700
  %v2702 = vpop.f32.mrb[0].mxu0
  %2703 = vmatprep.mubr.f32.mxu0 0.0
  %2704 = vmatmul.mubr.f32.gmra.mrb[0].mxu0 %v2021
  %v2705 = vpop.f32.mrb[0].mxu0
  %v2706 = vadd.f32 %v2315, %v2705
  %v2707 = vpop.f32.mrb[0].mxu0
  %2708 = vmatprep.mubr.f32.mxu0 0.0
  %2709 = vmatmul.mubr.f32.gmra.mrb[0].mxu0 %v2024
  %v2710 = vpop.f32.mrb[0].mxu0
  %v2711 = vadd.f32 %v2320, %v2710
  %v2712 = vpop.f32.mrb[0].mxu0
  %2713 = vmatprep.mubr.f32.mxu0 0.0
  %2714 = vmatmul.mubr.f32.gmra.mrb[0].mxu0 %v2027
  %v2715 = vpop.f32.mrb[0].mxu0
  %v2716 = vadd.f32 %v2325, %v2715
  %v2717 = vpop.f32.mrb[0].mxu0
  %2718 = vmatprep.mubr.f32.mxu0 0.0
  %2719 = vmatmul.mubr.f32.gmra.mrb[0].mxu0 %v2030
  %v2720 = vpop.f32.mrb[0].mxu0
  %v2721 = vadd.f32 %v2330, %v2720
  %v2722 = vpop.f32.mrb[0].mxu0
  %2723 = vmatprep.mubr.f32.mxu0 0.0
  %2724 = vmatmul.mubr.f32.gmra.mrb[0].mxu0 %v2033
  %v2725 = vpop.f32.mrb[0].mxu0
  %v2726 = vadd.f32 %v2335, %v2725
  %v2727 = vpop.f32.mrb[0].mxu0
  %2728 = vmatprep.mubr.f32.mxu0 0.0
  %2729 = vmatmul.mubr.f32.gmra.mrb[0].mxu0 %v2036
  %v2730 = vpop.f32.mrb[0].mxu0
  %v2731 = vadd.f32 %v2340, %v2730
  %v2732 = vpop.f32.mrb[0].mxu0
  %2733 = vmatprep.mubr.f32.mxu0 0.0
  %2734 = vmatmul.mubr.f32.gmra.mrb[0].mxu0 %v2039
  %v2735 = vpop.f32.mrb[0].mxu0
  %v2736 = vadd.f32 %v2345, %v2735
  %v2737 = vpop.f32.mrb[0].mxu0
  %2738 = vmatprep.mubr.f32.mxu0 0.0
  %2739 = vmatmul.mubr.f32.gmra.mrb[0].mxu0 %v2042
  %v2740 = vpop.f32.mrb[0].mxu0
  %v2741 = vadd.f32 %v2350, %v2740
  %v2742 = vpop.f32.mrb[0].mxu0
  %2743 = vmatprep.mubr.f32.mxu0 0.0
  %2744 = vmatmul.mubr.f32.gmra.mrb[0].mxu0 %v2045
  %v2745 = vpop.f32.mrb[0].mxu0
  %v2746 = vadd.f32 %v2355, %v2745
  %v2747 = vpop.f32.mrb[0].mxu0
  %2748 = vmatprep.mubr.f32.mxu0 0.0
  %2749 = vmatmul.mubr.f32.gmra.mrb[0].mxu0 %v2048
  %v2750 = vpop.f32.mrb[0].mxu0
  %v2751 = vadd.f32 %v2360, %v2750
  %v2752 = vpop.f32.mrb[0].mxu0
  %2753 = vmatprep.mubr.f32.mxu0 0.0
  %2754 = vmatmul.mubr.f32.gmra.mrb[0].mxu0 %v2051
  %v2755 = vpop.f32.mrb[0].mxu0
  %v2756 = vadd.f32 %v2365, %v2755
  %v2757 = vpop.f32.mrb[0].mxu0
  %2758 = vmatprep.mubr.f32.mxu0 0.0
  %2759 = vmatmul.mubr.f32.gmra.mrb[0].mxu0 %v2054
  %v2760 = vpop.f32.mrb[0].mxu0
  %v2761 = vadd.f32 %v2370, %v2760
  %v2762 = vpop.f32.mrb[0].mxu0
  %2763 = vmatprep.mubr.f32.mxu0 0.0
  %2764 = vmatmul.mubr.f32.gmra.mrb[0].mxu0 %v2057
  %v2765 = vpop.f32.mrb[0].mxu0
  %v2766 = vadd.f32 %v2375, %v2765
  %v2767 = vpop.f32.mrb[0].mxu0
  %2768 = vmatprep.mubr.f32.mxu0 0.0
  %2769 = vmatmul.mubr.f32.gmra.mrb[0].mxu0 %v2060
  %v2770 = vpop.f32.mrb[0].mxu0
  %v2771 = vadd.f32 %v2380, %v2770
  %v2772 = vpop.f32.mrb[0].mxu0
  %2773 = vmatprep.mubr.f32.mxu0 0.0
  %2774 = vmatmul.mubr.f32.gmra.mrb[0].mxu0 %v2063
  %v2775 = vpop.f32.mrb[0].mxu0
  %v2776 = vadd.f32 %v2385, %v2775
  %v2777 = vpop.f32.mrb[0].mxu0
  %2778 = vmatprep.mubr.f32.mxu0 0.0
  %2779 = vmatmul.mubr.f32.gmra.mrb[0].mxu0 %v2066
  %v2780 = vpop.f32.mrb[0].mxu0
  %v2781 = vadd.f32 %v2390, %v2780
  %v2782 = vpop.f32.mrb[0].mxu0
  %2783 = vmatprep.mubr.f32.mxu0 0.0
  %2784 = vmatmul.mubr.f32.gmra.mrb[0].mxu0 %v2069
  %v2785 = vpop.f32.mrb[0].mxu0
  %v2786 = vadd.f32 %v2395, %v2785
  %v2787 = vpop.f32.mrb[0].mxu0
  %2788 = vmatprep.mubr.f32.mxu0 0.0
  %2789 = vmatmul.mubr.f32.gmra.mrb[0].mxu0 %v2072
  %v2790 = vpop.f32.mrb[0].mxu0
  %v2791 = vadd.f32 %v2400, %v2790
  %v2792 = vpop.f32.mrb[0].mxu0
  %2793 = vmatprep.mubr.f32.mxu0 0.0
  %2794 = vmatmul.mubr.f32.gmra.mrb[0].mxu0 %v2075
  %v2795 = vpop.f32.mrb[0].mxu0
  %v2796 = vadd.f32 %v2405, %v2795
  %v2797 = vpop.f32.mrb[0].mxu0
  %2798 = vmatprep.mubr.f32.mxu0 0.0
  %2799 = vmatmul.mubr.f32.gmra.mrb[0].mxu0 %v2569
  %v2800 = vpop.f32.mrb[0].mxu0
  %v2801 = vadd.f32 %v2410, %v2800
  %v2802 = vpop.f32.mrb[0].mxu0
  %2803 = vmatprep.mubr.f32.mxu0 0.0
  %2804 = vmatmul.mubr.f32.gmra.mrb[0].mxu0 %v2569
  %v2805 = vpop.f32.mrb[0].mxu0
  %v2806 = vadd.f32 %v2415, %v2805
  %v2807 = vpop.f32.mrb[0].mxu0
  %2808 = vmatprep.mubr.f32.mxu0 0.0
  %2809 = vmatmul.mubr.f32.gmra.mrb[0].mxu0 %v2084
  %v2810 = vpop.f32.mrb[0].mxu0
  %v2811 = vadd.f32 %v2420, %v2810
  %v2812 = vpop.f32.mrb[0].mxu0
  %2813 = vmatprep.mubr.f32.mxu0 0.0
  %2814 = vmatmul.mubr.f32.gmra.mrb[0].mxu0 %v2087
  %v2815 = vpop.f32.mrb[0].mxu0
  %v2816 = vadd.f32 %v2425, %v2815
  %v2817 = vpop.f32.mrb[0].mxu0
  %2818 = vmatprep.mubr.f32.mxu0 0.0
  %2819 = vmatmul.mubr.f32.gmra.mrb[0].mxu0 %v2090
  %v2820 = vpop.f32.mrb[0].mxu0
  %v2821 = vadd.f32 %v2430, %v2820
  %v2822 = vpop.f32.mrb[0].mxu0
  %2823 = vmatprep.mubr.f32.mxu0 0.0
  %2824 = vmatmul.mubr.f32.gmra.mrb[0].mxu0 %v2093
  %v2825 = vpop.f32.mrb[0].mxu0
  %v2826 = vadd.f32 %v2435, %v2825
  %v2827 = vpop.f32.mrb[0].mxu0
  %2828 = vmatprep.mubr.f32.mxu0 0.0
  %2829 = vmatmul.mubr.f32.gmra.mrb[0].mxu0 %v2096
  %v2830 = vpop.f32.mrb[0].mxu0
  %v2831 = vadd.f32 %v2440, %v2830
  %v2832 = vpop.f32.mrb[0].mxu0
  %2833 = vmatprep.mubr.f32.mxu0 0.0
  %2834 = vmatmul.mubr.f32.gmra.mrb[0].mxu0 %v2099
  %v2835 = vpop.f32.mrb[0].mxu0
  %v2836 = vadd.f32 %v2445, %v2835
  %v2837 = vpop.f32.mrb[0].mxu0
  %2838 = vmatprep.mubr.f32.mxu0 0.0
  %2839 = vmatmul.mubr.f32.gmra.mrb[0].mxu0 %v2102
  %v2840 = vpop.f32.mrb[0].mxu0
  %v2841 = vadd.f32 %v2450, %v2840
  %v2842 = vpop.f32.mrb[0].mxu0
  %2843 = vmatprep.mubr.f32.mxu0 0.0
  %2844 = vmatmul.mubr.f32.gmra.mrb[0].mxu0 %v2105
  %v2845 = vpop.f32.mrb[0].mxu0
  %v2846 = vadd.f32 %v2455, %v2845
  %v2847 = vpop.f32.mrb[0].mxu0
  %2848 = vmatprep.mubr.f32.mxu0 0.0
  %2849 = vmatmul.mubr.f32.gmra.mrb[0].mxu0 %v2108
  %v2850 = vpop.f32.mrb[0].mxu0
  %v2851 = vadd.f32 %v2460, %v2850
  %v2852 = vpop.f32.mrb[0].mxu0
  %2853 = vmatprep.mubr.f32.mxu0 0.0
  %2854 = vmatmul.mubr.f32.gmra.mrb[0].mxu0 %v2111
  %v2855 = vpop.f32.mrb[0].mxu0
  %v2856 = vadd.f32 %v2465, %v2855
  %v2857 = vpop.f32.mrb[0].mxu0
  %2858 = vmatprep.mubr.f32.mxu0 0.0
  %2859 = vmatmul.mubr.f32.gmra.mrb[0].mxu0 %v2114
  %v2860 = vpop.f32.mrb[0].mxu0
  %v2861 = vadd.f32 %v2470, %v2860
  %v2862 = vpop.f32.mrb[0].mxu0
  %2863 = vmatprep.mubr.f32.mxu0 0.0
  %2864 = vmatmul.mubr.f32.gmra.mrb[0].mxu0 %v2117
  %v2865 = vpop.f32.mrb[0].mxu0
  %v2866 = vadd.f32 %v2475, %v2865
  %v2867 = vpop.f32.mrb[0].mxu0
  %2868 = vmatprep.mubr.f32.mxu0 0.0
  %2869 = vmatmul.mubr.f32.gmra.mrb[0].mxu0 %v2120
  %v2870 = vpop.f32.mrb[0].mxu0
  %v2871 = vadd.f32 %v2480, %v2870
  %v2872 = vpop.f32.mrb[0].mxu0
  %2873 = vmatprep.mubr.f32.mxu0 0.0
  %2874 = vmatmul.mubr.f32.gmra.mrb[0].mxu0 %v2123
  %v2875 = vpop.f32.mrb[0].mxu0
  %v2876 = vadd.f32 %v2485, %v2875
  %v2877 = vpop.f32.mrb[0].mxu0
  %2878 = vmatprep.mubr.f32.mxu0 0.0
  %2879 = vmatmul.mubr.f32.gmra.mrb[0].mxu0 %v2126
  %v2880 = vpop.f32.mrb[0].mxu0
  %v2881 = vadd.f32 %v2490, %v2880
  %v2882 = vpop.f32.mrb[0].mxu0
  %2883 = vmatprep.mubr.f32.mxu0 0.0
  %2884 = vmatmul.mubr.f32.gmra.mrb[0].mxu0 %v2129
  %v2885 = vpop.f32.mrb[0].mxu0
  %v2886 = vadd.f32 %v2495, %v2885
  %v2887 = vpop.f32.mrb[0].mxu0
  %2888 = vmatprep.mubr.f32.mxu0 0.0
  %2889 = vmatmul.mubr.f32.gmra.mrb[0].mxu0 %v2132
  %v2890 = vpop.f32.mrb[0].mxu0
  %v2891 = vadd.f32 %v2500, %v2890
  %v2892 = vpop.f32.mrb[0].mxu0
  %2893 = vmatprep.mubr.f32.mxu0 0.0
  %2894 = vmatmul.mubr.f32.gmra.mrb[0].mxu0 %v2135
  %v2895 = vpop.f32.mrb[0].mxu0
  %v2896 = vadd.f32 %v2505, %v2895
  %v2897 = vpop.f32.mrb[0].mxu0
  %2898 = vmatprep.mubr.f32.mxu0 0.0
  %2899 = vmatmul.mubr.f32.gmra.mrb[0].mxu0 %v2138
  %v2900 = vpop.f32.mrb[0].mxu0
  %v2901 = vadd.f32 %v2510, %v2900
  %v2902 = vpop.f32.mrb[0].mxu0
  %2903 = vmatprep.mubr.f32.mxu0 0.0
  %2904 = vmatmul.mubr.f32.gmra.mrb[0].mxu0 %v2141
  %v2905 = vpop.f32.mrb[0].mxu0
  %v2906 = vadd.f32 %v2515, %v2905
  %v2907 = vpop.f32.mrb[0].mxu0
  %2908 = vmatprep.mubr.f32.mxu0 0.0
  %2909 = vmatmul.mubr.f32.gmra.mrb[0].mxu0 %v2144
  %v2910 = vpop.f32.mrb[0].mxu0
  %v2911 = vadd.f32 %v2520, %v2910
  %v2912 = vpop.f32.mrb[0].mxu0
  %2913 = vmatprep.mubr.f32.mxu0 0.0
  %2914 = vmatmul.mubr.f32.gmra.mrb[0].mxu0 %v2147
  %v2915 = vpop.f32.mrb[0].mxu0
  %v2916 = vadd.f32 %v2525, %v2915
  %v2917 = vpop.f32.mrb[0].mxu0
  %2918 = vmatprep.mubr.f32.mxu0 0.0
  %2919 = vmatmul.mubr.f32.gmra.mrb[0].mxu0 %v2150
  %v2920 = vpop.f32.mrb[0].mxu0
  %v2921 = vadd.f32 %v2530, %v2920
  %v2922 = vpop.f32.mrb[0].mxu0
  %2923 = vmatprep.mubr.f32.mxu0 0.0
  %2924 = vmatmul.mubr.f32.gmra.mrb[0].mxu0 %v2153
  %v2925 = vpop.f32.mrb[0].mxu0
  %v2926 = vadd.f32 %v2535, %v2925
  %v2927 = vpop.f32.mrb[0].mxu0
  %2928 = vmatprep.mubr.f32.mxu0 0.0
  %2929 = vmatmul.mubr.f32.gmra.mrb[0].mxu0 %v2156
  %v2930 = vpop.f32.mrb[0].mxu0
  %v2931 = vadd.f32 %v2540, %v2930
  %v2932 = vpop.f32.mrb[0].mxu0
  %2933 = vmatprep.mubr.f32.mxu0 0.0
  %2934 = vmatmul.mubr.f32.gmra.mrb[0].mxu0 %v2159
  %v2935 = vpop.f32.mrb[0].mxu0
  %v2936 = vadd.f32 %v2545, %v2935
  %v2937 = vpop.f32.mrb[0].mxu0
  %2938 = vmatprep.mubr.f32.mxu0 0.0
  %2939 = vmatmul.mubr.f32.gmra.mrb[0].mxu0 %v2162
  %v2940 = vpop.f32.mrb[0].mxu0
  %v2941 = vadd.f32 %v2550, %v2940
  %v2942 = vpop.f32.mrb[0].mxu0
  %2943 = vmatprep.mubr.f32.mxu0 0.0
  %2944 = vmatmul.mubr.f32.gmra.mrb[0].mxu0 %v2165
  %v2945 = vpop.f32.mrb[0].mxu0
  %v2946 = vadd.f32 %v2555, %v2945
  %v2947 = vpop.f32.mrb[0].mxu0
  %2948 = vmatprep.mubr.f32.mxu0 0.0
  %2949 = vmatmul.mubr.f32.gmra.mrb[0].mxu0 %v2168
  %v2950 = vpop.f32.mrb[0].mxu0
  %v2951 = vadd.f32 %v2560, %v2950
  %v2952 = vpop.f32.mrb[0].mxu0
  %2953 = vmatprep.mubr.f32.mxu0 0.0
  %2954 = vmatmul.mubr.f32.gmra.mrb[0].mxu0 %v2171
  %v2955 = vpop.f32.mrb[0].mxu0
  %v2956 = vadd.f32 %v2565, %v2955
  %v2957 = vpop.f32.mrb[0].mxu0
  %2958 = vdwg.mxu0
  %s2959 = scalar_lea.vmem %s4, 32
  %v2960 = vld [vmem:[%s2959] sm:$0xff]
  %v2961 = vld [vmem:[%s2959 + $0x8] sm:$0xf]
  %v2963 = vsel %vm2179, %v2961, 0
  %2965 = vmatprep.subr.mxu0 0.0
  %2966 = vmatpush1.msra.mxu0 %v2960
  %2967 = vmatprep.subr.mxu0 0.0
  %2968 = vmatpush1.msra.mxu0 %v2963
  %2969 = vmatprep.subr.mxu0 0.0
  %2970 = vmatpush1.msra.mxu0 0.0
  %2971 = vmatprep.subr.mxu0 0.0
  %2972 = vmatpush1.msra.mxu0 0.0
  %2973 = vmatprep.subr.mxu0 0.0
  %2974 = vmatpush1.msra.mxu0 0.0
  %2975 = vmatprep.subr.mxu0 0.0
  %2976 = vmatpush1.msra.mxu0 0.0
  %2977 = vmatprep.subr.mxu0 0.0
  %2978 = vmatpush1.msra.mxu0 0.0
  %2979 = vmatprep.subr.mxu0 0.0
  %2980 = vmatpush1.msra.mxu0 0.0
  %2981 = vmatprep.subr.mxu0 0.0
  %2982 = vmatpush1.msra.mxu0 0.0
  %2983 = vmatprep.subr.mxu0 0.0
  %2984 = vmatpush1.msra.mxu0 0.0
  %2985 = vmatprep.subr.mxu0 0.0
  %2986 = vmatpush1.msra.mxu0 0.0
  %2987 = vmatprep.subr.mxu0 0.0
  %2988 = vmatpush1.msra.mxu0 0.0
  %2989 = vmatprep.subr.mxu0 0.0
  %2990 = vmatpush1.msra.mxu0 0.0
  %2991 = vmatprep.subr.mxu0 0.0
  %2992 = vmatpush1.msra.mxu0 0.0
  %2993 = vmatprep.subr.mxu0 0.0
  %2994 = vmatpush1.msra.mxu0 0.0
  %2995 = vmatprep.subr.mxu0 0.0
  %2996 = vmatpush1.msra.mxu0 0.0
  %2997 = vmatprep.subr.mxu0 0.0
  %2998 = vmatpush1.msra.mxu0 0.0
  %2999 = vmatprep.subr.mxu0 0.0
  %3000 = vmatpush1.msra.mxu0 0.0
  %3001 = vmatprep.subr.mxu0 0.0
  %3002 = vmatpush1.msra.mxu0 0.0
  %3003 = vmatprep.subr.mxu0 0.0
  %3004 = vmatpush1.msra.mxu0 0.0
  %3005 = vmatprep.subr.mxu0 0.0
  %3006 = vmatpush1.msra.mxu0 0.0
  %3007 = vmatprep.subr.mxu0 0.0
  %3008 = vmatpush1.msra.mxu0 0.0
  %3009 = vmatprep.subr.mxu0 0.0
  %3010 = vmatpush1.msra.mxu0 0.0
  %3011 = vmatprep.subr.mxu0 0.0
  %3012 = vmatpush1.msra.mxu0 0.0
  %3013 = vmatprep.subr.mxu0 0.0
  %3014 = vmatpush1.msra.mxu0 0.0
  %3015 = vmatprep.subr.mxu0 0.0
  %3016 = vmatpush1.msra.mxu0 0.0
  %3017 = vmatprep.subr.mxu0 0.0
  %3018 = vmatpush1.msra.mxu0 0.0
  %3019 = vmatprep.subr.mxu0 0.0
  %3020 = vmatpush1.msra.mxu0 0.0
  %3021 = vmatprep.subr.mxu0 0.0
  %3022 = vmatpush1.msra.mxu0 0.0
  %3023 = vmatprep.subr.mxu0 0.0
  %3024 = vmatpush1.msra.mxu0 0.0
  %3025 = vmatprep.subr.mxu0 0.0
  %3026 = vmatpush1.msra.mxu0 0.0
  %3027 = vmatprep.subr.mxu0 0.0
  %3028 = vmatpush1.msra.mxu0 0.0
  %3029 = vmatprep.mubr.f32.mxu0 0.0
  %3030 = vmatmul.mubr.f32.gmra.mrb[0].mxu0 %v1994
  %v3031 = vpop.f32.mrb[0].mxu0
  %v3032 = vadd.f32 0.0, %v3031
  %v3033 = vpop.f32.mrb[0].mxu0
  %3034 = vmatprep.mubr.f32.mxu0 0.0
  %3035 = vmatmul.mubr.f32.gmra.mrb[0].mxu0 %v1997
  %v3036 = vpop.f32.mrb[0].mxu0
  %v3037 = vadd.f32 0.0, %v3036
  %v3038 = vpop.f32.mrb[0].mxu0
  %3039 = vmatprep.mubr.f32.mxu0 0.0
  %3040 = vmatmul.mubr.f32.gmra.mrb[0].mxu0 %v2000
  %v3041 = vpop.f32.mrb[0].mxu0
  %v3042 = vadd.f32 0.0, %v3041
  %v3043 = vpop.f32.mrb[0].mxu0
  %3044 = vmatprep.mubr.f32.mxu0 0.0
  %3045 = vmatmul.mubr.f32.gmra.mrb[0].mxu0 %v2003
  %v3046 = vpop.f32.mrb[0].mxu0
  %v3047 = vadd.f32 0.0, %v3046
  %v3048 = vpop.f32.mrb[0].mxu0
  %3049 = vmatprep.mubr.f32.mxu0 0.0
  %3050 = vmatmul.mubr.f32.gmra.mrb[0].mxu0 %v2006
  %v3051 = vpop.f32.mrb[0].mxu0
  %v3052 = vadd.f32 0.0, %v3051
  %v3053 = vpop.f32.mrb[0].mxu0
  %3054 = vmatprep.mubr.f32.mxu0 0.0
  %3055 = vmatmul.mubr.f32.gmra.mrb[0].mxu0 %v2009
  %v3056 = vpop.f32.mrb[0].mxu0
  %v3057 = vadd.f32 0.0, %v3056
  %v3058 = vpop.f32.mrb[0].mxu0
  %3059 = vmatprep.mubr.f32.mxu0 0.0
  %3060 = vmatmul.mubr.f32.gmra.mrb[0].mxu0 %v2012
  %v3061 = vpop.f32.mrb[0].mxu0
  %v3062 = vadd.f32 0.0, %v3061
  %v3063 = vpop.f32.mrb[0].mxu0
  %3064 = vmatprep.mubr.f32.mxu0 0.0
  %3065 = vmatmul.mubr.f32.gmra.mrb[0].mxu0 %v2015
  %v3066 = vpop.f32.mrb[0].mxu0
  %v3067 = vadd.f32 0.0, %v3066
  %v3068 = vpop.f32.mrb[0].mxu0
  %3069 = vmatprep.mubr.f32.mxu0 0.0
  %3070 = vmatmul.mubr.f32.gmra.mrb[0].mxu0 %v2018
  %v3071 = vpop.f32.mrb[0].mxu0
  %v3072 = vadd.f32 0.0, %v3071
  %v3073 = vpop.f32.mrb[0].mxu0
  %3074 = vmatprep.mubr.f32.mxu0 0.0
  %3075 = vmatmul.mubr.f32.gmra.mrb[0].mxu0 %v2021
  %v3076 = vpop.f32.mrb[0].mxu0
  %v3077 = vadd.f32 0.0, %v3076
  %v3078 = vpop.f32.mrb[0].mxu0
  %3079 = vmatprep.mubr.f32.mxu0 0.0
  %3080 = vmatmul.mubr.f32.gmra.mrb[0].mxu0 %v2024
  %v3081 = vpop.f32.mrb[0].mxu0
  %v3082 = vadd.f32 0.0, %v3081
  %v3083 = vpop.f32.mrb[0].mxu0
  %3084 = vmatprep.mubr.f32.mxu0 0.0
  %3085 = vmatmul.mubr.f32.gmra.mrb[0].mxu0 %v2027
  %v3086 = vpop.f32.mrb[0].mxu0
  %v3087 = vadd.f32 0.0, %v3086
  %v3088 = vpop.f32.mrb[0].mxu0
  %3089 = vmatprep.mubr.f32.mxu0 0.0
  %3090 = vmatmul.mubr.f32.gmra.mrb[0].mxu0 %v2030
  %v3091 = vpop.f32.mrb[0].mxu0
  %v3092 = vadd.f32 0.0, %v3091
  %v3093 = vpop.f32.mrb[0].mxu0
  %3094 = vmatprep.mubr.f32.mxu0 0.0
  %3095 = vmatmul.mubr.f32.gmra.mrb[0].mxu0 %v2033
  %v3096 = vpop.f32.mrb[0].mxu0
  %v3097 = vadd.f32 0.0, %v3096
  %v3098 = vpop.f32.mrb[0].mxu0
  %3099 = vmatprep.mubr.f32.mxu0 0.0
  %3100 = vmatmul.mubr.f32.gmra.mrb[0].mxu0 %v2036
  %v3101 = vpop.f32.mrb[0].mxu0
  %v3102 = vadd.f32 0.0, %v3101
  %v3103 = vpop.f32.mrb[0].mxu0
  %3104 = vmatprep.mubr.f32.mxu0 0.0
  %3105 = vmatmul.mubr.f32.gmra.mrb[0].mxu0 %v2039
  %v3106 = vpop.f32.mrb[0].mxu0
  %v3107 = vadd.f32 0.0, %v3106
  %v3108 = vpop.f32.mrb[0].mxu0
  %3109 = vmatprep.mubr.f32.mxu0 0.0
  %3110 = vmatmul.mubr.f32.gmra.mrb[0].mxu0 %v2042
  %v3111 = vpop.f32.mrb[0].mxu0
  %v3112 = vadd.f32 0.0, %v3111
  %v3113 = vpop.f32.mrb[0].mxu0
  %3114 = vmatprep.mubr.f32.mxu0 0.0
  %3115 = vmatmul.mubr.f32.gmra.mrb[0].mxu0 %v2045
  %v3116 = vpop.f32.mrb[0].mxu0
  %v3117 = vadd.f32 0.0, %v3116
  %v3118 = vpop.f32.mrb[0].mxu0
  %3119 = vmatprep.mubr.f32.mxu0 0.0
  %3120 = vmatmul.mubr.f32.gmra.mrb[0].mxu0 %v2048
  %v3121 = vpop.f32.mrb[0].mxu0
  %v3122 = vadd.f32 0.0, %v3121
  %v3123 = vpop.f32.mrb[0].mxu0
  %3124 = vmatprep.mubr.f32.mxu0 0.0
  %3125 = vmatmul.mubr.f32.gmra.mrb[0].mxu0 %v2051
  %v3126 = vpop.f32.mrb[0].mxu0
  %v3127 = vadd.f32 0.0, %v3126
  %v3128 = vpop.f32.mrb[0].mxu0
  %3129 = vmatprep.mubr.f32.mxu0 0.0
  %3130 = vmatmul.mubr.f32.gmra.mrb[0].mxu0 %v2054
  %v3131 = vpop.f32.mrb[0].mxu0
  %v3132 = vadd.f32 0.0, %v3131
  %v3133 = vpop.f32.mrb[0].mxu0
  %3134 = vmatprep.mubr.f32.mxu0 0.0
  %3135 = vmatmul.mubr.f32.gmra.mrb[0].mxu0 %v2057
  %v3136 = vpop.f32.mrb[0].mxu0
  %v3137 = vadd.f32 0.0, %v3136
  %v3138 = vpop.f32.mrb[0].mxu0
  %3139 = vmatprep.mubr.f32.mxu0 0.0
  %3140 = vmatmul.mubr.f32.gmra.mrb[0].mxu0 %v2060
  %v3141 = vpop.f32.mrb[0].mxu0
  %v3142 = vadd.f32 0.0, %v3141
  %v3143 = vpop.f32.mrb[0].mxu0
  %3144 = vmatprep.mubr.f32.mxu0 0.0
  %3145 = vmatmul.mubr.f32.gmra.mrb[0].mxu0 %v2063
  %v3146 = vpop.f32.mrb[0].mxu0
  %v3147 = vadd.f32 0.0, %v3146
  %v3148 = vpop.f32.mrb[0].mxu0
  %3149 = vmatprep.mubr.f32.mxu0 0.0
  %3150 = vmatmul.mubr.f32.gmra.mrb[0].mxu0 %v2066
  %v3151 = vpop.f32.mrb[0].mxu0
  %v3152 = vadd.f32 0.0, %v3151
  %v3153 = vpop.f32.mrb[0].mxu0
  %3154 = vmatprep.mubr.f32.mxu0 0.0
  %3155 = vmatmul.mubr.f32.gmra.mrb[0].mxu0 %v2069
  %v3156 = vpop.f32.mrb[0].mxu0
  %v3157 = vadd.f32 0.0, %v3156
  %v3158 = vpop.f32.mrb[0].mxu0
  %3159 = vmatprep.mubr.f32.mxu0 0.0
  %3160 = vmatmul.mubr.f32.gmra.mrb[0].mxu0 %v2072
  %v3161 = vpop.f32.mrb[0].mxu0
  %v3162 = vadd.f32 0.0, %v3161
  %v3163 = vpop.f32.mrb[0].mxu0
  %3164 = vmatprep.mubr.f32.mxu0 0.0
  %3165 = vmatmul.mubr.f32.gmra.mrb[0].mxu0 %v2075
  %v3166 = vpop.f32.mrb[0].mxu0
  %v3167 = vadd.f32 0.0, %v3166
  %v3168 = vpop.f32.mrb[0].mxu0
  %3169 = vmatprep.mubr.f32.mxu0 0.0
  %3170 = vmatmul.mubr.f32.gmra.mrb[0].mxu0 %v2078
  %v3171 = vpop.f32.mrb[0].mxu0
  %v3172 = vadd.f32 0.0, %v3171
  %v3173 = vpop.f32.mrb[0].mxu0
  %3174 = vmatprep.mubr.f32.mxu0 0.0
  %3175 = vmatmul.mubr.f32.gmra.mrb[0].mxu0 %v2081
  %v3176 = vpop.f32.mrb[0].mxu0
  %v3177 = vadd.f32 0.0, %v3176
  %v3178 = vpop.f32.mrb[0].mxu0
  %3179 = vmatprep.mubr.f32.mxu0 0.0
  %3180 = vmatmul.mubr.f32.gmra.mrb[0].mxu0 %v2569
  %v3181 = vpop.f32.mrb[0].mxu0
  %v3182 = vadd.f32 0.0, %v3181
  %v3183 = vpop.f32.mrb[0].mxu0
  %3184 = vmatprep.mubr.f32.mxu0 0.0
  %3185 = vmatmul.mubr.f32.gmra.mrb[0].mxu0 %v2569
  %v3186 = vpop.f32.mrb[0].mxu0
  %v3187 = vadd.f32 0.0, %v3186
  %v3188 = vpop.f32.mrb[0].mxu0
  %3189 = vmatprep.mubr.f32.mxu0 0.0
  %3190 = vmatmul.mubr.f32.gmra.mrb[0].mxu0 %v2090
  %v3191 = vpop.f32.mrb[0].mxu0
  %v3192 = vadd.f32 0.0, %v3191
  %v3193 = vpop.f32.mrb[0].mxu0
  %3194 = vmatprep.mubr.f32.mxu0 0.0
  %3195 = vmatmul.mubr.f32.gmra.mrb[0].mxu0 %v2093
  %v3196 = vpop.f32.mrb[0].mxu0
  %v3197 = vadd.f32 0.0, %v3196
  %v3198 = vpop.f32.mrb[0].mxu0
  %3199 = vmatprep.mubr.f32.mxu0 0.0
  %3200 = vmatmul.mubr.f32.gmra.mrb[0].mxu0 %v2096
  %v3201 = vpop.f32.mrb[0].mxu0
  %v3202 = vadd.f32 0.0, %v3201
  %v3203 = vpop.f32.mrb[0].mxu0
  %3204 = vmatprep.mubr.f32.mxu0 0.0
  %3205 = vmatmul.mubr.f32.gmra.mrb[0].mxu0 %v2099
  %v3206 = vpop.f32.mrb[0].mxu0
  %v3207 = vadd.f32 0.0, %v3206
  %v3208 = vpop.f32.mrb[0].mxu0
  %3209 = vmatprep.mubr.f32.mxu0 0.0
  %3210 = vmatmul.mubr.f32.gmra.mrb[0].mxu0 %v2102
  %v3211 = vpop.f32.mrb[0].mxu0
  %v3212 = vadd.f32 0.0, %v3211
  %v3213 = vpop.f32.mrb[0].mxu0
  %3214 = vmatprep.mubr.f32.mxu0 0.0
  %3215 = vmatmul.mubr.f32.gmra.mrb[0].mxu0 %v2105
  %v3216 = vpop.f32.mrb[0].mxu0
  %v3217 = vadd.f32 0.0, %v3216
  %v3218 = vpop.f32.mrb[0].mxu0
  %3219 = vmatprep.mubr.f32.mxu0 0.0
  %3220 = vmatmul.mubr.f32.gmra.mrb[0].mxu0 %v2108
  %v3221 = vpop.f32.mrb[0].mxu0
  %v3222 = vadd.f32 0.0, %v3221
  %v3223 = vpop.f32.mrb[0].mxu0
  %3224 = vmatprep.mubr.f32.mxu0 0.0
  %3225 = vmatmul.mubr.f32.gmra.mrb[0].mxu0 %v2111
  %v3226 = vpop.f32.mrb[0].mxu0
  %v3227 = vadd.f32 0.0, %v3226
  %v3228 = vpop.f32.mrb[0].mxu0
  %3229 = vmatprep.mubr.f32.mxu0 0.0
  %3230 = vmatmul.mubr.f32.gmra.mrb[0].mxu0 %v2114
  %v3231 = vpop.f32.mrb[0].mxu0
  %v3232 = vadd.f32 0.0, %v3231
  %v3233 = vpop.f32.mrb[0].mxu0
  %3234 = vmatprep.mubr.f32.mxu0 0.0
  %3235 = vmatmul.mubr.f32.gmra.mrb[0].mxu0 %v2117
  %v3236 = vpop.f32.mrb[0].mxu0
  %v3237 = vadd.f32 0.0, %v3236
  %v3238 = vpop.f32.mrb[0].mxu0
  %3239 = vmatprep.mubr.f32.mxu0 0.0
  %3240 = vmatmul.mubr.f32.gmra.mrb[0].mxu0 %v2120
  %v3241 = vpop.f32.mrb[0].mxu0
  %v3242 = vadd.f32 0.0, %v3241
  %v3243 = vpop.f32.mrb[0].mxu0
  %3244 = vmatprep.mubr.f32.mxu0 0.0
  %3245 = vmatmul.mubr.f32.gmra.mrb[0].mxu0 %v2123
  %v3246 = vpop.f32.mrb[0].mxu0
  %v3247 = vadd.f32 0.0, %v3246
  %v3248 = vpop.f32.mrb[0].mxu0
  %3249 = vmatprep.mubr.f32.mxu0 0.0
  %3250 = vmatmul.mubr.f32.gmra.mrb[0].mxu0 %v2126
  %v3251 = vpop.f32.mrb[0].mxu0
  %v3252 = vadd.f32 0.0, %v3251
  %v3253 = vpop.f32.mrb[0].mxu0
  %3254 = vmatprep.mubr.f32.mxu0 0.0
  %3255 = vmatmul.mubr.f32.gmra.mrb[0].mxu0 %v2129
  %v3256 = vpop.f32.mrb[0].mxu0
  %v3257 = vadd.f32 0.0, %v3256
  %v3258 = vpop.f32.mrb[0].mxu0
  %3259 = vmatprep.mubr.f32.mxu0 0.0
  %3260 = vmatmul.mubr.f32.gmra.mrb[0].mxu0 %v2132
  %v3261 = vpop.f32.mrb[0].mxu0
  %v3262 = vadd.f32 0.0, %v3261
  %v3263 = vpop.f32.mrb[0].mxu0
  %3264 = vmatprep.mubr.f32.mxu0 0.0
  %3265 = vmatmul.mubr.f32.gmra.mrb[0].mxu0 %v2135
  %v3266 = vpop.f32.mrb[0].mxu0
  %v3267 = vadd.f32 0.0, %v3266
  %v3268 = vpop.f32.mrb[0].mxu0
  %3269 = vmatprep.mubr.f32.mxu0 0.0
  %3270 = vmatmul.mubr.f32.gmra.mrb[0].mxu0 %v2138
  %v3271 = vpop.f32.mrb[0].mxu0
  %v3272 = vadd.f32 0.0, %v3271
  %v3273 = vpop.f32.mrb[0].mxu0
  %3274 = vmatprep.mubr.f32.mxu0 0.0
  %3275 = vmatmul.mubr.f32.gmra.mrb[0].mxu0 %v2141
  %v3276 = vpop.f32.mrb[0].mxu0
  %v3277 = vadd.f32 0.0, %v3276
  %v3278 = vpop.f32.mrb[0].mxu0
  %3279 = vmatprep.mubr.f32.mxu0 0.0
  %3280 = vmatmul.mubr.f32.gmra.mrb[0].mxu0 %v2144
  %v3281 = vpop.f32.mrb[0].mxu0
  %v3282 = vadd.f32 0.0, %v3281
  %v3283 = vpop.f32.mrb[0].mxu0
  %3284 = vmatprep.mubr.f32.mxu0 0.0
  %3285 = vmatmul.mubr.f32.gmra.mrb[0].mxu0 %v2147
  %v3286 = vpop.f32.mrb[0].mxu0
  %v3287 = vadd.f32 0.0, %v3286
  %v3288 = vpop.f32.mrb[0].mxu0
  %3289 = vmatprep.mubr.f32.mxu0 0.0
  %3290 = vmatmul.mubr.f32.gmra.mrb[0].mxu0 %v2150
  %v3291 = vpop.f32.mrb[0].mxu0
  %v3292 = vadd.f32 0.0, %v3291
  %v3293 = vpop.f32.mrb[0].mxu0
  %3294 = vmatprep.mubr.f32.mxu0 0.0
  %3295 = vmatmul.mubr.f32.gmra.mrb[0].mxu0 %v2153
  %v3296 = vpop.f32.mrb[0].mxu0
  %v3297 = vadd.f32 0.0, %v3296
  %v3298 = vpop.f32.mrb[0].mxu0
  %3299 = vmatprep.mubr.f32.mxu0 0.0
  %3300 = vmatmul.mubr.f32.gmra.mrb[0].mxu0 %v2156
  %v3301 = vpop.f32.mrb[0].mxu0
  %v3302 = vadd.f32 0.0, %v3301
  %v3303 = vpop.f32.mrb[0].mxu0
  %3304 = vmatprep.mubr.f32.mxu0 0.0
  %3305 = vmatmul.mubr.f32.gmra.mrb[0].mxu0 %v2159
  %v3306 = vpop.f32.mrb[0].mxu0
  %v3307 = vadd.f32 0.0, %v3306
  %v3308 = vpop.f32.mrb[0].mxu0
  %3309 = vmatprep.mubr.f32.mxu0 0.0
  %3310 = vmatmul.mubr.f32.gmra.mrb[0].mxu0 %v2162
  %v3311 = vpop.f32.mrb[0].mxu0
  %v3312 = vadd.f32 0.0, %v3311
  %v3313 = vpop.f32.mrb[0].mxu0
  %3314 = vmatprep.mubr.f32.mxu0 0.0
  %3315 = vmatmul.mubr.f32.gmra.mrb[0].mxu0 %v2165
  %v3316 = vpop.f32.mrb[0].mxu0
  %v3317 = vadd.f32 0.0, %v3316
  %v3318 = vpop.f32.mrb[0].mxu0
  %3319 = vmatprep.mubr.f32.mxu0 0.0
  %3320 = vmatmul.mubr.f32.gmra.mrb[0].mxu0 %v2168
  %v3321 = vpop.f32.mrb[0].mxu0
  %v3322 = vadd.f32 0.0, %v3321
  %v3323 = vpop.f32.mrb[0].mxu0
  %3324 = vmatprep.mubr.f32.mxu0 0.0
  %3325 = vmatmul.mubr.f32.gmra.mrb[0].mxu0 %v2171
  %v3326 = vpop.f32.mrb[0].mxu0
  %v3327 = vadd.f32 0.0, %v3326
  %v3328 = vpop.f32.mrb[0].mxu0
  %3329 = vmatprep.mubr.f32.mxu0 0.0
  %3330 = vmatmul.mubr.f32.gmra.mrb[0].mxu0 %v2174
  %v3331 = vpop.f32.mrb[0].mxu0
  %v3332 = vadd.f32 0.0, %v3331
  %v3333 = vpop.f32.mrb[0].mxu0
  %3334 = vmatprep.mubr.f32.mxu0 0.0
  %3335 = vmatmul.mubr.f32.gmra.mrb[0].mxu0 %v2177
  %v3336 = vpop.f32.mrb[0].mxu0
  %v3337 = vadd.f32 0.0, %v3336
  %v3338 = vpop.f32.mrb[0].mxu0
  %3339 = vmatprep.mubr.f32.mxu0 0.0
  %3340 = vmatmul.mubr.f32.gmra.mrb[0].mxu0 %v2569
  %v3341 = vpop.f32.mrb[0].mxu0
  %v3342 = vadd.f32 0.0, %v3341
  %v3343 = vpop.f32.mrb[0].mxu0
  %3344 = vmatprep.mubr.f32.mxu0 0.0
  %3345 = vmatmul.mubr.f32.gmra.mrb[0].mxu0 %v2569
  %v3346 = vpop.f32.mrb[0].mxu0
  %v3347 = vadd.f32 0.0, %v3346
  %v3348 = vpop.f32.mrb[0].mxu0
  %3349 = vdwg.mxu0
  %v3350 = vadd.f32 %v2641, %v3032
  %v3351 = vadd.f32 %v2646, %v3037
  %v3352 = vadd.f32 %v2651, %v3042
  %v3353 = vadd.f32 %v2656, %v3047
  %v3354 = vadd.f32 %v2661, %v3052
  %v3355 = vadd.f32 %v2666, %v3057
  %v3356 = vadd.f32 %v2671, %v3062
  %v3357 = vadd.f32 %v2676, %v3067
  %v3358 = vadd.f32 %v2681, %v3072
  %v3359 = vadd.f32 %v2686, %v3077
  %v3360 = vadd.f32 %v2691, %v3082
  %v3361 = vadd.f32 %v2696, %v3087
  %v3362 = vadd.f32 %v2701, %v3092
  %v3363 = vadd.f32 %v2706, %v3097
  %v3364 = vadd.f32 %v2711, %v3102
  %v3365 = vadd.f32 %v2716, %v3107
  %v3366 = vadd.f32 %v2721, %v3112
  %v3367 = vadd.f32 %v2726, %v3117
  %v3368 = vadd.f32 %v2731, %v3122
  %v3369 = vadd.f32 %v2736, %v3127
  %v3370 = vadd.f32 %v2741, %v3132
  %v3371 = vadd.f32 %v2746, %v3137
  %v3372 = vadd.f32 %v2751, %v3142
  %v3373 = vadd.f32 %v2756, %v3147
  %v3374 = vadd.f32 %v2761, %v3152
  %v3375 = vadd.f32 %v2766, %v3157
  %v3376 = vadd.f32 %v2771, %v3162
  %v3377 = vadd.f32 %v2776, %v3167
  %v3378 = vadd.f32 %v2781, %v3172
  %v3379 = vadd.f32 %v2786, %v3177
  %v3380 = vadd.f32 %v2791, %v3182
  %v3381 = vadd.f32 %v2796, %v3187
  %v3382 = vadd.f32 %v2801, %v3192
  %v3383 = vadd.f32 %v2806, %v3197
  %v3384 = vadd.f32 %v2811, %v3202
  %v3385 = vadd.f32 %v2816, %v3207
  %v3386 = vadd.f32 %v2821, %v3212
  %v3387 = vadd.f32 %v2826, %v3217
  %v3388 = vadd.f32 %v2831, %v3222
  %v3389 = vadd.f32 %v2836, %v3227
  %v3390 = vadd.f32 %v2841, %v3232
  %v3391 = vadd.f32 %v2846, %v3237
  %v3392 = vadd.f32 %v2851, %v3242
  %v3393 = vadd.f32 %v2856, %v3247
  %v3394 = vadd.f32 %v2861, %v3252
  %v3395 = vadd.f32 %v2866, %v3257
  %v3396 = vadd.f32 %v2871, %v3262
  %v3397 = vadd.f32 %v2876, %v3267
  %v3398 = vadd.f32 %v2881, %v3272
  %v3399 = vadd.f32 %v2886, %v3277
  %v3400 = vadd.f32 %v2891, %v3282
  %v3401 = vadd.f32 %v2896, %v3287
  %v3402 = vadd.f32 %v2901, %v3292
  %v3403 = vadd.f32 %v2906, %v3297
  %v3404 = vadd.f32 %v2911, %v3302
  %v3405 = vadd.f32 %v2916, %v3307
  %v3406 = vadd.f32 %v2921, %v3312
  %v3407 = vadd.f32 %v2926, %v3317
  %v3408 = vadd.f32 %v2931, %v3322
  %v3409 = vadd.f32 %v2936, %v3327
  %v3410 = vadd.f32 %v2941, %v3332
  %v3411 = vadd.f32 %v2946, %v3337
  %v3412 = vadd.f32 %v2951, %v3342
  %v3413 = vadd.f32 %v2956, %v3347
  %v3414 = vld [vmem:[%s5] sm:$0x1]
  %v3416 = vlaneseq
  %v3417 = vshrl.u32 %v3416, 7
  %v3418 = vsub.s32 0, %v3417
  %v3419 = vrot.slane %v3414, %v3418
  %v3421 = vmul.f32 %v3350, %v3419
  %v3422 = vmul.f32 %v3351, %v3419
  %v3423 = vmul.f32 %v3352, %v3419
  %v3424 = vmul.f32 %v3353, %v3419
  %v3425 = vmul.f32 %v3354, %v3419
  %v3426 = vmul.f32 %v3355, %v3419
  %v3427 = vmul.f32 %v3356, %v3419
  %v3428 = vmul.f32 %v3357, %v3419
  %v3429 = vmul.f32 %v3358, %v3419
  %v3430 = vmul.f32 %v3359, %v3419
  %v3431 = vmul.f32 %v3360, %v3419
  %v3432 = vmul.f32 %v3361, %v3419
  %v3433 = vmul.f32 %v3362, %v3419
  %v3434 = vmul.f32 %v3363, %v3419
  %v3435 = vmul.f32 %v3364, %v3419
  %v3436 = vmul.f32 %v3365, %v3419
  %v3437 = vmul.f32 %v3366, %v3419
  %v3438 = vmul.f32 %v3367, %v3419
  %v3439 = vmul.f32 %v3368, %v3419
  %v3440 = vmul.f32 %v3369, %v3419
  %v3441 = vmul.f32 %v3370, %v3419
  %v3442 = vmul.f32 %v3371, %v3419
  %v3443 = vmul.f32 %v3372, %v3419
  %v3444 = vmul.f32 %v3373, %v3419
  %v3445 = vmul.f32 %v3374, %v3419
  %v3446 = vmul.f32 %v3375, %v3419
  %v3447 = vmul.f32 %v3376, %v3419
  %v3448 = vmul.f32 %v3377, %v3419
  %v3449 = vmul.f32 %v3378, %v3419
  %v3450 = vmul.f32 %v3379, %v3419
  %v3451 = vmul.f32 %v3380, %v3419
  %v3452 = vmul.f32 %v3381, %v3419
  %v3453 = vmul.f32 %v3382, %v3419
  %v3454 = vmul.f32 %v3383, %v3419
  %v3455 = vmul.f32 %v3384, %v3419
  %v3456 = vmul.f32 %v3385, %v3419
  %v3457 = vmul.f32 %v3386, %v3419
  %v3458 = vmul.f32 %v3387, %v3419
  %v3459 = vmul.f32 %v3388, %v3419
  %v3460 = vmul.f32 %v3389, %v3419
  %v3461 = vmul.f32 %v3390, %v3419
  %v3462 = vmul.f32 %v3391, %v3419
  %v3463 = vmul.f32 %v3392, %v3419
  %v3464 = vmul.f32 %v3393, %v3419
  %v3465 = vmul.f32 %v3394, %v3419
  %v3466 = vmul.f32 %v3395, %v3419
  %v3467 = vmul.f32 %v3396, %v3419
  %v3468 = vmul.f32 %v3397, %v3419
  %v3469 = vmul.f32 %v3398, %v3419
  %v3470 = vmul.f32 %v3399, %v3419
  %v3471 = vmul.f32 %v3400, %v3419
  %v3472 = vmul.f32 %v3401, %v3419
  %v3473 = vmul.f32 %v3402, %v3419
  %v3474 = vmul.f32 %v3403, %v3419
  %v3475 = vmul.f32 %v3404, %v3419
  %v3476 = vmul.f32 %v3405, %v3419
  %v3477 = vmul.f32 %v3406, %v3419
  %v3478 = vmul.f32 %v3407, %v3419
  %v3479 = vmul.f32 %v3408, %v3419
  %v3480 = vmul.f32 %v3409, %v3419
  %v3481 = vmul.f32 %v3410, %v3419
  %v3482 = vmul.f32 %v3411, %v3419
  %v3483 = vmul.f32 %v3412, %v3419
  %v3484 = vmul.f32 %v3413, %v3419
  %v3485 = vld [vmem:[%s6] sm:$0x1]
  %v3487 = vlaneseq
  %v3488 = vshrl.u32 %v3487, 7
  %v3489 = vsub.s32 0, %v3488
  %v3490 = vrot.slane %v3485, %v3489
  %v3492 = vadd.f32 %v3421, %v3490
  %v3493 = vadd.f32 %v3422, %v3490
  %v3494 = vadd.f32 %v3423, %v3490
  %v3495 = vadd.f32 %v3424, %v3490
  %v3496 = vadd.f32 %v3425, %v3490
  %v3497 = vadd.f32 %v3426, %v3490
  %v3498 = vadd.f32 %v3427, %v3490
  %v3499 = vadd.f32 %v3428, %v3490
  %v3500 = vadd.f32 %v3429, %v3490
  %v3501 = vadd.f32 %v3430, %v3490
  %v3502 = vadd.f32 %v3431, %v3490
  %v3503 = vadd.f32 %v3432, %v3490
  %v3504 = vadd.f32 %v3433, %v3490
  %v3505 = vadd.f32 %v3434, %v3490
  %v3506 = vadd.f32 %v3435, %v3490
  %v3507 = vadd.f32 %v3436, %v3490
  %v3508 = vadd.f32 %v3437, %v3490
  %v3509 = vadd.f32 %v3438, %v3490
  %v3510 = vadd.f32 %v3439, %v3490
  %v3511 = vadd.f32 %v3440, %v3490
  %v3512 = vadd.f32 %v3441, %v3490
  %v3513 = vadd.f32 %v3442, %v3490
  %v3514 = vadd.f32 %v3443, %v3490
  %v3515 = vadd.f32 %v3444, %v3490
  %v3516 = vadd.f32 %v3445, %v3490
  %v3517 = vadd.f32 %v3446, %v3490
  %v3518 = vadd.f32 %v3447, %v3490
  %v3519 = vadd.f32 %v3448, %v3490
  %v3520 = vadd.f32 %v3449, %v3490
  %v3521 = vadd.f32 %v3450, %v3490
  %v3522 = vadd.f32 %v3451, %v3490
  %v3523 = vadd.f32 %v3452, %v3490
  %v3524 = vadd.f32 %v3453, %v3490
  %v3525 = vadd.f32 %v3454, %v3490
  %v3526 = vadd.f32 %v3455, %v3490
  %v3527 = vadd.f32 %v3456, %v3490
  %v3528 = vadd.f32 %v3457, %v3490
  %v3529 = vadd.f32 %v3458, %v3490
  %v3530 = vadd.f32 %v3459, %v3490
  %v3531 = vadd.f32 %v3460, %v3490
  %v3532 = vadd.f32 %v3461, %v3490
  %v3533 = vadd.f32 %v3462, %v3490
  %v3534 = vadd.f32 %v3463, %v3490
  %v3535 = vadd.f32 %v3464, %v3490
  %v3536 = vadd.f32 %v3465, %v3490
  %v3537 = vadd.f32 %v3466, %v3490
  %v3538 = vadd.f32 %v3467, %v3490
  %v3539 = vadd.f32 %v3468, %v3490
  %v3540 = vadd.f32 %v3469, %v3490
  %v3541 = vadd.f32 %v3470, %v3490
  %v3542 = vadd.f32 %v3471, %v3490
  %v3543 = vadd.f32 %v3472, %v3490
  %v3544 = vadd.f32 %v3473, %v3490
  %v3545 = vadd.f32 %v3474, %v3490
  %v3546 = vadd.f32 %v3475, %v3490
  %v3547 = vadd.f32 %v3476, %v3490
  %v3548 = vadd.f32 %v3477, %v3490
  %v3549 = vadd.f32 %v3478, %v3490
  %v3550 = vadd.f32 %v3479, %v3490
  %v3551 = vadd.f32 %v3480, %v3490
  %v3552 = vadd.f32 %v3481, %v3490
  %v3553 = vadd.f32 %v3482, %v3490
  %v3554 = vadd.f32 %v3483, %v3490
  %v3555 = vadd.f32 %v3484, %v3490
  %v3556 = vmul.f32 %v3492, 0.1
  %v3557 = vmul.f32 %v3493, 0.1
  %v3558 = vmul.f32 %v3494, 0.1
  %v3559 = vmul.f32 %v3495, 0.1
  %v3560 = vmul.f32 %v3496, 0.1
  %v3561 = vmul.f32 %v3497, 0.1
  %v3562 = vmul.f32 %v3498, 0.1
  %v3563 = vmul.f32 %v3499, 0.1
  %v3564 = vmul.f32 %v3500, 0.1
  %v3565 = vmul.f32 %v3501, 0.1
  %v3566 = vmul.f32 %v3502, 0.1
  %v3567 = vmul.f32 %v3503, 0.1
  %v3568 = vmul.f32 %v3504, 0.1
  %v3569 = vmul.f32 %v3505, 0.1
  %v3570 = vmul.f32 %v3506, 0.1
  %v3571 = vmul.f32 %v3507, 0.1
  %v3572 = vmul.f32 %v3508, 0.1
  %v3573 = vmul.f32 %v3509, 0.1
  %v3574 = vmul.f32 %v3510, 0.1
  %v3575 = vmul.f32 %v3511, 0.1
  %v3576 = vmul.f32 %v3512, 0.1
  %v3577 = vmul.f32 %v3513, 0.1
  %v3578 = vmul.f32 %v3514, 0.1
  %v3579 = vmul.f32 %v3515, 0.1
  %v3580 = vmul.f32 %v3516, 0.1
  %v3581 = vmul.f32 %v3517, 0.1
  %v3582 = vmul.f32 %v3518, 0.1
  %v3583 = vmul.f32 %v3519, 0.1
  %v3584 = vmul.f32 %v3520, 0.1
  %v3585 = vmul.f32 %v3521, 0.1
  %v3586 = vmul.f32 %v3522, 0.1
  %v3587 = vmul.f32 %v3523, 0.1
  %v3588 = vmul.f32 %v3524, 0.1
  %v3589 = vmul.f32 %v3525, 0.1
  %v3590 = vmul.f32 %v3526, 0.1
  %v3591 = vmul.f32 %v3527, 0.1
  %v3592 = vmul.f32 %v3528, 0.1
  %v3593 = vmul.f32 %v3529, 0.1
  %v3594 = vmul.f32 %v3530, 0.1
  %v3595 = vmul.f32 %v3531, 0.1
  %v3596 = vmul.f32 %v3532, 0.1
  %v3597 = vmul.f32 %v3533, 0.1
  %v3598 = vmul.f32 %v3534, 0.1
  %v3599 = vmul.f32 %v3535, 0.1
  %v3600 = vmul.f32 %v3536, 0.1
  %v3601 = vmul.f32 %v3537, 0.1
  %v3602 = vmul.f32 %v3538, 0.1
  %v3603 = vmul.f32 %v3539, 0.1
  %v3604 = vmul.f32 %v3540, 0.1
  %v3605 = vmul.f32 %v3541, 0.1
  %v3606 = vmul.f32 %v3542, 0.1
  %v3607 = vmul.f32 %v3543, 0.1
  %v3608 = vmul.f32 %v3544, 0.1
  %v3609 = vmul.f32 %v3545, 0.1
  %v3610 = vmul.f32 %v3546, 0.1
  %v3611 = vmul.f32 %v3547, 0.1
  %v3612 = vmul.f32 %v3548, 0.1
  %v3613 = vmul.f32 %v3549, 0.1
  %v3614 = vmul.f32 %v3550, 0.1
  %v3615 = vmul.f32 %v3551, 0.1
  %v3616 = vmul.f32 %v3552, 0.1
  %v3617 = vmul.f32 %v3553, 0.1
  %v3618 = vmul.f32 %v3554, 0.1
  %v3619 = vmul.f32 %v3555, 0.1
  %v3620 = vmax.f32 %v3492, %v3556
  %v3621 = vmax.f32 %v3493, %v3557
  %v3622 = vmax.f32 %v3494, %v3558
  %v3623 = vmax.f32 %v3495, %v3559
  %v3624 = vmax.f32 %v3496, %v3560
  %v3625 = vmax.f32 %v3497, %v3561
  %v3626 = vmax.f32 %v3498, %v3562
  %v3627 = vmax.f32 %v3499, %v3563
  %v3628 = vmax.f32 %v3500, %v3564
  %v3629 = vmax.f32 %v3501, %v3565
  %v3630 = vmax.f32 %v3502, %v3566
  %v3631 = vmax.f32 %v3503, %v3567
  %v3632 = vmax.f32 %v3504, %v3568
  %v3633 = vmax.f32 %v3505, %v3569
  %v3634 = vmax.f32 %v3506, %v3570
  %v3635 = vmax.f32 %v3507, %v3571
  %v3636 = vmax.f32 %v3508, %v3572
  %v3637 = vmax.f32 %v3509, %v3573
  %v3638 = vmax.f32 %v3510, %v3574
  %v3639 = vmax.f32 %v3511, %v3575
  %v3640 = vmax.f32 %v3512, %v3576
  %v3641 = vmax.f32 %v3513, %v3577
  %v3642 = vmax.f32 %v3514, %v3578
  %v3643 = vmax.f32 %v3515, %v3579
  %v3644 = vmax.f32 %v3516, %v3580
  %v3645 = vmax.f32 %v3517, %v3581
  %v3646 = vmax.f32 %v3518, %v3582
  %v3647 = vmax.f32 %v3519, %v3583
  %v3648 = vmax.f32 %v3520, %v3584
  %v3649 = vmax.f32 %v3521, %v3585
  %v3650 = vmax.f32 %v3522, %v3586
  %v3651 = vmax.f32 %v3523, %v3587
  %v3652 = vmax.f32 %v3524, %v3588
  %v3653 = vmax.f32 %v3525, %v3589
  %v3654 = vmax.f32 %v3526, %v3590
  %v3655 = vmax.f32 %v3527, %v3591
  %v3656 = vmax.f32 %v3528, %v3592
  %v3657 = vmax.f32 %v3529, %v3593
  %v3658 = vmax.f32 %v3530, %v3594
  %v3659 = vmax.f32 %v3531, %v3595
  %v3660 = vmax.f32 %v3532, %v3596
  %v3661 = vmax.f32 %v3533, %v3597
  %v3662 = vmax.f32 %v3534, %v3598
  %v3663 = vmax.f32 %v3535, %v3599
  %v3664 = vmax.f32 %v3536, %v3600
  %v3665 = vmax.f32 %v3537, %v3601
  %v3666 = vmax.f32 %v3538, %v3602
  %v3667 = vmax.f32 %v3539, %v3603
  %v3668 = vmax.f32 %v3540, %v3604
  %v3669 = vmax.f32 %v3541, %v3605
  %v3670 = vmax.f32 %v3542, %v3606
  %v3671 = vmax.f32 %v3543, %v3607
  %v3672 = vmax.f32 %v3544, %v3608
  %v3673 = vmax.f32 %v3545, %v3609
  %v3674 = vmax.f32 %v3546, %v3610
  %v3675 = vmax.f32 %v3547, %v3611
  %v3676 = vmax.f32 %v3548, %v3612
  %v3677 = vmax.f32 %v3549, %v3613
  %v3678 = vmax.f32 %v3550, %v3614
  %v3679 = vmax.f32 %v3551, %v3615
  %v3680 = vmax.f32 %v3552, %v3616
  %v3681 = vmax.f32 %v3553, %v3617
  %v3682 = vmax.f32 %v3554, %v3618
  %v3683 = vmax.f32 %v3555, %v3619
  %v3684 = vadd.f32 %v3620, %v26
  %v3685 = vadd.f32 %v3621, %v27
  %v3686 = vadd.f32 %v3622, %v28
  %v3687 = vadd.f32 %v3623, %v29
  %v3688 = vadd.f32 %v3624, %v30
  %v3689 = vadd.f32 %v3625, %v31
  %v3690 = vadd.f32 %v3626, %v32
  %v3691 = vadd.f32 %v3627, %v33
  %v3692 = vadd.f32 %v3628, %v34
  %v3693 = vadd.f32 %v3629, %v35
  %v3694 = vadd.f32 %v3630, %v36
  %v3695 = vadd.f32 %v3631, %v37
  %v3696 = vadd.f32 %v3632, %v38
  %v3697 = vadd.f32 %v3633, %v39
  %v3698 = vadd.f32 %v3634, %v40
  %v3699 = vadd.f32 %v3635, %v41
  %v3700 = vadd.f32 %v3636, %v42
  %v3701 = vadd.f32 %v3637, %v43
  %v3702 = vadd.f32 %v3638, %v44
  %v3703 = vadd.f32 %v3639, %v45
  %v3704 = vadd.f32 %v3640, %v46
  %v3705 = vadd.f32 %v3641, %v47
  %v3706 = vadd.f32 %v3642, %v48
  %v3707 = vadd.f32 %v3643, %v49
  %v3708 = vadd.f32 %v3644, %v50
  %v3709 = vadd.f32 %v3645, %v51
  %v3710 = vadd.f32 %v3646, %v52
  %v3711 = vadd.f32 %v3647, %v53
  %v3712 = vadd.f32 %v3648, %v54
  %v3713 = vadd.f32 %v3649, %v55
  %v3714 = vadd.f32 %v3650, %v56
  %v3715 = vadd.f32 %v3651, %v57
  %v3716 = vadd.f32 %v3652, %v58
  %v3717 = vadd.f32 %v3653, %v59
  %v3718 = vadd.f32 %v3654, %v60
  %v3719 = vadd.f32 %v3655, %v61
  %v3720 = vadd.f32 %v3656, %v62
  %v3721 = vadd.f32 %v3657, %v63
  %v3722 = vadd.f32 %v3658, %v64
  %v3723 = vadd.f32 %v3659, %v65
  %v3724 = vadd.f32 %v3660, %v66
  %v3725 = vadd.f32 %v3661, %v67
  %v3726 = vadd.f32 %v3662, %v68
  %v3727 = vadd.f32 %v3663, %v69
  %v3728 = vadd.f32 %v3664, %v70
  %v3729 = vadd.f32 %v3665, %v71
  %v3730 = vadd.f32 %v3666, %v72
  %v3731 = vadd.f32 %v3667, %v73
  %v3732 = vadd.f32 %v3668, %v74
  %v3733 = vadd.f32 %v3669, %v75
  %v3734 = vadd.f32 %v3670, %v76
  %v3735 = vadd.f32 %v3671, %v77
  %v3736 = vadd.f32 %v3672, %v78
  %v3737 = vadd.f32 %v3673, %v79
  %v3738 = vadd.f32 %v3674, %v80
  %v3739 = vadd.f32 %v3675, %v81
  %v3740 = vadd.f32 %v3676, %v82
  %v3741 = vadd.f32 %v3677, %v83
  %v3742 = vadd.f32 %v3678, %v84
  %v3743 = vadd.f32 %v3679, %v85
  %v3744 = vadd.f32 %v3680, %v86
  %v3745 = vadd.f32 %v3681, %v87
  %v3746 = vadd.f32 %v3682, %v88
  %v3747 = vadd.f32 %v3683, %v89
  %s3748 = scalar_lea.vmem %s1, 8
  %v3749 = vld [vmem:[%s3748] sm:$0xff]
  %v3751 = vsel %vm98, %v3684, 0
  %v3754 = vsel %vm98, %v3685, 0
  %v3757 = vsel %vm98, %v3686, 0
  %v3760 = vsel %vm98, %v3687, 0
  %v3763 = vsel %vm98, %v3688, 0
  %v3766 = vsel %vm98, %v3689, 0
  %v3769 = vsel %vm98, %v3690, 0
  %v3772 = vsel %vm98, %v3691, 0
  %v3775 = vsel %vm98, %v3692, 0
  %v3778 = vsel %vm98, %v3693, 0
  %v3781 = vsel %vm98, %v3694, 0
  %v3784 = vsel %vm98, %v3695, 0
  %v3787 = vsel %vm98, %v3696, 0
  %v3790 = vsel %vm98, %v3697, 0
  %v3793 = vsel %vm98, %v3698, 0
  %v3796 = vsel %vm98, %v3699, 0
  %v3799 = vsel %vm98, %v3700, 0
  %v3802 = vsel %vm98, %v3701, 0
  %v3805 = vsel %vm98, %v3702, 0
  %v3808 = vsel %vm98, %v3703, 0
  %v3811 = vsel %vm98, %v3704, 0
  %v3814 = vsel %vm98, %v3705, 0
  %v3817 = vsel %vm98, %v3706, 0
  %v3820 = vsel %vm98, %v3707, 0
  %v3823 = vsel %vm98, %v3708, 0
  %v3826 = vsel %vm98, %v3709, 0
  %v3829 = vsel %vm98, %v3710, 0
  %v3832 = vsel %vm98, %v3711, 0
  %v3835 = vsel %vm98, %v3712, 0
  %v3838 = vsel %vm98, %v3713, 0
  %v3841 = vsel %vm98, %v3714, 0
  %v3844 = vsel %vm98, %v3715, 0
  %v3847 = vsel %vm98, %v3716, 0
  %v3850 = vsel %vm98, %v3717, 0
  %v3853 = vsel %vm98, %v3718, 0
  %v3856 = vsel %vm98, %v3719, 0
  %v3859 = vsel %vm98, %v3720, 0
  %v3862 = vsel %vm98, %v3721, 0
  %v3865 = vsel %vm98, %v3722, 0
  %v3868 = vsel %vm98, %v3723, 0
  %v3871 = vsel %vm98, %v3724, 0
  %v3874 = vsel %vm98, %v3725, 0
  %v3877 = vsel %vm98, %v3726, 0
  %v3880 = vsel %vm98, %v3727, 0
  %v3883 = vsel %vm98, %v3728, 0
  %v3886 = vsel %vm98, %v3729, 0
  %v3889 = vsel %vm98, %v3730, 0
  %v3892 = vsel %vm98, %v3731, 0
  %v3895 = vsel %vm98, %v3732, 0
  %v3898 = vsel %vm98, %v3733, 0
  %v3901 = vsel %vm98, %v3734, 0
  %v3904 = vsel %vm98, %v3735, 0
  %v3907 = vsel %vm98, %v3736, 0
  %v3910 = vsel %vm98, %v3737, 0
  %v3913 = vsel %vm98, %v3738, 0
  %v3916 = vsel %vm98, %v3739, 0
  %v3919 = vsel %vm98, %v3740, 0
  %v3922 = vsel %vm98, %v3741, 0
  %v3925 = vsel %vm98, %v3742, 0
  %v3928 = vsel %vm98, %v3743, 0
  %v3931 = vsel %vm98, %v3744, 0
  %v3934 = vsel %vm98, %v3745, 0
  %v3937 = vsel %vm98, %v3746, 0
  %v3940 = vsel %vm98, %v3747, 0
  %3942 = vmatprep.subr.mxu0 0.0
  %3943 = vmatpush1.msra.mxu0 %v3749
  %3944 = vmatprep.subr.mxu0 0.0
  %3945 = vmatpush1.msra.mxu0 0.0
  %3946 = vmatprep.subr.mxu0 0.0
  %3947 = vmatpush1.msra.mxu0 0.0
  %3948 = vmatprep.subr.mxu0 0.0
  %3949 = vmatpush1.msra.mxu0 0.0
  %3950 = vmatprep.subr.mxu0 0.0
  %3951 = vmatpush1.msra.mxu0 0.0
  %3952 = vmatprep.subr.mxu0 0.0
  %3953 = vmatpush1.msra.mxu0 0.0
  %3954 = vmatprep.subr.mxu0 0.0
  %3955 = vmatpush1.msra.mxu0 0.0
  %3956 = vmatprep.subr.mxu0 0.0
  %3957 = vmatpush1.msra.mxu0 0.0
  %3958 = vmatprep.subr.mxu0 0.0
  %3959 = vmatpush1.msra.mxu0 0.0
  %3960 = vmatprep.subr.mxu0 0.0
  %3961 = vmatpush1.msra.mxu0 0.0
  %3962 = vmatprep.subr.mxu0 0.0
  %3963 = vmatpush1.msra.mxu0 0.0
  %3964 = vmatprep.subr.mxu0 0.0
  %3965 = vmatpush1.msra.mxu0 0.0
  %3966 = vmatprep.subr.mxu0 0.0
  %3967 = vmatpush1.msra.mxu0 0.0
  %3968 = vmatprep.subr.mxu0 0.0
  %3969 = vmatpush1.msra.mxu0 0.0
  %3970 = vmatprep.subr.mxu0 0.0
  %3971 = vmatpush1.msra.mxu0 0.0
  %3972 = vmatprep.subr.mxu0 0.0
  %3973 = vmatpush1.msra.mxu0 0.0
  %3974 = vmatprep.subr.mxu0 0.0
  %3975 = vmatpush1.msra.mxu0 0.0
  %3976 = vmatprep.subr.mxu0 0.0
  %3977 = vmatpush1.msra.mxu0 0.0
  %3978 = vmatprep.subr.mxu0 0.0
  %3979 = vmatpush1.msra.mxu0 0.0
  %3980 = vmatprep.subr.mxu0 0.0
  %3981 = vmatpush1.msra.mxu0 0.0
  %3982 = vmatprep.subr.mxu0 0.0
  %3983 = vmatpush1.msra.mxu0 0.0
  %3984 = vmatprep.subr.mxu0 0.0
  %3985 = vmatpush1.msra.mxu0 0.0
  %3986 = vmatprep.subr.mxu0 0.0
  %3987 = vmatpush1.msra.mxu0 0.0
  %3988 = vmatprep.subr.mxu0 0.0
  %3989 = vmatpush1.msra.mxu0 0.0
  %3990 = vmatprep.subr.mxu0 0.0
  %3991 = vmatpush1.msra.mxu0 0.0
  %3992 = vmatprep.subr.mxu0 0.0
  %3993 = vmatpush1.msra.mxu0 0.0
  %3994 = vmatprep.subr.mxu0 0.0
  %3995 = vmatpush1.msra.mxu0 0.0
  %3996 = vmatprep.subr.mxu0 0.0
  %3997 = vmatpush1.msra.mxu0 0.0
  %3998 = vmatprep.subr.mxu0 0.0
  %3999 = vmatpush1.msra.mxu0 0.0
  %4000 = vmatprep.subr.mxu0 0.0
  %4001 = vmatpush1.msra.mxu0 0.0
  %4002 = vmatprep.subr.mxu0 0.0
  %4003 = vmatpush1.msra.mxu0 0.0
  %4004 = vmatprep.subr.mxu0 0.0
  %4005 = vmatpush1.msra.mxu0 0.0
  %4006 = vmatprep.mubr.f32.mxu0 0.0
  %4007 = vmatmul.mubr.f32.gmra.mrb[0].mxu0 %v3751
  %v4008 = vpop.f32.mrb[0].mxu0
  %v4009 = vadd.f32 0.0, %v4008
  %v4010 = vpop.f32.mrb[0].mxu0
  %4011 = vmatprep.mubr.f32.mxu0 0.0
  %4012 = vmatmul.mubr.f32.gmra.mrb[0].mxu0 %v3754
  %v4013 = vpop.f32.mrb[0].mxu0
  %v4014 = vadd.f32 0.0, %v4013
  %v4015 = vpop.f32.mrb[0].mxu0
  %4016 = vmatprep.mubr.f32.mxu0 0.0
  %4017 = vmatmul.mubr.f32.gmra.mrb[0].mxu0 %v3757
  %v4018 = vpop.f32.mrb[0].mxu0
  %v4019 = vadd.f32 0.0, %v4018
  %v4020 = vpop.f32.mrb[0].mxu0
  %4021 = vmatprep.mubr.f32.mxu0 0.0
  %4022 = vmatmul.mubr.f32.gmra.mrb[0].mxu0 %v3760
  %v4023 = vpop.f32.mrb[0].mxu0
  %v4024 = vadd.f32 0.0, %v4023
  %v4025 = vpop.f32.mrb[0].mxu0
  %4026 = vmatprep.mubr.f32.mxu0 0.0
  %4027 = vmatmul.mubr.f32.gmra.mrb[0].mxu0 %v3763
  %v4028 = vpop.f32.mrb[0].mxu0
  %v4029 = vadd.f32 0.0, %v4028
  %v4030 = vpop.f32.mrb[0].mxu0
  %4031 = vmatprep.mubr.f32.mxu0 0.0
  %4032 = vmatmul.mubr.f32.gmra.mrb[0].mxu0 %v3766
  %v4033 = vpop.f32.mrb[0].mxu0
  %v4034 = vadd.f32 0.0, %v4033
  %v4035 = vpop.f32.mrb[0].mxu0
  %4036 = vmatprep.mubr.f32.mxu0 0.0
  %4037 = vmatmul.mubr.f32.gmra.mrb[0].mxu0 %v3769
  %v4038 = vpop.f32.mrb[0].mxu0
  %v4039 = vadd.f32 0.0, %v4038
  %v4040 = vpop.f32.mrb[0].mxu0
  %4041 = vmatprep.mubr.f32.mxu0 0.0
  %4042 = vmatmul.mubr.f32.gmra.mrb[0].mxu0 %v3772
  %v4043 = vpop.f32.mrb[0].mxu0
  %v4044 = vadd.f32 0.0, %v4043
  %v4045 = vpop.f32.mrb[0].mxu0
  %4046 = vmatprep.mubr.f32.mxu0 0.0
  %4047 = vmatmul.mubr.f32.gmra.mrb[0].mxu0 %v3775
  %v4048 = vpop.f32.mrb[0].mxu0
  %v4049 = vadd.f32 0.0, %v4048
  %v4050 = vpop.f32.mrb[0].mxu0
  %4051 = vmatprep.mubr.f32.mxu0 0.0
  %4052 = vmatmul.mubr.f32.gmra.mrb[0].mxu0 %v3778
  %v4053 = vpop.f32.mrb[0].mxu0
  %v4054 = vadd.f32 0.0, %v4053
  %v4055 = vpop.f32.mrb[0].mxu0
  %4056 = vmatprep.mubr.f32.mxu0 0.0
  %4057 = vmatmul.mubr.f32.gmra.mrb[0].mxu0 %v3781
  %v4058 = vpop.f32.mrb[0].mxu0
  %v4059 = vadd.f32 0.0, %v4058
  %v4060 = vpop.f32.mrb[0].mxu0
  %4061 = vmatprep.mubr.f32.mxu0 0.0
  %4062 = vmatmul.mubr.f32.gmra.mrb[0].mxu0 %v3784
  %v4063 = vpop.f32.mrb[0].mxu0
  %v4064 = vadd.f32 0.0, %v4063
  %v4065 = vpop.f32.mrb[0].mxu0
  %4066 = vmatprep.mubr.f32.mxu0 0.0
  %4067 = vmatmul.mubr.f32.gmra.mrb[0].mxu0 %v3787
  %v4068 = vpop.f32.mrb[0].mxu0
  %v4069 = vadd.f32 0.0, %v4068
  %v4070 = vpop.f32.mrb[0].mxu0
  %4071 = vmatprep.mubr.f32.mxu0 0.0
  %4072 = vmatmul.mubr.f32.gmra.mrb[0].mxu0 %v3790
  %v4073 = vpop.f32.mrb[0].mxu0
  %v4074 = vadd.f32 0.0, %v4073
  %v4075 = vpop.f32.mrb[0].mxu0
  %4076 = vmatprep.mubr.f32.mxu0 0.0
  %4077 = vmatmul.mubr.f32.gmra.mrb[0].mxu0 %v3793
  %v4078 = vpop.f32.mrb[0].mxu0
  %v4079 = vadd.f32 0.0, %v4078
  %v4080 = vpop.f32.mrb[0].mxu0
  %4081 = vmatprep.mubr.f32.mxu0 0.0
  %4082 = vmatmul.mubr.f32.gmra.mrb[0].mxu0 %v3796
  %v4083 = vpop.f32.mrb[0].mxu0
  %v4084 = vadd.f32 0.0, %v4083
  %v4085 = vpop.f32.mrb[0].mxu0
  %4086 = vmatprep.mubr.f32.mxu0 0.0
  %4087 = vmatmul.mubr.f32.gmra.mrb[0].mxu0 %v3799
  %v4088 = vpop.f32.mrb[0].mxu0
  %v4089 = vadd.f32 0.0, %v4088
  %v4090 = vpop.f32.mrb[0].mxu0
  %4091 = vmatprep.mubr.f32.mxu0 0.0
  %4092 = vmatmul.mubr.f32.gmra.mrb[0].mxu0 %v3802
  %v4093 = vpop.f32.mrb[0].mxu0
  %v4094 = vadd.f32 0.0, %v4093
  %v4095 = vpop.f32.mrb[0].mxu0
  %4096 = vmatprep.mubr.f32.mxu0 0.0
  %4097 = vmatmul.mubr.f32.gmra.mrb[0].mxu0 %v3805
  %v4098 = vpop.f32.mrb[0].mxu0
  %v4099 = vadd.f32 0.0, %v4098
  %v4100 = vpop.f32.mrb[0].mxu0
  %4101 = vmatprep.mubr.f32.mxu0 0.0
  %4102 = vmatmul.mubr.f32.gmra.mrb[0].mxu0 %v3808
  %v4103 = vpop.f32.mrb[0].mxu0
  %v4104 = vadd.f32 0.0, %v4103
  %v4105 = vpop.f32.mrb[0].mxu0
  %4106 = vmatprep.mubr.f32.mxu0 0.0
  %4107 = vmatmul.mubr.f32.gmra.mrb[0].mxu0 %v3811
  %v4108 = vpop.f32.mrb[0].mxu0
  %v4109 = vadd.f32 0.0, %v4108
  %v4110 = vpop.f32.mrb[0].mxu0
  %4111 = vmatprep.mubr.f32.mxu0 0.0
  %4112 = vmatmul.mubr.f32.gmra.mrb[0].mxu0 %v3814
  %v4113 = vpop.f32.mrb[0].mxu0
  %v4114 = vadd.f32 0.0, %v4113
  %v4115 = vpop.f32.mrb[0].mxu0
  %4116 = vmatprep.mubr.f32.mxu0 0.0
  %4117 = vmatmul.mubr.f32.gmra.mrb[0].mxu0 %v3817
  %v4118 = vpop.f32.mrb[0].mxu0
  %v4119 = vadd.f32 0.0, %v4118
  %v4120 = vpop.f32.mrb[0].mxu0
  %4121 = vmatprep.mubr.f32.mxu0 0.0
  %4122 = vmatmul.mubr.f32.gmra.mrb[0].mxu0 %v3820
  %v4123 = vpop.f32.mrb[0].mxu0
  %v4124 = vadd.f32 0.0, %v4123
  %v4125 = vpop.f32.mrb[0].mxu0
  %4126 = vmatprep.mubr.f32.mxu0 0.0
  %4127 = vmatmul.mubr.f32.gmra.mrb[0].mxu0 %v3823
  %v4128 = vpop.f32.mrb[0].mxu0
  %v4129 = vadd.f32 0.0, %v4128
  %v4130 = vpop.f32.mrb[0].mxu0
  %4131 = vmatprep.mubr.f32.mxu0 0.0
  %4132 = vmatmul.mubr.f32.gmra.mrb[0].mxu0 %v3826
  %v4133 = vpop.f32.mrb[0].mxu0
  %v4134 = vadd.f32 0.0, %v4133
  %v4135 = vpop.f32.mrb[0].mxu0
  %4136 = vmatprep.mubr.f32.mxu0 0.0
  %4137 = vmatmul.mubr.f32.gmra.mrb[0].mxu0 %v3829
  %v4138 = vpop.f32.mrb[0].mxu0
  %v4139 = vadd.f32 0.0, %v4138
  %v4140 = vpop.f32.mrb[0].mxu0
  %4141 = vmatprep.mubr.f32.mxu0 0.0
  %4142 = vmatmul.mubr.f32.gmra.mrb[0].mxu0 %v3832
  %v4143 = vpop.f32.mrb[0].mxu0
  %v4144 = vadd.f32 0.0, %v4143
  %v4145 = vpop.f32.mrb[0].mxu0
  %4146 = vmatprep.mubr.f32.mxu0 0.0
  %4147 = vmatmul.mubr.f32.gmra.mrb[0].mxu0 %v3835
  %v4148 = vpop.f32.mrb[0].mxu0
  %v4149 = vadd.f32 0.0, %v4148
  %v4150 = vpop.f32.mrb[0].mxu0
  %4151 = vmatprep.mubr.f32.mxu0 0.0
  %4152 = vmatmul.mubr.f32.gmra.mrb[0].mxu0 %v3838
  %v4153 = vpop.f32.mrb[0].mxu0
  %v4154 = vadd.f32 0.0, %v4153
  %v4155 = vpop.f32.mrb[0].mxu0
  %4156 = vmatprep.mubr.f32.mxu0 0.0
  %4157 = vmatmul.mubr.f32.gmra.mrb[0].mxu0 %v3841
  %v4158 = vpop.f32.mrb[0].mxu0
  %v4159 = vadd.f32 0.0, %v4158
  %v4160 = vpop.f32.mrb[0].mxu0
  %4161 = vmatprep.mubr.f32.mxu0 0.0
  %4162 = vmatmul.mubr.f32.gmra.mrb[0].mxu0 %v3844
  %v4163 = vpop.f32.mrb[0].mxu0
  %v4164 = vadd.f32 0.0, %v4163
  %v4165 = vpop.f32.mrb[0].mxu0
  %4166 = vmatprep.mubr.f32.mxu0 0.0
  %4167 = vmatmul.mubr.f32.gmra.mrb[0].mxu0 %v3847
  %v4168 = vpop.f32.mrb[0].mxu0
  %v4169 = vadd.f32 0.0, %v4168
  %v4170 = vpop.f32.mrb[0].mxu0
  %4171 = vmatprep.mubr.f32.mxu0 0.0
  %4172 = vmatmul.mubr.f32.gmra.mrb[0].mxu0 %v3850
  %v4173 = vpop.f32.mrb[0].mxu0
  %v4174 = vadd.f32 0.0, %v4173
  %v4175 = vpop.f32.mrb[0].mxu0
  %4176 = vmatprep.mubr.f32.mxu0 0.0
  %4177 = vmatmul.mubr.f32.gmra.mrb[0].mxu0 %v3853
  %v4178 = vpop.f32.mrb[0].mxu0
  %v4179 = vadd.f32 0.0, %v4178
  %v4180 = vpop.f32.mrb[0].mxu0
  %4181 = vmatprep.mubr.f32.mxu0 0.0
  %4182 = vmatmul.mubr.f32.gmra.mrb[0].mxu0 %v3856
  %v4183 = vpop.f32.mrb[0].mxu0
  %v4184 = vadd.f32 0.0, %v4183
  %v4185 = vpop.f32.mrb[0].mxu0
  %4186 = vmatprep.mubr.f32.mxu0 0.0
  %4187 = vmatmul.mubr.f32.gmra.mrb[0].mxu0 %v3859
  %v4188 = vpop.f32.mrb[0].mxu0
  %v4189 = vadd.f32 0.0, %v4188
  %v4190 = vpop.f32.mrb[0].mxu0
  %4191 = vmatprep.mubr.f32.mxu0 0.0
  %4192 = vmatmul.mubr.f32.gmra.mrb[0].mxu0 %v3862
  %v4193 = vpop.f32.mrb[0].mxu0
  %v4194 = vadd.f32 0.0, %v4193
  %v4195 = vpop.f32.mrb[0].mxu0
  %4196 = vmatprep.mubr.f32.mxu0 0.0
  %4197 = vmatmul.mubr.f32.gmra.mrb[0].mxu0 %v3865
  %v4198 = vpop.f32.mrb[0].mxu0
  %v4199 = vadd.f32 0.0, %v4198
  %v4200 = vpop.f32.mrb[0].mxu0
  %4201 = vmatprep.mubr.f32.mxu0 0.0
  %4202 = vmatmul.mubr.f32.gmra.mrb[0].mxu0 %v3868
  %v4203 = vpop.f32.mrb[0].mxu0
  %v4204 = vadd.f32 0.0, %v4203
  %v4205 = vpop.f32.mrb[0].mxu0
  %4206 = vmatprep.mubr.f32.mxu0 0.0
  %4207 = vmatmul.mubr.f32.gmra.mrb[0].mxu0 %v3871
  %v4208 = vpop.f32.mrb[0].mxu0
  %v4209 = vadd.f32 0.0, %v4208
  %v4210 = vpop.f32.mrb[0].mxu0
  %4211 = vmatprep.mubr.f32.mxu0 0.0
  %4212 = vmatmul.mubr.f32.gmra.mrb[0].mxu0 %v3874
  %v4213 = vpop.f32.mrb[0].mxu0
  %v4214 = vadd.f32 0.0, %v4213
  %v4215 = vpop.f32.mrb[0].mxu0
  %4216 = vmatprep.mubr.f32.mxu0 0.0
  %4217 = vmatmul.mubr.f32.gmra.mrb[0].mxu0 %v3877
  %v4218 = vpop.f32.mrb[0].mxu0
  %v4219 = vadd.f32 0.0, %v4218
  %v4220 = vpop.f32.mrb[0].mxu0
  %4221 = vmatprep.mubr.f32.mxu0 0.0
  %4222 = vmatmul.mubr.f32.gmra.mrb[0].mxu0 %v3880
  %v4223 = vpop.f32.mrb[0].mxu0
  %v4224 = vadd.f32 0.0, %v4223
  %v4225 = vpop.f32.mrb[0].mxu0
  %4226 = vmatprep.mubr.f32.mxu0 0.0
  %4227 = vmatmul.mubr.f32.gmra.mrb[0].mxu0 %v3883
  %v4228 = vpop.f32.mrb[0].mxu0
  %v4229 = vadd.f32 0.0, %v4228
  %v4230 = vpop.f32.mrb[0].mxu0
  %4231 = vmatprep.mubr.f32.mxu0 0.0
  %4232 = vmatmul.mubr.f32.gmra.mrb[0].mxu0 %v3886
  %v4233 = vpop.f32.mrb[0].mxu0
  %v4234 = vadd.f32 0.0, %v4233
  %v4235 = vpop.f32.mrb[0].mxu0
  %4236 = vmatprep.mubr.f32.mxu0 0.0
  %4237 = vmatmul.mubr.f32.gmra.mrb[0].mxu0 %v3889
  %v4238 = vpop.f32.mrb[0].mxu0
  %v4239 = vadd.f32 0.0, %v4238
  %v4240 = vpop.f32.mrb[0].mxu0
  %4241 = vmatprep.mubr.f32.mxu0 0.0
  %4242 = vmatmul.mubr.f32.gmra.mrb[0].mxu0 %v3892
  %v4243 = vpop.f32.mrb[0].mxu0
  %v4244 = vadd.f32 0.0, %v4243
  %v4245 = vpop.f32.mrb[0].mxu0
  %4246 = vmatprep.mubr.f32.mxu0 0.0
  %4247 = vmatmul.mubr.f32.gmra.mrb[0].mxu0 %v3895
  %v4248 = vpop.f32.mrb[0].mxu0
  %v4249 = vadd.f32 0.0, %v4248
  %v4250 = vpop.f32.mrb[0].mxu0
  %4251 = vmatprep.mubr.f32.mxu0 0.0
  %4252 = vmatmul.mubr.f32.gmra.mrb[0].mxu0 %v3898
  %v4253 = vpop.f32.mrb[0].mxu0
  %v4254 = vadd.f32 0.0, %v4253
  %v4255 = vpop.f32.mrb[0].mxu0
  %4256 = vmatprep.mubr.f32.mxu0 0.0
  %4257 = vmatmul.mubr.f32.gmra.mrb[0].mxu0 %v3901
  %v4258 = vpop.f32.mrb[0].mxu0
  %v4259 = vadd.f32 0.0, %v4258
  %v4260 = vpop.f32.mrb[0].mxu0
  %4261 = vmatprep.mubr.f32.mxu0 0.0
  %4262 = vmatmul.mubr.f32.gmra.mrb[0].mxu0 %v3904
  %v4263 = vpop.f32.mrb[0].mxu0
  %v4264 = vadd.f32 0.0, %v4263
  %v4265 = vpop.f32.mrb[0].mxu0
  %4266 = vmatprep.mubr.f32.mxu0 0.0
  %4267 = vmatmul.mubr.f32.gmra.mrb[0].mxu0 %v3907
  %v4268 = vpop.f32.mrb[0].mxu0
  %v4269 = vadd.f32 0.0, %v4268
  %v4270 = vpop.f32.mrb[0].mxu0
  %4271 = vmatprep.mubr.f32.mxu0 0.0
  %4272 = vmatmul.mubr.f32.gmra.mrb[0].mxu0 %v3910
  %v4273 = vpop.f32.mrb[0].mxu0
  %v4274 = vadd.f32 0.0, %v4273
  %v4275 = vpop.f32.mrb[0].mxu0
  %4276 = vmatprep.mubr.f32.mxu0 0.0
  %4277 = vmatmul.mubr.f32.gmra.mrb[0].mxu0 %v3913
  %v4278 = vpop.f32.mrb[0].mxu0
  %v4279 = vadd.f32 0.0, %v4278
  %v4280 = vpop.f32.mrb[0].mxu0
  %4281 = vmatprep.mubr.f32.mxu0 0.0
  %4282 = vmatmul.mubr.f32.gmra.mrb[0].mxu0 %v3916
  %v4283 = vpop.f32.mrb[0].mxu0
  %v4284 = vadd.f32 0.0, %v4283
  %v4285 = vpop.f32.mrb[0].mxu0
  %4286 = vmatprep.mubr.f32.mxu0 0.0
  %4287 = vmatmul.mubr.f32.gmra.mrb[0].mxu0 %v3919
  %v4288 = vpop.f32.mrb[0].mxu0
  %v4289 = vadd.f32 0.0, %v4288
  %v4290 = vpop.f32.mrb[0].mxu0
  %4291 = vmatprep.mubr.f32.mxu0 0.0
  %4292 = vmatmul.mubr.f32.gmra.mrb[0].mxu0 %v3922
  %v4293 = vpop.f32.mrb[0].mxu0
  %v4294 = vadd.f32 0.0, %v4293
  %v4295 = vpop.f32.mrb[0].mxu0
  %4296 = vmatprep.mubr.f32.mxu0 0.0
  %4297 = vmatmul.mubr.f32.gmra.mrb[0].mxu0 %v3925
  %v4298 = vpop.f32.mrb[0].mxu0
  %v4299 = vadd.f32 0.0, %v4298
  %v4300 = vpop.f32.mrb[0].mxu0
  %4301 = vmatprep.mubr.f32.mxu0 0.0
  %4302 = vmatmul.mubr.f32.gmra.mrb[0].mxu0 %v3928
  %v4303 = vpop.f32.mrb[0].mxu0
  %v4304 = vadd.f32 0.0, %v4303
  %v4305 = vpop.f32.mrb[0].mxu0
  %4306 = vmatprep.mubr.f32.mxu0 0.0
  %4307 = vmatmul.mubr.f32.gmra.mrb[0].mxu0 %v3931
  %v4308 = vpop.f32.mrb[0].mxu0
  %v4309 = vadd.f32 0.0, %v4308
  %v4310 = vpop.f32.mrb[0].mxu0
  %4311 = vmatprep.mubr.f32.mxu0 0.0
  %4312 = vmatmul.mubr.f32.gmra.mrb[0].mxu0 %v3934
  %v4313 = vpop.f32.mrb[0].mxu0
  %v4314 = vadd.f32 0.0, %v4313
  %v4315 = vpop.f32.mrb[0].mxu0
  %4316 = vmatprep.mubr.f32.mxu0 0.0
  %4317 = vmatmul.mubr.f32.gmra.mrb[0].mxu0 %v3937
  %v4318 = vpop.f32.mrb[0].mxu0
  %v4319 = vadd.f32 0.0, %v4318
  %v4320 = vpop.f32.mrb[0].mxu0
  %4321 = vmatprep.mubr.f32.mxu0 0.0
  %4322 = vmatmul.mubr.f32.gmra.mrb[0].mxu0 %v3940
  %v4323 = vpop.f32.mrb[0].mxu0
  %v4324 = vadd.f32 0.0, %v4323
  %v4325 = vpop.f32.mrb[0].mxu0
  %4326 = vdwg.mxu0
  %s4327 = scalar_lea.vmem %s2, 1
  %v4328 = vld [vmem:[%s4327] sm:$0x1]
  %v4330 = vlaneseq
  %v4331 = vshrl.u32 %v4330, 7
  %v4332 = vsub.s32 0, %v4331
  %v4333 = vrot.slane %v4328, %v4332
  %v4335 = vmul.f32 %v4009, %v4333
  %v4336 = vmul.f32 %v4014, %v4333
  %v4337 = vmul.f32 %v4019, %v4333
  %v4338 = vmul.f32 %v4024, %v4333
  %v4339 = vmul.f32 %v4029, %v4333
  %v4340 = vmul.f32 %v4034, %v4333
  %v4341 = vmul.f32 %v4039, %v4333
  %v4342 = vmul.f32 %v4044, %v4333
  %v4343 = vmul.f32 %v4049, %v4333
  %v4344 = vmul.f32 %v4054, %v4333
  %v4345 = vmul.f32 %v4059, %v4333
  %v4346 = vmul.f32 %v4064, %v4333
  %v4347 = vmul.f32 %v4069, %v4333
  %v4348 = vmul.f32 %v4074, %v4333
  %v4349 = vmul.f32 %v4079, %v4333
  %v4350 = vmul.f32 %v4084, %v4333
  %v4351 = vmul.f32 %v4089, %v4333
  %v4352 = vmul.f32 %v4094, %v4333
  %v4353 = vmul.f32 %v4099, %v4333
  %v4354 = vmul.f32 %v4104, %v4333
  %v4355 = vmul.f32 %v4109, %v4333
  %v4356 = vmul.f32 %v4114, %v4333
  %v4357 = vmul.f32 %v4119, %v4333
  %v4358 = vmul.f32 %v4124, %v4333
  %v4359 = vmul.f32 %v4129, %v4333
  %v4360 = vmul.f32 %v4134, %v4333
  %v4361 = vmul.f32 %v4139, %v4333
  %v4362 = vmul.f32 %v4144, %v4333
  %v4363 = vmul.f32 %v4149, %v4333
  %v4364 = vmul.f32 %v4154, %v4333
  %v4365 = vmul.f32 %v4159, %v4333
  %v4366 = vmul.f32 %v4164, %v4333
  %v4367 = vmul.f32 %v4169, %v4333
  %v4368 = vmul.f32 %v4174, %v4333
  %v4369 = vmul.f32 %v4179, %v4333
  %v4370 = vmul.f32 %v4184, %v4333
  %v4371 = vmul.f32 %v4189, %v4333
  %v4372 = vmul.f32 %v4194, %v4333
  %v4373 = vmul.f32 %v4199, %v4333
  %v4374 = vmul.f32 %v4204, %v4333
  %v4375 = vmul.f32 %v4209, %v4333
  %v4376 = vmul.f32 %v4214, %v4333
  %v4377 = vmul.f32 %v4219, %v4333
  %v4378 = vmul.f32 %v4224, %v4333
  %v4379 = vmul.f32 %v4229, %v4333
  %v4380 = vmul.f32 %v4234, %v4333
  %v4381 = vmul.f32 %v4239, %v4333
  %v4382 = vmul.f32 %v4244, %v4333
  %v4383 = vmul.f32 %v4249, %v4333
  %v4384 = vmul.f32 %v4254, %v4333
  %v4385 = vmul.f32 %v4259, %v4333
  %v4386 = vmul.f32 %v4264, %v4333
  %v4387 = vmul.f32 %v4269, %v4333
  %v4388 = vmul.f32 %v4274, %v4333
  %v4389 = vmul.f32 %v4279, %v4333
  %v4390 = vmul.f32 %v4284, %v4333
  %v4391 = vmul.f32 %v4289, %v4333
  %v4392 = vmul.f32 %v4294, %v4333
  %v4393 = vmul.f32 %v4299, %v4333
  %v4394 = vmul.f32 %v4304, %v4333
  %v4395 = vmul.f32 %v4309, %v4333
  %v4396 = vmul.f32 %v4314, %v4333
  %v4397 = vmul.f32 %v4319, %v4333
  %v4398 = vmul.f32 %v4324, %v4333
  %s4399 = scalar_lea.vmem %s3, 1
  %v4400 = vld [vmem:[%s4399] sm:$0x1]
  %v4402 = vlaneseq
  %v4403 = vshrl.u32 %v4402, 7
  %v4404 = vsub.s32 0, %v4403
  %v4405 = vrot.slane %v4400, %v4404
  %v4407 = vadd.f32 %v4335, %v4405
  %v4408 = vadd.f32 %v4336, %v4405
  %v4409 = vadd.f32 %v4337, %v4405
  %v4410 = vadd.f32 %v4338, %v4405
  %v4411 = vadd.f32 %v4339, %v4405
  %v4412 = vadd.f32 %v4340, %v4405
  %v4413 = vadd.f32 %v4341, %v4405
  %v4414 = vadd.f32 %v4342, %v4405
  %v4415 = vadd.f32 %v4343, %v4405
  %v4416 = vadd.f32 %v4344, %v4405
  %v4417 = vadd.f32 %v4345, %v4405
  %v4418 = vadd.f32 %v4346, %v4405
  %v4419 = vadd.f32 %v4347, %v4405
  %v4420 = vadd.f32 %v4348, %v4405
  %v4421 = vadd.f32 %v4349, %v4405
  %v4422 = vadd.f32 %v4350, %v4405
  %v4423 = vadd.f32 %v4351, %v4405
  %v4424 = vadd.f32 %v4352, %v4405
  %v4425 = vadd.f32 %v4353, %v4405
  %v4426 = vadd.f32 %v4354, %v4405
  %v4427 = vadd.f32 %v4355, %v4405
  %v4428 = vadd.f32 %v4356, %v4405
  %v4429 = vadd.f32 %v4357, %v4405
  %v4430 = vadd.f32 %v4358, %v4405
  %v4431 = vadd.f32 %v4359, %v4405
  %v4432 = vadd.f32 %v4360, %v4405
  %v4433 = vadd.f32 %v4361, %v4405
  %v4434 = vadd.f32 %v4362, %v4405
  %v4435 = vadd.f32 %v4363, %v4405
  %v4436 = vadd.f32 %v4364, %v4405
  %v4437 = vadd.f32 %v4365, %v4405
  %v4438 = vadd.f32 %v4366, %v4405
  %v4439 = vadd.f32 %v4367, %v4405
  %v4440 = vadd.f32 %v4368, %v4405
  %v4441 = vadd.f32 %v4369, %v4405
  %v4442 = vadd.f32 %v4370, %v4405
  %v4443 = vadd.f32 %v4371, %v4405
  %v4444 = vadd.f32 %v4372, %v4405
  %v4445 = vadd.f32 %v4373, %v4405
  %v4446 = vadd.f32 %v4374, %v4405
  %v4447 = vadd.f32 %v4375, %v4405
  %v4448 = vadd.f32 %v4376, %v4405
  %v4449 = vadd.f32 %v4377, %v4405
  %v4450 = vadd.f32 %v4378, %v4405
  %v4451 = vadd.f32 %v4379, %v4405
  %v4452 = vadd.f32 %v4380, %v4405
  %v4453 = vadd.f32 %v4381, %v4405
  %v4454 = vadd.f32 %v4382, %v4405
  %v4455 = vadd.f32 %v4383, %v4405
  %v4456 = vadd.f32 %v4384, %v4405
  %v4457 = vadd.f32 %v4385, %v4405
  %v4458 = vadd.f32 %v4386, %v4405
  %v4459 = vadd.f32 %v4387, %v4405
  %v4460 = vadd.f32 %v4388, %v4405
  %v4461 = vadd.f32 %v4389, %v4405
  %v4462 = vadd.f32 %v4390, %v4405
  %v4463 = vadd.f32 %v4391, %v4405
  %v4464 = vadd.f32 %v4392, %v4405
  %v4465 = vadd.f32 %v4393, %v4405
  %v4466 = vadd.f32 %v4394, %v4405
  %v4467 = vadd.f32 %v4395, %v4405
  %v4468 = vadd.f32 %v4396, %v4405
  %v4469 = vadd.f32 %v4397, %v4405
  %v4470 = vadd.f32 %v4398, %v4405
  %v4471 = vmul.f32 %v4407, 0.1
  %v4472 = vmul.f32 %v4408, 0.1
  %v4473 = vmul.f32 %v4409, 0.1
  %v4474 = vmul.f32 %v4410, 0.1
  %v4475 = vmul.f32 %v4411, 0.1
  %v4476 = vmul.f32 %v4412, 0.1
  %v4477 = vmul.f32 %v4413, 0.1
  %v4478 = vmul.f32 %v4414, 0.1
  %v4479 = vmul.f32 %v4415, 0.1
  %v4480 = vmul.f32 %v4416, 0.1
  %v4481 = vmul.f32 %v4417, 0.1
  %v4482 = vmul.f32 %v4418, 0.1
  %v4483 = vmul.f32 %v4419, 0.1
  %v4484 = vmul.f32 %v4420, 0.1
  %v4485 = vmul.f32 %v4421, 0.1
  %v4486 = vmul.f32 %v4422, 0.1
  %v4487 = vmul.f32 %v4423, 0.1
  %v4488 = vmul.f32 %v4424, 0.1
  %v4489 = vmul.f32 %v4425, 0.1
  %v4490 = vmul.f32 %v4426, 0.1
  %v4491 = vmul.f32 %v4427, 0.1
  %v4492 = vmul.f32 %v4428, 0.1
  %v4493 = vmul.f32 %v4429, 0.1
  %v4494 = vmul.f32 %v4430, 0.1
  %v4495 = vmul.f32 %v4431, 0.1
  %v4496 = vmul.f32 %v4432, 0.1
  %v4497 = vmul.f32 %v4433, 0.1
  %v4498 = vmul.f32 %v4434, 0.1
  %v4499 = vmul.f32 %v4435, 0.1
  %v4500 = vmul.f32 %v4436, 0.1
  %v4501 = vmul.f32 %v4437, 0.1
  %v4502 = vmul.f32 %v4438, 0.1
  %v4503 = vmul.f32 %v4439, 0.1
  %v4504 = vmul.f32 %v4440, 0.1
  %v4505 = vmul.f32 %v4441, 0.1
  %v4506 = vmul.f32 %v4442, 0.1
  %v4507 = vmul.f32 %v4443, 0.1
  %v4508 = vmul.f32 %v4444, 0.1
  %v4509 = vmul.f32 %v4445, 0.1
  %v4510 = vmul.f32 %v4446, 0.1
  %v4511 = vmul.f32 %v4447, 0.1
  %v4512 = vmul.f32 %v4448, 0.1
  %v4513 = vmul.f32 %v4449, 0.1
  %v4514 = vmul.f32 %v4450, 0.1
  %v4515 = vmul.f32 %v4451, 0.1
  %v4516 = vmul.f32 %v4452, 0.1
  %v4517 = vmul.f32 %v4453, 0.1
  %v4518 = vmul.f32 %v4454, 0.1
  %v4519 = vmul.f32 %v4455, 0.1
  %v4520 = vmul.f32 %v4456, 0.1
  %v4521 = vmul.f32 %v4457, 0.1
  %v4522 = vmul.f32 %v4458, 0.1
  %v4523 = vmul.f32 %v4459, 0.1
  %v4524 = vmul.f32 %v4460, 0.1
  %v4525 = vmul.f32 %v4461, 0.1
  %v4526 = vmul.f32 %v4462, 0.1
  %v4527 = vmul.f32 %v4463, 0.1
  %v4528 = vmul.f32 %v4464, 0.1
  %v4529 = vmul.f32 %v4465, 0.1
  %v4530 = vmul.f32 %v4466, 0.1
  %v4531 = vmul.f32 %v4467, 0.1
  %v4532 = vmul.f32 %v4468, 0.1
  %v4533 = vmul.f32 %v4469, 0.1
  %v4534 = vmul.f32 %v4470, 0.1
  %v4535 = vmax.f32 %v4407, %v4471
  %v4536 = vmax.f32 %v4408, %v4472
  %v4537 = vmax.f32 %v4409, %v4473
  %v4538 = vmax.f32 %v4410, %v4474
  %v4539 = vmax.f32 %v4411, %v4475
  %v4540 = vmax.f32 %v4412, %v4476
  %v4541 = vmax.f32 %v4413, %v4477
  %v4542 = vmax.f32 %v4414, %v4478
  %v4543 = vmax.f32 %v4415, %v4479
  %v4544 = vmax.f32 %v4416, %v4480
  %v4545 = vmax.f32 %v4417, %v4481
  %v4546 = vmax.f32 %v4418, %v4482
  %v4547 = vmax.f32 %v4419, %v4483
  %v4548 = vmax.f32 %v4420, %v4484
  %v4549 = vmax.f32 %v4421, %v4485
  %v4550 = vmax.f32 %v4422, %v4486
  %v4551 = vmax.f32 %v4423, %v4487
  %v4552 = vmax.f32 %v4424, %v4488
  %v4553 = vmax.f32 %v4425, %v4489
  %v4554 = vmax.f32 %v4426, %v4490
  %v4555 = vmax.f32 %v4427, %v4491
  %v4556 = vmax.f32 %v4428, %v4492
  %v4557 = vmax.f32 %v4429, %v4493
  %v4558 = vmax.f32 %v4430, %v4494
  %v4559 = vmax.f32 %v4431, %v4495
  %v4560 = vmax.f32 %v4432, %v4496
  %v4561 = vmax.f32 %v4433, %v4497
  %v4562 = vmax.f32 %v4434, %v4498
  %v4563 = vmax.f32 %v4435, %v4499
  %v4564 = vmax.f32 %v4436, %v4500
  %v4565 = vmax.f32 %v4437, %v4501
  %v4566 = vmax.f32 %v4438, %v4502
  %v4567 = vmax.f32 %v4439, %v4503
  %v4568 = vmax.f32 %v4440, %v4504
  %v4569 = vmax.f32 %v4441, %v4505
  %v4570 = vmax.f32 %v4442, %v4506
  %v4571 = vmax.f32 %v4443, %v4507
  %v4572 = vmax.f32 %v4444, %v4508
  %v4573 = vmax.f32 %v4445, %v4509
  %v4574 = vmax.f32 %v4446, %v4510
  %v4575 = vmax.f32 %v4447, %v4511
  %v4576 = vmax.f32 %v4448, %v4512
  %v4577 = vmax.f32 %v4449, %v4513
  %v4578 = vmax.f32 %v4450, %v4514
  %v4579 = vmax.f32 %v4451, %v4515
  %v4580 = vmax.f32 %v4452, %v4516
  %v4581 = vmax.f32 %v4453, %v4517
  %v4582 = vmax.f32 %v4454, %v4518
  %v4583 = vmax.f32 %v4455, %v4519
  %v4584 = vmax.f32 %v4456, %v4520
  %v4585 = vmax.f32 %v4457, %v4521
  %v4586 = vmax.f32 %v4458, %v4522
  %v4587 = vmax.f32 %v4459, %v4523
  %v4588 = vmax.f32 %v4460, %v4524
  %v4589 = vmax.f32 %v4461, %v4525
  %v4590 = vmax.f32 %v4462, %v4526
  %v4591 = vmax.f32 %v4463, %v4527
  %v4592 = vmax.f32 %v4464, %v4528
  %v4593 = vmax.f32 %v4465, %v4529
  %v4594 = vmax.f32 %v4466, %v4530
  %v4595 = vmax.f32 %v4467, %v4531
  %v4596 = vmax.f32 %v4468, %v4532
  %v4597 = vmax.f32 %v4469, %v4533
  %v4598 = vmax.f32 %v4470, %v4534
  %v4599 = vrot.slane %v4535, 7
  %v4600 = vrot.slane %v4536, 7
  %v4601 = vrot.slane %v4537, 7
  %v4602 = vrot.slane %v4538, 7
  %v4603 = vrot.slane %v4539, 7
  %v4604 = vrot.slane %v4540, 7
  %v4605 = vrot.slane %v4541, 7
  %v4606 = vrot.slane %v4542, 7
  %v4607 = vrot.slane %v4543, 7
  %v4608 = vrot.slane %v4544, 7
  %v4609 = vrot.slane %v4545, 7
  %v4610 = vrot.slane %v4546, 7
  %v4611 = vrot.slane %v4547, 7
  %v4612 = vrot.slane %v4548, 7
  %v4613 = vrot.slane %v4549, 7
  %v4614 = vrot.slane %v4550, 7
  %v4615 = vrot.slane %v4551, 7
  %v4616 = vrot.slane %v4552, 7
  %v4617 = vrot.slane %v4553, 7
  %v4618 = vrot.slane %v4554, 7
  %v4619 = vrot.slane %v4555, 7
  %v4620 = vrot.slane %v4556, 7
  %v4621 = vrot.slane %v4557, 7
  %v4622 = vrot.slane %v4558, 7
  %v4623 = vrot.slane %v4559, 7
  %v4624 = vrot.slane %v4560, 7
  %v4625 = vrot.slane %v4561, 7
  %v4626 = vrot.slane %v4562, 7
  %v4627 = vrot.slane %v4563, 7
  %v4628 = vrot.slane %v4564, 7
  %v4629 = vrot.slane %v4565, 7
  %v4630 = vrot.slane %v4566, 7
  %v4631 = vrot.slane %v4567, 7
  %v4632 = vrot.slane %v4568, 7
  %v4633 = vrot.slane %v4569, 7
  %v4634 = vrot.slane %v4570, 7
  %v4635 = vrot.slane %v4571, 7
  %v4636 = vrot.slane %v4572, 7
  %v4637 = vrot.slane %v4573, 7
  %v4638 = vrot.slane %v4574, 7
  %v4639 = vrot.slane %v4575, 7
  %v4640 = vrot.slane %v4576, 7
  %v4641 = vrot.slane %v4577, 7
  %v4642 = vrot.slane %v4578, 7
  %v4643 = vrot.slane %v4579, 7
  %v4644 = vrot.slane %v4580, 7
  %v4645 = vrot.slane %v4581, 7
  %v4646 = vrot.slane %v4582, 7
  %v4647 = vrot.slane %v4583, 7
  %v4648 = vrot.slane %v4584, 7
  %v4649 = vrot.slane %v4585, 7
  %v4650 = vrot.slane %v4586, 7
  %v4651 = vrot.slane %v4587, 7
  %v4652 = vrot.slane %v4588, 7
  %v4653 = vrot.slane %v4589, 7
  %v4654 = vrot.slane %v4590, 7
  %v4655 = vrot.slane %v4591, 7
  %v4656 = vrot.slane %v4592, 7
  %v4657 = vrot.slane %v4593, 7
  %v4658 = vrot.slane %v4594, 7
  %v4659 = vrot.slane %v4595, 7
  %v4660 = vrot.slane %v4596, 7
  %v4661 = vrot.slane %v4597, 7
  %v4662 = vrot.slane %v4598, 7
  %v4663 = vsel %vm1010, %v4661, %v4662
  %v4664 = vsel %vm1010, %v4660, %v4661
  %v4665 = vsel %vm1010, %v4659, %v4660
  %v4666 = vsel %vm1010, %v4658, %v4659
  %v4667 = vsel %vm1010, %v4657, %v4658
  %v4668 = vsel %vm1010, %v4656, %v4657
  %v4669 = vsel %vm1010, %v4655, %v4656
  %v4670 = vsel %vm1010, %v4654, %v4655
  %v4671 = vsel %vm1010, %v4653, %v4654
  %v4672 = vsel %vm1010, %v4652, %v4653
  %v4673 = vsel %vm1010, %v4651, %v4652
  %v4674 = vsel %vm1010, %v4650, %v4651
  %v4675 = vsel %vm1010, %v4649, %v4650
  %v4676 = vsel %vm1010, %v4648, %v4649
  %v4677 = vsel %vm1010, %v4647, %v4648
  %v4678 = vsel %vm1010, %v4646, %v4647
  %v4679 = vsel %vm1010, %v4645, %v4646
  %v4680 = vsel %vm1010, %v4644, %v4645
  %v4681 = vsel %vm1010, %v4643, %v4644
  %v4682 = vsel %vm1010, %v4642, %v4643
  %v4683 = vsel %vm1010, %v4641, %v4642
  %v4684 = vsel %vm1010, %v4640, %v4641
  %v4685 = vsel %vm1010, %v4639, %v4640
  %v4686 = vsel %vm1010, %v4638, %v4639
  %v4687 = vsel %vm1010, %v4637, %v4638
  %v4688 = vsel %vm1010, %v4636, %v4637
  %v4689 = vsel %vm1010, %v4635, %v4636
  %v4690 = vsel %vm1010, %v4634, %v4635
  %v4691 = vsel %vm1010, %v4633, %v4634
  %v4692 = vsel %vm1010, %v4632, %v4633
  %v4693 = vsel %vm1010, %v4631, %v4632
  %v4694 = vsel %vm1010, %v4630, %v4631
  %v4695 = vsel %vm1010, %v4629, %v4630
  %v4696 = vsel %vm1010, %v4628, %v4629
  %v4697 = vsel %vm1010, %v4627, %v4628
  %v4698 = vsel %vm1010, %v4626, %v4627
  %v4699 = vsel %vm1010, %v4625, %v4626
  %v4700 = vsel %vm1010, %v4624, %v4625
  %v4701 = vsel %vm1010, %v4623, %v4624
  %v4702 = vsel %vm1010, %v4622, %v4623
  %v4703 = vsel %vm1010, %v4621, %v4622
  %v4704 = vsel %vm1010, %v4620, %v4621
  %v4705 = vsel %vm1010, %v4619, %v4620
  %v4706 = vsel %vm1010, %v4618, %v4619
  %v4707 = vsel %vm1010, %v4617, %v4618
  %v4708 = vsel %vm1010, %v4616, %v4617
  %v4709 = vsel %vm1010, %v4615, %v4616
  %v4710 = vsel %vm1010, %v4614, %v4615
  %v4711 = vsel %vm1010, %v4613, %v4614
  %v4712 = vsel %vm1010, %v4612, %v4613
  %v4713 = vsel %vm1010, %v4611, %v4612
  %v4714 = vsel %vm1010, %v4610, %v4611
  %v4715 = vsel %vm1010, %v4609, %v4610
  %v4716 = vsel %vm1010, %v4608, %v4609
  %v4717 = vsel %vm1010, %v4607, %v4608
  %v4718 = vsel %vm1010, %v4606, %v4607
  %v4719 = vsel %vm1010, %v4605, %v4606
  %v4720 = vsel %vm1010, %v4604, %v4605
  %v4721 = vsel %vm1010, %v4603, %v4604
  %v4722 = vsel %vm1010, %v4602, %v4603
  %v4723 = vsel %vm1010, %v4601, %v4602
  %v4724 = vsel %vm1010, %v4600, %v4601
  %v4725 = vsel %vm1010, %v4599, %v4600
  %v4726 = vsel %vm1010, %v4662, %v4599
  %v4727 = vsel %vm1077, %v4726, 0.0
  %v4728 = vsel %vm1078, %v4725, 0.0
  %v4729 = vsel %vm1077, %v4724, 0.0
  %v4730 = vsel %vm1078, %v4723, 0.0
  %v4731 = vsel %vm1077, %v4722, 0.0
  %v4732 = vsel %vm1078, %v4721, 0.0
  %v4733 = vsel %vm1077, %v4720, 0.0
  %v4734 = vsel %vm1078, %v4719, 0.0
  %v4735 = vsel %vm1077, %v4718, 0.0
  %v4736 = vsel %vm1078, %v4717, 0.0
  %v4737 = vsel %vm1077, %v4716, 0.0
  %v4738 = vsel %vm1078, %v4715, 0.0
  %v4739 = vsel %vm1077, %v4714, 0.0
  %v4740 = vsel %vm1078, %v4713, 0.0
  %v4741 = vsel %vm1077, %v4712, 0.0
  %v4742 = vsel %vm1078, %v4711, 0.0
  %v4743 = vsel %vm1077, %v4710, 0.0
  %v4744 = vsel %vm1078, %v4709, 0.0
  %v4745 = vsel %vm1077, %v4708, 0.0
  %v4746 = vsel %vm1078, %v4707, 0.0
  %v4747 = vsel %vm1077, %v4706, 0.0
  %v4748 = vsel %vm1078, %v4705, 0.0
  %v4749 = vsel %vm1077, %v4704, 0.0
  %v4750 = vsel %vm1078, %v4703, 0.0
  %v4751 = vsel %vm1077, %v4702, 0.0
  %v4752 = vsel %vm1078, %v4701, 0.0
  %v4753 = vsel %vm1077, %v4700, 0.0
  %v4754 = vsel %vm1078, %v4699, 0.0
  %v4755 = vsel %vm1077, %v4698, 0.0
  %v4756 = vsel %vm1078, %v4697, 0.0
  %v4757 = vsel %vm1077, %v4696, 0.0
  %v4758 = vsel %vm1078, %v4695, 0.0
  %v4759 = vsel %vm1077, %v4694, 0.0
  %v4760 = vsel %vm1078, %v4693, 0.0
  %v4761 = vsel %vm1077, %v4692, 0.0
  %v4762 = vsel %vm1078, %v4691, 0.0
  %v4763 = vsel %vm1077, %v4690, 0.0
  %v4764 = vsel %vm1078, %v4689, 0.0
  %v4765 = vsel %vm1077, %v4688, 0.0
  %v4766 = vsel %vm1078, %v4687, 0.0
  %v4767 = vsel %vm1077, %v4686, 0.0
  %v4768 = vsel %vm1078, %v4685, 0.0
  %v4769 = vsel %vm1077, %v4684, 0.0
  %v4770 = vsel %vm1078, %v4683, 0.0
  %v4771 = vsel %vm1077, %v4682, 0.0
  %v4772 = vsel %vm1078, %v4681, 0.0
  %v4773 = vsel %vm1077, %v4680, 0.0
  %v4774 = vsel %vm1078, %v4679, 0.0
  %v4775 = vsel %vm1077, %v4678, 0.0
  %v4776 = vsel %vm1078, %v4677, 0.0
  %v4777 = vsel %vm1077, %v4676, 0.0
  %v4778 = vsel %vm1078, %v4675, 0.0
  %v4779 = vsel %vm1077, %v4674, 0.0
  %v4780 = vsel %vm1078, %v4673, 0.0
  %v4781 = vsel %vm1077, %v4672, 0.0
  %v4782 = vsel %vm1078, %v4671, 0.0
  %v4783 = vsel %vm1077, %v4670, 0.0
  %v4784 = vsel %vm1078, %v4669, 0.0
  %v4785 = vsel %vm1077, %v4668, 0.0
  %v4786 = vsel %vm1078, %v4667, 0.0
  %v4787 = vsel %vm1077, %v4666, 0.0
  %v4788 = vsel %vm1078, %v4665, 0.0
  %v4789 = vsel %vm1077, %v4664, 0.0
  %v4790 = vsel %vm1078, %v4663, 0.0
  %v4791 = vrot.slane %v4535, 1
  %v4792 = vrot.slane %v4536, 1
  %v4793 = vrot.slane %v4537, 1
  %v4794 = vrot.slane %v4538, 1
  %v4795 = vrot.slane %v4539, 1
  %v4796 = vrot.slane %v4540, 1
  %v4797 = vrot.slane %v4541, 1
  %v4798 = vrot.slane %v4542, 1
  %v4799 = vrot.slane %v4543, 1
  %v4800 = vrot.slane %v4544, 1
  %v4801 = vrot.slane %v4545, 1
  %v4802 = vrot.slane %v4546, 1
  %v4803 = vrot.slane %v4547, 1
  %v4804 = vrot.slane %v4548, 1
  %v4805 = vrot.slane %v4549, 1
  %v4806 = vrot.slane %v4550, 1
  %v4807 = vrot.slane %v4551, 1
  %v4808 = vrot.slane %v4552, 1
  %v4809 = vrot.slane %v4553, 1
  %v4810 = vrot.slane %v4554, 1
  %v4811 = vrot.slane %v4555, 1
  %v4812 = vrot.slane %v4556, 1
  %v4813 = vrot.slane %v4557, 1
  %v4814 = vrot.slane %v4558, 1
  %v4815 = vrot.slane %v4559, 1
  %v4816 = vrot.slane %v4560, 1
  %v4817 = vrot.slane %v4561, 1
  %v4818 = vrot.slane %v4562, 1
  %v4819 = vrot.slane %v4563, 1
  %v4820 = vrot.slane %v4564, 1
  %v4821 = vrot.slane %v4565, 1
  %v4822 = vrot.slane %v4566, 1
  %v4823 = vrot.slane %v4567, 1
  %v4824 = vrot.slane %v4568, 1
  %v4825 = vrot.slane %v4569, 1
  %v4826 = vrot.slane %v4570, 1
  %v4827 = vrot.slane %v4571, 1
  %v4828 = vrot.slane %v4572, 1
  %v4829 = vrot.slane %v4573, 1
  %v4830 = vrot.slane %v4574, 1
  %v4831 = vrot.slane %v4575, 1
  %v4832 = vrot.slane %v4576, 1
  %v4833 = vrot.slane %v4577, 1
  %v4834 = vrot.slane %v4578, 1
  %v4835 = vrot.slane %v4579, 1
  %v4836 = vrot.slane %v4580, 1
  %v4837 = vrot.slane %v4581, 1
  %v4838 = vrot.slane %v4582, 1
  %v4839 = vrot.slane %v4583, 1
  %v4840 = vrot.slane %v4584, 1
  %v4841 = vrot.slane %v4585, 1
  %v4842 = vrot.slane %v4586, 1
  %v4843 = vrot.slane %v4587, 1
  %v4844 = vrot.slane %v4588, 1
  %v4845 = vrot.slane %v4589, 1
  %v4846 = vrot.slane %v4590, 1
  %v4847 = vrot.slane %v4591, 1
  %v4848 = vrot.slane %v4592, 1
  %v4849 = vrot.slane %v4593, 1
  %v4850 = vrot.slane %v4594, 1
  %v4851 = vrot.slane %v4595, 1
  %v4852 = vrot.slane %v4596, 1
  %v4853 = vrot.slane %v4597, 1
  %v4854 = vrot.slane %v4598, 1
  %v4855 = vsel %vm1207, %v4853, %v4854
  %v4856 = vsel %vm1207, %v4852, %v4853
  %v4857 = vsel %vm1207, %v4851, %v4852
  %v4858 = vsel %vm1207, %v4850, %v4851
  %v4859 = vsel %vm1207, %v4849, %v4850
  %v4860 = vsel %vm1207, %v4848, %v4849
  %v4861 = vsel %vm1207, %v4847, %v4848
  %v4862 = vsel %vm1207, %v4846, %v4847
  %v4863 = vsel %vm1207, %v4845, %v4846
  %v4864 = vsel %vm1207, %v4844, %v4845
  %v4865 = vsel %vm1207, %v4843, %v4844
  %v4866 = vsel %vm1207, %v4842, %v4843
  %v4867 = vsel %vm1207, %v4841, %v4842
  %v4868 = vsel %vm1207, %v4840, %v4841
  %v4869 = vsel %vm1207, %v4839, %v4840
  %v4870 = vsel %vm1207, %v4838, %v4839
  %v4871 = vsel %vm1207, %v4837, %v4838
  %v4872 = vsel %vm1207, %v4836, %v4837
  %v4873 = vsel %vm1207, %v4835, %v4836
  %v4874 = vsel %vm1207, %v4834, %v4835
  %v4875 = vsel %vm1207, %v4833, %v4834
  %v4876 = vsel %vm1207, %v4832, %v4833
  %v4877 = vsel %vm1207, %v4831, %v4832
  %v4878 = vsel %vm1207, %v4830, %v4831
  %v4879 = vsel %vm1207, %v4829, %v4830
  %v4880 = vsel %vm1207, %v4828, %v4829
  %v4881 = vsel %vm1207, %v4827, %v4828
  %v4882 = vsel %vm1207, %v4826, %v4827
  %v4883 = vsel %vm1207, %v4825, %v4826
  %v4884 = vsel %vm1207, %v4824, %v4825
  %v4885 = vsel %vm1207, %v4823, %v4824
  %v4886 = vsel %vm1207, %v4822, %v4823
  %v4887 = vsel %vm1207, %v4821, %v4822
  %v4888 = vsel %vm1207, %v4820, %v4821
  %v4889 = vsel %vm1207, %v4819, %v4820
  %v4890 = vsel %vm1207, %v4818, %v4819
  %v4891 = vsel %vm1207, %v4817, %v4818
  %v4892 = vsel %vm1207, %v4816, %v4817
  %v4893 = vsel %vm1207, %v4815, %v4816
  %v4894 = vsel %vm1207, %v4814, %v4815
  %v4895 = vsel %vm1207, %v4813, %v4814
  %v4896 = vsel %vm1207, %v4812, %v4813
  %v4897 = vsel %vm1207, %v4811, %v4812
  %v4898 = vsel %vm1207, %v4810, %v4811
  %v4899 = vsel %vm1207, %v4809, %v4810
  %v4900 = vsel %vm1207, %v4808, %v4809
  %v4901 = vsel %vm1207, %v4807, %v4808
  %v4902 = vsel %vm1207, %v4806, %v4807
  %v4903 = vsel %vm1207, %v4805, %v4806
  %v4904 = vsel %vm1207, %v4804, %v4805
  %v4905 = vsel %vm1207, %v4803, %v4804
  %v4906 = vsel %vm1207, %v4802, %v4803
  %v4907 = vsel %vm1207, %v4801, %v4802
  %v4908 = vsel %vm1207, %v4800, %v4801
  %v4909 = vsel %vm1207, %v4799, %v4800
  %v4910 = vsel %vm1207, %v4798, %v4799
  %v4911 = vsel %vm1207, %v4797, %v4798
  %v4912 = vsel %vm1207, %v4796, %v4797
  %v4913 = vsel %vm1207, %v4795, %v4796
  %v4914 = vsel %vm1207, %v4794, %v4795
  %v4915 = vsel %vm1207, %v4793, %v4794
  %v4916 = vsel %vm1207, %v4792, %v4793
  %v4917 = vsel %vm1207, %v4791, %v4792
  %v4918 = vsel %vm1207, %v4854, %v4791
  %v4919 = vsel %vm1274, %v4917, 0.0
  %v4920 = vsel %vm1275, %v4916, 0.0
  %v4921 = vsel %vm1274, %v4915, 0.0
  %v4922 = vsel %vm1275, %v4914, 0.0
  %v4923 = vsel %vm1274, %v4913, 0.0
  %v4924 = vsel %vm1275, %v4912, 0.0
  %v4925 = vsel %vm1274, %v4911, 0.0
  %v4926 = vsel %vm1275, %v4910, 0.0
  %v4927 = vsel %vm1274, %v4909, 0.0
  %v4928 = vsel %vm1275, %v4908, 0.0
  %v4929 = vsel %vm1274, %v4907, 0.0
  %v4930 = vsel %vm1275, %v4906, 0.0
  %v4931 = vsel %vm1274, %v4905, 0.0
  %v4932 = vsel %vm1275, %v4904, 0.0
  %v4933 = vsel %vm1274, %v4903, 0.0
  %v4934 = vsel %vm1275, %v4902, 0.0
  %v4935 = vsel %vm1274, %v4901, 0.0
  %v4936 = vsel %vm1275, %v4900, 0.0
  %v4937 = vsel %vm1274, %v4899, 0.0
  %v4938 = vsel %vm1275, %v4898, 0.0
  %v4939 = vsel %vm1274, %v4897, 0.0
  %v4940 = vsel %vm1275, %v4896, 0.0
  %v4941 = vsel %vm1274, %v4895, 0.0
  %v4942 = vsel %vm1275, %v4894, 0.0
  %v4943 = vsel %vm1274, %v4893, 0.0
  %v4944 = vsel %vm1275, %v4892, 0.0
  %v4945 = vsel %vm1274, %v4891, 0.0
  %v4946 = vsel %vm1275, %v4890, 0.0
  %v4947 = vsel %vm1274, %v4889, 0.0
  %v4948 = vsel %vm1275, %v4888, 0.0
  %v4949 = vsel %vm1274, %v4887, 0.0
  %v4950 = vsel %vm1275, %v4886, 0.0
  %v4951 = vsel %vm1274, %v4885, 0.0
  %v4952 = vsel %vm1275, %v4884, 0.0
  %v4953 = vsel %vm1274, %v4883, 0.0
  %v4954 = vsel %vm1275, %v4882, 0.0
  %v4955 = vsel %vm1274, %v4881, 0.0
  %v4956 = vsel %vm1275, %v4880, 0.0
  %v4957 = vsel %vm1274, %v4879, 0.0
  %v4958 = vsel %vm1275, %v4878, 0.0
  %v4959 = vsel %vm1274, %v4877, 0.0
  %v4960 = vsel %vm1275, %v4876, 0.0
  %v4961 = vsel %vm1274, %v4875, 0.0
  %v4962 = vsel %vm1275, %v4874, 0.0
  %v4963 = vsel %vm1274, %v4873, 0.0
  %v4964 = vsel %vm1275, %v4872, 0.0
  %v4965 = vsel %vm1274, %v4871, 0.0
  %v4966 = vsel %vm1275, %v4870, 0.0
  %v4967 = vsel %vm1274, %v4869, 0.0
  %v4968 = vsel %vm1275, %v4868, 0.0
  %v4969 = vsel %vm1274, %v4867, 0.0
  %v4970 = vsel %vm1275, %v4866, 0.0
  %v4971 = vsel %vm1274, %v4865, 0.0
  %v4972 = vsel %vm1275, %v4864, 0.0
  %v4973 = vsel %vm1274, %v4863, 0.0
  %v4974 = vsel %vm1275, %v4862, 0.0
  %v4975 = vsel %vm1274, %v4861, 0.0
  %v4976 = vsel %vm1275, %v4860, 0.0
  %v4977 = vsel %vm1274, %v4859, 0.0
  %v4978 = vsel %vm1275, %v4858, 0.0
  %v4979 = vsel %vm1274, %v4857, 0.0
  %v4980 = vsel %vm1275, %v4856, 0.0
  %v4981 = vsel %vm1274, %v4855, 0.0
  %v4982 = vsel %vm1275, %v4918, 0.0
  %5047 = vrot.lane.b32.xlu0 %v4535, 4
  %v5048 = vpop.permute.xlu0 %5047
  %5049 = vrot.lane.b32.xlu0 %v4536, 4
  %v5050 = vpop.permute.xlu0 %5049
  %5051 = vrot.lane.b32.xlu0 %v4537, 4
  %v5052 = vpop.permute.xlu0 %5051
  %5053 = vrot.lane.b32.xlu0 %v4538, 4
  %v5054 = vpop.permute.xlu0 %5053
  %5055 = vrot.lane.b32.xlu0 %v4539, 4
  %v5056 = vpop.permute.xlu0 %5055
  %5057 = vrot.lane.b32.xlu0 %v4540, 4
  %v5058 = vpop.permute.xlu0 %5057
  %5059 = vrot.lane.b32.xlu0 %v4541, 4
  %v5060 = vpop.permute.xlu0 %5059
  %5061 = vrot.lane.b32.xlu0 %v4542, 4
  %v5062 = vpop.permute.xlu0 %5061
  %5063 = vrot.lane.b32.xlu0 %v4543, 4
  %v5064 = vpop.permute.xlu0 %5063
  %5065 = vrot.lane.b32.xlu0 %v4544, 4
  %v5066 = vpop.permute.xlu0 %5065
  %5067 = vrot.lane.b32.xlu0 %v4545, 4
  %v5068 = vpop.permute.xlu0 %5067
  %5069 = vrot.lane.b32.xlu0 %v4546, 4
  %v5070 = vpop.permute.xlu0 %5069
  %5071 = vrot.lane.b32.xlu0 %v4547, 4
  %v5072 = vpop.permute.xlu0 %5071
  %5073 = vrot.lane.b32.xlu0 %v4548, 4
  %v5074 = vpop.permute.xlu0 %5073
  %5075 = vrot.lane.b32.xlu0 %v4549, 4
  %v5076 = vpop.permute.xlu0 %5075
  %5077 = vrot.lane.b32.xlu0 %v4550, 4
  %v5078 = vpop.permute.xlu0 %5077
  %5079 = vrot.lane.b32.xlu0 %v4551, 4
  %v5080 = vpop.permute.xlu0 %5079
  %5081 = vrot.lane.b32.xlu0 %v4552, 4
  %v5082 = vpop.permute.xlu0 %5081
  %5083 = vrot.lane.b32.xlu0 %v4553, 4
  %v5084 = vpop.permute.xlu0 %5083
  %5085 = vrot.lane.b32.xlu0 %v4554, 4
  %v5086 = vpop.permute.xlu0 %5085
  %5087 = vrot.lane.b32.xlu0 %v4555, 4
  %v5088 = vpop.permute.xlu0 %5087
  %5089 = vrot.lane.b32.xlu0 %v4556, 4
  %v5090 = vpop.permute.xlu0 %5089
  %5091 = vrot.lane.b32.xlu0 %v4557, 4
  %v5092 = vpop.permute.xlu0 %5091
  %5093 = vrot.lane.b32.xlu0 %v4558, 4
  %v5094 = vpop.permute.xlu0 %5093
  %5095 = vrot.lane.b32.xlu0 %v4559, 4
  %v5096 = vpop.permute.xlu0 %5095
  %5097 = vrot.lane.b32.xlu0 %v4560, 4
  %v5098 = vpop.permute.xlu0 %5097
  %5099 = vrot.lane.b32.xlu0 %v4561, 4
  %v5100 = vpop.permute.xlu0 %5099
  %5101 = vrot.lane.b32.xlu0 %v4562, 4
  %v5102 = vpop.permute.xlu0 %5101
  %5103 = vrot.lane.b32.xlu0 %v4563, 4
  %v5104 = vpop.permute.xlu0 %5103
  %5105 = vrot.lane.b32.xlu0 %v4564, 4
  %v5106 = vpop.permute.xlu0 %5105
  %5107 = vrot.lane.b32.xlu0 %v4565, 4
  %v5108 = vpop.permute.xlu0 %5107
  %5109 = vrot.lane.b32.xlu0 %v4566, 4
  %v5110 = vpop.permute.xlu0 %5109
  %5111 = vrot.lane.b32.xlu0 %v4567, 4
  %v5112 = vpop.permute.xlu0 %5111
  %5113 = vrot.lane.b32.xlu0 %v4568, 4
  %v5114 = vpop.permute.xlu0 %5113
  %5115 = vrot.lane.b32.xlu0 %v4569, 4
  %v5116 = vpop.permute.xlu0 %5115
  %5117 = vrot.lane.b32.xlu0 %v4570, 4
  %v5118 = vpop.permute.xlu0 %5117
  %5119 = vrot.lane.b32.xlu0 %v4571, 4
  %v5120 = vpop.permute.xlu0 %5119
  %5121 = vrot.lane.b32.xlu0 %v4572, 4
  %v5122 = vpop.permute.xlu0 %5121
  %5123 = vrot.lane.b32.xlu0 %v4573, 4
  %v5124 = vpop.permute.xlu0 %5123
  %5125 = vrot.lane.b32.xlu0 %v4574, 4
  %v5126 = vpop.permute.xlu0 %5125
  %5127 = vrot.lane.b32.xlu0 %v4575, 4
  %v5128 = vpop.permute.xlu0 %5127
  %5129 = vrot.lane.b32.xlu0 %v4576, 4
  %v5130 = vpop.permute.xlu0 %5129
  %5131 = vrot.lane.b32.xlu0 %v4577, 4
  %v5132 = vpop.permute.xlu0 %5131
  %5133 = vrot.lane.b32.xlu0 %v4578, 4
  %v5134 = vpop.permute.xlu0 %5133
  %5135 = vrot.lane.b32.xlu0 %v4579, 4
  %v5136 = vpop.permute.xlu0 %5135
  %5137 = vrot.lane.b32.xlu0 %v4580, 4
  %v5138 = vpop.permute.xlu0 %5137
  %5139 = vrot.lane.b32.xlu0 %v4581, 4
  %v5140 = vpop.permute.xlu0 %5139
  %5141 = vrot.lane.b32.xlu0 %v4582, 4
  %v5142 = vpop.permute.xlu0 %5141
  %5143 = vrot.lane.b32.xlu0 %v4583, 4
  %v5144 = vpop.permute.xlu0 %5143
  %5145 = vrot.lane.b32.xlu0 %v4584, 4
  %v5146 = vpop.permute.xlu0 %5145
  %5147 = vrot.lane.b32.xlu0 %v4585, 4
  %v5148 = vpop.permute.xlu0 %5147
  %5149 = vrot.lane.b32.xlu0 %v4586, 4
  %v5150 = vpop.permute.xlu0 %5149
  %5151 = vrot.lane.b32.xlu0 %v4587, 4
  %v5152 = vpop.permute.xlu0 %5151
  %5153 = vrot.lane.b32.xlu0 %v4588, 4
  %v5154 = vpop.permute.xlu0 %5153
  %5155 = vrot.lane.b32.xlu0 %v4589, 4
  %v5156 = vpop.permute.xlu0 %5155
  %5157 = vrot.lane.b32.xlu0 %v4590, 4
  %v5158 = vpop.permute.xlu0 %5157
  %5159 = vrot.lane.b32.xlu0 %v4591, 4
  %v5160 = vpop.permute.xlu0 %5159
  %5161 = vrot.lane.b32.xlu0 %v4592, 4
  %v5162 = vpop.permute.xlu0 %5161
  %5163 = vrot.lane.b32.xlu0 %v4593, 4
  %v5164 = vpop.permute.xlu0 %5163
  %5165 = vrot.lane.b32.xlu0 %v4594, 4
  %v5166 = vpop.permute.xlu0 %5165
  %5167 = vrot.lane.b32.xlu0 %v4595, 4
  %v5168 = vpop.permute.xlu0 %5167
  %5169 = vrot.lane.b32.xlu0 %v4596, 4
  %v5170 = vpop.permute.xlu0 %5169
  %5171 = vrot.lane.b32.xlu0 %v4597, 4
  %v5172 = vpop.permute.xlu0 %5171
  %5173 = vrot.lane.b32.xlu0 %v4598, 4
  %v5174 = vpop.permute.xlu0 %5173
  %5303 = vrot.lane.b32.xlu0 %v4919, 8
  %v5304 = vpop.permute.xlu0 %5303
  %5305 = vrot.lane.b32.xlu0 %v4920, 8
  %v5306 = vpop.permute.xlu0 %5305
  %5307 = vrot.lane.b32.xlu0 %v4921, 8
  %v5308 = vpop.permute.xlu0 %5307
  %5309 = vrot.lane.b32.xlu0 %v4922, 8
  %v5310 = vpop.permute.xlu0 %5309
  %5311 = vrot.lane.b32.xlu0 %v4923, 8
  %v5312 = vpop.permute.xlu0 %5311
  %5313 = vrot.lane.b32.xlu0 %v4924, 8
  %v5314 = vpop.permute.xlu0 %5313
  %5315 = vrot.lane.b32.xlu0 %v4925, 8
  %v5316 = vpop.permute.xlu0 %5315
  %5317 = vrot.lane.b32.xlu0 %v4926, 8
  %v5318 = vpop.permute.xlu0 %5317
  %5319 = vrot.lane.b32.xlu0 %v4927, 8
  %v5320 = vpop.permute.xlu0 %5319
  %5321 = vrot.lane.b32.xlu0 %v4928, 8
  %v5322 = vpop.permute.xlu0 %5321
  %5323 = vrot.lane.b32.xlu0 %v4929, 8
  %v5324 = vpop.permute.xlu0 %5323
  %5325 = vrot.lane.b32.xlu0 %v4930, 8
  %v5326 = vpop.permute.xlu0 %5325
  %5327 = vrot.lane.b32.xlu0 %v4931, 8
  %v5328 = vpop.permute.xlu0 %5327
  %5329 = vrot.lane.b32.xlu0 %v4932, 8
  %v5330 = vpop.permute.xlu0 %5329
  %5331 = vrot.lane.b32.xlu0 %v4933, 8
  %v5332 = vpop.permute.xlu0 %5331
  %5333 = vrot.lane.b32.xlu0 %v4934, 8
  %v5334 = vpop.permute.xlu0 %5333
  %5335 = vrot.lane.b32.xlu0 %v4935, 8
  %v5336 = vpop.permute.xlu0 %5335
  %5337 = vrot.lane.b32.xlu0 %v4936, 8
  %v5338 = vpop.permute.xlu0 %5337
  %5339 = vrot.lane.b32.xlu0 %v4937, 8
  %v5340 = vpop.permute.xlu0 %5339
  %5341 = vrot.lane.b32.xlu0 %v4938, 8
  %v5342 = vpop.permute.xlu0 %5341
  %5343 = vrot.lane.b32.xlu0 %v4939, 8
  %v5344 = vpop.permute.xlu0 %5343
  %5345 = vrot.lane.b32.xlu0 %v4940, 8
  %v5346 = vpop.permute.xlu0 %5345
  %5347 = vrot.lane.b32.xlu0 %v4941, 8
  %v5348 = vpop.permute.xlu0 %5347
  %5349 = vrot.lane.b32.xlu0 %v4942, 8
  %v5350 = vpop.permute.xlu0 %5349
  %5351 = vrot.lane.b32.xlu0 %v4943, 8
  %v5352 = vpop.permute.xlu0 %5351
  %5353 = vrot.lane.b32.xlu0 %v4944, 8
  %v5354 = vpop.permute.xlu0 %5353
  %5355 = vrot.lane.b32.xlu0 %v4945, 8
  %v5356 = vpop.permute.xlu0 %5355
  %5357 = vrot.lane.b32.xlu0 %v4946, 8
  %v5358 = vpop.permute.xlu0 %5357
  %5359 = vrot.lane.b32.xlu0 %v4947, 8
  %v5360 = vpop.permute.xlu0 %5359
  %5361 = vrot.lane.b32.xlu0 %v4948, 8
  %v5362 = vpop.permute.xlu0 %5361
  %5363 = vrot.lane.b32.xlu0 %v4949, 8
  %v5364 = vpop.permute.xlu0 %5363
  %5365 = vrot.lane.b32.xlu0 %v4950, 8
  %v5366 = vpop.permute.xlu0 %5365
  %5367 = vrot.lane.b32.xlu0 %v4951, 8
  %v5368 = vpop.permute.xlu0 %5367
  %5369 = vrot.lane.b32.xlu0 %v4952, 8
  %v5370 = vpop.permute.xlu0 %5369
  %5371 = vrot.lane.b32.xlu0 %v4953, 8
  %v5372 = vpop.permute.xlu0 %5371
  %5373 = vrot.lane.b32.xlu0 %v4954, 8
  %v5374 = vpop.permute.xlu0 %5373
  %5375 = vrot.lane.b32.xlu0 %v4955, 8
  %v5376 = vpop.permute.xlu0 %5375
  %5377 = vrot.lane.b32.xlu0 %v4956, 8
  %v5378 = vpop.permute.xlu0 %5377
  %5379 = vrot.lane.b32.xlu0 %v4957, 8
  %v5380 = vpop.permute.xlu0 %5379
  %5381 = vrot.lane.b32.xlu0 %v4958, 8
  %v5382 = vpop.permute.xlu0 %5381
  %5383 = vrot.lane.b32.xlu0 %v4959, 8
  %v5384 = vpop.permute.xlu0 %5383
  %5385 = vrot.lane.b32.xlu0 %v4960, 8
  %v5386 = vpop.permute.xlu0 %5385
  %5387 = vrot.lane.b32.xlu0 %v4961, 8
  %v5388 = vpop.permute.xlu0 %5387
  %5389 = vrot.lane.b32.xlu0 %v4962, 8
  %v5390 = vpop.permute.xlu0 %5389
  %5391 = vrot.lane.b32.xlu0 %v4963, 8
  %v5392 = vpop.permute.xlu0 %5391
  %5393 = vrot.lane.b32.xlu0 %v4964, 8
  %v5394 = vpop.permute.xlu0 %5393
  %5395 = vrot.lane.b32.xlu0 %v4965, 8
  %v5396 = vpop.permute.xlu0 %5395
  %5397 = vrot.lane.b32.xlu0 %v4966, 8
  %v5398 = vpop.permute.xlu0 %5397
  %5399 = vrot.lane.b32.xlu0 %v4967, 8
  %v5400 = vpop.permute.xlu0 %5399
  %5401 = vrot.lane.b32.xlu0 %v4968, 8
  %v5402 = vpop.permute.xlu0 %5401
  %5403 = vrot.lane.b32.xlu0 %v4969, 8
  %v5404 = vpop.permute.xlu0 %5403
  %5405 = vrot.lane.b32.xlu0 %v4970, 8
  %v5406 = vpop.permute.xlu0 %5405
  %5407 = vrot.lane.b32.xlu0 %v4971, 8
  %v5408 = vpop.permute.xlu0 %5407
  %5409 = vrot.lane.b32.xlu0 %v4972, 8
  %v5410 = vpop.permute.xlu0 %5409
  %5411 = vrot.lane.b32.xlu0 %v4973, 8
  %v5412 = vpop.permute.xlu0 %5411
  %5413 = vrot.lane.b32.xlu0 %v4974, 8
  %v5414 = vpop.permute.xlu0 %5413
  %5415 = vrot.lane.b32.xlu0 %v4975, 8
  %v5416 = vpop.permute.xlu0 %5415
  %5417 = vrot.lane.b32.xlu0 %v4976, 8
  %v5418 = vpop.permute.xlu0 %5417
  %5419 = vrot.lane.b32.xlu0 %v4977, 8
  %v5420 = vpop.permute.xlu0 %5419
  %5421 = vrot.lane.b32.xlu0 %v4978, 8
  %v5422 = vpop.permute.xlu0 %5421
  %5423 = vrot.lane.b32.xlu0 %v4979, 8
  %v5424 = vpop.permute.xlu0 %5423
  %5425 = vrot.lane.b32.xlu0 %v4980, 8
  %v5426 = vpop.permute.xlu0 %5425
  %5427 = vrot.lane.b32.xlu0 %v4981, 8
  %v5428 = vpop.permute.xlu0 %5427
  %5429 = vrot.lane.b32.xlu0 %v4982, 8
  %v5430 = vpop.permute.xlu0 %5429
  %v5495 = vsel %vm1852, %v4727, %v5048
  %v5496 = vsel %vm1852, %v4728, %v5050
  %v5497 = vsel %vm1852, %v4729, %v5052
  %v5498 = vsel %vm1852, %v4730, %v5054
  %v5499 = vsel %vm1852, %v4731, %v5056
  %v5500 = vsel %vm1852, %v4732, %v5058
  %v5501 = vsel %vm1852, %v4733, %v5060
  %v5502 = vsel %vm1852, %v4734, %v5062
  %v5503 = vsel %vm1852, %v4735, %v5064
  %v5504 = vsel %vm1852, %v4736, %v5066
  %v5505 = vsel %vm1852, %v4737, %v5068
  %v5506 = vsel %vm1852, %v4738, %v5070
  %v5507 = vsel %vm1852, %v4739, %v5072
  %v5508 = vsel %vm1852, %v4740, %v5074
  %v5509 = vsel %vm1852, %v4741, %v5076
  %v5510 = vsel %vm1852, %v4742, %v5078
  %v5511 = vsel %vm1852, %v4743, %v5080
  %v5512 = vsel %vm1852, %v4744, %v5082
  %v5513 = vsel %vm1852, %v4745, %v5084
  %v5514 = vsel %vm1852, %v4746, %v5086
  %v5515 = vsel %vm1852, %v4747, %v5088
  %v5516 = vsel %vm1852, %v4748, %v5090
  %v5517 = vsel %vm1852, %v4749, %v5092
  %v5518 = vsel %vm1852, %v4750, %v5094
  %v5519 = vsel %vm1852, %v4751, %v5096
  %v5520 = vsel %vm1852, %v4752, %v5098
  %v5521 = vsel %vm1852, %v4753, %v5100
  %v5522 = vsel %vm1852, %v4754, %v5102
  %v5523 = vsel %vm1852, %v4755, %v5104
  %v5524 = vsel %vm1852, %v4756, %v5106
  %v5525 = vsel %vm1852, %v4757, %v5108
  %v5526 = vsel %vm1852, %v4758, %v5110
  %v5527 = vsel %vm1852, %v4759, %v5112
  %v5528 = vsel %vm1852, %v4760, %v5114
  %v5529 = vsel %vm1852, %v4761, %v5116
  %v5530 = vsel %vm1852, %v4762, %v5118
  %v5531 = vsel %vm1852, %v4763, %v5120
  %v5532 = vsel %vm1852, %v4764, %v5122
  %v5533 = vsel %vm1852, %v4765, %v5124
  %v5534 = vsel %vm1852, %v4766, %v5126
  %v5535 = vsel %vm1852, %v4767, %v5128
  %v5536 = vsel %vm1852, %v4768, %v5130
  %v5537 = vsel %vm1852, %v4769, %v5132
  %v5538 = vsel %vm1852, %v4770, %v5134
  %v5539 = vsel %vm1852, %v4771, %v5136
  %v5540 = vsel %vm1852, %v4772, %v5138
  %v5541 = vsel %vm1852, %v4773, %v5140
  %v5542 = vsel %vm1852, %v4774, %v5142
  %v5543 = vsel %vm1852, %v4775, %v5144
  %v5544 = vsel %vm1852, %v4776, %v5146
  %v5545 = vsel %vm1852, %v4777, %v5148
  %v5546 = vsel %vm1852, %v4778, %v5150
  %v5547 = vsel %vm1852, %v4779, %v5152
  %v5548 = vsel %vm1852, %v4780, %v5154
  %v5549 = vsel %vm1852, %v4781, %v5156
  %v5550 = vsel %vm1852, %v4782, %v5158
  %v5551 = vsel %vm1852, %v4783, %v5160
  %v5552 = vsel %vm1852, %v4784, %v5162
  %v5553 = vsel %vm1852, %v4785, %v5164
  %v5554 = vsel %vm1852, %v4786, %v5166
  %v5555 = vsel %vm1852, %v4787, %v5168
  %v5556 = vsel %vm1852, %v4788, %v5170
  %v5557 = vsel %vm1852, %v4789, %v5172
  %v5558 = vsel %vm1852, %v4790, %v5174
  %v5559 = vsel %vm98, %v5495, %v5304
  %v5560 = vsel %vm98, %v5496, %v5306
  %v5561 = vsel %vm98, %v5497, %v5308
  %v5562 = vsel %vm98, %v5498, %v5310
  %v5563 = vsel %vm98, %v5499, %v5312
  %v5564 = vsel %vm98, %v5500, %v5314
  %v5565 = vsel %vm98, %v5501, %v5316
  %v5566 = vsel %vm98, %v5502, %v5318
  %v5567 = vsel %vm98, %v5503, %v5320
  %v5568 = vsel %vm98, %v5504, %v5322
  %v5569 = vsel %vm98, %v5505, %v5324
  %v5570 = vsel %vm98, %v5506, %v5326
  %v5571 = vsel %vm98, %v5507, %v5328
  %v5572 = vsel %vm98, %v5508, %v5330
  %v5573 = vsel %vm98, %v5509, %v5332
  %v5574 = vsel %vm98, %v5510, %v5334
  %v5575 = vsel %vm98, %v5511, %v5336
  %v5576 = vsel %vm98, %v5512, %v5338
  %v5577 = vsel %vm98, %v5513, %v5340
  %v5578 = vsel %vm98, %v5514, %v5342
  %v5579 = vsel %vm98, %v5515, %v5344
  %v5580 = vsel %vm98, %v5516, %v5346
  %v5581 = vsel %vm98, %v5517, %v5348
  %v5582 = vsel %vm98, %v5518, %v5350
  %v5583 = vsel %vm98, %v5519, %v5352
  %v5584 = vsel %vm98, %v5520, %v5354
  %v5585 = vsel %vm98, %v5521, %v5356
  %v5586 = vsel %vm98, %v5522, %v5358
  %v5587 = vsel %vm98, %v5523, %v5360
  %v5588 = vsel %vm98, %v5524, %v5362
  %v5589 = vsel %vm98, %v5525, %v5364
  %v5590 = vsel %vm98, %v5526, %v5366
  %v5591 = vsel %vm98, %v5527, %v5368
  %v5592 = vsel %vm98, %v5528, %v5370
  %v5593 = vsel %vm98, %v5529, %v5372
  %v5594 = vsel %vm98, %v5530, %v5374
  %v5595 = vsel %vm98, %v5531, %v5376
  %v5596 = vsel %vm98, %v5532, %v5378
  %v5597 = vsel %vm98, %v5533, %v5380
  %v5598 = vsel %vm98, %v5534, %v5382
  %v5599 = vsel %vm98, %v5535, %v5384
  %v5600 = vsel %vm98, %v5536, %v5386
  %v5601 = vsel %vm98, %v5537, %v5388
  %v5602 = vsel %vm98, %v5538, %v5390
  %v5603 = vsel %vm98, %v5539, %v5392
  %v5604 = vsel %vm98, %v5540, %v5394
  %v5605 = vsel %vm98, %v5541, %v5396
  %v5606 = vsel %vm98, %v5542, %v5398
  %v5607 = vsel %vm98, %v5543, %v5400
  %v5608 = vsel %vm98, %v5544, %v5402
  %v5609 = vsel %vm98, %v5545, %v5404
  %v5610 = vsel %vm98, %v5546, %v5406
  %v5611 = vsel %vm98, %v5547, %v5408
  %v5612 = vsel %vm98, %v5548, %v5410
  %v5613 = vsel %vm98, %v5549, %v5412
  %v5614 = vsel %vm98, %v5550, %v5414
  %v5615 = vsel %vm98, %v5551, %v5416
  %v5616 = vsel %vm98, %v5552, %v5418
  %v5617 = vsel %vm98, %v5553, %v5420
  %v5618 = vsel %vm98, %v5554, %v5422
  %v5619 = vsel %vm98, %v5555, %v5424
  %v5620 = vsel %vm98, %v5556, %v5426
  %v5621 = vsel %vm98, %v5557, %v5428
  %v5622 = vsel %vm98, %v5558, %v5430
  %s5623 = scalar_lea.vmem %s4, 48
  %v5624 = vld [vmem:[%s5623] sm:$0xff]
  %v5625 = vld [vmem:[%s5623 + $0x8] sm:$0xf]
  %s5626 = scalar_lea.vmem %s4, 64
  %v5627 = vld [vmem:[%s5626] sm:$0xff]
  %v5628 = vld [vmem:[%s5626 + $0x8] sm:$0xf]
  %v5630 = vsel %vm1986, %v5559, 0
  %v5633 = vsel %vm1986, %v5560, 0
  %v5636 = vsel %vm1986, %v5561, 0
  %v5639 = vsel %vm1986, %v5562, 0
  %v5642 = vsel %vm1986, %v5563, 0
  %v5645 = vsel %vm1986, %v5564, 0
  %v5648 = vsel %vm1986, %v5565, 0
  %v5651 = vsel %vm1986, %v5566, 0
  %v5654 = vsel %vm1986, %v5567, 0
  %v5657 = vsel %vm1986, %v5568, 0
  %v5660 = vsel %vm1986, %v5569, 0
  %v5663 = vsel %vm1986, %v5570, 0
  %v5666 = vsel %vm1986, %v5571, 0
  %v5669 = vsel %vm1986, %v5572, 0
  %v5672 = vsel %vm1986, %v5573, 0
  %v5675 = vsel %vm1986, %v5574, 0
  %v5678 = vsel %vm1986, %v5575, 0
  %v5681 = vsel %vm1986, %v5576, 0
  %v5684 = vsel %vm1986, %v5577, 0
  %v5687 = vsel %vm1986, %v5578, 0
  %v5690 = vsel %vm1986, %v5579, 0
  %v5693 = vsel %vm1986, %v5580, 0
  %v5696 = vsel %vm1986, %v5581, 0
  %v5699 = vsel %vm1986, %v5582, 0
  %v5702 = vsel %vm1986, %v5583, 0
  %v5705 = vsel %vm1986, %v5584, 0
  %v5708 = vsel %vm1986, %v5585, 0
  %v5711 = vsel %vm1986, %v5586, 0
  %v5714 = vsel %vm1986, %v5587, 0
  %v5717 = vsel %vm1986, %v5588, 0
  %v5720 = vsel %vm1986, %v5589, 0
  %v5723 = vsel %vm1986, %v5590, 0
  %v5726 = vsel %vm1986, %v5591, 0
  %v5729 = vsel %vm1986, %v5592, 0
  %v5732 = vsel %vm1986, %v5593, 0
  %v5735 = vsel %vm1986, %v5594, 0
  %v5738 = vsel %vm1986, %v5595, 0
  %v5741 = vsel %vm1986, %v5596, 0
  %v5744 = vsel %vm1986, %v5597, 0
  %v5747 = vsel %vm1986, %v5598, 0
  %v5750 = vsel %vm1986, %v5599, 0
  %v5753 = vsel %vm1986, %v5600, 0
  %v5756 = vsel %vm1986, %v5601, 0
  %v5759 = vsel %vm1986, %v5602, 0
  %v5762 = vsel %vm1986, %v5603, 0
  %v5765 = vsel %vm1986, %v5604, 0
  %v5768 = vsel %vm1986, %v5605, 0
  %v5771 = vsel %vm1986, %v5606, 0
  %v5774 = vsel %vm1986, %v5607, 0
  %v5777 = vsel %vm1986, %v5608, 0
  %v5780 = vsel %vm1986, %v5609, 0
  %v5783 = vsel %vm1986, %v5610, 0
  %v5786 = vsel %vm1986, %v5611, 0
  %v5789 = vsel %vm1986, %v5612, 0
  %v5792 = vsel %vm1986, %v5613, 0
  %v5795 = vsel %vm1986, %v5614, 0
  %v5798 = vsel %vm1986, %v5615, 0
  %v5801 = vsel %vm1986, %v5616, 0
  %v5804 = vsel %vm1986, %v5617, 0
  %v5807 = vsel %vm1986, %v5618, 0
  %v5810 = vsel %vm1986, %v5619, 0
  %v5813 = vsel %vm1986, %v5620, 0
  %v5816 = vsel %vm1986, %v5621, 0
  %v5819 = vsel %vm1986, %v5622, 0
  %v5822 = vsel %vm2179, %v5628, 0
  %5824 = vmatprep.subr.mxu0 0.0
  %5825 = vmatpush1.msra.mxu0 %v5627
  %5826 = vmatprep.subr.mxu0 0.0
  %5827 = vmatpush1.msra.mxu0 %v5822
  %5828 = vmatprep.subr.mxu0 0.0
  %5829 = vmatpush1.msra.mxu0 0.0
  %5830 = vmatprep.subr.mxu0 0.0
  %5831 = vmatpush1.msra.mxu0 0.0
  %5832 = vmatprep.subr.mxu0 0.0
  %5833 = vmatpush1.msra.mxu0 0.0
  %5834 = vmatprep.subr.mxu0 0.0
  %5835 = vmatpush1.msra.mxu0 0.0
  %5836 = vmatprep.subr.mxu0 0.0
  %5837 = vmatpush1.msra.mxu0 0.0
  %5838 = vmatprep.subr.mxu0 0.0
  %5839 = vmatpush1.msra.mxu0 0.0
  %5840 = vmatprep.subr.mxu0 0.0
  %5841 = vmatpush1.msra.mxu0 0.0
  %5842 = vmatprep.subr.mxu0 0.0
  %5843 = vmatpush1.msra.mxu0 0.0
  %5844 = vmatprep.subr.mxu0 0.0
  %5845 = vmatpush1.msra.mxu0 0.0
  %5846 = vmatprep.subr.mxu0 0.0
  %5847 = vmatpush1.msra.mxu0 0.0
  %5848 = vmatprep.subr.mxu0 0.0
  %5849 = vmatpush1.msra.mxu0 0.0
  %5850 = vmatprep.subr.mxu0 0.0
  %5851 = vmatpush1.msra.mxu0 0.0
  %5852 = vmatprep.subr.mxu0 0.0
  %5853 = vmatpush1.msra.mxu0 0.0
  %5854 = vmatprep.subr.mxu0 0.0
  %5855 = vmatpush1.msra.mxu0 0.0
  %5856 = vmatprep.subr.mxu0 0.0
  %5857 = vmatpush1.msra.mxu0 0.0
  %5858 = vmatprep.subr.mxu0 0.0
  %5859 = vmatpush1.msra.mxu0 0.0
  %5860 = vmatprep.subr.mxu0 0.0
  %5861 = vmatpush1.msra.mxu0 0.0
  %5862 = vmatprep.subr.mxu0 0.0
  %5863 = vmatpush1.msra.mxu0 0.0
  %5864 = vmatprep.subr.mxu0 0.0
  %5865 = vmatpush1.msra.mxu0 0.0
  %5866 = vmatprep.subr.mxu0 0.0
  %5867 = vmatpush1.msra.mxu0 0.0
  %5868 = vmatprep.subr.mxu0 0.0
  %5869 = vmatpush1.msra.mxu0 0.0
  %5870 = vmatprep.subr.mxu0 0.0
  %5871 = vmatpush1.msra.mxu0 0.0
  %5872 = vmatprep.subr.mxu0 0.0
  %5873 = vmatpush1.msra.mxu0 0.0
  %5874 = vmatprep.subr.mxu0 0.0
  %5875 = vmatpush1.msra.mxu0 0.0
  %5876 = vmatprep.subr.mxu0 0.0
  %5877 = vmatpush1.msra.mxu0 0.0
  %5878 = vmatprep.subr.mxu0 0.0
  %5879 = vmatpush1.msra.mxu0 0.0
  %5880 = vmatprep.subr.mxu0 0.0
  %5881 = vmatpush1.msra.mxu0 0.0
  %5882 = vmatprep.subr.mxu0 0.0
  %5883 = vmatpush1.msra.mxu0 0.0
  %5884 = vmatprep.subr.mxu0 0.0
  %5885 = vmatpush1.msra.mxu0 0.0
  %5886 = vmatprep.subr.mxu0 0.0
  %5887 = vmatpush1.msra.mxu0 0.0
  %5888 = vmatprep.mubr.f32.mxu0 0.0
  %5889 = vmatmul.mubr.f32.gmra.mrb[0].mxu0 %v5630
  %v5890 = vpop.f32.mrb[0].mxu0
  %v5891 = vadd.f32 0.0, %v5890
  %v5892 = vpop.f32.mrb[0].mxu0
  %5893 = vmatprep.mubr.f32.mxu0 0.0
  %5894 = vmatmul.mubr.f32.gmra.mrb[0].mxu0 %v5633
  %v5895 = vpop.f32.mrb[0].mxu0
  %v5896 = vadd.f32 0.0, %v5895
  %v5897 = vpop.f32.mrb[0].mxu0
  %5898 = vmatprep.mubr.f32.mxu0 0.0
  %5899 = vmatmul.mubr.f32.gmra.mrb[0].mxu0 %v5636
  %v5900 = vpop.f32.mrb[0].mxu0
  %v5901 = vadd.f32 0.0, %v5900
  %v5902 = vpop.f32.mrb[0].mxu0
  %5903 = vmatprep.mubr.f32.mxu0 0.0
  %5904 = vmatmul.mubr.f32.gmra.mrb[0].mxu0 %v5639
  %v5905 = vpop.f32.mrb[0].mxu0
  %v5906 = vadd.f32 0.0, %v5905
  %v5907 = vpop.f32.mrb[0].mxu0
  %5908 = vmatprep.mubr.f32.mxu0 0.0
  %5909 = vmatmul.mubr.f32.gmra.mrb[0].mxu0 %v5642
  %v5910 = vpop.f32.mrb[0].mxu0
  %v5911 = vadd.f32 0.0, %v5910
  %v5912 = vpop.f32.mrb[0].mxu0
  %5913 = vmatprep.mubr.f32.mxu0 0.0
  %5914 = vmatmul.mubr.f32.gmra.mrb[0].mxu0 %v5645
  %v5915 = vpop.f32.mrb[0].mxu0
  %v5916 = vadd.f32 0.0, %v5915
  %v5917 = vpop.f32.mrb[0].mxu0
  %5918 = vmatprep.mubr.f32.mxu0 0.0
  %5919 = vmatmul.mubr.f32.gmra.mrb[0].mxu0 %v5648
  %v5920 = vpop.f32.mrb[0].mxu0
  %v5921 = vadd.f32 0.0, %v5920
  %v5922 = vpop.f32.mrb[0].mxu0
  %5923 = vmatprep.mubr.f32.mxu0 0.0
  %5924 = vmatmul.mubr.f32.gmra.mrb[0].mxu0 %v5651
  %v5925 = vpop.f32.mrb[0].mxu0
  %v5926 = vadd.f32 0.0, %v5925
  %v5927 = vpop.f32.mrb[0].mxu0
  %5928 = vmatprep.mubr.f32.mxu0 0.0
  %5929 = vmatmul.mubr.f32.gmra.mrb[0].mxu0 %v5654
  %v5930 = vpop.f32.mrb[0].mxu0
  %v5931 = vadd.f32 0.0, %v5930
  %v5932 = vpop.f32.mrb[0].mxu0
  %5933 = vmatprep.mubr.f32.mxu0 0.0
  %5934 = vmatmul.mubr.f32.gmra.mrb[0].mxu0 %v5657
  %v5935 = vpop.f32.mrb[0].mxu0
  %v5936 = vadd.f32 0.0, %v5935
  %v5937 = vpop.f32.mrb[0].mxu0
  %5938 = vmatprep.mubr.f32.mxu0 0.0
  %5939 = vmatmul.mubr.f32.gmra.mrb[0].mxu0 %v5660
  %v5940 = vpop.f32.mrb[0].mxu0
  %v5941 = vadd.f32 0.0, %v5940
  %v5942 = vpop.f32.mrb[0].mxu0
  %5943 = vmatprep.mubr.f32.mxu0 0.0
  %5944 = vmatmul.mubr.f32.gmra.mrb[0].mxu0 %v5663
  %v5945 = vpop.f32.mrb[0].mxu0
  %v5946 = vadd.f32 0.0, %v5945
  %v5947 = vpop.f32.mrb[0].mxu0
  %5948 = vmatprep.mubr.f32.mxu0 0.0
  %5949 = vmatmul.mubr.f32.gmra.mrb[0].mxu0 %v5666
  %v5950 = vpop.f32.mrb[0].mxu0
  %v5951 = vadd.f32 0.0, %v5950
  %v5952 = vpop.f32.mrb[0].mxu0
  %5953 = vmatprep.mubr.f32.mxu0 0.0
  %5954 = vmatmul.mubr.f32.gmra.mrb[0].mxu0 %v5669
  %v5955 = vpop.f32.mrb[0].mxu0
  %v5956 = vadd.f32 0.0, %v5955
  %v5957 = vpop.f32.mrb[0].mxu0
  %5958 = vmatprep.mubr.f32.mxu0 0.0
  %5959 = vmatmul.mubr.f32.gmra.mrb[0].mxu0 %v5672
  %v5960 = vpop.f32.mrb[0].mxu0
  %v5961 = vadd.f32 0.0, %v5960
  %v5962 = vpop.f32.mrb[0].mxu0
  %5963 = vmatprep.mubr.f32.mxu0 0.0
  %5964 = vmatmul.mubr.f32.gmra.mrb[0].mxu0 %v5675
  %v5965 = vpop.f32.mrb[0].mxu0
  %v5966 = vadd.f32 0.0, %v5965
  %v5967 = vpop.f32.mrb[0].mxu0
  %5968 = vmatprep.mubr.f32.mxu0 0.0
  %5969 = vmatmul.mubr.f32.gmra.mrb[0].mxu0 %v5678
  %v5970 = vpop.f32.mrb[0].mxu0
  %v5971 = vadd.f32 0.0, %v5970
  %v5972 = vpop.f32.mrb[0].mxu0
  %5973 = vmatprep.mubr.f32.mxu0 0.0
  %5974 = vmatmul.mubr.f32.gmra.mrb[0].mxu0 %v5681
  %v5975 = vpop.f32.mrb[0].mxu0
  %v5976 = vadd.f32 0.0, %v5975
  %v5977 = vpop.f32.mrb[0].mxu0
  %5978 = vmatprep.mubr.f32.mxu0 0.0
  %5979 = vmatmul.mubr.f32.gmra.mrb[0].mxu0 %v5684
  %v5980 = vpop.f32.mrb[0].mxu0
  %v5981 = vadd.f32 0.0, %v5980
  %v5982 = vpop.f32.mrb[0].mxu0
  %5983 = vmatprep.mubr.f32.mxu0 0.0
  %5984 = vmatmul.mubr.f32.gmra.mrb[0].mxu0 %v5687
  %v5985 = vpop.f32.mrb[0].mxu0
  %v5986 = vadd.f32 0.0, %v5985
  %v5987 = vpop.f32.mrb[0].mxu0
  %5988 = vmatprep.mubr.f32.mxu0 0.0
  %5989 = vmatmul.mubr.f32.gmra.mrb[0].mxu0 %v5690
  %v5990 = vpop.f32.mrb[0].mxu0
  %v5991 = vadd.f32 0.0, %v5990
  %v5992 = vpop.f32.mrb[0].mxu0
  %5993 = vmatprep.mubr.f32.mxu0 0.0
  %5994 = vmatmul.mubr.f32.gmra.mrb[0].mxu0 %v5693
  %v5995 = vpop.f32.mrb[0].mxu0
  %v5996 = vadd.f32 0.0, %v5995
  %v5997 = vpop.f32.mrb[0].mxu0
  %5998 = vmatprep.mubr.f32.mxu0 0.0
  %5999 = vmatmul.mubr.f32.gmra.mrb[0].mxu0 %v5696
  %v6000 = vpop.f32.mrb[0].mxu0
  %v6001 = vadd.f32 0.0, %v6000
  %v6002 = vpop.f32.mrb[0].mxu0
  %6003 = vmatprep.mubr.f32.mxu0 0.0
  %6004 = vmatmul.mubr.f32.gmra.mrb[0].mxu0 %v5699
  %v6005 = vpop.f32.mrb[0].mxu0
  %v6006 = vadd.f32 0.0, %v6005
  %v6007 = vpop.f32.mrb[0].mxu0
  %6008 = vmatprep.mubr.f32.mxu0 0.0
  %6009 = vmatmul.mubr.f32.gmra.mrb[0].mxu0 %v5702
  %v6010 = vpop.f32.mrb[0].mxu0
  %v6011 = vadd.f32 0.0, %v6010
  %v6012 = vpop.f32.mrb[0].mxu0
  %6013 = vmatprep.mubr.f32.mxu0 0.0
  %6014 = vmatmul.mubr.f32.gmra.mrb[0].mxu0 %v5705
  %v6015 = vpop.f32.mrb[0].mxu0
  %v6016 = vadd.f32 0.0, %v6015
  %v6017 = vpop.f32.mrb[0].mxu0
  %6018 = vmatprep.mubr.f32.mxu0 0.0
  %6019 = vmatmul.mubr.f32.gmra.mrb[0].mxu0 %v5708
  %v6020 = vpop.f32.mrb[0].mxu0
  %v6021 = vadd.f32 0.0, %v6020
  %v6022 = vpop.f32.mrb[0].mxu0
  %6023 = vmatprep.mubr.f32.mxu0 0.0
  %6024 = vmatmul.mubr.f32.gmra.mrb[0].mxu0 %v5711
  %v6025 = vpop.f32.mrb[0].mxu0
  %v6026 = vadd.f32 0.0, %v6025
  %v6027 = vpop.f32.mrb[0].mxu0
  %6028 = vmatprep.mubr.f32.mxu0 0.0
  %6029 = vmatmul.mubr.f32.gmra.mrb[0].mxu0 %v5714
  %v6030 = vpop.f32.mrb[0].mxu0
  %v6031 = vadd.f32 0.0, %v6030
  %v6032 = vpop.f32.mrb[0].mxu0
  %6033 = vmatprep.mubr.f32.mxu0 0.0
  %6034 = vmatmul.mubr.f32.gmra.mrb[0].mxu0 %v5717
  %v6035 = vpop.f32.mrb[0].mxu0
  %v6036 = vadd.f32 0.0, %v6035
  %v6037 = vpop.f32.mrb[0].mxu0
  %6038 = vmatprep.mubr.f32.mxu0 0.0
  %6039 = vmatmul.mubr.f32.gmra.mrb[0].mxu0 %v5720
  %v6040 = vpop.f32.mrb[0].mxu0
  %v6041 = vadd.f32 0.0, %v6040
  %v6042 = vpop.f32.mrb[0].mxu0
  %6043 = vmatprep.mubr.f32.mxu0 0.0
  %6044 = vmatmul.mubr.f32.gmra.mrb[0].mxu0 %v5723
  %v6045 = vpop.f32.mrb[0].mxu0
  %v6046 = vadd.f32 0.0, %v6045
  %v6047 = vpop.f32.mrb[0].mxu0
  %6048 = vmatprep.mubr.f32.mxu0 0.0
  %6049 = vmatmul.mubr.f32.gmra.mrb[0].mxu0 %v5726
  %v6050 = vpop.f32.mrb[0].mxu0
  %v6051 = vadd.f32 0.0, %v6050
  %v6052 = vpop.f32.mrb[0].mxu0
  %6053 = vmatprep.mubr.f32.mxu0 0.0
  %6054 = vmatmul.mubr.f32.gmra.mrb[0].mxu0 %v5729
  %v6055 = vpop.f32.mrb[0].mxu0
  %v6056 = vadd.f32 0.0, %v6055
  %v6057 = vpop.f32.mrb[0].mxu0
  %6058 = vmatprep.mubr.f32.mxu0 0.0
  %6059 = vmatmul.mubr.f32.gmra.mrb[0].mxu0 %v5732
  %v6060 = vpop.f32.mrb[0].mxu0
  %v6061 = vadd.f32 0.0, %v6060
  %v6062 = vpop.f32.mrb[0].mxu0
  %6063 = vmatprep.mubr.f32.mxu0 0.0
  %6064 = vmatmul.mubr.f32.gmra.mrb[0].mxu0 %v5735
  %v6065 = vpop.f32.mrb[0].mxu0
  %v6066 = vadd.f32 0.0, %v6065
  %v6067 = vpop.f32.mrb[0].mxu0
  %6068 = vmatprep.mubr.f32.mxu0 0.0
  %6069 = vmatmul.mubr.f32.gmra.mrb[0].mxu0 %v5738
  %v6070 = vpop.f32.mrb[0].mxu0
  %v6071 = vadd.f32 0.0, %v6070
  %v6072 = vpop.f32.mrb[0].mxu0
  %6073 = vmatprep.mubr.f32.mxu0 0.0
  %6074 = vmatmul.mubr.f32.gmra.mrb[0].mxu0 %v5741
  %v6075 = vpop.f32.mrb[0].mxu0
  %v6076 = vadd.f32 0.0, %v6075
  %v6077 = vpop.f32.mrb[0].mxu0
  %6078 = vmatprep.mubr.f32.mxu0 0.0
  %6079 = vmatmul.mubr.f32.gmra.mrb[0].mxu0 %v5744
  %v6080 = vpop.f32.mrb[0].mxu0
  %v6081 = vadd.f32 0.0, %v6080
  %v6082 = vpop.f32.mrb[0].mxu0
  %6083 = vmatprep.mubr.f32.mxu0 0.0
  %6084 = vmatmul.mubr.f32.gmra.mrb[0].mxu0 %v5747
  %v6085 = vpop.f32.mrb[0].mxu0
  %v6086 = vadd.f32 0.0, %v6085
  %v6087 = vpop.f32.mrb[0].mxu0
  %6088 = vmatprep.mubr.f32.mxu0 0.0
  %6089 = vmatmul.mubr.f32.gmra.mrb[0].mxu0 %v5750
  %v6090 = vpop.f32.mrb[0].mxu0
  %v6091 = vadd.f32 0.0, %v6090
  %v6092 = vpop.f32.mrb[0].mxu0
  %6093 = vmatprep.mubr.f32.mxu0 0.0
  %6094 = vmatmul.mubr.f32.gmra.mrb[0].mxu0 %v5753
  %v6095 = vpop.f32.mrb[0].mxu0
  %v6096 = vadd.f32 0.0, %v6095
  %v6097 = vpop.f32.mrb[0].mxu0
  %6098 = vmatprep.mubr.f32.mxu0 0.0
  %6099 = vmatmul.mubr.f32.gmra.mrb[0].mxu0 %v5756
  %v6100 = vpop.f32.mrb[0].mxu0
  %v6101 = vadd.f32 0.0, %v6100
  %v6102 = vpop.f32.mrb[0].mxu0
  %6103 = vmatprep.mubr.f32.mxu0 0.0
  %6104 = vmatmul.mubr.f32.gmra.mrb[0].mxu0 %v5759
  %v6105 = vpop.f32.mrb[0].mxu0
  %v6106 = vadd.f32 0.0, %v6105
  %v6107 = vpop.f32.mrb[0].mxu0
  %6108 = vmatprep.mubr.f32.mxu0 0.0
  %6109 = vmatmul.mubr.f32.gmra.mrb[0].mxu0 %v5762
  %v6110 = vpop.f32.mrb[0].mxu0
  %v6111 = vadd.f32 0.0, %v6110
  %v6112 = vpop.f32.mrb[0].mxu0
  %6113 = vmatprep.mubr.f32.mxu0 0.0
  %6114 = vmatmul.mubr.f32.gmra.mrb[0].mxu0 %v5765
  %v6115 = vpop.f32.mrb[0].mxu0
  %v6116 = vadd.f32 0.0, %v6115
  %v6117 = vpop.f32.mrb[0].mxu0
  %6118 = vmatprep.mubr.f32.mxu0 0.0
  %6119 = vmatmul.mubr.f32.gmra.mrb[0].mxu0 %v5768
  %v6120 = vpop.f32.mrb[0].mxu0
  %v6121 = vadd.f32 0.0, %v6120
  %v6122 = vpop.f32.mrb[0].mxu0
  %6123 = vmatprep.mubr.f32.mxu0 0.0
  %6124 = vmatmul.mubr.f32.gmra.mrb[0].mxu0 %v5771
  %v6125 = vpop.f32.mrb[0].mxu0
  %v6126 = vadd.f32 0.0, %v6125
  %v6127 = vpop.f32.mrb[0].mxu0
  %6128 = vmatprep.mubr.f32.mxu0 0.0
  %6129 = vmatmul.mubr.f32.gmra.mrb[0].mxu0 %v5774
  %v6130 = vpop.f32.mrb[0].mxu0
  %v6131 = vadd.f32 0.0, %v6130
  %v6132 = vpop.f32.mrb[0].mxu0
  %6133 = vmatprep.mubr.f32.mxu0 0.0
  %6134 = vmatmul.mubr.f32.gmra.mrb[0].mxu0 %v5777
  %v6135 = vpop.f32.mrb[0].mxu0
  %v6136 = vadd.f32 0.0, %v6135
  %v6137 = vpop.f32.mrb[0].mxu0
  %6138 = vmatprep.mubr.f32.mxu0 0.0
  %6139 = vmatmul.mubr.f32.gmra.mrb[0].mxu0 %v5780
  %v6140 = vpop.f32.mrb[0].mxu0
  %v6141 = vadd.f32 0.0, %v6140
  %v6142 = vpop.f32.mrb[0].mxu0
  %6143 = vmatprep.mubr.f32.mxu0 0.0
  %6144 = vmatmul.mubr.f32.gmra.mrb[0].mxu0 %v5783
  %v6145 = vpop.f32.mrb[0].mxu0
  %v6146 = vadd.f32 0.0, %v6145
  %v6147 = vpop.f32.mrb[0].mxu0
  %6148 = vmatprep.mubr.f32.mxu0 0.0
  %6149 = vmatmul.mubr.f32.gmra.mrb[0].mxu0 %v5786
  %v6150 = vpop.f32.mrb[0].mxu0
  %v6151 = vadd.f32 0.0, %v6150
  %v6152 = vpop.f32.mrb[0].mxu0
  %6153 = vmatprep.mubr.f32.mxu0 0.0
  %6154 = vmatmul.mubr.f32.gmra.mrb[0].mxu0 %v5789
  %v6155 = vpop.f32.mrb[0].mxu0
  %v6156 = vadd.f32 0.0, %v6155
  %v6157 = vpop.f32.mrb[0].mxu0
  %6158 = vmatprep.mubr.f32.mxu0 0.0
  %6159 = vmatmul.mubr.f32.gmra.mrb[0].mxu0 %v5792
  %v6160 = vpop.f32.mrb[0].mxu0
  %v6161 = vadd.f32 0.0, %v6160
  %v6162 = vpop.f32.mrb[0].mxu0
  %6163 = vmatprep.mubr.f32.mxu0 0.0
  %6164 = vmatmul.mubr.f32.gmra.mrb[0].mxu0 %v5795
  %v6165 = vpop.f32.mrb[0].mxu0
  %v6166 = vadd.f32 0.0, %v6165
  %v6167 = vpop.f32.mrb[0].mxu0
  %6168 = vmatprep.mubr.f32.mxu0 0.0
  %6169 = vmatmul.mubr.f32.gmra.mrb[0].mxu0 %v5798
  %v6170 = vpop.f32.mrb[0].mxu0
  %v6171 = vadd.f32 0.0, %v6170
  %v6172 = vpop.f32.mrb[0].mxu0
  %6173 = vmatprep.mubr.f32.mxu0 0.0
  %6174 = vmatmul.mubr.f32.gmra.mrb[0].mxu0 %v5801
  %v6175 = vpop.f32.mrb[0].mxu0
  %v6176 = vadd.f32 0.0, %v6175
  %v6177 = vpop.f32.mrb[0].mxu0
  %6178 = vmatprep.mubr.f32.mxu0 0.0
  %6179 = vmatmul.mubr.f32.gmra.mrb[0].mxu0 %v5804
  %v6180 = vpop.f32.mrb[0].mxu0
  %v6181 = vadd.f32 0.0, %v6180
  %v6182 = vpop.f32.mrb[0].mxu0
  %6183 = vmatprep.mubr.f32.mxu0 0.0
  %6184 = vmatmul.mubr.f32.gmra.mrb[0].mxu0 %v5807
  %v6185 = vpop.f32.mrb[0].mxu0
  %v6186 = vadd.f32 0.0, %v6185
  %v6187 = vpop.f32.mrb[0].mxu0
  %6188 = vmatprep.mubr.f32.mxu0 0.0
  %6189 = vmatmul.mubr.f32.gmra.mrb[0].mxu0 %v5810
  %v6190 = vpop.f32.mrb[0].mxu0
  %v6191 = vadd.f32 0.0, %v6190
  %v6192 = vpop.f32.mrb[0].mxu0
  %6193 = vmatprep.mubr.f32.mxu0 0.0
  %6194 = vmatmul.mubr.f32.gmra.mrb[0].mxu0 %v5813
  %v6195 = vpop.f32.mrb[0].mxu0
  %v6196 = vadd.f32 0.0, %v6195
  %v6197 = vpop.f32.mrb[0].mxu0
  %6198 = vmatprep.mubr.f32.mxu0 0.0
  %6199 = vmatmul.mubr.f32.gmra.mrb[0].mxu0 %v5816
  %v6200 = vpop.f32.mrb[0].mxu0
  %v6201 = vadd.f32 0.0, %v6200
  %v6202 = vpop.f32.mrb[0].mxu0
  %6203 = vmatprep.mubr.f32.mxu0 0.0
  %6204 = vmatmul.mubr.f32.gmra.mrb[0].mxu0 %v5819
  %v6205 = vpop.f32.mrb[0].mxu0
  %v6206 = vadd.f32 0.0, %v6205
  %v6207 = vpop.f32.mrb[0].mxu0
  %6208 = vdwg.mxu0
  %v6210 = vsel %vm2179, %v5625, 0
  %6212 = vmatprep.subr.mxu0 0.0
  %6213 = vmatpush1.msra.mxu0 %v5624
  %6214 = vmatprep.subr.mxu0 0.0
  %6215 = vmatpush1.msra.mxu0 %v6210
  %6216 = vmatprep.subr.mxu0 0.0
  %6217 = vmatpush1.msra.mxu0 0.0
  %6218 = vmatprep.subr.mxu0 0.0
  %6219 = vmatpush1.msra.mxu0 0.0
  %6220 = vmatprep.subr.mxu0 0.0
  %6221 = vmatpush1.msra.mxu0 0.0
  %6222 = vmatprep.subr.mxu0 0.0
  %6223 = vmatpush1.msra.mxu0 0.0
  %6224 = vmatprep.subr.mxu0 0.0
  %6225 = vmatpush1.msra.mxu0 0.0
  %6226 = vmatprep.subr.mxu0 0.0
  %6227 = vmatpush1.msra.mxu0 0.0
  %6228 = vmatprep.subr.mxu0 0.0
  %6229 = vmatpush1.msra.mxu0 0.0
  %6230 = vmatprep.subr.mxu0 0.0
  %6231 = vmatpush1.msra.mxu0 0.0
  %6232 = vmatprep.subr.mxu0 0.0
  %6233 = vmatpush1.msra.mxu0 0.0
  %6234 = vmatprep.subr.mxu0 0.0
  %6235 = vmatpush1.msra.mxu0 0.0
  %6236 = vmatprep.subr.mxu0 0.0
  %6237 = vmatpush1.msra.mxu0 0.0
  %6238 = vmatprep.subr.mxu0 0.0
  %6239 = vmatpush1.msra.mxu0 0.0
  %6240 = vmatprep.subr.mxu0 0.0
  %6241 = vmatpush1.msra.mxu0 0.0
  %6242 = vmatprep.subr.mxu0 0.0
  %6243 = vmatpush1.msra.mxu0 0.0
  %6244 = vmatprep.subr.mxu0 0.0
  %6245 = vmatpush1.msra.mxu0 0.0
  %6246 = vmatprep.subr.mxu0 0.0
  %6247 = vmatpush1.msra.mxu0 0.0
  %6248 = vmatprep.subr.mxu0 0.0
  %6249 = vmatpush1.msra.mxu0 0.0
  %6250 = vmatprep.subr.mxu0 0.0
  %6251 = vmatpush1.msra.mxu0 0.0
  %6252 = vmatprep.subr.mxu0 0.0
  %6253 = vmatpush1.msra.mxu0 0.0
  %6254 = vmatprep.subr.mxu0 0.0
  %6255 = vmatpush1.msra.mxu0 0.0
  %6256 = vmatprep.subr.mxu0 0.0
  %6257 = vmatpush1.msra.mxu0 0.0
  %6258 = vmatprep.subr.mxu0 0.0
  %6259 = vmatpush1.msra.mxu0 0.0
  %6260 = vmatprep.subr.mxu0 0.0
  %6261 = vmatpush1.msra.mxu0 0.0
  %6262 = vmatprep.subr.mxu0 0.0
  %6263 = vmatpush1.msra.mxu0 0.0
  %6264 = vmatprep.subr.mxu0 0.0
  %6265 = vmatpush1.msra.mxu0 0.0
  %6266 = vmatprep.subr.mxu0 0.0
  %6267 = vmatpush1.msra.mxu0 0.0
  %6268 = vmatprep.subr.mxu0 0.0
  %6269 = vmatpush1.msra.mxu0 0.0
  %6270 = vmatprep.subr.mxu0 0.0
  %6271 = vmatpush1.msra.mxu0 0.0
  %6272 = vmatprep.subr.mxu0 0.0
  %6273 = vmatpush1.msra.mxu0 0.0
  %6274 = vmatprep.subr.mxu0 0.0
  %6275 = vmatpush1.msra.mxu0 0.0
  %6276 = vmatprep.mubr.f32.mxu0 0.0
  %6277 = vmatmul.mubr.f32.gmra.mrb[0].mxu0 %v2569
  %v6278 = vpop.f32.mrb[0].mxu0
  %v6279 = vadd.f32 %v5891, %v6278
  %v6280 = vpop.f32.mrb[0].mxu0
  %6281 = vmatprep.mubr.f32.mxu0 0.0
  %6282 = vmatmul.mubr.f32.gmra.mrb[0].mxu0 %v2569
  %v6283 = vpop.f32.mrb[0].mxu0
  %v6284 = vadd.f32 %v5896, %v6283
  %v6285 = vpop.f32.mrb[0].mxu0
  %6286 = vmatprep.mubr.f32.mxu0 0.0
  %6287 = vmatmul.mubr.f32.gmra.mrb[0].mxu0 %v5630
  %v6288 = vpop.f32.mrb[0].mxu0
  %v6289 = vadd.f32 %v5901, %v6288
  %v6290 = vpop.f32.mrb[0].mxu0
  %6291 = vmatprep.mubr.f32.mxu0 0.0
  %6292 = vmatmul.mubr.f32.gmra.mrb[0].mxu0 %v5633
  %v6293 = vpop.f32.mrb[0].mxu0
  %v6294 = vadd.f32 %v5906, %v6293
  %v6295 = vpop.f32.mrb[0].mxu0
  %6296 = vmatprep.mubr.f32.mxu0 0.0
  %6297 = vmatmul.mubr.f32.gmra.mrb[0].mxu0 %v5636
  %v6298 = vpop.f32.mrb[0].mxu0
  %v6299 = vadd.f32 %v5911, %v6298
  %v6300 = vpop.f32.mrb[0].mxu0
  %6301 = vmatprep.mubr.f32.mxu0 0.0
  %6302 = vmatmul.mubr.f32.gmra.mrb[0].mxu0 %v5639
  %v6303 = vpop.f32.mrb[0].mxu0
  %v6304 = vadd.f32 %v5916, %v6303
  %v6305 = vpop.f32.mrb[0].mxu0
  %6306 = vmatprep.mubr.f32.mxu0 0.0
  %6307 = vmatmul.mubr.f32.gmra.mrb[0].mxu0 %v5642
  %v6308 = vpop.f32.mrb[0].mxu0
  %v6309 = vadd.f32 %v5921, %v6308
  %v6310 = vpop.f32.mrb[0].mxu0
  %6311 = vmatprep.mubr.f32.mxu0 0.0
  %6312 = vmatmul.mubr.f32.gmra.mrb[0].mxu0 %v5645
  %v6313 = vpop.f32.mrb[0].mxu0
  %v6314 = vadd.f32 %v5926, %v6313
  %v6315 = vpop.f32.mrb[0].mxu0
  %6316 = vmatprep.mubr.f32.mxu0 0.0
  %6317 = vmatmul.mubr.f32.gmra.mrb[0].mxu0 %v5648
  %v6318 = vpop.f32.mrb[0].mxu0
  %v6319 = vadd.f32 %v5931, %v6318
  %v6320 = vpop.f32.mrb[0].mxu0
  %6321 = vmatprep.mubr.f32.mxu0 0.0
  %6322 = vmatmul.mubr.f32.gmra.mrb[0].mxu0 %v5651
  %v6323 = vpop.f32.mrb[0].mxu0
  %v6324 = vadd.f32 %v5936, %v6323
  %v6325 = vpop.f32.mrb[0].mxu0
  %6326 = vmatprep.mubr.f32.mxu0 0.0
  %6327 = vmatmul.mubr.f32.gmra.mrb[0].mxu0 %v5654
  %v6328 = vpop.f32.mrb[0].mxu0
  %v6329 = vadd.f32 %v5941, %v6328
  %v6330 = vpop.f32.mrb[0].mxu0
  %6331 = vmatprep.mubr.f32.mxu0 0.0
  %6332 = vmatmul.mubr.f32.gmra.mrb[0].mxu0 %v5657
  %v6333 = vpop.f32.mrb[0].mxu0
  %v6334 = vadd.f32 %v5946, %v6333
  %v6335 = vpop.f32.mrb[0].mxu0
  %6336 = vmatprep.mubr.f32.mxu0 0.0
  %6337 = vmatmul.mubr.f32.gmra.mrb[0].mxu0 %v5660
  %v6338 = vpop.f32.mrb[0].mxu0
  %v6339 = vadd.f32 %v5951, %v6338
  %v6340 = vpop.f32.mrb[0].mxu0
  %6341 = vmatprep.mubr.f32.mxu0 0.0
  %6342 = vmatmul.mubr.f32.gmra.mrb[0].mxu0 %v5663
  %v6343 = vpop.f32.mrb[0].mxu0
  %v6344 = vadd.f32 %v5956, %v6343
  %v6345 = vpop.f32.mrb[0].mxu0
  %6346 = vmatprep.mubr.f32.mxu0 0.0
  %6347 = vmatmul.mubr.f32.gmra.mrb[0].mxu0 %v5666
  %v6348 = vpop.f32.mrb[0].mxu0
  %v6349 = vadd.f32 %v5961, %v6348
  %v6350 = vpop.f32.mrb[0].mxu0
  %6351 = vmatprep.mubr.f32.mxu0 0.0
  %6352 = vmatmul.mubr.f32.gmra.mrb[0].mxu0 %v5669
  %v6353 = vpop.f32.mrb[0].mxu0
  %v6354 = vadd.f32 %v5966, %v6353
  %v6355 = vpop.f32.mrb[0].mxu0
  %6356 = vmatprep.mubr.f32.mxu0 0.0
  %6357 = vmatmul.mubr.f32.gmra.mrb[0].mxu0 %v5672
  %v6358 = vpop.f32.mrb[0].mxu0
  %v6359 = vadd.f32 %v5971, %v6358
  %v6360 = vpop.f32.mrb[0].mxu0
  %6361 = vmatprep.mubr.f32.mxu0 0.0
  %6362 = vmatmul.mubr.f32.gmra.mrb[0].mxu0 %v5675
  %v6363 = vpop.f32.mrb[0].mxu0
  %v6364 = vadd.f32 %v5976, %v6363
  %v6365 = vpop.f32.mrb[0].mxu0
  %6366 = vmatprep.mubr.f32.mxu0 0.0
  %6367 = vmatmul.mubr.f32.gmra.mrb[0].mxu0 %v5678
  %v6368 = vpop.f32.mrb[0].mxu0
  %v6369 = vadd.f32 %v5981, %v6368
  %v6370 = vpop.f32.mrb[0].mxu0
  %6371 = vmatprep.mubr.f32.mxu0 0.0
  %6372 = vmatmul.mubr.f32.gmra.mrb[0].mxu0 %v5681
  %v6373 = vpop.f32.mrb[0].mxu0
  %v6374 = vadd.f32 %v5986, %v6373
  %v6375 = vpop.f32.mrb[0].mxu0
  %6376 = vmatprep.mubr.f32.mxu0 0.0
  %6377 = vmatmul.mubr.f32.gmra.mrb[0].mxu0 %v5684
  %v6378 = vpop.f32.mrb[0].mxu0
  %v6379 = vadd.f32 %v5991, %v6378
  %v6380 = vpop.f32.mrb[0].mxu0
  %6381 = vmatprep.mubr.f32.mxu0 0.0
  %6382 = vmatmul.mubr.f32.gmra.mrb[0].mxu0 %v5687
  %v6383 = vpop.f32.mrb[0].mxu0
  %v6384 = vadd.f32 %v5996, %v6383
  %v6385 = vpop.f32.mrb[0].mxu0
  %6386 = vmatprep.mubr.f32.mxu0 0.0
  %6387 = vmatmul.mubr.f32.gmra.mrb[0].mxu0 %v5690
  %v6388 = vpop.f32.mrb[0].mxu0
  %v6389 = vadd.f32 %v6001, %v6388
  %v6390 = vpop.f32.mrb[0].mxu0
  %6391 = vmatprep.mubr.f32.mxu0 0.0
  %6392 = vmatmul.mubr.f32.gmra.mrb[0].mxu0 %v5693
  %v6393 = vpop.f32.mrb[0].mxu0
  %v6394 = vadd.f32 %v6006, %v6393
  %v6395 = vpop.f32.mrb[0].mxu0
  %6396 = vmatprep.mubr.f32.mxu0 0.0
  %6397 = vmatmul.mubr.f32.gmra.mrb[0].mxu0 %v5696
  %v6398 = vpop.f32.mrb[0].mxu0
  %v6399 = vadd.f32 %v6011, %v6398
  %v6400 = vpop.f32.mrb[0].mxu0
  %6401 = vmatprep.mubr.f32.mxu0 0.0
  %6402 = vmatmul.mubr.f32.gmra.mrb[0].mxu0 %v5699
  %v6403 = vpop.f32.mrb[0].mxu0
  %v6404 = vadd.f32 %v6016, %v6403
  %v6405 = vpop.f32.mrb[0].mxu0
  %6406 = vmatprep.mubr.f32.mxu0 0.0
  %6407 = vmatmul.mubr.f32.gmra.mrb[0].mxu0 %v5702
  %v6408 = vpop.f32.mrb[0].mxu0
  %v6409 = vadd.f32 %v6021, %v6408
  %v6410 = vpop.f32.mrb[0].mxu0
  %6411 = vmatprep.mubr.f32.mxu0 0.0
  %6412 = vmatmul.mubr.f32.gmra.mrb[0].mxu0 %v5705
  %v6413 = vpop.f32.mrb[0].mxu0
  %v6414 = vadd.f32 %v6026, %v6413
  %v6415 = vpop.f32.mrb[0].mxu0
  %6416 = vmatprep.mubr.f32.mxu0 0.0
  %6417 = vmatmul.mubr.f32.gmra.mrb[0].mxu0 %v5708
  %v6418 = vpop.f32.mrb[0].mxu0
  %v6419 = vadd.f32 %v6031, %v6418
  %v6420 = vpop.f32.mrb[0].mxu0
  %6421 = vmatprep.mubr.f32.mxu0 0.0
  %6422 = vmatmul.mubr.f32.gmra.mrb[0].mxu0 %v5711
  %v6423 = vpop.f32.mrb[0].mxu0
  %v6424 = vadd.f32 %v6036, %v6423
  %v6425 = vpop.f32.mrb[0].mxu0
  %6426 = vmatprep.mubr.f32.mxu0 0.0
  %6427 = vmatmul.mubr.f32.gmra.mrb[0].mxu0 %v5714
  %v6428 = vpop.f32.mrb[0].mxu0
  %v6429 = vadd.f32 %v6041, %v6428
  %v6430 = vpop.f32.mrb[0].mxu0
  %6431 = vmatprep.mubr.f32.mxu0 0.0
  %6432 = vmatmul.mubr.f32.gmra.mrb[0].mxu0 %v5717
  %v6433 = vpop.f32.mrb[0].mxu0
  %v6434 = vadd.f32 %v6046, %v6433
  %v6435 = vpop.f32.mrb[0].mxu0
  %6436 = vmatprep.mubr.f32.mxu0 0.0
  %6437 = vmatmul.mubr.f32.gmra.mrb[0].mxu0 %v2569
  %v6438 = vpop.f32.mrb[0].mxu0
  %v6439 = vadd.f32 %v6051, %v6438
  %v6440 = vpop.f32.mrb[0].mxu0
  %6441 = vmatprep.mubr.f32.mxu0 0.0
  %6442 = vmatmul.mubr.f32.gmra.mrb[0].mxu0 %v2569
  %v6443 = vpop.f32.mrb[0].mxu0
  %v6444 = vadd.f32 %v6056, %v6443
  %v6445 = vpop.f32.mrb[0].mxu0
  %6446 = vmatprep.mubr.f32.mxu0 0.0
  %6447 = vmatmul.mubr.f32.gmra.mrb[0].mxu0 %v5726
  %v6448 = vpop.f32.mrb[0].mxu0
  %v6449 = vadd.f32 %v6061, %v6448
  %v6450 = vpop.f32.mrb[0].mxu0
  %6451 = vmatprep.mubr.f32.mxu0 0.0
  %6452 = vmatmul.mubr.f32.gmra.mrb[0].mxu0 %v5729
  %v6453 = vpop.f32.mrb[0].mxu0
  %v6454 = vadd.f32 %v6066, %v6453
  %v6455 = vpop.f32.mrb[0].mxu0
  %6456 = vmatprep.mubr.f32.mxu0 0.0
  %6457 = vmatmul.mubr.f32.gmra.mrb[0].mxu0 %v5732
  %v6458 = vpop.f32.mrb[0].mxu0
  %v6459 = vadd.f32 %v6071, %v6458
  %v6460 = vpop.f32.mrb[0].mxu0
  %6461 = vmatprep.mubr.f32.mxu0 0.0
  %6462 = vmatmul.mubr.f32.gmra.mrb[0].mxu0 %v5735
  %v6463 = vpop.f32.mrb[0].mxu0
  %v6464 = vadd.f32 %v6076, %v6463
  %v6465 = vpop.f32.mrb[0].mxu0
  %6466 = vmatprep.mubr.f32.mxu0 0.0
  %6467 = vmatmul.mubr.f32.gmra.mrb[0].mxu0 %v5738
  %v6468 = vpop.f32.mrb[0].mxu0
  %v6469 = vadd.f32 %v6081, %v6468
  %v6470 = vpop.f32.mrb[0].mxu0
  %6471 = vmatprep.mubr.f32.mxu0 0.0
  %6472 = vmatmul.mubr.f32.gmra.mrb[0].mxu0 %v5741
  %v6473 = vpop.f32.mrb[0].mxu0
  %v6474 = vadd.f32 %v6086, %v6473
  %v6475 = vpop.f32.mrb[0].mxu0
  %6476 = vmatprep.mubr.f32.mxu0 0.0
  %6477 = vmatmul.mubr.f32.gmra.mrb[0].mxu0 %v5744
  %v6478 = vpop.f32.mrb[0].mxu0
  %v6479 = vadd.f32 %v6091, %v6478
  %v6480 = vpop.f32.mrb[0].mxu0
  %6481 = vmatprep.mubr.f32.mxu0 0.0
  %6482 = vmatmul.mubr.f32.gmra.mrb[0].mxu0 %v5747
  %v6483 = vpop.f32.mrb[0].mxu0
  %v6484 = vadd.f32 %v6096, %v6483
  %v6485 = vpop.f32.mrb[0].mxu0
  %6486 = vmatprep.mubr.f32.mxu0 0.0
  %6487 = vmatmul.mubr.f32.gmra.mrb[0].mxu0 %v5750
  %v6488 = vpop.f32.mrb[0].mxu0
  %v6489 = vadd.f32 %v6101, %v6488
  %v6490 = vpop.f32.mrb[0].mxu0
  %6491 = vmatprep.mubr.f32.mxu0 0.0
  %6492 = vmatmul.mubr.f32.gmra.mrb[0].mxu0 %v5753
  %v6493 = vpop.f32.mrb[0].mxu0
  %v6494 = vadd.f32 %v6106, %v6493
  %v6495 = vpop.f32.mrb[0].mxu0
  %6496 = vmatprep.mubr.f32.mxu0 0.0
  %6497 = vmatmul.mubr.f32.gmra.mrb[0].mxu0 %v5756
  %v6498 = vpop.f32.mrb[0].mxu0
  %v6499 = vadd.f32 %v6111, %v6498
  %v6500 = vpop.f32.mrb[0].mxu0
  %6501 = vmatprep.mubr.f32.mxu0 0.0
  %6502 = vmatmul.mubr.f32.gmra.mrb[0].mxu0 %v5759
  %v6503 = vpop.f32.mrb[0].mxu0
  %v6504 = vadd.f32 %v6116, %v6503
  %v6505 = vpop.f32.mrb[0].mxu0
  %6506 = vmatprep.mubr.f32.mxu0 0.0
  %6507 = vmatmul.mubr.f32.gmra.mrb[0].mxu0 %v5762
  %v6508 = vpop.f32.mrb[0].mxu0
  %v6509 = vadd.f32 %v6121, %v6508
  %v6510 = vpop.f32.mrb[0].mxu0
  %6511 = vmatprep.mubr.f32.mxu0 0.0
  %6512 = vmatmul.mubr.f32.gmra.mrb[0].mxu0 %v5765
  %v6513 = vpop.f32.mrb[0].mxu0
  %v6514 = vadd.f32 %v6126, %v6513
  %v6515 = vpop.f32.mrb[0].mxu0
  %6516 = vmatprep.mubr.f32.mxu0 0.0
  %6517 = vmatmul.mubr.f32.gmra.mrb[0].mxu0 %v5768
  %v6518 = vpop.f32.mrb[0].mxu0
  %v6519 = vadd.f32 %v6131, %v6518
  %v6520 = vpop.f32.mrb[0].mxu0
  %6521 = vmatprep.mubr.f32.mxu0 0.0
  %6522 = vmatmul.mubr.f32.gmra.mrb[0].mxu0 %v5771
  %v6523 = vpop.f32.mrb[0].mxu0
  %v6524 = vadd.f32 %v6136, %v6523
  %v6525 = vpop.f32.mrb[0].mxu0
  %6526 = vmatprep.mubr.f32.mxu0 0.0
  %6527 = vmatmul.mubr.f32.gmra.mrb[0].mxu0 %v5774
  %v6528 = vpop.f32.mrb[0].mxu0
  %v6529 = vadd.f32 %v6141, %v6528
  %v6530 = vpop.f32.mrb[0].mxu0
  %6531 = vmatprep.mubr.f32.mxu0 0.0
  %6532 = vmatmul.mubr.f32.gmra.mrb[0].mxu0 %v5777
  %v6533 = vpop.f32.mrb[0].mxu0
  %v6534 = vadd.f32 %v6146, %v6533
  %v6535 = vpop.f32.mrb[0].mxu0
  %6536 = vmatprep.mubr.f32.mxu0 0.0
  %6537 = vmatmul.mubr.f32.gmra.mrb[0].mxu0 %v5780
  %v6538 = vpop.f32.mrb[0].mxu0
  %v6539 = vadd.f32 %v6151, %v6538
  %v6540 = vpop.f32.mrb[0].mxu0
  %6541 = vmatprep.mubr.f32.mxu0 0.0
  %6542 = vmatmul.mubr.f32.gmra.mrb[0].mxu0 %v5783
  %v6543 = vpop.f32.mrb[0].mxu0
  %v6544 = vadd.f32 %v6156, %v6543
  %v6545 = vpop.f32.mrb[0].mxu0
  %6546 = vmatprep.mubr.f32.mxu0 0.0
  %6547 = vmatmul.mubr.f32.gmra.mrb[0].mxu0 %v5786
  %v6548 = vpop.f32.mrb[0].mxu0
  %v6549 = vadd.f32 %v6161, %v6548
  %v6550 = vpop.f32.mrb[0].mxu0
  %6551 = vmatprep.mubr.f32.mxu0 0.0
  %6552 = vmatmul.mubr.f32.gmra.mrb[0].mxu0 %v5789
  %v6553 = vpop.f32.mrb[0].mxu0
  %v6554 = vadd.f32 %v6166, %v6553
  %v6555 = vpop.f32.mrb[0].mxu0
  %6556 = vmatprep.mubr.f32.mxu0 0.0
  %6557 = vmatmul.mubr.f32.gmra.mrb[0].mxu0 %v5792
  %v6558 = vpop.f32.mrb[0].mxu0
  %v6559 = vadd.f32 %v6171, %v6558
  %v6560 = vpop.f32.mrb[0].mxu0
  %6561 = vmatprep.mubr.f32.mxu0 0.0
  %6562 = vmatmul.mubr.f32.gmra.mrb[0].mxu0 %v5795
  %v6563 = vpop.f32.mrb[0].mxu0
  %v6564 = vadd.f32 %v6176, %v6563
  %v6565 = vpop.f32.mrb[0].mxu0
  %6566 = vmatprep.mubr.f32.mxu0 0.0
  %6567 = vmatmul.mubr.f32.gmra.mrb[0].mxu0 %v5798
  %v6568 = vpop.f32.mrb[0].mxu0
  %v6569 = vadd.f32 %v6181, %v6568
  %v6570 = vpop.f32.mrb[0].mxu0
  %6571 = vmatprep.mubr.f32.mxu0 0.0
  %6572 = vmatmul.mubr.f32.gmra.mrb[0].mxu0 %v5801
  %v6573 = vpop.f32.mrb[0].mxu0
  %v6574 = vadd.f32 %v6186, %v6573
  %v6575 = vpop.f32.mrb[0].mxu0
  %6576 = vmatprep.mubr.f32.mxu0 0.0
  %6577 = vmatmul.mubr.f32.gmra.mrb[0].mxu0 %v5804
  %v6578 = vpop.f32.mrb[0].mxu0
  %v6579 = vadd.f32 %v6191, %v6578
  %v6580 = vpop.f32.mrb[0].mxu0
  %6581 = vmatprep.mubr.f32.mxu0 0.0
  %6582 = vmatmul.mubr.f32.gmra.mrb[0].mxu0 %v5807
  %v6583 = vpop.f32.mrb[0].mxu0
  %v6584 = vadd.f32 %v6196, %v6583
  %v6585 = vpop.f32.mrb[0].mxu0
  %6586 = vmatprep.mubr.f32.mxu0 0.0
  %6587 = vmatmul.mubr.f32.gmra.mrb[0].mxu0 %v5810
  %v6588 = vpop.f32.mrb[0].mxu0
  %v6589 = vadd.f32 %v6201, %v6588
  %v6590 = vpop.f32.mrb[0].mxu0
  %6591 = vmatprep.mubr.f32.mxu0 0.0
  %6592 = vmatmul.mubr.f32.gmra.mrb[0].mxu0 %v5813
  %v6593 = vpop.f32.mrb[0].mxu0
  %v6594 = vadd.f32 %v6206, %v6593
  %v6595 = vpop.f32.mrb[0].mxu0
  %6596 = vdwg.mxu0
  %s6597 = scalar_lea.vmem %s4, 80
  %v6598 = vld [vmem:[%s6597] sm:$0xff]
  %v6599 = vld [vmem:[%s6597 + $0x8] sm:$0xf]
  %v6601 = vsel %vm2179, %v6599, 0
  %6603 = vmatprep.subr.mxu0 0.0
  %6604 = vmatpush1.msra.mxu0 %v6598
  %6605 = vmatprep.subr.mxu0 0.0
  %6606 = vmatpush1.msra.mxu0 %v6601
  %6607 = vmatprep.subr.mxu0 0.0
  %6608 = vmatpush1.msra.mxu0 0.0
  %6609 = vmatprep.subr.mxu0 0.0
  %6610 = vmatpush1.msra.mxu0 0.0
  %6611 = vmatprep.subr.mxu0 0.0
  %6612 = vmatpush1.msra.mxu0 0.0
  %6613 = vmatprep.subr.mxu0 0.0
  %6614 = vmatpush1.msra.mxu0 0.0
  %6615 = vmatprep.subr.mxu0 0.0
  %6616 = vmatpush1.msra.mxu0 0.0
  %6617 = vmatprep.subr.mxu0 0.0
  %6618 = vmatpush1.msra.mxu0 0.0
  %6619 = vmatprep.subr.mxu0 0.0
  %6620 = vmatpush1.msra.mxu0 0.0
  %6621 = vmatprep.subr.mxu0 0.0
  %6622 = vmatpush1.msra.mxu0 0.0
  %6623 = vmatprep.subr.mxu0 0.0
  %6624 = vmatpush1.msra.mxu0 0.0
  %6625 = vmatprep.subr.mxu0 0.0
  %6626 = vmatpush1.msra.mxu0 0.0
  %6627 = vmatprep.subr.mxu0 0.0
  %6628 = vmatpush1.msra.mxu0 0.0
  %6629 = vmatprep.subr.mxu0 0.0
  %6630 = vmatpush1.msra.mxu0 0.0
  %6631 = vmatprep.subr.mxu0 0.0
  %6632 = vmatpush1.msra.mxu0 0.0
  %6633 = vmatprep.subr.mxu0 0.0
  %6634 = vmatpush1.msra.mxu0 0.0
  %6635 = vmatprep.subr.mxu0 0.0
  %6636 = vmatpush1.msra.mxu0 0.0
  %6637 = vmatprep.subr.mxu0 0.0
  %6638 = vmatpush1.msra.mxu0 0.0
  %6639 = vmatprep.subr.mxu0 0.0
  %6640 = vmatpush1.msra.mxu0 0.0
  %6641 = vmatprep.subr.mxu0 0.0
  %6642 = vmatpush1.msra.mxu0 0.0
  %6643 = vmatprep.subr.mxu0 0.0
  %6644 = vmatpush1.msra.mxu0 0.0
  %6645 = vmatprep.subr.mxu0 0.0
  %6646 = vmatpush1.msra.mxu0 0.0
  %6647 = vmatprep.subr.mxu0 0.0
  %6648 = vmatpush1.msra.mxu0 0.0
  %6649 = vmatprep.subr.mxu0 0.0
  %6650 = vmatpush1.msra.mxu0 0.0
  %6651 = vmatprep.subr.mxu0 0.0
  %6652 = vmatpush1.msra.mxu0 0.0
  %6653 = vmatprep.subr.mxu0 0.0
  %6654 = vmatpush1.msra.mxu0 0.0
  %6655 = vmatprep.subr.mxu0 0.0
  %6656 = vmatpush1.msra.mxu0 0.0
  %6657 = vmatprep.subr.mxu0 0.0
  %6658 = vmatpush1.msra.mxu0 0.0
  %6659 = vmatprep.subr.mxu0 0.0
  %6660 = vmatpush1.msra.mxu0 0.0
  %6661 = vmatprep.subr.mxu0 0.0
  %6662 = vmatpush1.msra.mxu0 0.0
  %6663 = vmatprep.subr.mxu0 0.0
  %6664 = vmatpush1.msra.mxu0 0.0
  %6665 = vmatprep.subr.mxu0 0.0
  %6666 = vmatpush1.msra.mxu0 0.0
  %6667 = vmatprep.mubr.f32.mxu0 0.0
  %6668 = vmatmul.mubr.f32.gmra.mrb[0].mxu0 %v5636
  %v6669 = vpop.f32.mrb[0].mxu0
  %v6670 = vadd.f32 0.0, %v6669
  %v6671 = vpop.f32.mrb[0].mxu0
  %6672 = vmatprep.mubr.f32.mxu0 0.0
  %6673 = vmatmul.mubr.f32.gmra.mrb[0].mxu0 %v5639
  %v6674 = vpop.f32.mrb[0].mxu0
  %v6675 = vadd.f32 0.0, %v6674
  %v6676 = vpop.f32.mrb[0].mxu0
  %6677 = vmatprep.mubr.f32.mxu0 0.0
  %6678 = vmatmul.mubr.f32.gmra.mrb[0].mxu0 %v5642
  %v6679 = vpop.f32.mrb[0].mxu0
  %v6680 = vadd.f32 0.0, %v6679
  %v6681 = vpop.f32.mrb[0].mxu0
  %6682 = vmatprep.mubr.f32.mxu0 0.0
  %6683 = vmatmul.mubr.f32.gmra.mrb[0].mxu0 %v5645
  %v6684 = vpop.f32.mrb[0].mxu0
  %v6685 = vadd.f32 0.0, %v6684
  %v6686 = vpop.f32.mrb[0].mxu0
  %6687 = vmatprep.mubr.f32.mxu0 0.0
  %6688 = vmatmul.mubr.f32.gmra.mrb[0].mxu0 %v5648
  %v6689 = vpop.f32.mrb[0].mxu0
  %v6690 = vadd.f32 0.0, %v6689
  %v6691 = vpop.f32.mrb[0].mxu0
  %6692 = vmatprep.mubr.f32.mxu0 0.0
  %6693 = vmatmul.mubr.f32.gmra.mrb[0].mxu0 %v5651
  %v6694 = vpop.f32.mrb[0].mxu0
  %v6695 = vadd.f32 0.0, %v6694
  %v6696 = vpop.f32.mrb[0].mxu0
  %6697 = vmatprep.mubr.f32.mxu0 0.0
  %6698 = vmatmul.mubr.f32.gmra.mrb[0].mxu0 %v5654
  %v6699 = vpop.f32.mrb[0].mxu0
  %v6700 = vadd.f32 0.0, %v6699
  %v6701 = vpop.f32.mrb[0].mxu0
  %6702 = vmatprep.mubr.f32.mxu0 0.0
  %6703 = vmatmul.mubr.f32.gmra.mrb[0].mxu0 %v5657
  %v6704 = vpop.f32.mrb[0].mxu0
  %v6705 = vadd.f32 0.0, %v6704
  %v6706 = vpop.f32.mrb[0].mxu0
  %6707 = vmatprep.mubr.f32.mxu0 0.0
  %6708 = vmatmul.mubr.f32.gmra.mrb[0].mxu0 %v5660
  %v6709 = vpop.f32.mrb[0].mxu0
  %v6710 = vadd.f32 0.0, %v6709
  %v6711 = vpop.f32.mrb[0].mxu0
  %6712 = vmatprep.mubr.f32.mxu0 0.0
  %6713 = vmatmul.mubr.f32.gmra.mrb[0].mxu0 %v5663
  %v6714 = vpop.f32.mrb[0].mxu0
  %v6715 = vadd.f32 0.0, %v6714
  %v6716 = vpop.f32.mrb[0].mxu0
  %6717 = vmatprep.mubr.f32.mxu0 0.0
  %6718 = vmatmul.mubr.f32.gmra.mrb[0].mxu0 %v5666
  %v6719 = vpop.f32.mrb[0].mxu0
  %v6720 = vadd.f32 0.0, %v6719
  %v6721 = vpop.f32.mrb[0].mxu0
  %6722 = vmatprep.mubr.f32.mxu0 0.0
  %6723 = vmatmul.mubr.f32.gmra.mrb[0].mxu0 %v5669
  %v6724 = vpop.f32.mrb[0].mxu0
  %v6725 = vadd.f32 0.0, %v6724
  %v6726 = vpop.f32.mrb[0].mxu0
  %6727 = vmatprep.mubr.f32.mxu0 0.0
  %6728 = vmatmul.mubr.f32.gmra.mrb[0].mxu0 %v5672
  %v6729 = vpop.f32.mrb[0].mxu0
  %v6730 = vadd.f32 0.0, %v6729
  %v6731 = vpop.f32.mrb[0].mxu0
  %6732 = vmatprep.mubr.f32.mxu0 0.0
  %6733 = vmatmul.mubr.f32.gmra.mrb[0].mxu0 %v5675
  %v6734 = vpop.f32.mrb[0].mxu0
  %v6735 = vadd.f32 0.0, %v6734
  %v6736 = vpop.f32.mrb[0].mxu0
  %6737 = vmatprep.mubr.f32.mxu0 0.0
  %6738 = vmatmul.mubr.f32.gmra.mrb[0].mxu0 %v5678
  %v6739 = vpop.f32.mrb[0].mxu0
  %v6740 = vadd.f32 0.0, %v6739
  %v6741 = vpop.f32.mrb[0].mxu0
  %6742 = vmatprep.mubr.f32.mxu0 0.0
  %6743 = vmatmul.mubr.f32.gmra.mrb[0].mxu0 %v5681
  %v6744 = vpop.f32.mrb[0].mxu0
  %v6745 = vadd.f32 0.0, %v6744
  %v6746 = vpop.f32.mrb[0].mxu0
  %6747 = vmatprep.mubr.f32.mxu0 0.0
  %6748 = vmatmul.mubr.f32.gmra.mrb[0].mxu0 %v5684
  %v6749 = vpop.f32.mrb[0].mxu0
  %v6750 = vadd.f32 0.0, %v6749
  %v6751 = vpop.f32.mrb[0].mxu0
  %6752 = vmatprep.mubr.f32.mxu0 0.0
  %6753 = vmatmul.mubr.f32.gmra.mrb[0].mxu0 %v5687
  %v6754 = vpop.f32.mrb[0].mxu0
  %v6755 = vadd.f32 0.0, %v6754
  %v6756 = vpop.f32.mrb[0].mxu0
  %6757 = vmatprep.mubr.f32.mxu0 0.0
  %6758 = vmatmul.mubr.f32.gmra.mrb[0].mxu0 %v5690
  %v6759 = vpop.f32.mrb[0].mxu0
  %v6760 = vadd.f32 0.0, %v6759
  %v6761 = vpop.f32.mrb[0].mxu0
  %6762 = vmatprep.mubr.f32.mxu0 0.0
  %6763 = vmatmul.mubr.f32.gmra.mrb[0].mxu0 %v5693
  %v6764 = vpop.f32.mrb[0].mxu0
  %v6765 = vadd.f32 0.0, %v6764
  %v6766 = vpop.f32.mrb[0].mxu0
  %6767 = vmatprep.mubr.f32.mxu0 0.0
  %6768 = vmatmul.mubr.f32.gmra.mrb[0].mxu0 %v5696
  %v6769 = vpop.f32.mrb[0].mxu0
  %v6770 = vadd.f32 0.0, %v6769
  %v6771 = vpop.f32.mrb[0].mxu0
  %6772 = vmatprep.mubr.f32.mxu0 0.0
  %6773 = vmatmul.mubr.f32.gmra.mrb[0].mxu0 %v5699
  %v6774 = vpop.f32.mrb[0].mxu0
  %v6775 = vadd.f32 0.0, %v6774
  %v6776 = vpop.f32.mrb[0].mxu0
  %6777 = vmatprep.mubr.f32.mxu0 0.0
  %6778 = vmatmul.mubr.f32.gmra.mrb[0].mxu0 %v5702
  %v6779 = vpop.f32.mrb[0].mxu0
  %v6780 = vadd.f32 0.0, %v6779
  %v6781 = vpop.f32.mrb[0].mxu0
  %6782 = vmatprep.mubr.f32.mxu0 0.0
  %6783 = vmatmul.mubr.f32.gmra.mrb[0].mxu0 %v5705
  %v6784 = vpop.f32.mrb[0].mxu0
  %v6785 = vadd.f32 0.0, %v6784
  %v6786 = vpop.f32.mrb[0].mxu0
  %6787 = vmatprep.mubr.f32.mxu0 0.0
  %6788 = vmatmul.mubr.f32.gmra.mrb[0].mxu0 %v5708
  %v6789 = vpop.f32.mrb[0].mxu0
  %v6790 = vadd.f32 0.0, %v6789
  %v6791 = vpop.f32.mrb[0].mxu0
  %6792 = vmatprep.mubr.f32.mxu0 0.0
  %6793 = vmatmul.mubr.f32.gmra.mrb[0].mxu0 %v5711
  %v6794 = vpop.f32.mrb[0].mxu0
  %v6795 = vadd.f32 0.0, %v6794
  %v6796 = vpop.f32.mrb[0].mxu0
  %6797 = vmatprep.mubr.f32.mxu0 0.0
  %6798 = vmatmul.mubr.f32.gmra.mrb[0].mxu0 %v5714
  %v6799 = vpop.f32.mrb[0].mxu0
  %v6800 = vadd.f32 0.0, %v6799
  %v6801 = vpop.f32.mrb[0].mxu0
  %6802 = vmatprep.mubr.f32.mxu0 0.0
  %6803 = vmatmul.mubr.f32.gmra.mrb[0].mxu0 %v5717
  %v6804 = vpop.f32.mrb[0].mxu0
  %v6805 = vadd.f32 0.0, %v6804
  %v6806 = vpop.f32.mrb[0].mxu0
  %6807 = vmatprep.mubr.f32.mxu0 0.0
  %6808 = vmatmul.mubr.f32.gmra.mrb[0].mxu0 %v5720
  %v6809 = vpop.f32.mrb[0].mxu0
  %v6810 = vadd.f32 0.0, %v6809
  %v6811 = vpop.f32.mrb[0].mxu0
  %6812 = vmatprep.mubr.f32.mxu0 0.0
  %6813 = vmatmul.mubr.f32.gmra.mrb[0].mxu0 %v5723
  %v6814 = vpop.f32.mrb[0].mxu0
  %v6815 = vadd.f32 0.0, %v6814
  %v6816 = vpop.f32.mrb[0].mxu0
  %6817 = vmatprep.mubr.f32.mxu0 0.0
  %6818 = vmatmul.mubr.f32.gmra.mrb[0].mxu0 %v2569
  %v6819 = vpop.f32.mrb[0].mxu0
  %v6820 = vadd.f32 0.0, %v6819
  %v6821 = vpop.f32.mrb[0].mxu0
  %6822 = vmatprep.mubr.f32.mxu0 0.0
  %6823 = vmatmul.mubr.f32.gmra.mrb[0].mxu0 %v2569
  %v6824 = vpop.f32.mrb[0].mxu0
  %v6825 = vadd.f32 0.0, %v6824
  %v6826 = vpop.f32.mrb[0].mxu0
  %6827 = vmatprep.mubr.f32.mxu0 0.0
  %6828 = vmatmul.mubr.f32.gmra.mrb[0].mxu0 %v5732
  %v6829 = vpop.f32.mrb[0].mxu0
  %v6830 = vadd.f32 0.0, %v6829
  %v6831 = vpop.f32.mrb[0].mxu0
  %6832 = vmatprep.mubr.f32.mxu0 0.0
  %6833 = vmatmul.mubr.f32.gmra.mrb[0].mxu0 %v5735
  %v6834 = vpop.f32.mrb[0].mxu0
  %v6835 = vadd.f32 0.0, %v6834
  %v6836 = vpop.f32.mrb[0].mxu0
  %6837 = vmatprep.mubr.f32.mxu0 0.0
  %6838 = vmatmul.mubr.f32.gmra.mrb[0].mxu0 %v5738
  %v6839 = vpop.f32.mrb[0].mxu0
  %v6840 = vadd.f32 0.0, %v6839
  %v6841 = vpop.f32.mrb[0].mxu0
  %6842 = vmatprep.mubr.f32.mxu0 0.0
  %6843 = vmatmul.mubr.f32.gmra.mrb[0].mxu0 %v5741
  %v6844 = vpop.f32.mrb[0].mxu0
  %v6845 = vadd.f32 0.0, %v6844
  %v6846 = vpop.f32.mrb[0].mxu0
  %6847 = vmatprep.mubr.f32.mxu0 0.0
  %6848 = vmatmul.mubr.f32.gmra.mrb[0].mxu0 %v5744
  %v6849 = vpop.f32.mrb[0].mxu0
  %v6850 = vadd.f32 0.0, %v6849
  %v6851 = vpop.f32.mrb[0].mxu0
  %6852 = vmatprep.mubr.f32.mxu0 0.0
  %6853 = vmatmul.mubr.f32.gmra.mrb[0].mxu0 %v5747
  %v6854 = vpop.f32.mrb[0].mxu0
  %v6855 = vadd.f32 0.0, %v6854
  %v6856 = vpop.f32.mrb[0].mxu0
  %6857 = vmatprep.mubr.f32.mxu0 0.0
  %6858 = vmatmul.mubr.f32.gmra.mrb[0].mxu0 %v5750
  %v6859 = vpop.f32.mrb[0].mxu0
  %v6860 = vadd.f32 0.0, %v6859
  %v6861 = vpop.f32.mrb[0].mxu0
  %6862 = vmatprep.mubr.f32.mxu0 0.0
  %6863 = vmatmul.mubr.f32.gmra.mrb[0].mxu0 %v5753
  %v6864 = vpop.f32.mrb[0].mxu0
  %v6865 = vadd.f32 0.0, %v6864
  %v6866 = vpop.f32.mrb[0].mxu0
  %6867 = vmatprep.mubr.f32.mxu0 0.0
  %6868 = vmatmul.mubr.f32.gmra.mrb[0].mxu0 %v5756
  %v6869 = vpop.f32.mrb[0].mxu0
  %v6870 = vadd.f32 0.0, %v6869
  %v6871 = vpop.f32.mrb[0].mxu0
  %6872 = vmatprep.mubr.f32.mxu0 0.0
  %6873 = vmatmul.mubr.f32.gmra.mrb[0].mxu0 %v5759
  %v6874 = vpop.f32.mrb[0].mxu0
  %v6875 = vadd.f32 0.0, %v6874
  %v6876 = vpop.f32.mrb[0].mxu0
  %6877 = vmatprep.mubr.f32.mxu0 0.0
  %6878 = vmatmul.mubr.f32.gmra.mrb[0].mxu0 %v5762
  %v6879 = vpop.f32.mrb[0].mxu0
  %v6880 = vadd.f32 0.0, %v6879
  %v6881 = vpop.f32.mrb[0].mxu0
  %6882 = vmatprep.mubr.f32.mxu0 0.0
  %6883 = vmatmul.mubr.f32.gmra.mrb[0].mxu0 %v5765
  %v6884 = vpop.f32.mrb[0].mxu0
  %v6885 = vadd.f32 0.0, %v6884
  %v6886 = vpop.f32.mrb[0].mxu0
  %6887 = vmatprep.mubr.f32.mxu0 0.0
  %6888 = vmatmul.mubr.f32.gmra.mrb[0].mxu0 %v5768
  %v6889 = vpop.f32.mrb[0].mxu0
  %v6890 = vadd.f32 0.0, %v6889
  %v6891 = vpop.f32.mrb[0].mxu0
  %6892 = vmatprep.mubr.f32.mxu0 0.0
  %6893 = vmatmul.mubr.f32.gmra.mrb[0].mxu0 %v5771
  %v6894 = vpop.f32.mrb[0].mxu0
  %v6895 = vadd.f32 0.0, %v6894
  %v6896 = vpop.f32.mrb[0].mxu0
  %6897 = vmatprep.mubr.f32.mxu0 0.0
  %6898 = vmatmul.mubr.f32.gmra.mrb[0].mxu0 %v5774
  %v6899 = vpop.f32.mrb[0].mxu0
  %v6900 = vadd.f32 0.0, %v6899
  %v6901 = vpop.f32.mrb[0].mxu0
  %6902 = vmatprep.mubr.f32.mxu0 0.0
  %6903 = vmatmul.mubr.f32.gmra.mrb[0].mxu0 %v5777
  %v6904 = vpop.f32.mrb[0].mxu0
  %v6905 = vadd.f32 0.0, %v6904
  %v6906 = vpop.f32.mrb[0].mxu0
  %6907 = vmatprep.mubr.f32.mxu0 0.0
  %6908 = vmatmul.mubr.f32.gmra.mrb[0].mxu0 %v5780
  %v6909 = vpop.f32.mrb[0].mxu0
  %v6910 = vadd.f32 0.0, %v6909
  %v6911 = vpop.f32.mrb[0].mxu0
  %6912 = vmatprep.mubr.f32.mxu0 0.0
  %6913 = vmatmul.mubr.f32.gmra.mrb[0].mxu0 %v5783
  %v6914 = vpop.f32.mrb[0].mxu0
  %v6915 = vadd.f32 0.0, %v6914
  %v6916 = vpop.f32.mrb[0].mxu0
  %6917 = vmatprep.mubr.f32.mxu0 0.0
  %6918 = vmatmul.mubr.f32.gmra.mrb[0].mxu0 %v5786
  %v6919 = vpop.f32.mrb[0].mxu0
  %v6920 = vadd.f32 0.0, %v6919
  %v6921 = vpop.f32.mrb[0].mxu0
  %6922 = vmatprep.mubr.f32.mxu0 0.0
  %6923 = vmatmul.mubr.f32.gmra.mrb[0].mxu0 %v5789
  %v6924 = vpop.f32.mrb[0].mxu0
  %v6925 = vadd.f32 0.0, %v6924
  %v6926 = vpop.f32.mrb[0].mxu0
  %6927 = vmatprep.mubr.f32.mxu0 0.0
  %6928 = vmatmul.mubr.f32.gmra.mrb[0].mxu0 %v5792
  %v6929 = vpop.f32.mrb[0].mxu0
  %v6930 = vadd.f32 0.0, %v6929
  %v6931 = vpop.f32.mrb[0].mxu0
  %6932 = vmatprep.mubr.f32.mxu0 0.0
  %6933 = vmatmul.mubr.f32.gmra.mrb[0].mxu0 %v5795
  %v6934 = vpop.f32.mrb[0].mxu0
  %v6935 = vadd.f32 0.0, %v6934
  %v6936 = vpop.f32.mrb[0].mxu0
  %6937 = vmatprep.mubr.f32.mxu0 0.0
  %6938 = vmatmul.mubr.f32.gmra.mrb[0].mxu0 %v5798
  %v6939 = vpop.f32.mrb[0].mxu0
  %v6940 = vadd.f32 0.0, %v6939
  %v6941 = vpop.f32.mrb[0].mxu0
  %6942 = vmatprep.mubr.f32.mxu0 0.0
  %6943 = vmatmul.mubr.f32.gmra.mrb[0].mxu0 %v5801
  %v6944 = vpop.f32.mrb[0].mxu0
  %v6945 = vadd.f32 0.0, %v6944
  %v6946 = vpop.f32.mrb[0].mxu0
  %6947 = vmatprep.mubr.f32.mxu0 0.0
  %6948 = vmatmul.mubr.f32.gmra.mrb[0].mxu0 %v5804
  %v6949 = vpop.f32.mrb[0].mxu0
  %v6950 = vadd.f32 0.0, %v6949
  %v6951 = vpop.f32.mrb[0].mxu0
  %6952 = vmatprep.mubr.f32.mxu0 0.0
  %6953 = vmatmul.mubr.f32.gmra.mrb[0].mxu0 %v5807
  %v6954 = vpop.f32.mrb[0].mxu0
  %v6955 = vadd.f32 0.0, %v6954
  %v6956 = vpop.f32.mrb[0].mxu0
  %6957 = vmatprep.mubr.f32.mxu0 0.0
  %6958 = vmatmul.mubr.f32.gmra.mrb[0].mxu0 %v5810
  %v6959 = vpop.f32.mrb[0].mxu0
  %v6960 = vadd.f32 0.0, %v6959
  %v6961 = vpop.f32.mrb[0].mxu0
  %6962 = vmatprep.mubr.f32.mxu0 0.0
  %6963 = vmatmul.mubr.f32.gmra.mrb[0].mxu0 %v5813
  %v6964 = vpop.f32.mrb[0].mxu0
  %v6965 = vadd.f32 0.0, %v6964
  %v6966 = vpop.f32.mrb[0].mxu0
  %6967 = vmatprep.mubr.f32.mxu0 0.0
  %6968 = vmatmul.mubr.f32.gmra.mrb[0].mxu0 %v5816
  %v6969 = vpop.f32.mrb[0].mxu0
  %v6970 = vadd.f32 0.0, %v6969
  %v6971 = vpop.f32.mrb[0].mxu0
  %6972 = vmatprep.mubr.f32.mxu0 0.0
  %6973 = vmatmul.mubr.f32.gmra.mrb[0].mxu0 %v5819
  %v6974 = vpop.f32.mrb[0].mxu0
  %v6975 = vadd.f32 0.0, %v6974
  %v6976 = vpop.f32.mrb[0].mxu0
  %6977 = vmatprep.mubr.f32.mxu0 0.0
  %6978 = vmatmul.mubr.f32.gmra.mrb[0].mxu0 %v2569
  %v6979 = vpop.f32.mrb[0].mxu0
  %v6980 = vadd.f32 0.0, %v6979
  %v6981 = vpop.f32.mrb[0].mxu0
  %6982 = vmatprep.mubr.f32.mxu0 0.0
  %6983 = vmatmul.mubr.f32.gmra.mrb[0].mxu0 %v2569
  %v6984 = vpop.f32.mrb[0].mxu0
  %v6985 = vadd.f32 0.0, %v6984
  %v6986 = vpop.f32.mrb[0].mxu0
  %6987 = vdwg.mxu0
  %v6988 = vadd.f32 %v6279, %v6670
  %v6989 = vadd.f32 %v6284, %v6675
  %v6990 = vadd.f32 %v6289, %v6680
  %v6991 = vadd.f32 %v6294, %v6685
  %v6992 = vadd.f32 %v6299, %v6690
  %v6993 = vadd.f32 %v6304, %v6695
  %v6994 = vadd.f32 %v6309, %v6700
  %v6995 = vadd.f32 %v6314, %v6705
  %v6996 = vadd.f32 %v6319, %v6710
  %v6997 = vadd.f32 %v6324, %v6715
  %v6998 = vadd.f32 %v6329, %v6720
  %v6999 = vadd.f32 %v6334, %v6725
  %v7000 = vadd.f32 %v6339, %v6730
  %v7001 = vadd.f32 %v6344, %v6735
  %v7002 = vadd.f32 %v6349, %v6740
  %v7003 = vadd.f32 %v6354, %v6745
  %v7004 = vadd.f32 %v6359, %v6750
  %v7005 = vadd.f32 %v6364, %v6755
  %v7006 = vadd.f32 %v6369, %v6760
  %v7007 = vadd.f32 %v6374, %v6765
  %v7008 = vadd.f32 %v6379, %v6770
  %v7009 = vadd.f32 %v6384, %v6775
  %v7010 = vadd.f32 %v6389, %v6780
  %v7011 = vadd.f32 %v6394, %v6785
  %v7012 = vadd.f32 %v6399, %v6790
  %v7013 = vadd.f32 %v6404, %v6795
  %v7014 = vadd.f32 %v6409, %v6800
  %v7015 = vadd.f32 %v6414, %v6805
  %v7016 = vadd.f32 %v6419, %v6810
  %v7017 = vadd.f32 %v6424, %v6815
  %v7018 = vadd.f32 %v6429, %v6820
  %v7019 = vadd.f32 %v6434, %v6825
  %v7020 = vadd.f32 %v6439, %v6830
  %v7021 = vadd.f32 %v6444, %v6835
  %v7022 = vadd.f32 %v6449, %v6840
  %v7023 = vadd.f32 %v6454, %v6845
  %v7024 = vadd.f32 %v6459, %v6850
  %v7025 = vadd.f32 %v6464, %v6855
  %v7026 = vadd.f32 %v6469, %v6860
  %v7027 = vadd.f32 %v6474, %v6865
  %v7028 = vadd.f32 %v6479, %v6870
  %v7029 = vadd.f32 %v6484, %v6875
  %v7030 = vadd.f32 %v6489, %v6880
  %v7031 = vadd.f32 %v6494, %v6885
  %v7032 = vadd.f32 %v6499, %v6890
  %v7033 = vadd.f32 %v6504, %v6895
  %v7034 = vadd.f32 %v6509, %v6900
  %v7035 = vadd.f32 %v6514, %v6905
  %v7036 = vadd.f32 %v6519, %v6910
  %v7037 = vadd.f32 %v6524, %v6915
  %v7038 = vadd.f32 %v6529, %v6920
  %v7039 = vadd.f32 %v6534, %v6925
  %v7040 = vadd.f32 %v6539, %v6930
  %v7041 = vadd.f32 %v6544, %v6935
  %v7042 = vadd.f32 %v6549, %v6940
  %v7043 = vadd.f32 %v6554, %v6945
  %v7044 = vadd.f32 %v6559, %v6950
  %v7045 = vadd.f32 %v6564, %v6955
  %v7046 = vadd.f32 %v6569, %v6960
  %v7047 = vadd.f32 %v6574, %v6965
  %v7048 = vadd.f32 %v6579, %v6970
  %v7049 = vadd.f32 %v6584, %v6975
  %v7050 = vadd.f32 %v6589, %v6980
  %v7051 = vadd.f32 %v6594, %v6985
  %s7052 = scalar_lea.vmem %s5, 1
  %v7053 = vld [vmem:[%s7052] sm:$0x1]
  %v7055 = vlaneseq
  %v7056 = vshrl.u32 %v7055, 7
  %v7057 = vsub.s32 0, %v7056
  %v7058 = vrot.slane %v7053, %v7057
  %v7060 = vmul.f32 %v6988, %v7058
  %v7061 = vmul.f32 %v6989, %v7058
  %v7062 = vmul.f32 %v6990, %v7058
  %v7063 = vmul.f32 %v6991, %v7058
  %v7064 = vmul.f32 %v6992, %v7058
  %v7065 = vmul.f32 %v6993, %v7058
  %v7066 = vmul.f32 %v6994, %v7058
  %v7067 = vmul.f32 %v6995, %v7058
  %v7068 = vmul.f32 %v6996, %v7058
  %v7069 = vmul.f32 %v6997, %v7058
  %v7070 = vmul.f32 %v6998, %v7058
  %v7071 = vmul.f32 %v6999, %v7058
  %v7072 = vmul.f32 %v7000, %v7058
  %v7073 = vmul.f32 %v7001, %v7058
  %v7074 = vmul.f32 %v7002, %v7058
  %v7075 = vmul.f32 %v7003, %v7058
  %v7076 = vmul.f32 %v7004, %v7058
  %v7077 = vmul.f32 %v7005, %v7058
  %v7078 = vmul.f32 %v7006, %v7058
  %v7079 = vmul.f32 %v7007, %v7058
  %v7080 = vmul.f32 %v7008, %v7058
  %v7081 = vmul.f32 %v7009, %v7058
  %v7082 = vmul.f32 %v7010, %v7058
  %v7083 = vmul.f32 %v7011, %v7058
  %v7084 = vmul.f32 %v7012, %v7058
  %v7085 = vmul.f32 %v7013, %v7058
  %v7086 = vmul.f32 %v7014, %v7058
  %v7087 = vmul.f32 %v7015, %v7058
  %v7088 = vmul.f32 %v7016, %v7058
  %v7089 = vmul.f32 %v7017, %v7058
  %v7090 = vmul.f32 %v7018, %v7058
  %v7091 = vmul.f32 %v7019, %v7058
  %v7092 = vmul.f32 %v7020, %v7058
  %v7093 = vmul.f32 %v7021, %v7058
  %v7094 = vmul.f32 %v7022, %v7058
  %v7095 = vmul.f32 %v7023, %v7058
  %v7096 = vmul.f32 %v7024, %v7058
  %v7097 = vmul.f32 %v7025, %v7058
  %v7098 = vmul.f32 %v7026, %v7058
  %v7099 = vmul.f32 %v7027, %v7058
  %v7100 = vmul.f32 %v7028, %v7058
  %v7101 = vmul.f32 %v7029, %v7058
  %v7102 = vmul.f32 %v7030, %v7058
  %v7103 = vmul.f32 %v7031, %v7058
  %v7104 = vmul.f32 %v7032, %v7058
  %v7105 = vmul.f32 %v7033, %v7058
  %v7106 = vmul.f32 %v7034, %v7058
  %v7107 = vmul.f32 %v7035, %v7058
  %v7108 = vmul.f32 %v7036, %v7058
  %v7109 = vmul.f32 %v7037, %v7058
  %v7110 = vmul.f32 %v7038, %v7058
  %v7111 = vmul.f32 %v7039, %v7058
  %v7112 = vmul.f32 %v7040, %v7058
  %v7113 = vmul.f32 %v7041, %v7058
  %v7114 = vmul.f32 %v7042, %v7058
  %v7115 = vmul.f32 %v7043, %v7058
  %v7116 = vmul.f32 %v7044, %v7058
  %v7117 = vmul.f32 %v7045, %v7058
  %v7118 = vmul.f32 %v7046, %v7058
  %v7119 = vmul.f32 %v7047, %v7058
  %v7120 = vmul.f32 %v7048, %v7058
  %v7121 = vmul.f32 %v7049, %v7058
  %v7122 = vmul.f32 %v7050, %v7058
  %v7123 = vmul.f32 %v7051, %v7058
  %s7124 = scalar_lea.vmem %s6, 1
  %v7125 = vld [vmem:[%s7124] sm:$0x1]
  %v7127 = vlaneseq
  %v7128 = vshrl.u32 %v7127, 7
  %v7129 = vsub.s32 0, %v7128
  %v7130 = vrot.slane %v7125, %v7129
  %v7132 = vadd.f32 %v7060, %v7130
  %v7133 = vadd.f32 %v7061, %v7130
  %v7134 = vadd.f32 %v7062, %v7130
  %v7135 = vadd.f32 %v7063, %v7130
  %v7136 = vadd.f32 %v7064, %v7130
  %v7137 = vadd.f32 %v7065, %v7130
  %v7138 = vadd.f32 %v7066, %v7130
  %v7139 = vadd.f32 %v7067, %v7130
  %v7140 = vadd.f32 %v7068, %v7130
  %v7141 = vadd.f32 %v7069, %v7130
  %v7142 = vadd.f32 %v7070, %v7130
  %v7143 = vadd.f32 %v7071, %v7130
  %v7144 = vadd.f32 %v7072, %v7130
  %v7145 = vadd.f32 %v7073, %v7130
  %v7146 = vadd.f32 %v7074, %v7130
  %v7147 = vadd.f32 %v7075, %v7130
  %v7148 = vadd.f32 %v7076, %v7130
  %v7149 = vadd.f32 %v7077, %v7130
  %v7150 = vadd.f32 %v7078, %v7130
  %v7151 = vadd.f32 %v7079, %v7130
  %v7152 = vadd.f32 %v7080, %v7130
  %v7153 = vadd.f32 %v7081, %v7130
  %v7154 = vadd.f32 %v7082, %v7130
  %v7155 = vadd.f32 %v7083, %v7130
  %v7156 = vadd.f32 %v7084, %v7130
  %v7157 = vadd.f32 %v7085, %v7130
  %v7158 = vadd.f32 %v7086, %v7130
  %v7159 = vadd.f32 %v7087, %v7130
  %v7160 = vadd.f32 %v7088, %v7130
  %v7161 = vadd.f32 %v7089, %v7130
  %v7162 = vadd.f32 %v7090, %v7130
  %v7163 = vadd.f32 %v7091, %v7130
  %v7164 = vadd.f32 %v7092, %v7130
  %v7165 = vadd.f32 %v7093, %v7130
  %v7166 = vadd.f32 %v7094, %v7130
  %v7167 = vadd.f32 %v7095, %v7130
  %v7168 = vadd.f32 %v7096, %v7130
  %v7169 = vadd.f32 %v7097, %v7130
  %v7170 = vadd.f32 %v7098, %v7130
  %v7171 = vadd.f32 %v7099, %v7130
  %v7172 = vadd.f32 %v7100, %v7130
  %v7173 = vadd.f32 %v7101, %v7130
  %v7174 = vadd.f32 %v7102, %v7130
  %v7175 = vadd.f32 %v7103, %v7130
  %v7176 = vadd.f32 %v7104, %v7130
  %v7177 = vadd.f32 %v7105, %v7130
  %v7178 = vadd.f32 %v7106, %v7130
  %v7179 = vadd.f32 %v7107, %v7130
  %v7180 = vadd.f32 %v7108, %v7130
  %v7181 = vadd.f32 %v7109, %v7130
  %v7182 = vadd.f32 %v7110, %v7130
  %v7183 = vadd.f32 %v7111, %v7130
  %v7184 = vadd.f32 %v7112, %v7130
  %v7185 = vadd.f32 %v7113, %v7130
  %v7186 = vadd.f32 %v7114, %v7130
  %v7187 = vadd.f32 %v7115, %v7130
  %v7188 = vadd.f32 %v7116, %v7130
  %v7189 = vadd.f32 %v7117, %v7130
  %v7190 = vadd.f32 %v7118, %v7130
  %v7191 = vadd.f32 %v7119, %v7130
  %v7192 = vadd.f32 %v7120, %v7130
  %v7193 = vadd.f32 %v7121, %v7130
  %v7194 = vadd.f32 %v7122, %v7130
  %v7195 = vadd.f32 %v7123, %v7130
  %v7196 = vmul.f32 %v7132, 0.1
  %v7197 = vmul.f32 %v7133, 0.1
  %v7198 = vmul.f32 %v7134, 0.1
  %v7199 = vmul.f32 %v7135, 0.1
  %v7200 = vmul.f32 %v7136, 0.1
  %v7201 = vmul.f32 %v7137, 0.1
  %v7202 = vmul.f32 %v7138, 0.1
  %v7203 = vmul.f32 %v7139, 0.1
  %v7204 = vmul.f32 %v7140, 0.1
  %v7205 = vmul.f32 %v7141, 0.1
  %v7206 = vmul.f32 %v7142, 0.1
  %v7207 = vmul.f32 %v7143, 0.1
  %v7208 = vmul.f32 %v7144, 0.1
  %v7209 = vmul.f32 %v7145, 0.1
  %v7210 = vmul.f32 %v7146, 0.1
  %v7211 = vmul.f32 %v7147, 0.1
  %v7212 = vmul.f32 %v7148, 0.1
  %v7213 = vmul.f32 %v7149, 0.1
  %v7214 = vmul.f32 %v7150, 0.1
  %v7215 = vmul.f32 %v7151, 0.1
  %v7216 = vmul.f32 %v7152, 0.1
  %v7217 = vmul.f32 %v7153, 0.1
  %v7218 = vmul.f32 %v7154, 0.1
  %v7219 = vmul.f32 %v7155, 0.1
  %v7220 = vmul.f32 %v7156, 0.1
  %v7221 = vmul.f32 %v7157, 0.1
  %v7222 = vmul.f32 %v7158, 0.1
  %v7223 = vmul.f32 %v7159, 0.1
  %v7224 = vmul.f32 %v7160, 0.1
  %v7225 = vmul.f32 %v7161, 0.1
  %v7226 = vmul.f32 %v7162, 0.1
  %v7227 = vmul.f32 %v7163, 0.1
  %v7228 = vmul.f32 %v7164, 0.1
  %v7229 = vmul.f32 %v7165, 0.1
  %v7230 = vmul.f32 %v7166, 0.1
  %v7231 = vmul.f32 %v7167, 0.1
  %v7232 = vmul.f32 %v7168, 0.1
  %v7233 = vmul.f32 %v7169, 0.1
  %v7234 = vmul.f32 %v7170, 0.1
  %v7235 = vmul.f32 %v7171, 0.1
  %v7236 = vmul.f32 %v7172, 0.1
  %v7237 = vmul.f32 %v7173, 0.1
  %v7238 = vmul.f32 %v7174, 0.1
  %v7239 = vmul.f32 %v7175, 0.1
  %v7240 = vmul.f32 %v7176, 0.1
  %v7241 = vmul.f32 %v7177, 0.1
  %v7242 = vmul.f32 %v7178, 0.1
  %v7243 = vmul.f32 %v7179, 0.1
  %v7244 = vmul.f32 %v7180, 0.1
  %v7245 = vmul.f32 %v7181, 0.1
  %v7246 = vmul.f32 %v7182, 0.1
  %v7247 = vmul.f32 %v7183, 0.1
  %v7248 = vmul.f32 %v7184, 0.1
  %v7249 = vmul.f32 %v7185, 0.1
  %v7250 = vmul.f32 %v7186, 0.1
  %v7251 = vmul.f32 %v7187, 0.1
  %v7252 = vmul.f32 %v7188, 0.1
  %v7253 = vmul.f32 %v7189, 0.1
  %v7254 = vmul.f32 %v7190, 0.1
  %v7255 = vmul.f32 %v7191, 0.1
  %v7256 = vmul.f32 %v7192, 0.1
  %v7257 = vmul.f32 %v7193, 0.1
  %v7258 = vmul.f32 %v7194, 0.1
  %v7259 = vmul.f32 %v7195, 0.1
  %v7260 = vmax.f32 %v7132, %v7196
  %v7261 = vmax.f32 %v7133, %v7197
  %v7262 = vmax.f32 %v7134, %v7198
  %v7263 = vmax.f32 %v7135, %v7199
  %v7264 = vmax.f32 %v7136, %v7200
  %v7265 = vmax.f32 %v7137, %v7201
  %v7266 = vmax.f32 %v7138, %v7202
  %v7267 = vmax.f32 %v7139, %v7203
  %v7268 = vmax.f32 %v7140, %v7204
  %v7269 = vmax.f32 %v7141, %v7205
  %v7270 = vmax.f32 %v7142, %v7206
  %v7271 = vmax.f32 %v7143, %v7207
  %v7272 = vmax.f32 %v7144, %v7208
  %v7273 = vmax.f32 %v7145, %v7209
  %v7274 = vmax.f32 %v7146, %v7210
  %v7275 = vmax.f32 %v7147, %v7211
  %v7276 = vmax.f32 %v7148, %v7212
  %v7277 = vmax.f32 %v7149, %v7213
  %v7278 = vmax.f32 %v7150, %v7214
  %v7279 = vmax.f32 %v7151, %v7215
  %v7280 = vmax.f32 %v7152, %v7216
  %v7281 = vmax.f32 %v7153, %v7217
  %v7282 = vmax.f32 %v7154, %v7218
  %v7283 = vmax.f32 %v7155, %v7219
  %v7284 = vmax.f32 %v7156, %v7220
  %v7285 = vmax.f32 %v7157, %v7221
  %v7286 = vmax.f32 %v7158, %v7222
  %v7287 = vmax.f32 %v7159, %v7223
  %v7288 = vmax.f32 %v7160, %v7224
  %v7289 = vmax.f32 %v7161, %v7225
  %v7290 = vmax.f32 %v7162, %v7226
  %v7291 = vmax.f32 %v7163, %v7227
  %v7292 = vmax.f32 %v7164, %v7228
  %v7293 = vmax.f32 %v7165, %v7229
  %v7294 = vmax.f32 %v7166, %v7230
  %v7295 = vmax.f32 %v7167, %v7231
  %v7296 = vmax.f32 %v7168, %v7232
  %v7297 = vmax.f32 %v7169, %v7233
  %v7298 = vmax.f32 %v7170, %v7234
  %v7299 = vmax.f32 %v7171, %v7235
  %v7300 = vmax.f32 %v7172, %v7236
  %v7301 = vmax.f32 %v7173, %v7237
  %v7302 = vmax.f32 %v7174, %v7238
  %v7303 = vmax.f32 %v7175, %v7239
  %v7304 = vmax.f32 %v7176, %v7240
  %v7305 = vmax.f32 %v7177, %v7241
  %v7306 = vmax.f32 %v7178, %v7242
  %v7307 = vmax.f32 %v7179, %v7243
  %v7308 = vmax.f32 %v7180, %v7244
  %v7309 = vmax.f32 %v7181, %v7245
  %v7310 = vmax.f32 %v7182, %v7246
  %v7311 = vmax.f32 %v7183, %v7247
  %v7312 = vmax.f32 %v7184, %v7248
  %v7313 = vmax.f32 %v7185, %v7249
  %v7314 = vmax.f32 %v7186, %v7250
  %v7315 = vmax.f32 %v7187, %v7251
  %v7316 = vmax.f32 %v7188, %v7252
  %v7317 = vmax.f32 %v7189, %v7253
  %v7318 = vmax.f32 %v7190, %v7254
  %v7319 = vmax.f32 %v7191, %v7255
  %v7320 = vmax.f32 %v7192, %v7256
  %v7321 = vmax.f32 %v7193, %v7257
  %v7322 = vmax.f32 %v7194, %v7258
  %v7323 = vmax.f32 %v7195, %v7259
  %v7324 = vadd.f32 %v7260, %v3684
  %v7325 = vadd.f32 %v7261, %v3685
  %v7326 = vadd.f32 %v7262, %v3686
  %v7327 = vadd.f32 %v7263, %v3687
  %v7328 = vadd.f32 %v7264, %v3688
  %v7329 = vadd.f32 %v7265, %v3689
  %v7330 = vadd.f32 %v7266, %v3690
  %v7331 = vadd.f32 %v7267, %v3691
  %v7332 = vadd.f32 %v7268, %v3692
  %v7333 = vadd.f32 %v7269, %v3693
  %v7334 = vadd.f32 %v7270, %v3694
  %v7335 = vadd.f32 %v7271, %v3695
  %v7336 = vadd.f32 %v7272, %v3696
  %v7337 = vadd.f32 %v7273, %v3697
  %v7338 = vadd.f32 %v7274, %v3698
  %v7339 = vadd.f32 %v7275, %v3699
  %v7340 = vadd.f32 %v7276, %v3700
  %v7341 = vadd.f32 %v7277, %v3701
  %v7342 = vadd.f32 %v7278, %v3702
  %v7343 = vadd.f32 %v7279, %v3703
  %v7344 = vadd.f32 %v7280, %v3704
  %v7345 = vadd.f32 %v7281, %v3705
  %v7346 = vadd.f32 %v7282, %v3706
  %v7347 = vadd.f32 %v7283, %v3707
  %v7348 = vadd.f32 %v7284, %v3708
  %v7349 = vadd.f32 %v7285, %v3709
  %v7350 = vadd.f32 %v7286, %v3710
  %v7351 = vadd.f32 %v7287, %v3711
  %v7352 = vadd.f32 %v7288, %v3712
  %v7353 = vadd.f32 %v7289, %v3713
  %v7354 = vadd.f32 %v7290, %v3714
  %v7355 = vadd.f32 %v7291, %v3715
  %v7356 = vadd.f32 %v7292, %v3716
  %v7357 = vadd.f32 %v7293, %v3717
  %v7358 = vadd.f32 %v7294, %v3718
  %v7359 = vadd.f32 %v7295, %v3719
  %v7360 = vadd.f32 %v7296, %v3720
  %v7361 = vadd.f32 %v7297, %v3721
  %v7362 = vadd.f32 %v7298, %v3722
  %v7363 = vadd.f32 %v7299, %v3723
  %v7364 = vadd.f32 %v7300, %v3724
  %v7365 = vadd.f32 %v7301, %v3725
  %v7366 = vadd.f32 %v7302, %v3726
  %v7367 = vadd.f32 %v7303, %v3727
  %v7368 = vadd.f32 %v7304, %v3728
  %v7369 = vadd.f32 %v7305, %v3729
  %v7370 = vadd.f32 %v7306, %v3730
  %v7371 = vadd.f32 %v7307, %v3731
  %v7372 = vadd.f32 %v7308, %v3732
  %v7373 = vadd.f32 %v7309, %v3733
  %v7374 = vadd.f32 %v7310, %v3734
  %v7375 = vadd.f32 %v7311, %v3735
  %v7376 = vadd.f32 %v7312, %v3736
  %v7377 = vadd.f32 %v7313, %v3737
  %v7378 = vadd.f32 %v7314, %v3738
  %v7379 = vadd.f32 %v7315, %v3739
  %v7380 = vadd.f32 %v7316, %v3740
  %v7381 = vadd.f32 %v7317, %v3741
  %v7382 = vadd.f32 %v7318, %v3742
  %v7383 = vadd.f32 %v7319, %v3743
  %v7384 = vadd.f32 %v7320, %v3744
  %v7385 = vadd.f32 %v7321, %v3745
  %v7386 = vadd.f32 %v7322, %v3746
  %v7387 = vadd.f32 %v7323, %v3747
  %7388 = vst.msk [vmem:[%s7] sm:$0xff] %vm98, %v7324
  %7389 = vst.msk [vmem:[%s7 + $0x8] sm:$0xff] %vm98, %v7325
  %7390 = vst.msk [vmem:[%s7 + $0x10] sm:$0xff] %vm98, %v7326
  %7391 = vst.msk [vmem:[%s7 + $0x18] sm:$0xff] %vm98, %v7327
  %7392 = vst.msk [vmem:[%s7 + $0x20] sm:$0xff] %vm98, %v7328
  %7393 = vst.msk [vmem:[%s7 + $0x28] sm:$0xff] %vm98, %v7329
  %7394 = vst.msk [vmem:[%s7 + $0x30] sm:$0xff] %vm98, %v7330
  %7395 = vst.msk [vmem:[%s7 + $0x38] sm:$0xff] %vm98, %v7331
  %7396 = vst.msk [vmem:[%s7 + $0x40] sm:$0xff] %vm98, %v7332
  %7397 = vst.msk [vmem:[%s7 + $0x48] sm:$0xff] %vm98, %v7333
  %7398 = vst.msk [vmem:[%s7 + $0x50] sm:$0xff] %vm98, %v7334
  %7399 = vst.msk [vmem:[%s7 + $0x58] sm:$0xff] %vm98, %v7335
  %7400 = vst.msk [vmem:[%s7 + $0x60] sm:$0xff] %vm98, %v7336
  %7401 = vst.msk [vmem:[%s7 + $0x68] sm:$0xff] %vm98, %v7337
  %7402 = vst.msk [vmem:[%s7 + $0x70] sm:$0xff] %vm98, %v7338
  %7403 = vst.msk [vmem:[%s7 + $0x78] sm:$0xff] %vm98, %v7339
  %7404 = vst.msk [vmem:[%s7 + $0x80] sm:$0xff] %vm98, %v7340
  %7405 = vst.msk [vmem:[%s7 + $0x88] sm:$0xff] %vm98, %v7341
  %7406 = vst.msk [vmem:[%s7 + $0x90] sm:$0xff] %vm98, %v7342
  %7407 = vst.msk [vmem:[%s7 + $0x98] sm:$0xff] %vm98, %v7343
  %7408 = vst.msk [vmem:[%s7 + $0xa0] sm:$0xff] %vm98, %v7344
  %7409 = vst.msk [vmem:[%s7 + $0xa8] sm:$0xff] %vm98, %v7345
  %7410 = vst.msk [vmem:[%s7 + $0xb0] sm:$0xff] %vm98, %v7346
  %7411 = vst.msk [vmem:[%s7 + $0xb8] sm:$0xff] %vm98, %v7347
  %7412 = vst.msk [vmem:[%s7 + $0xc0] sm:$0xff] %vm98, %v7348
  %7413 = vst.msk [vmem:[%s7 + $0xc8] sm:$0xff] %vm98, %v7349
  %7414 = vst.msk [vmem:[%s7 + $0xd0] sm:$0xff] %vm98, %v7350
  %7415 = vst.msk [vmem:[%s7 + $0xd8] sm:$0xff] %vm98, %v7351
  %7416 = vst.msk [vmem:[%s7 + $0xe0] sm:$0xff] %vm98, %v7352
  %7417 = vst.msk [vmem:[%s7 + $0xe8] sm:$0xff] %vm98, %v7353
  %7418 = vst.msk [vmem:[%s7 + $0xf0] sm:$0xff] %vm98, %v7354
  %7419 = vst.msk [vmem:[%s7 + $0xf8] sm:$0xff] %vm98, %v7355
  %7420 = vst.msk [vmem:[%s7 + $0x100] sm:$0xff] %vm98, %v7356
  %7421 = vst.msk [vmem:[%s7 + $0x108] sm:$0xff] %vm98, %v7357
  %7422 = vst.msk [vmem:[%s7 + $0x110] sm:$0xff] %vm98, %v7358
  %7423 = vst.msk [vmem:[%s7 + $0x118] sm:$0xff] %vm98, %v7359
  %7424 = vst.msk [vmem:[%s7 + $0x120] sm:$0xff] %vm98, %v7360
  %7425 = vst.msk [vmem:[%s7 + $0x128] sm:$0xff] %vm98, %v7361
  %7426 = vst.msk [vmem:[%s7 + $0x130] sm:$0xff] %vm98, %v7362
  %7427 = vst.msk [vmem:[%s7 + $0x138] sm:$0xff] %vm98, %v7363
  %7428 = vst.msk [vmem:[%s7 + $0x140] sm:$0xff] %vm98, %v7364
  %7429 = vst.msk [vmem:[%s7 + $0x148] sm:$0xff] %vm98, %v7365
  %7430 = vst.msk [vmem:[%s7 + $0x150] sm:$0xff] %vm98, %v7366
  %7431 = vst.msk [vmem:[%s7 + $0x158] sm:$0xff] %vm98, %v7367
  %7432 = vst.msk [vmem:[%s7 + $0x160] sm:$0xff] %vm98, %v7368
  %7433 = vst.msk [vmem:[%s7 + $0x168] sm:$0xff] %vm98, %v7369
  %7434 = vst.msk [vmem:[%s7 + $0x170] sm:$0xff] %vm98, %v7370
  %7435 = vst.msk [vmem:[%s7 + $0x178] sm:$0xff] %vm98, %v7371
  %7436 = vst.msk [vmem:[%s7 + $0x180] sm:$0xff] %vm98, %v7372
  %7437 = vst.msk [vmem:[%s7 + $0x188] sm:$0xff] %vm98, %v7373
  %7438 = vst.msk [vmem:[%s7 + $0x190] sm:$0xff] %vm98, %v7374
  %7439 = vst.msk [vmem:[%s7 + $0x198] sm:$0xff] %vm98, %v7375
  %7440 = vst.msk [vmem:[%s7 + $0x1a0] sm:$0xff] %vm98, %v7376
  %7441 = vst.msk [vmem:[%s7 + $0x1a8] sm:$0xff] %vm98, %v7377
  %7442 = vst.msk [vmem:[%s7 + $0x1b0] sm:$0xff] %vm98, %v7378
  %7443 = vst.msk [vmem:[%s7 + $0x1b8] sm:$0xff] %vm98, %v7379
  %7444 = vst.msk [vmem:[%s7 + $0x1c0] sm:$0xff] %vm98, %v7380
  %7445 = vst.msk [vmem:[%s7 + $0x1c8] sm:$0xff] %vm98, %v7381
  %7446 = vst.msk [vmem:[%s7 + $0x1d0] sm:$0xff] %vm98, %v7382
  %7447 = vst.msk [vmem:[%s7 + $0x1d8] sm:$0xff] %vm98, %v7383
  %7448 = vst.msk [vmem:[%s7 + $0x1e0] sm:$0xff] %vm98, %v7384
  %7449 = vst.msk [vmem:[%s7 + $0x1e8] sm:$0xff] %vm98, %v7385
  %7450 = vst.msk [vmem:[%s7 + $0x1f0] sm:$0xff] %vm98, %v7386
  %7451 = vst.msk [vmem:[%s7 + $0x1f8] sm:$0xff] %vm98, %v7387
  // Predicated region
  $region30: #{tpu_custom_call.1} parent=0 // pred_check
    _
  $region31: #{tpu_custom_call.1} parent=0 // pred_check_branch
    %7453 = sbr.rel (0) target = $region33
  $region32: #{tpu_custom_call.1} parent=0 // pred_region
    _
  $region33: #{tpu_custom_call.1} parent=0 // pred_fallthru
    _
  // Predicated region
  $region34: #{tpu_custom_call.1} parent=0 // pred_check
    _
  $region35: #{tpu_custom_call.1} parent=0 // pred_check_branch
    %7455 = sbr.rel (0) target = $region37
  $region36: #{tpu_custom_call.1} parent=0 // pred_region
    _
  $region37: #{tpu_custom_call.1} parent=0 // pred_fallthru
    _

</llo_original>
